<compile_context>
chip_gen: v7x
topology: tpu7x:2x2x1
jax: 0.10.0
libtpu: 0.0.40
codegen_flags: <defaults>
</compile_context>

<pallas_src>
import functools
import numpy as np
import jax
import jax.numpy as jnp
from jax import lax
from jax.experimental import pallas as pl
from jax.experimental.pallas import tpu as pltpu

_BN_EPS = 1e-5


# --------------------------- hardware-aware knobs --------------------------- #

def _vmem_capacity_bytes():
    """Physical per-core VMEM (generation aware); conservative if unknown."""
    try:
        info = pltpu.get_tpu_info()
        cap = int(getattr(info, "vmem_capacity_bytes", 0))
        if cap > 0:
            return cap
    except Exception:
        pass
    return 64 * 1024 * 1024     # assume the smallest (v7x) when unknown


def _pick_tile(n, cap):
    """Largest divisor of n that is a multiple of 8 and <= cap."""
    best = 8
    t = 8
    while t <= min(n, cap):
        if n % t == 0:
            best = t
        t += 8
    return best


# --------------------------------- kernels ---------------------------------- #

def _stn_points_kernel(x_ref, w1, b1, w2, b2, w3, b3, pool_ref):
    """STN3d point MLP 3->64->128->1024 (use_bn=False) + running per-batch max
    over point tiles (MaxPool2d((N, 1)))."""
    t = pl.program_id(1)
    x = x_ref[...].astype(jnp.bfloat16)                                   # (T, 8)
    h = jnp.maximum(jnp.dot(x, w1[...],
                            preferred_element_type=jnp.float32) + b1[...], 0.0)
    h = jnp.maximum(jnp.dot(h.astype(jnp.bfloat16), w2[...],
                            preferred_element_type=jnp.float32) + b2[...], 0.0)
    h = jnp.maximum(jnp.dot(h.astype(jnp.bfloat16), w3[...],
                            preferred_element_type=jnp.float32) + b3[...], 0.0)

    @pl.when(t == 0)
    def _():
        pool_ref[...] = jnp.full_like(pool_ref, -jnp.inf)

    tile_max = jnp.max(h, axis=0, keepdims=True)[:, None, :]              # (1,1,1024)
    pool_ref[...] = jnp.maximum(pool_ref[...], tile_max)


def _stn_head_kernel(g_ref, fw1, fb1, fw2, fb2, fw3, fb3, eye_ref, out_ref):
    """STN3d FC head 1024->512->256->9 plus the flattened 3x3 identity."""
    g = g_ref[...].astype(jnp.bfloat16)
    f = jnp.maximum(jnp.dot(g, fw1[...],
                            preferred_element_type=jnp.float32) + fb1[...], 0.0)
    f = jnp.maximum(jnp.dot(f.astype(jnp.bfloat16), fw2[...],
                            preferred_element_type=jnp.float32) + fb2[...], 0.0)
    f = jnp.dot(f.astype(jnp.bfloat16), fw3[...],
                preferred_element_type=jnp.float32) + fb3[...]
    out_ref[...] = f + eye_ref[...]                                        # (B, 9)


def _fused_main_kernel(tiles_per_b, tile_n,
                       x_ref, tw1_ref, b1_ref, w2_ref, b2_ref, w3_ref, b3_ref,
                       w4_ref, b4_ref, w5_ref, b5_ref,
                       feat_ref, act1, act2, act3):
    """All five main-branch convs + training-mode BN + ReLU + MaxPool in one
    kernel.  Inter-layer activations stay in VMEM scratch (bf16, no HBM
    round-trips).  Each layer is a fori_loop over point tiles that also
    accumulates per-channel [sum, sum_sq] in f32 loop carries; the BN
    scale/shift for that layer is derived in-kernel before the next layer runs
    (the BN-stat barrier).  BN5 has no ReLU and is monotone per channel, so it
    is applied to the pooled per-batch maxima at the end."""
    f32, bf16 = jnp.float32, jnp.bfloat16
    B = tw1_ref.shape[0]
    D = feat_ref.shape[1]
    n_tiles = B * tiles_per_b
    rows = n_tiles * tile_n

    def finish(s, q):
        # TODO(synk): single-pass E[x^2]-E[x]^2 in f32 can cancel for very large
        # rows; a Welford/centered combine would be more robust.
        mean = s / rows
        var = jnp.maximum(q / rows - mean * mean, 0.0)
        sc = lax.rsqrt(var + _BN_EPS)
        return sc, -mean * sc

    def acc(c, a):
        s, q = c
        return (s + jnp.sum(a, axis=0, keepdims=True),
                q + jnp.sum(a * a, axis=0, keepdims=True))

    z64 = jnp.zeros((1, 64), f32)
    zD = jnp.zeros((1, D), f32)

    # ---- layer 1: x @ (trans @ W1) + b1 (transform folded; no input BN) ----
    s1, q1 = z64, z64
    for b in range(B):                       # static: per-batch folded weight
        w1b = tw1_ref[b]                     # (8, 64) bf16

        def l1(i, c):
            r = pl.ds(pl.multiple_of((b * tiles_per_b + i) * tile_n, tile_n),
                      tile_n)
            a = jnp.dot(x_ref[r, :].astype(bf16), w1b,
                        preferred_element_type=f32) + b1_ref[...]
            act1[r, :] = a.astype(bf16)
            return acc(c, a)

        s1, q1 = lax.fori_loop(0, tiles_per_b, l1, (s1, q1))
    sc1, sh1 = finish(s1, q1)

    # ---- layers 2..4: relu(BN(prev)) @ W + b, ping-ponging VMEM scratch ----
    def bn_relu_layer(src_ref, sc, sh, w_ref, b_ref, dst_ref, cout):
        zc = jnp.zeros((1, cout), f32)

        def body(i, c):
            r = pl.ds(pl.multiple_of(i * tile_n, tile_n), tile_n)
            x = jnp.maximum(src_ref[r, :].astype(f32) * sc + sh, 0.0)
            a = jnp.dot(x.astype(bf16), w_ref[...],
                        preferred_element_type=f32) + b_ref[...]
            dst_ref[r, :] = a.astype(bf16)
            return acc(c, a)

        s, q = lax.fori_loop(0, n_tiles, body, (zc, zc))
        return finish(s, q)

    sc2, sh2 = bn_relu_layer(act1, sc1, sh1, w2_ref, b2_ref, act2, 64)   # conv2
    sc3, sh3 = bn_relu_layer(act2, sc2, sh2, w3_ref, b3_ref, act1, 64)   # conv3
    sc4, sh4 = bn_relu_layer(act1, sc3, sh3, w4_ref, b4_ref, act3, 128)  # conv4

    # ---- layer 5: conv5 + per-batch max pool + BN5 stats (never hits HBM) ---
    s5, q5 = zD, zD
    for b in range(B):

        def l5(i, c):
            s, q, m = c
            r = pl.ds(pl.multiple_of((b * tiles_per_b + i) * tile_n, tile_n),
                      tile_n)
            x = jnp.maximum(act3[r, :].astype(f32) * sc4 + sh4, 0.0)
            a = jnp.dot(x.astype(bf16), w5_ref[...],
                        preferred_element_type=f32) + b5_ref[...]          # (T, D)
            s, q = acc((s, q), a)
            return s, q, jnp.maximum(m, jnp.max(a, axis=0, keepdims=True))

        s5, q5, m_b = lax.fori_loop(
            0, tiles_per_b, l5, (s5, q5, jnp.full((1, D), -jnp.inf, f32)))
        feat_ref[pl.ds(b, 1), :] = m_b
    sc5, sh5 = finish(s5, q5)
    # BN5 (no ReLU) is monotone per channel -> commutes with the max pool.
    feat_ref[...] = feat_ref[...] * sc5 + sh5


# ------------------- multi-pass fallback (large B*N) kernels ---------------- #

def _conv_bn_layer_kernel(apply_input_relu, x_ref, shift_ref, w_ref, b_ref,
                          out_ref, sum_ref, sq_ref):
    """One (1,1)-conv over a point tile (fallback path).  The previous layer's
    BN scale is folded into this layer's weight host-side (scale > 0), so the
    input transform is just relu(x + shift).  Emits the pre-BN activation tile
    (bf16) and per-batch per-channel sum / sum_sq partials."""
    t = pl.program_id(1)
    x = x_ref[...].astype(jnp.float32)
    if apply_input_relu:
        x = jnp.maximum(x + shift_ref[...], 0.0)
    a = jnp.dot(x.astype(jnp.bfloat16), w_ref[0],
                preferred_element_type=jnp.float32) + b_ref[...]           # (T, C)
    out_ref[...] = a.astype(out_ref.dtype)

    @pl.when(t == 0)
    def _():
        sum_ref[...] = jnp.zeros_like(sum_ref)
        sq_ref[...] = jnp.zeros_like(sq_ref)

    sum_ref[...] += jnp.sum(a, axis=0, keepdims=True)[:, None, :]
    sq_ref[...] += jnp.sum(a * a, axis=0, keepdims=True)[:, None, :]


def _final_conv_pool_kernel(x_ref, shift_ref, w_ref, b_ref,
                            pool_ref, sum_ref, sq_ref):
    """Last conv (128 -> output_dim) fused with the per-batch max pool and BN5
    statistics (fallback path)."""
    t = pl.program_id(1)
    x = jnp.maximum(x_ref[...].astype(jnp.float32) + shift_ref[...], 0.0)
    a = jnp.dot(x.astype(jnp.bfloat16), w_ref[0],
                preferred_element_type=jnp.float32) + b_ref[...]           # (T, D)

    @pl.when(t == 0)
    def _():
        pool_ref[...] = jnp.full_like(pool_ref, -jnp.inf)
        sum_ref[...] = jnp.zeros_like(sum_ref)
        sq_ref[...] = jnp.zeros_like(sq_ref)

    pool_ref[...] = jnp.maximum(pool_ref[...],
                                jnp.max(a, axis=0, keepdims=True)[:, None, :])
    sum_ref[...] += jnp.sum(a, axis=0, keepdims=True)[:, None, :]
    sq_ref[...] += jnp.sum(a * a, axis=0, keepdims=True)[:, None, :]


# ------------------------------ host-side glue ------------------------------ #

def _bn_scale_shift(sum_st, sq_st, count, eps=_BN_EPS):
    """sum_st/sq_st: (B, 1, C) per-batch partials.  Returns (1, C) f32 scale /
    shift implementing training-mode BatchNorm (biased variance)."""
    mean = jnp.sum(sum_st, axis=(0, 1)) / count
    var = jnp.maximum(jnp.sum(sq_st, axis=(0, 1)) / count - mean * mean, 0.0)
    scale = lax.rsqrt(var + eps)
    return scale[None, :], (-mean * scale)[None, :]


def _fold_scale_into_weight(scale, shift, w):
    """relu(x*s + t) @ W == relu(x + t/s) @ (s[:, None] * W) for s > 0."""
    return scale[0][:, None] * w, shift / scale


def init_params(key, output_dim):
    """Deterministic synthetic init (PyTorch-like uniform(-1/sqrt(fan_in), .)).
    Conv2d (1,1)/(1,3) kernels are stored directly as (fan_in, fan_out) matmul
    weights; biases as (1, fan_out)."""
    keys = jax.random.split(key, 10)

    def lin(k, fin, fout):
        bound = 1.0 / np.sqrt(fin)
        kw, kb = jax.random.split(k)
        w = jax.random.uniform(kw, (fin, fout), jnp.float32, -bound, bound)
        b = jax.random.uniform(kb, (1, fout), jnp.float32, -bound, bound)
        return w, b

    p = {}
    # STN3d(k=3, use_bn=False)
    p["s1"] = lin(keys[0], 3, 64)        # Conv2d(1, 64, (1, 3))
    p["s2"] = lin(keys[1], 64, 128)      # Conv2d(64, 128, (1, 1))
    p["s3"] = lin(keys[2], 128, 1024)    # Conv2d(128, 1024, (1, 1))
    p["sf1"] = lin(keys[3], 1024, 512)   # Linear(1024, 512)
    p["sf2"] = lin(keys[4], 512, 256)    # Linear(512, 256)
    # fc3 is explicitly zero-initialized in STN3d.__init__
    p["sf3"] = (jnp.zeros((256, 9), jnp.float32), jnp.zeros((1, 9), jnp.float32))
    # PointNetfeatv1 main branch
    p["c1"] = lin(keys[5], 3, 64)            # Conv2d(1, 64, (1, 3))
    p["c2"] = lin(keys[6], 64, 64)           # Conv2d(64, 64, (1, 1))
    p["c3"] = lin(keys[7], 64, 64)           # Conv2d(64, 64, (1, 1))
    p["c4"] = lin(keys[8], 64, 128)          # Conv2d(64, 128, (1, 1))
    p["c5"] = lin(keys[9], 128, output_dim)  # Conv2d(128, output_dim, (1, 1))
    return p


def pointnetfeat_v1(x, params, output_dim, tile_cap=None, force_multipass=False):
    """x: (B, 1, N, 3) float32 (NCHW, N == num_points).
    Returns (features (B, output_dim), trans (B, 3, 3)) like the PyTorch module
    (global_feat=True, feature_transform=False, max_pool=True)."""
    B, C, N, K = x.shape
    assert C == 1 and K == 3
    assert N % 8 == 0, "num_points must be a multiple of 8"
    f32, bf16 = jnp.float32, jnp.bfloat16
    rows = B * N

    # Generation-aware knobs: v5e/v6e have 128 MiB VMEM/TC, v7x has 64 MiB.
    vmem_cap = _vmem_capacity_bytes()
    vmem_limit = int(vmem_cap * 3 // 4)            # headroom for Mosaic scratch
    if tile_cap is None:
        tile_cap = 1024 if vmem_cap >= (96 << 20) else 512
    tile_n = _pick_tile(N, tile_cap)
    tiles_per_b = N // tile_n
    grid = (B, tiles_per_b)

    # points-major layout; xyz contraction dim zero-padded 3 -> 8
    xp = jnp.pad(x.reshape(rows, 3), ((0, 0), (0, 5)))                    # (B*N, 8)

    def pinned(shape):
        nd = len(shape)
        return pl.BlockSpec(shape, lambda b, t: (0,) * nd)

    def x_tile_spec(cin):
        return pl.BlockSpec((tile_n, cin), lambda b, t: (b * tiles_per_b + t, 0))

    def vmem_spec():
        return pl.BlockSpec(memory_space=pltpu.MemorySpace.VMEM)

    def mosaic_grid():
        return pltpu.CompilerParams(
            dimension_semantics=("parallel", "arbitrary"),
            vmem_limit_bytes=vmem_limit)

    # ---------------- STN3d: point MLP + per-batch max pool ----------------- #
    s1w = jnp.pad(params["s1"][0], ((0, 5), (0, 0))).astype(bf16)         # (8, 64)
    s2w = params["s2"][0].astype(bf16)
    s3w = params["s3"][0].astype(bf16)
    g = pl.pallas_call(
        _stn_points_kernel,
        out_shape=jax.ShapeDtypeStruct((B, 1, 1024), f32),
        grid=grid,
        in_specs=[x_tile_spec(8),
                  pinned((8, 64)), pinned((1, 64)),
                  pinned((64, 128)), pinned((1, 128)),
                  pinned((128, 1024)), pinned((1, 1024))],
        out_specs=pl.BlockSpec((1, 1, 1024), lambda b, t: (b, 0, 0)),
        compiler_params=mosaic_grid(),
        cost_estimate=pl.CostEstimate(
            flops=2 * rows * (8 * 64 + 64 * 128 + 128 * 1024),
            transcendentals=0,
            bytes_accessed=rows * 8 * 4 + B * 1024 * 4
            + (8 * 64 + 64 * 128 + 128 * 1024) * 2),
    )(xp, s1w, params["s1"][1], s2w, params["s2"][1], s3w, params["s3"][1])

    # ---------------- STN3d FC head (tiny, no grid) ------------------------- #
    eye_flat = jnp.eye(3, dtype=f32).reshape(1, 9)
    head_in = (g[:, 0, :],
               params["sf1"][0].astype(bf16), params["sf1"][1],
               params["sf2"][0].astype(bf16), params["sf2"][1],
               params["sf3"][0].astype(bf16), params["sf3"][1],
               eye_flat)
    trans9 = pl.pallas_call(
        _stn_head_kernel,
        out_shape=jax.ShapeDtypeStruct((B, 9), f32),
        in_specs=[vmem_spec() for _ in head_in],
        out_specs=vmem_spec(),
        compiler_params=pltpu.CompilerParams(vmem_limit_bytes=vmem_limit),
    )(*head_in)
    trans = trans9.reshape(B, 3, 3)

    # Fold the 3x3 input transform into the first conv weight (tiny O(B) op).
    tw1 = jnp.einsum("bij,jc->bic", trans, params["c1"][0])               # (B, 3, 64)
    tw1 = jnp.pad(tw1, ((0, 0), (0, 5), (0, 0))).astype(bf16)             # (B, 8, 64)

    # ---------------- main branch: fused VMEM-resident path ----------------- #
    # act1/act2/act3 scratch (bf16) + full xp block + per-tile f32 intermediate.
    fused_bytes = (rows * (64 + 64 + 128) * 2 + rows * 8 * 4
                   + tile_n * output_dim * 4 + (2 << 20))
    use_fused = (not force_multipass) and fused_bytes <= int(vmem_limit * 0.6)

    if use_fused:
        feat = pl.pallas_call(
            functools.partial(_fused_main_kernel, tiles_per_b, tile_n),
            out_shape=jax.ShapeDtypeStruct((B, output_dim), f32),
            in_specs=[vmem_spec() for _ in range(11)],
            out_specs=vmem_spec(),
            scratch_shapes=[pltpu.VMEM((rows, 64), bf16),
                            pltpu.VMEM((rows, 64), bf16),
                            pltpu.VMEM((rows, 128), bf16)],
            compiler_params=pltpu.CompilerParams(vmem_limit_bytes=vmem_limit),
            cost_estimate=pl.CostEstimate(
                flops=2 * rows * (8 * 64 + 64 * 64 + 64 * 64 + 64 * 128
                                  + 128 * output_dim),
                transcendentals=0,
                bytes_accessed=rows * 8 * 4 + B * output_dim * 4
                + (64 * 64 * 2 + 64 * 128 + 128 * output_dim) * 2),
        )(xp, tw1, params["c1"][1],
          params["c2"][0].astype(bf16), params["c2"][1],
          params["c3"][0].astype(bf16), params["c3"][1],
          params["c4"][0].astype(bf16), params["c4"][1],
          params["c5"][0].astype(bf16), params["c5"][1])
        return feat, trans

    # ---------------- multi-pass fallback (B*N too large for VMEM) ---------- #
    def conv_bn_pass(x_act, cin, shift, w3d, bias, cout, apply_relu, per_batch_w):
        w_index = (lambda b, t: (b, 0, 0)) if per_batch_w else (lambda b, t: (0, 0, 0))
        return pl.pallas_call(
            functools.partial(_conv_bn_layer_kernel, apply_relu),
            out_shape=(jax.ShapeDtypeStruct((rows, cout), bf16),
                       jax.ShapeDtypeStruct((B, 1, cout), f32),
                       jax.ShapeDtypeStruct((B, 1, cout), f32)),
            grid=grid,
            in_specs=[x_tile_spec(cin),
                      pinned((1, cin)),
                      pl.BlockSpec((1,) + w3d.shape[1:], w_index),
                      pinned((1, cout))],
            out_specs=(pl.BlockSpec((tile_n, cout),
                                    lambda b, t: (b * tiles_per_b + t, 0)),
                       pl.BlockSpec((1, 1, cout), lambda b, t: (b, 0, 0)),
                       pl.BlockSpec((1, 1, cout), lambda b, t: (b, 0, 0))),
            compiler_params=mosaic_grid(),
            cost_estimate=pl.CostEstimate(
                flops=2 * rows * cin * cout, transcendentals=0,
                bytes_accessed=rows * (cin + cout) * 2 + cin * cout * 2
                + B * 2 * cout * 4),
        )(x_act, shift, w3d, bias)

    zero8 = jnp.zeros((1, 8), f32)
    a1, s1, q1 = conv_bn_pass(xp, 8, zero8, tw1, params["c1"][1], 64, False, True)
    sc1, sh1 = _bn_scale_shift(s1, q1, rows)
    w2f, t1 = _fold_scale_into_weight(sc1, sh1, params["c2"][0])
    a2, s2, q2 = conv_bn_pass(a1, 64, t1, w2f.astype(bf16)[None],
                              params["c2"][1], 64, True, False)
    sc2, sh2 = _bn_scale_shift(s2, q2, rows)
    w3f, t2 = _fold_scale_into_weight(sc2, sh2, params["c3"][0])
    a3, s3, q3 = conv_bn_pass(a2, 64, t2, w3f.astype(bf16)[None],
                              params["c3"][1], 64, True, False)
    sc3, sh3 = _bn_scale_shift(s3, q3, rows)
    w4f, t3 = _fold_scale_into_weight(sc3, sh3, params["c4"][0])
    a4, s4, q4 = conv_bn_pass(a3, 64, t3, w4f.astype(bf16)[None],
                              params["c4"][1], 128, True, False)
    sc4, sh4 = _bn_scale_shift(s4, q4, rows)
    w5f, t4 = _fold_scale_into_weight(sc4, sh4, params["c5"][0])

    pooled, s5, q5 = pl.pallas_call(
        _final_conv_pool_kernel,
        out_shape=(jax.ShapeDtypeStruct((B, 1, output_dim), f32),
                   jax.ShapeDtypeStruct((B, 1, output_dim), f32),
                   jax.ShapeDtypeStruct((B, 1, output_dim), f32)),
        grid=grid,
        in_specs=[x_tile_spec(128),
                  pinned((1, 128)),
                  pinned((1, 128, output_dim)), pinned((1, output_dim))],
        out_specs=(pl.BlockSpec((1, 1, output_dim), lambda b, t: (b, 0, 0)),
                   pl.BlockSpec((1, 1, output_dim), lambda b, t: (b, 0, 0)),
                   pl.BlockSpec((1, 1, output_dim), lambda b, t: (b, 0, 0))),
        compiler_params=mosaic_grid(),
        cost_estimate=pl.CostEstimate(
            flops=2 * rows * 128 * output_dim, transcendentals=0,
            bytes_accessed=rows * 128 * 2 + 128 * output_dim * 2
            + B * 3 * output_dim * 4),
    )(a4, t4, w5f.astype(bf16)[None], params["c5"][1])

    sc5, sh5 = _bn_scale_shift(s5, q5, rows)
    # BN5 has no ReLU after it and is monotone per channel -> commutes with max.
    feat = pooled[:, 0, :] * sc5 + sh5
    return feat, trans


if __name__ == "__main__":
    B = 2
    N = 256           # num_points (small; multiple of 8)
    OUTPUT_DIM = 256  # small output_dim

    key = jax.random.PRNGKey(0)
    k_x, k_p = jax.random.split(key)
    x = jax.random.normal(k_x, (B, 1, N, 3), dtype=jnp.float32)
    params = init_params(k_p, OUTPUT_DIM)

    fwd = jax.jit(functools.partial(pointnetfeat_v1, output_dim=OUTPUT_DIM))
    feat, trans = fwd(x, params)
    feat = jax.block_until_ready(feat)
    trans = jax.block_until_ready(trans)

    assert feat.shape == (B, OUTPUT_DIM)
    assert trans.shape == (B, 3, 3)
    assert np.all(np.isfinite(np.asarray(feat)))
    # fc3 of the STN is zero-initialized in the module, so trans == identity.
    assert np.allclose(np.asarray(trans),
                       np.broadcast_to(np.eye(3, dtype=np.float32), (B, 3, 3)),
                       atol=1e-5)

    # Exercise + cross-check the multi-pass fallback path (used when B*N
    # activations do not fit VMEM).  Both paths keep bf16 activations; they
    # differ only in where bf16 rounding lands, so agreement is loose-tolerance.
    fwd_mp = jax.jit(functools.partial(pointnetfeat_v1, output_dim=OUTPUT_DIM,
                                       force_multipass=True))
    feat_mp, _ = fwd_mp(x, params)
    feat_mp = jax.block_until_ready(feat_mp)
    assert np.all(np.isfinite(np.asarray(feat_mp)))
    assert np.allclose(np.asarray(feat), np.asarray(feat_mp),
                       rtol=0.25, atol=0.25)
    print("KERNEL_OK")
</pallas_src>

<mosaic_0001>
module attributes {stable_mosaic.version = 11 : i64} {
  func.func @_stn_points_kernel(%arg0: i32, %arg1: i32, %arg2: memref<256x8xf32, #tpu.memory_space<vmem>>, %arg3: memref<8x64xbf16, #tpu.memory_space<vmem>>, %arg4: memref<1x64xf32, #tpu.memory_space<vmem>>, %arg5: memref<64x128xbf16, #tpu.memory_space<vmem>>, %arg6: memref<1x128xf32, #tpu.memory_space<vmem>>, %arg7: memref<128x1024xbf16, #tpu.memory_space<vmem>>, %arg8: memref<1x1024xf32, #tpu.memory_space<vmem>>, %arg9: memref<1x1x1024xf32, #tpu.memory_space<vmem>>) attributes {dimension_semantics = [#tpu.dimension_semantics<parallel>, #tpu.dimension_semantics<arbitrary>], iteration_bounds = array<i64: 2, 1>, scalar_prefetch = 0 : i64, scratch_operands = 0 : i64, tpu.core_type = #tpu.core_type<tc>, window_params = [{transform_indices = @transform_0, window_bounds = array<i64: 256, 8>}, {pipeline_mode = #tpu.pipeline_mode<synchronous>, transform_indices = @transform_1, window_bounds = array<i64: 8, 64>}, {pipeline_mode = #tpu.pipeline_mode<synchronous>, transform_indices = @transform_2, window_bounds = array<i64: 1, 64>}, {pipeline_mode = #tpu.pipeline_mode<synchronous>, transform_indices = @transform_3, window_bounds = array<i64: 64, 128>}, {pipeline_mode = #tpu.pipeline_mode<synchronous>, transform_indices = @transform_4, window_bounds = array<i64: 1, 128>}, {pipeline_mode = #tpu.pipeline_mode<synchronous>, transform_indices = @transform_5, window_bounds = array<i64: 128, 1024>}, {pipeline_mode = #tpu.pipeline_mode<synchronous>, transform_indices = @transform_6, window_bounds = array<i64: 1, 1024>}, {transform_indices = @transform_7, window_bounds = array<i64: 1, 1, 1024>}]} {
    %c0 = arith.constant 0 : index
    %c0_0 = arith.constant 0 : index
    %0 = vector.load %arg2[%c0, %c0_0] : memref<256x8xf32, #tpu.memory_space<vmem>>, vector<256x8xf32>
    %1 = arith.truncf %0 : vector<256x8xf32> to vector<256x8xbf16>
    %c0_1 = arith.constant 0 : index
    %c0_2 = arith.constant 0 : index
    %2 = vector.load %arg3[%c0_1, %c0_2] : memref<8x64xbf16, #tpu.memory_space<vmem>>, vector<8x64xbf16>
    %cst = arith.constant dense<0.000000e+00> : vector<256x64xf32>
    %3 = tpu.matmul %1, %2, %cst {dimension_numbers = #tpu.dot_dimension_numbers<[1], [0], [0], [1], [0, 0, 1, 1], [], []>} : vector<256x8xbf16>, vector<8x64xbf16>, vector<256x64xf32> -> vector<256x64xf32>
    %c0_3 = arith.constant 0 : index
    %c0_4 = arith.constant 0 : index
    %4 = vector.load %arg4[%c0_3, %c0_4] : memref<1x64xf32, #tpu.memory_space<vmem>>, vector<1x64xf32>
    %5 = vector.broadcast %4 : vector<1x64xf32> to vector<256x64xf32>
    %6 = arith.addf %3, %5 : vector<256x64xf32>
    %cst_5 = arith.constant 0.000000e+00 : f32
    %7 = vector.broadcast %cst_5 : f32 to vector<256x64xf32>
    %8 = arith.maximumf %6, %7 : vector<256x64xf32>
    %9 = arith.truncf %8 : vector<256x64xf32> to vector<256x64xbf16>
    %c0_6 = arith.constant 0 : index
    %c0_7 = arith.constant 0 : index
    %10 = vector.load %arg5[%c0_6, %c0_7] : memref<64x128xbf16, #tpu.memory_space<vmem>>, vector<64x128xbf16>
    %cst_8 = arith.constant dense<0.000000e+00> : vector<256x128xf32>
    %11 = tpu.matmul %9, %10, %cst_8 {dimension_numbers = #tpu.dot_dimension_numbers<[1], [0], [0], [1], [0, 0, 1, 1], [], []>} : vector<256x64xbf16>, vector<64x128xbf16>, vector<256x128xf32> -> vector<256x128xf32>
    %c0_9 = arith.constant 0 : index
    %c0_10 = arith.constant 0 : index
    %12 = vector.load %arg6[%c0_9, %c0_10] : memref<1x128xf32, #tpu.memory_space<vmem>>, vector<1x128xf32>
    %13 = vector.broadcast %12 : vector<1x128xf32> to vector<256x128xf32>
    %14 = arith.addf %11, %13 : vector<256x128xf32>
    %cst_11 = arith.constant 0.000000e+00 : f32
    %15 = vector.broadcast %cst_11 : f32 to vector<256x128xf32>
    %16 = arith.maximumf %14, %15 : vector<256x128xf32>
    %17 = arith.truncf %16 : vector<256x128xf32> to vector<256x128xbf16>
    %c0_12 = arith.constant 0 : index
    %c0_13 = arith.constant 0 : index
    %18 = vector.load %arg7[%c0_12, %c0_13] : memref<128x1024xbf16, #tpu.memory_space<vmem>>, vector<128x1024xbf16>
    %cst_14 = arith.constant dense<0.000000e+00> : vector<256x1024xf32>
    %19 = tpu.matmul %17, %18, %cst_14 {dimension_numbers = #tpu.dot_dimension_numbers<[1], [0], [0], [1], [0, 0, 1, 1], [], []>} : vector<256x128xbf16>, vector<128x1024xbf16>, vector<256x1024xf32> -> vector<256x1024xf32>
    %c0_15 = arith.constant 0 : index
    %c0_16 = arith.constant 0 : index
    %20 = vector.load %arg8[%c0_15, %c0_16] : memref<1x1024xf32, #tpu.memory_space<vmem>>, vector<1x1024xf32>
    %21 = vector.broadcast %20 : vector<1x1024xf32> to vector<256x1024xf32>
    %22 = arith.addf %19, %21 : vector<256x1024xf32>
    %cst_17 = arith.constant 0.000000e+00 : f32
    %23 = vector.broadcast %cst_17 : f32 to vector<256x1024xf32>
    %24 = arith.maximumf %22, %23 : vector<256x1024xf32>
    %c0_i32 = arith.constant 0 : i32
    %25 = arith.cmpi eq, %arg1, %c0_i32 : i32
    %26 = arith.extui %25 : i1 to i32
    %c0_i32_18 = arith.constant 0 : i32
    %27 = arith.cmpi ne, %26, %c0_i32_18 : i32
    scf.if %27 {
      %cst_26 = arith.constant 0xFF800000 : f32
      %34 = vector.broadcast %cst_26 : f32 to vector<1x1x1024xf32>
      %c0_27 = arith.constant 0 : index
      %c0_28 = arith.constant 0 : index
      %c0_29 = arith.constant 0 : index
      %35 = vector.load %arg9[%c0_27, %c0_28, %c0_29] : memref<1x1x1024xf32, #tpu.memory_space<vmem>>, vector<1x1x1024xf32>
      tpu.vector_store %arg9[%c0_27, %c0_28, %c0_29], %34 {strides = array<i32>} : memref<1x1x1024xf32, #tpu.memory_space<vmem>>, vector<1x1x1024xf32>,
    } else {
    }
    %cst_19 = arith.constant dense<0xFF800000> : vector<1024xf32>
    %28 = vector.multi_reduction <maximumf>, %24, %cst_19 [0] : vector<256x1024xf32> to vector<1024xf32>
    %29 = vector.shape_cast %28 : vector<1024xf32> to vector<1x1024xf32>
    %30 = vector.shape_cast %29 : vector<1x1024xf32> to vector<1x1x1024xf32>
    %c0_20 = arith.constant 0 : index
    %c0_21 = arith.constant 0 : index
    %c0_22 = arith.constant 0 : index
    %31 = vector.load %arg9[%c0_20, %c0_21, %c0_22] : memref<1x1x1024xf32, #tpu.memory_space<vmem>>, vector<1x1x1024xf32>
    %32 = arith.maximumf %31, %30 : vector<1x1x1024xf32>
    %c0_23 = arith.constant 0 : index
    %c0_24 = arith.constant 0 : index
    %c0_25 = arith.constant 0 : index
    %33 = vector.load %arg9[%c0_23, %c0_24, %c0_25] : memref<1x1x1024xf32, #tpu.memory_space<vmem>>, vector<1x1x1024xf32>
    tpu.vector_store %arg9[%c0_23, %c0_24, %c0_25], %32 {strides = array<i32>} : memref<1x1x1024xf32, #tpu.memory_space<vmem>>, vector<1x1x1024xf32>,
    return
  }
  func.func @transform_0(%arg0: i32, %arg1: i32) -> (i32, i32) {
    %c1_i32 = arith.constant 1 : i32
    %0 = arith.muli %arg0, %c1_i32 : i32
    %1 = arith.addi %0, %arg1 : i32
    %c0_i32 = arith.constant 0 : i32
    %c0_i32_0 = arith.constant 0 : i32
    return %1, %c0_i32 : i32, i32
  }
  func.func @transform_1(%arg0: i32, %arg1: i32) -> (i32, i32) {
    %c0_i32 = arith.constant 0 : i32
    %c0_i32_0 = arith.constant 0 : i32
    %c0_i32_1 = arith.constant 0 : i32
    return %c0_i32, %c0_i32_0 : i32, i32
  }
  func.func @transform_2(%arg0: i32, %arg1: i32) -> (i32, i32) {
    %c0_i32 = arith.constant 0 : i32
    %c0_i32_0 = arith.constant 0 : i32
    %c0_i32_1 = arith.constant 0 : i32
    return %c0_i32, %c0_i32_0 : i32, i32
  }
  func.func @transform_3(%arg0: i32, %arg1: i32) -> (i32, i32) {
    %c0_i32 = arith.constant 0 : i32
    %c0_i32_0 = arith.constant 0 : i32
    %c0_i32_1 = arith.constant 0 : i32
    return %c0_i32, %c0_i32_0 : i32, i32
  }
  func.func @transform_4(%arg0: i32, %arg1: i32) -> (i32, i32) {
    %c0_i32 = arith.constant 0 : i32
    %c0_i32_0 = arith.constant 0 : i32
    %c0_i32_1 = arith.constant 0 : i32
    return %c0_i32, %c0_i32_0 : i32, i32
  }
  func.func @transform_5(%arg0: i32, %arg1: i32) -> (i32, i32) {
    %c0_i32 = arith.constant 0 : i32
    %c0_i32_0 = arith.constant 0 : i32
    %c0_i32_1 = arith.constant 0 : i32
    return %c0_i32, %c0_i32_0 : i32, i32
  }
  func.func @transform_6(%arg0: i32, %arg1: i32) -> (i32, i32) {
    %c0_i32 = arith.constant 0 : i32
    %c0_i32_0 = arith.constant 0 : i32
    %c0_i32_1 = arith.constant 0 : i32
    return %c0_i32, %c0_i32_0 : i32, i32
  }
  func.func @transform_7(%arg0: i32, %arg1: i32) -> (i32, i32, i32) {
    %c0_i32 = arith.constant 0 : i32
    %c0_i32_0 = arith.constant 0 : i32
    %c0_i32_1 = arith.constant 0 : i32
    return %arg0, %c0_i32, %c0_i32_0 : i32, i32, i32
  }
}

module attributes {stable_mosaic.version = 11 : i64} {
  func.func @_stn_head_kernel(%arg0: memref<2x1024xf32, #tpu.memory_space<vmem>>, %arg1: memref<1024x512xbf16, #tpu.memory_space<vmem>>, %arg2: memref<1x512xf32, #tpu.memory_space<vmem>>, %arg3: memref<512x256xbf16, #tpu.memory_space<vmem>>, %arg4: memref<1x256xf32, #tpu.memory_space<vmem>>, %arg5: memref<256x9xbf16, #tpu.memory_space<vmem>>, %arg6: memref<1x9xf32, #tpu.memory_space<vmem>>, %arg7: memref<1x9xf32, #tpu.memory_space<vmem>>, %arg8: memref<2x9xf32, #tpu.memory_space<vmem>>) attributes {dimension_semantics = [], scalar_prefetch = 0 : i64, scratch_operands = 0 : i64, tpu.core_type = #tpu.core_type<tc>} {
    %c0 = arith.constant 0 : index
    %c0_0 = arith.constant 0 : index
    %0 = vector.load %arg0[%c0, %c0_0] : memref<2x1024xf32, #tpu.memory_space<vmem>>, vector<2x1024xf32>
    %1 = arith.truncf %0 : vector<2x1024xf32> to vector<2x1024xbf16>
    %c0_1 = arith.constant 0 : index
    %c0_2 = arith.constant 0 : index
    %2 = vector.load %arg1[%c0_1, %c0_2] : memref<1024x512xbf16, #tpu.memory_space<vmem>>, vector<1024x512xbf16>
    %cst = arith.constant dense<0.000000e+00> : vector<2x512xf32>
    %3 = tpu.matmul %1, %2, %cst {dimension_numbers = #tpu.dot_dimension_numbers<[1], [0], [0], [1], [0, 0, 1, 1], [], []>} : vector<2x1024xbf16>, vector<1024x512xbf16>, vector<2x512xf32> -> vector<2x512xf32>
    %c0_3 = arith.constant 0 : index
    %c0_4 = arith.constant 0 : index
    %4 = vector.load %arg2[%c0_3, %c0_4] : memref<1x512xf32, #tpu.memory_space<vmem>>, vector<1x512xf32>
    %5 = vector.broadcast %4 : vector<1x512xf32> to vector<2x512xf32>
    %6 = arith.addf %3, %5 : vector<2x512xf32>
    %cst_5 = arith.constant 0.000000e+00 : f32
    %7 = vector.broadcast %cst_5 : f32 to vector<2x512xf32>
    %8 = arith.maximumf %6, %7 : vector<2x512xf32>
    %9 = arith.truncf %8 : vector<2x512xf32> to vector<2x512xbf16>
    %c0_6 = arith.constant 0 : index
    %c0_7 = arith.constant 0 : index
    %10 = vector.load %arg3[%c0_6, %c0_7] : memref<512x256xbf16, #tpu.memory_space<vmem>>, vector<512x256xbf16>
    %cst_8 = arith.constant dense<0.000000e+00> : vector<2x256xf32>
    %11 = tpu.matmul %9, %10, %cst_8 {dimension_numbers = #tpu.dot_dimension_numbers<[1], [0], [0], [1], [0, 0, 1, 1], [], []>} : vector<2x512xbf16>, vector<512x256xbf16>, vector<2x256xf32> -> vector<2x256xf32>
    %c0_9 = arith.constant 0 : index
    %c0_10 = arith.constant 0 : index
    %12 = vector.load %arg4[%c0_9, %c0_10] : memref<1x256xf32, #tpu.memory_space<vmem>>, vector<1x256xf32>
    %13 = vector.broadcast %12 : vector<1x256xf32> to vector<2x256xf32>
    %14 = arith.addf %11, %13 : vector<2x256xf32>
    %cst_11 = arith.constant 0.000000e+00 : f32
    %15 = vector.broadcast %cst_11 : f32 to vector<2x256xf32>
    %16 = arith.maximumf %14, %15 : vector<2x256xf32>
    %17 = arith.truncf %16 : vector<2x256xf32> to vector<2x256xbf16>
    %c0_12 = arith.constant 0 : index
    %c0_13 = arith.constant 0 : index
    %18 = vector.load %arg5[%c0_12, %c0_13] : memref<256x9xbf16, #tpu.memory_space<vmem>>, vector<256x9xbf16>
    %cst_14 = arith.constant dense<0.000000e+00> : vector<2x9xf32>
    %19 = tpu.matmul %17, %18, %cst_14 {dimension_numbers = #tpu.dot_dimension_numbers<[1], [0], [0], [1], [0, 0, 1, 1], [], []>} : vector<2x256xbf16>, vector<256x9xbf16>, vector<2x9xf32> -> vector<2x9xf32>
    %c0_15 = arith.constant 0 : index
    %c0_16 = arith.constant 0 : index
    %20 = vector.load %arg6[%c0_15, %c0_16] : memref<1x9xf32, #tpu.memory_space<vmem>>, vector<1x9xf32>
    %21 = vector.broadcast %20 : vector<1x9xf32> to vector<2x9xf32>
    %22 = arith.addf %19, %21 : vector<2x9xf32>
    %c0_17 = arith.constant 0 : index
    %c0_18 = arith.constant 0 : index
    %23 = vector.load %arg7[%c0_17, %c0_18] : memref<1x9xf32, #tpu.memory_space<vmem>>, vector<1x9xf32>
    %24 = vector.broadcast %23 : vector<1x9xf32> to vector<2x9xf32>
    %25 = arith.addf %22, %24 : vector<2x9xf32>
    %c0_19 = arith.constant 0 : index
    %c0_20 = arith.constant 0 : index
    %26 = vector.load %arg8[%c0_19, %c0_20] : memref<2x9xf32, #tpu.memory_space<vmem>>, vector<2x9xf32>
    tpu.vector_store %arg8[%c0_19, %c0_20], %25 {strides = array<i32>} : memref<2x9xf32, #tpu.memory_space<vmem>>, vector<2x9xf32>,
    return
  }
}

module attributes {stable_mosaic.version = 11 : i64} {
  func.func @_fused_main_kernel(%arg0: memref<512x8xf32, #tpu.memory_space<vmem>>, %arg1: memref<2x8x64xbf16, #tpu.memory_space<vmem>>, %arg2: memref<1x64xf32, #tpu.memory_space<vmem>>, %arg3: memref<64x64xbf16, #tpu.memory_space<vmem>>, %arg4: memref<1x64xf32, #tpu.memory_space<vmem>>, %arg5: memref<64x64xbf16, #tpu.memory_space<vmem>>, %arg6: memref<1x64xf32, #tpu.memory_space<vmem>>, %arg7: memref<64x128xbf16, #tpu.memory_space<vmem>>, %arg8: memref<1x128xf32, #tpu.memory_space<vmem>>, %arg9: memref<128x256xbf16, #tpu.memory_space<vmem>>, %arg10: memref<1x256xf32, #tpu.memory_space<vmem>>, %arg11: memref<2x256xf32, #tpu.memory_space<vmem>>, %arg12: memref<512x64xbf16, #tpu.memory_space<vmem>>, %arg13: memref<512x64xbf16, #tpu.memory_space<vmem>>, %arg14: memref<512x128xbf16, #tpu.memory_space<vmem>>) attributes {dimension_semantics = [], scalar_prefetch = 0 : i64, scratch_operands = 3 : i64, tpu.core_type = #tpu.core_type<tc>} {
    %cst = arith.constant 0.000000e+00 : f32
    %0 = vector.broadcast %cst : f32 to vector<1x64xf32>
    %cst_0 = arith.constant 0.000000e+00 : f32
    %1 = vector.broadcast %cst_0 : f32 to vector<1x256xf32>
    %c0 = arith.constant 0 : index
    %c0_1 = arith.constant 0 : index
    %c0_2 = arith.constant 0 : index
    %2 = vector.load %arg1[%c0, %c0_1, %c0_2] : memref<2x8x64xbf16, #tpu.memory_space<vmem>>, vector<1x8x64xbf16>
    %3 = vector.shape_cast %2 : vector<1x8x64xbf16> to vector<8x64xbf16>
    %c0_i32 = arith.constant 0 : i32
    %c0_i32_3 = arith.constant 0 : i32
    %4 = arith.addi %c0_i32_3, %c0_i32 : i32
    %c256_i32 = arith.constant 256 : i32
    %5 = arith.muli %4, %c256_i32 : i32
    %6 = tpu.assume_multiple %5, 256 : i32
    %7 = arith.index_cast %6 : i32 to index
    %c0_4 = arith.constant 0 : index
    %8 = vector.load %arg0[%7, %c0_4] : memref<512x8xf32, #tpu.memory_space<vmem>>, vector<256x8xf32>
    %9 = arith.truncf %8 : vector<256x8xf32> to vector<256x8xbf16>
    %cst_5 = arith.constant dense<0.000000e+00> : vector<256x64xf32>
    %10 = tpu.matmul %9, %3, %cst_5 {dimension_numbers = #tpu.dot_dimension_numbers<[1], [0], [0], [1], [0, 0, 1, 1], [], []>} : vector<256x8xbf16>, vector<8x64xbf16>, vector<256x64xf32> -> vector<256x64xf32>
    %c0_6 = arith.constant 0 : index
    %c0_7 = arith.constant 0 : index
    %11 = vector.load %arg2[%c0_6, %c0_7] : memref<1x64xf32, #tpu.memory_space<vmem>>, vector<1x64xf32>
    %12 = vector.broadcast %11 : vector<1x64xf32> to vector<256x64xf32>
    %13 = arith.addf %10, %12 : vector<256x64xf32>
    %14 = arith.truncf %13 : vector<256x64xf32> to vector<256x64xbf16>
    %15 = arith.index_cast %6 : i32 to index
    %c0_8 = arith.constant 0 : index
    %16 = vector.load %arg12[%15, %c0_8] : memref<512x64xbf16, #tpu.memory_space<vmem>>, vector<256x64xbf16>
    tpu.vector_store %arg12[%15, %c0_8], %14 {strides = array<i32>} : memref<512x64xbf16, #tpu.memory_space<vmem>>, vector<256x64xbf16>,
    %cst_9 = arith.constant dense<0.000000e+00> : vector<64xf32>
    %17 = vector.multi_reduction <add>, %13, %cst_9 [0] : vector<256x64xf32> to vector<64xf32>
    %18 = vector.shape_cast %17 : vector<64xf32> to vector<1x64xf32>
    %19 = arith.addf %0, %18 : vector<1x64xf32>
    %20 = arith.mulf %13, %13 : vector<256x64xf32>
    %cst_10 = arith.constant dense<0.000000e+00> : vector<64xf32>
    %21 = vector.multi_reduction <add>, %20, %cst_10 [0] : vector<256x64xf32> to vector<64xf32>
    %22 = vector.shape_cast %21 : vector<64xf32> to vector<1x64xf32>
    %23 = arith.addf %0, %22 : vector<1x64xf32>
    %c1_i32 = arith.constant 1 : i32
    %c1 = arith.constant 1 : index
    %c0_11 = arith.constant 0 : index
    %c0_12 = arith.constant 0 : index
    %24 = vector.load %arg1[%c1, %c0_11, %c0_12] : memref<2x8x64xbf16, #tpu.memory_space<vmem>>, vector<1x8x64xbf16>
    %25 = vector.shape_cast %24 : vector<1x8x64xbf16> to vector<8x64xbf16>
    %c0_i32_13 = arith.constant 0 : i32
    %c1_i32_14 = arith.constant 1 : i32
    %26 = arith.addi %c1_i32_14, %c0_i32_13 : i32
    %c256_i32_15 = arith.constant 256 : i32
    %27 = arith.muli %26, %c256_i32_15 : i32
    %28 = tpu.assume_multiple %27, 256 : i32
    %29 = arith.index_cast %28 : i32 to index
    %c0_16 = arith.constant 0 : index
    %30 = vector.load %arg0[%29, %c0_16] : memref<512x8xf32, #tpu.memory_space<vmem>>, vector<256x8xf32>
    %31 = arith.truncf %30 : vector<256x8xf32> to vector<256x8xbf16>
    %cst_17 = arith.constant dense<0.000000e+00> : vector<256x64xf32>
    %32 = tpu.matmul %31, %25, %cst_17 {dimension_numbers = #tpu.dot_dimension_numbers<[1], [0], [0], [1], [0, 0, 1, 1], [], []>} : vector<256x8xbf16>, vector<8x64xbf16>, vector<256x64xf32> -> vector<256x64xf32>
    %c0_18 = arith.constant 0 : index
    %c0_19 = arith.constant 0 : index
    %33 = vector.load %arg2[%c0_18, %c0_19] : memref<1x64xf32, #tpu.memory_space<vmem>>, vector<1x64xf32>
    %34 = vector.broadcast %33 : vector<1x64xf32> to vector<256x64xf32>
    %35 = arith.addf %32, %34 : vector<256x64xf32>
    %36 = arith.truncf %35 : vector<256x64xf32> to vector<256x64xbf16>
    %37 = arith.index_cast %28 : i32 to index
    %c0_20 = arith.constant 0 : index
    %38 = vector.load %arg12[%37, %c0_20] : memref<512x64xbf16, #tpu.memory_space<vmem>>, vector<256x64xbf16>
    tpu.vector_store %arg12[%37, %c0_20], %36 {strides = array<i32>} : memref<512x64xbf16, #tpu.memory_space<vmem>>, vector<256x64xbf16>,
    %cst_21 = arith.constant dense<0.000000e+00> : vector<64xf32>
    %39 = vector.multi_reduction <add>, %35, %cst_21 [0] : vector<256x64xf32> to vector<64xf32>
    %40 = vector.shape_cast %39 : vector<64xf32> to vector<1x64xf32>
    %41 = arith.addf %19, %40 : vector<1x64xf32>
    %42 = arith.mulf %35, %35 : vector<256x64xf32>
    %cst_22 = arith.constant dense<0.000000e+00> : vector<64xf32>
    %43 = vector.multi_reduction <add>, %42, %cst_22 [0] : vector<256x64xf32> to vector<64xf32>
    %44 = vector.shape_cast %43 : vector<64xf32> to vector<1x64xf32>
    %45 = arith.addf %23, %44 : vector<1x64xf32>
    %c1_i32_23 = arith.constant 1 : i32
    %cst_24 = arith.constant 5.120000e+02 : f32
    %46 = vector.broadcast %cst_24 : f32 to vector<1x64xf32>
    %47 = arith.divf %41, %46 : vector<1x64xf32>
    %cst_25 = arith.constant 5.120000e+02 : f32
    %48 = vector.broadcast %cst_25 : f32 to vector<1x64xf32>
    %49 = arith.divf %45, %48 : vector<1x64xf32>
    %50 = arith.mulf %47, %47 : vector<1x64xf32>
    %51 = arith.subf %49, %50 : vector<1x64xf32>
    %cst_26 = arith.constant 0.000000e+00 : f32
    %52 = vector.broadcast %cst_26 : f32 to vector<1x64xf32>
    %53 = arith.maximumf %51, %52 : vector<1x64xf32>
    %cst_27 = arith.constant 9.99999974E-6 : f32
    %54 = vector.broadcast %cst_27 : f32 to vector<1x64xf32>
    %55 = arith.addf %53, %54 : vector<1x64xf32>
    %56 = math.rsqrt %55 : vector<1x64xf32>
    %cst_28 = arith.constant 0.000000e+00 : f32
    %57 = vector.broadcast %cst_28 : f32 to vector<1x64xf32>
    %58 = arith.subf %57, %47 : vector<1x64xf32>
    %59 = arith.mulf %58, %56 : vector<1x64xf32>
    %cst_29 = arith.constant 0.000000e+00 : f32
    %60 = vector.broadcast %cst_29 : f32 to vector<1x64xf32>
    %c0_i32_30 = arith.constant 0 : i32
    %c2_i32 = arith.constant 2 : i32
    %61 = arith.addi %c0_i32_30, %c2_i32 : i32
    %c1_i32_31 = arith.constant 1 : i32
    %62:2 = scf.for %arg15 = %c0_i32_30 to %61 step %c1_i32_31 iter_args(%arg16 = %60, %arg17 = %60) -> (vector<1x64xf32>, vector<1x64xf32>)  : i32 {
      %c256_i32_101 = arith.constant 256 : i32
      %191 = arith.muli %arg15, %c256_i32_101 : i32
      %192 = tpu.assume_multiple %191, 256 : i32
      %193 = arith.index_cast %192 : i32 to index
      %c0_102 = arith.constant 0 : index
      %194 = vector.load %arg12[%193, %c0_102] : memref<512x64xbf16, #tpu.memory_space<vmem>>, vector<256x64xbf16>
      %195 = arith.extf %194 : vector<256x64xbf16> to vector<256x64xf32>
      %196 = vector.broadcast %56 : vector<1x64xf32> to vector<256x64xf32>
      %197 = arith.mulf %195, %196 : vector<256x64xf32>
      %198 = vector.broadcast %59 : vector<1x64xf32> to vector<256x64xf32>
      %199 = arith.addf %197, %198 : vector<256x64xf32>
      %cst_103 = arith.constant 0.000000e+00 : f32
      %200 = vector.broadcast %cst_103 : f32 to vector<256x64xf32>
      %201 = arith.maximumf %199, %200 : vector<256x64xf32>
      %202 = arith.truncf %201 : vector<256x64xf32> to vector<256x64xbf16>
      %c0_104 = arith.constant 0 : index
      %c0_105 = arith.constant 0 : index
      %203 = vector.load %arg3[%c0_104, %c0_105] : memref<64x64xbf16, #tpu.memory_space<vmem>>, vector<64x64xbf16>
      %cst_106 = arith.constant dense<0.000000e+00> : vector<256x64xf32>
      %204 = tpu.matmul %202, %203, %cst_106 {dimension_numbers = #tpu.dot_dimension_numbers<[1], [0], [0], [1], [0, 0, 1, 1], [], []>} : vector<256x64xbf16>, vector<64x64xbf16>, vector<256x64xf32> -> vector<256x64xf32>
      %c0_107 = arith.constant 0 : index
      %c0_108 = arith.constant 0 : index
      %205 = vector.load %arg4[%c0_107, %c0_108] : memref<1x64xf32, #tpu.memory_space<vmem>>, vector<1x64xf32>
      %206 = vector.broadcast %205 : vector<1x64xf32> to vector<256x64xf32>
      %207 = arith.addf %204, %206 : vector<256x64xf32>
      %208 = arith.truncf %207 : vector<256x64xf32> to vector<256x64xbf16>
      %209 = arith.index_cast %192 : i32 to index
      %c0_109 = arith.constant 0 : index
      %210 = vector.load %arg13[%209, %c0_109] : memref<512x64xbf16, #tpu.memory_space<vmem>>, vector<256x64xbf16>
      tpu.vector_store %arg13[%209, %c0_109], %208 {strides = array<i32>} : memref<512x64xbf16, #tpu.memory_space<vmem>>, vector<256x64xbf16>,
      %cst_110 = arith.constant dense<0.000000e+00> : vector<64xf32>
      %211 = vector.multi_reduction <add>, %207, %cst_110 [0] : vector<256x64xf32> to vector<64xf32>
      %212 = vector.shape_cast %211 : vector<64xf32> to vector<1x64xf32>
      %213 = arith.addf %arg16, %212 : vector<1x64xf32>
      %214 = arith.mulf %207, %207 : vector<256x64xf32>
      %cst_111 = arith.constant dense<0.000000e+00> : vector<64xf32>
      %215 = vector.multi_reduction <add>, %214, %cst_111 [0] : vector<256x64xf32> to vector<64xf32>
      %216 = vector.shape_cast %215 : vector<64xf32> to vector<1x64xf32>
      %217 = arith.addf %arg17, %216 : vector<1x64xf32>
      scf.yield %213, %217 : vector<1x64xf32>, vector<1x64xf32>
    }
    %c2_i32_32 = arith.constant 2 : i32
    %cst_33 = arith.constant 5.120000e+02 : f32
    %63 = vector.broadcast %cst_33 : f32 to vector<1x64xf32>
    %64 = arith.divf %62#0, %63 : vector<1x64xf32>
    %cst_34 = arith.constant 5.120000e+02 : f32
    %65 = vector.broadcast %cst_34 : f32 to vector<1x64xf32>
    %66 = arith.divf %62#1, %65 : vector<1x64xf32>
    %67 = arith.mulf %64, %64 : vector<1x64xf32>
    %68 = arith.subf %66, %67 : vector<1x64xf32>
    %cst_35 = arith.constant 0.000000e+00 : f32
    %69 = vector.broadcast %cst_35 : f32 to vector<1x64xf32>
    %70 = arith.maximumf %68, %69 : vector<1x64xf32>
    %cst_36 = arith.constant 9.99999974E-6 : f32
    %71 = vector.broadcast %cst_36 : f32 to vector<1x64xf32>
    %72 = arith.addf %70, %71 : vector<1x64xf32>
    %73 = math.rsqrt %72 : vector<1x64xf32>
    %cst_37 = arith.constant 0.000000e+00 : f32
    %74 = vector.broadcast %cst_37 : f32 to vector<1x64xf32>
    %75 = arith.subf %74, %64 : vector<1x64xf32>
    %76 = arith.mulf %75, %73 : vector<1x64xf32>
    %cst_38 = arith.constant 0.000000e+00 : f32
    %77 = vector.broadcast %cst_38 : f32 to vector<1x64xf32>
    %c0_i32_39 = arith.constant 0 : i32
    %c2_i32_40 = arith.constant 2 : i32
    %78 = arith.addi %c0_i32_39, %c2_i32_40 : i32
    %c1_i32_41 = arith.constant 1 : i32
    %79:2 = scf.for %arg15 = %c0_i32_39 to %78 step %c1_i32_41 iter_args(%arg16 = %77, %arg17 = %77) -> (vector<1x64xf32>, vector<1x64xf32>)  : i32 {
      %c256_i32_101 = arith.constant 256 : i32
      %191 = arith.muli %arg15, %c256_i32_101 : i32
      %192 = tpu.assume_multiple %191, 256 : i32
      %193 = arith.index_cast %192 : i32 to index
      %c0_102 = arith.constant 0 : index
      %194 = vector.load %arg13[%193, %c0_102] : memref<512x64xbf16, #tpu.memory_space<vmem>>, vector<256x64xbf16>
      %195 = arith.extf %194 : vector<256x64xbf16> to vector<256x64xf32>
      %196 = vector.broadcast %73 : vector<1x64xf32> to vector<256x64xf32>
      %197 = arith.mulf %195, %196 : vector<256x64xf32>
      %198 = vector.broadcast %76 : vector<1x64xf32> to vector<256x64xf32>
      %199 = arith.addf %197, %198 : vector<256x64xf32>
      %cst_103 = arith.constant 0.000000e+00 : f32
      %200 = vector.broadcast %cst_103 : f32 to vector<256x64xf32>
      %201 = arith.maximumf %199, %200 : vector<256x64xf32>
      %202 = arith.truncf %201 : vector<256x64xf32> to vector<256x64xbf16>
      %c0_104 = arith.constant 0 : index
      %c0_105 = arith.constant 0 : index
      %203 = vector.load %arg5[%c0_104, %c0_105] : memref<64x64xbf16, #tpu.memory_space<vmem>>, vector<64x64xbf16>
      %cst_106 = arith.constant dense<0.000000e+00> : vector<256x64xf32>
      %204 = tpu.matmul %202, %203, %cst_106 {dimension_numbers = #tpu.dot_dimension_numbers<[1], [0], [0], [1], [0, 0, 1, 1], [], []>} : vector<256x64xbf16>, vector<64x64xbf16>, vector<256x64xf32> -> vector<256x64xf32>
      %c0_107 = arith.constant 0 : index
      %c0_108 = arith.constant 0 : index
      %205 = vector.load %arg6[%c0_107, %c0_108] : memref<1x64xf32, #tpu.memory_space<vmem>>, vector<1x64xf32>
      %206 = vector.broadcast %205 : vector<1x64xf32> to vector<256x64xf32>
      %207 = arith.addf %204, %206 : vector<256x64xf32>
      %208 = arith.truncf %207 : vector<256x64xf32> to vector<256x64xbf16>
      %209 = arith.index_cast %192 : i32 to index
      %c0_109 = arith.constant 0 : index
      %210 = vector.load %arg12[%209, %c0_109] : memref<512x64xbf16, #tpu.memory_space<vmem>>, vector<256x64xbf16>
      tpu.vector_store %arg12[%209, %c0_109], %208 {strides = array<i32>} : memref<512x64xbf16, #tpu.memory_space<vmem>>, vector<256x64xbf16>,
      %cst_110 = arith.constant dense<0.000000e+00> : vector<64xf32>
      %211 = vector.multi_reduction <add>, %207, %cst_110 [0] : vector<256x64xf32> to vector<64xf32>
      %212 = vector.shape_cast %211 : vector<64xf32> to vector<1x64xf32>
      %213 = arith.addf %arg16, %212 : vector<1x64xf32>
      %214 = arith.mulf %207, %207 : vector<256x64xf32>
      %cst_111 = arith.constant dense<0.000000e+00> : vector<64xf32>
      %215 = vector.multi_reduction <add>, %214, %cst_111 [0] : vector<256x64xf32> to vector<64xf32>
      %216 = vector.shape_cast %215 : vector<64xf32> to vector<1x64xf32>
      %217 = arith.addf %arg17, %216 : vector<1x64xf32>
      scf.yield %213, %217 : vector<1x64xf32>, vector<1x64xf32>
    }
    %c2_i32_42 = arith.constant 2 : i32
    %cst_43 = arith.constant 5.120000e+02 : f32
    %80 = vector.broadcast %cst_43 : f32 to vector<1x64xf32>
    %81 = arith.divf %79#0, %80 : vector<1x64xf32>
    %cst_44 = arith.constant 5.120000e+02 : f32
    %82 = vector.broadcast %cst_44 : f32 to vector<1x64xf32>
    %83 = arith.divf %79#1, %82 : vector<1x64xf32>
    %84 = arith.mulf %81, %81 : vector<1x64xf32>
    %85 = arith.subf %83, %84 : vector<1x64xf32>
    %cst_45 = arith.constant 0.000000e+00 : f32
    %86 = vector.broadcast %cst_45 : f32 to vector<1x64xf32>
    %87 = arith.maximumf %85, %86 : vector<1x64xf32>
    %cst_46 = arith.constant 9.99999974E-6 : f32
    %88 = vector.broadcast %cst_46 : f32 to vector<1x64xf32>
    %89 = arith.addf %87, %88 : vector<1x64xf32>
    %90 = math.rsqrt %89 : vector<1x64xf32>
    %cst_47 = arith.constant 0.000000e+00 : f32
    %91 = vector.broadcast %cst_47 : f32 to vector<1x64xf32>
    %92 = arith.subf %91, %81 : vector<1x64xf32>
    %93 = arith.mulf %92, %90 : vector<1x64xf32>
    %cst_48 = arith.constant 0.000000e+00 : f32
    %94 = vector.broadcast %cst_48 : f32 to vector<1x128xf32>
    %c0_i32_49 = arith.constant 0 : i32
    %c2_i32_50 = arith.constant 2 : i32
    %95 = arith.addi %c0_i32_49, %c2_i32_50 : i32
    %c1_i32_51 = arith.constant 1 : i32
    %96:2 = scf.for %arg15 = %c0_i32_49 to %95 step %c1_i32_51 iter_args(%arg16 = %94, %arg17 = %94) -> (vector<1x128xf32>, vector<1x128xf32>)  : i32 {
      %c256_i32_101 = arith.constant 256 : i32
      %191 = arith.muli %arg15, %c256_i32_101 : i32
      %192 = tpu.assume_multiple %191, 256 : i32
      %193 = arith.index_cast %192 : i32 to index
      %c0_102 = arith.constant 0 : index
      %194 = vector.load %arg12[%193, %c0_102] : memref<512x64xbf16, #tpu.memory_space<vmem>>, vector<256x64xbf16>
      %195 = arith.extf %194 : vector<256x64xbf16> to vector<256x64xf32>
      %196 = vector.broadcast %90 : vector<1x64xf32> to vector<256x64xf32>
      %197 = arith.mulf %195, %196 : vector<256x64xf32>
      %198 = vector.broadcast %93 : vector<1x64xf32> to vector<256x64xf32>
      %199 = arith.addf %197, %198 : vector<256x64xf32>
      %cst_103 = arith.constant 0.000000e+00 : f32
      %200 = vector.broadcast %cst_103 : f32 to vector<256x64xf32>
      %201 = arith.maximumf %199, %200 : vector<256x64xf32>
      %202 = arith.truncf %201 : vector<256x64xf32> to vector<256x64xbf16>
      %c0_104 = arith.constant 0 : index
      %c0_105 = arith.constant 0 : index
      %203 = vector.load %arg7[%c0_104, %c0_105] : memref<64x128xbf16, #tpu.memory_space<vmem>>, vector<64x128xbf16>
      %cst_106 = arith.constant dense<0.000000e+00> : vector<256x128xf32>
      %204 = tpu.matmul %202, %203, %cst_106 {dimension_numbers = #tpu.dot_dimension_numbers<[1], [0], [0], [1], [0, 0, 1, 1], [], []>} : vector<256x64xbf16>, vector<64x128xbf16>, vector<256x128xf32> -> vector<256x128xf32>
      %c0_107 = arith.constant 0 : index
      %c0_108 = arith.constant 0 : index
      %205 = vector.load %arg8[%c0_107, %c0_108] : memref<1x128xf32, #tpu.memory_space<vmem>>, vector<1x128xf32>
      %206 = vector.broadcast %205 : vector<1x128xf32> to vector<256x128xf32>
      %207 = arith.addf %204, %206 : vector<256x128xf32>
      %208 = arith.truncf %207 : vector<256x128xf32> to vector<256x128xbf16>
      %209 = arith.index_cast %192 : i32 to index
      %c0_109 = arith.constant 0 : index
      %210 = vector.load %arg14[%209, %c0_109] : memref<512x128xbf16, #tpu.memory_space<vmem>>, vector<256x128xbf16>
      tpu.vector_store %arg14[%209, %c0_109], %208 {strides = array<i32>} : memref<512x128xbf16, #tpu.memory_space<vmem>>, vector<256x128xbf16>,
      %cst_110 = arith.constant dense<0.000000e+00> : vector<128xf32>
      %211 = vector.multi_reduction <add>, %207, %cst_110 [0] : vector<256x128xf32> to vector<128xf32>
      %212 = vector.shape_cast %211 : vector<128xf32> to vector<1x128xf32>
      %213 = arith.addf %arg16, %212 : vector<1x128xf32>
      %214 = arith.mulf %207, %207 : vector<256x128xf32>
      %cst_111 = arith.constant dense<0.000000e+00> : vector<128xf32>
      %215 = vector.multi_reduction <add>, %214, %cst_111 [0] : vector<256x128xf32> to vector<128xf32>
      %216 = vector.shape_cast %215 : vector<128xf32> to vector<1x128xf32>
      %217 = arith.addf %arg17, %216 : vector<1x128xf32>
      scf.yield %213, %217 : vector<1x128xf32>, vector<1x128xf32>
    }
    %c2_i32_52 = arith.constant 2 : i32
    %cst_53 = arith.constant 5.120000e+02 : f32
    %97 = vector.broadcast %cst_53 : f32 to vector<1x128xf32>
    %98 = arith.divf %96#0, %97 : vector<1x128xf32>
    %cst_54 = arith.constant 5.120000e+02 : f32
    %99 = vector.broadcast %cst_54 : f32 to vector<1x128xf32>
    %100 = arith.divf %96#1, %99 : vector<1x128xf32>
    %101 = arith.mulf %98, %98 : vector<1x128xf32>
    %102 = arith.subf %100, %101 : vector<1x128xf32>
    %cst_55 = arith.constant 0.000000e+00 : f32
    %103 = vector.broadcast %cst_55 : f32 to vector<1x128xf32>
    %104 = arith.maximumf %102, %103 : vector<1x128xf32>
    %cst_56 = arith.constant 9.99999974E-6 : f32
    %105 = vector.broadcast %cst_56 : f32 to vector<1x128xf32>
    %106 = arith.addf %104, %105 : vector<1x128xf32>
    %107 = math.rsqrt %106 : vector<1x128xf32>
    %cst_57 = arith.constant 0.000000e+00 : f32
    %108 = vector.broadcast %cst_57 : f32 to vector<1x128xf32>
    %109 = arith.subf %108, %98 : vector<1x128xf32>
    %110 = arith.mulf %109, %107 : vector<1x128xf32>
    %cst_58 = arith.constant 0xFF800000 : f32
    %111 = vector.broadcast %cst_58 : f32 to vector<1x256xf32>
    %c0_i32_59 = arith.constant 0 : i32
    %c0_i32_60 = arith.constant 0 : i32
    %112 = arith.addi %c0_i32_60, %c0_i32_59 : i32
    %c256_i32_61 = arith.constant 256 : i32
    %113 = arith.muli %112, %c256_i32_61 : i32
    %114 = tpu.assume_multiple %113, 256 : i32
    %115 = arith.index_cast %114 : i32 to index
    %c0_62 = arith.constant 0 : index
    %116 = vector.load %arg14[%115, %c0_62] : memref<512x128xbf16, #tpu.memory_space<vmem>>, vector<256x128xbf16>
    %117 = arith.extf %116 : vector<256x128xbf16> to vector<256x128xf32>
    %118 = vector.broadcast %107 : vector<1x128xf32> to vector<256x128xf32>
    %119 = arith.mulf %117, %118 : vector<256x128xf32>
    %120 = vector.broadcast %110 : vector<1x128xf32> to vector<256x128xf32>
    %121 = arith.addf %119, %120 : vector<256x128xf32>
    %cst_63 = arith.constant 0.000000e+00 : f32
    %122 = vector.broadcast %cst_63 : f32 to vector<256x128xf32>
    %123 = arith.maximumf %121, %122 : vector<256x128xf32>
    %124 = arith.truncf %123 : vector<256x128xf32> to vector<256x128xbf16>
    %c0_64 = arith.constant 0 : index
    %c0_65 = arith.constant 0 : index
    %125 = vector.load %arg9[%c0_64, %c0_65] : memref<128x256xbf16, #tpu.memory_space<vmem>>, vector<128x256xbf16>
    %cst_66 = arith.constant dense<0.000000e+00> : vector<256x256xf32>
    %126 = tpu.matmul %124, %125, %cst_66 {dimension_numbers = #tpu.dot_dimension_numbers<[1], [0], [0], [1], [0, 0, 1, 1], [], []>} : vector<256x128xbf16>, vector<128x256xbf16>, vector<256x256xf32> -> vector<256x256xf32>
    %c0_67 = arith.constant 0 : index
    %c0_68 = arith.constant 0 : index
    %127 = vector.load %arg10[%c0_67, %c0_68] : memref<1x256xf32, #tpu.memory_space<vmem>>, vector<1x256xf32>
    %128 = vector.broadcast %127 : vector<1x256xf32> to vector<256x256xf32>
    %129 = arith.addf %126, %128 : vector<256x256xf32>
    %cst_69 = arith.constant dense<0.000000e+00> : vector<256xf32>
    %130 = vector.multi_reduction <add>, %129, %cst_69 [0] : vector<256x256xf32> to vector<256xf32>
    %131 = vector.shape_cast %130 : vector<256xf32> to vector<1x256xf32>
    %132 = arith.addf %1, %131 : vector<1x256xf32>
    %133 = arith.mulf %129, %129 : vector<256x256xf32>
    %cst_70 = arith.constant dense<0.000000e+00> : vector<256xf32>
    %134 = vector.multi_reduction <add>, %133, %cst_70 [0] : vector<256x256xf32> to vector<256xf32>
    %135 = vector.shape_cast %134 : vector<256xf32> to vector<1x256xf32>
    %136 = arith.addf %1, %135 : vector<1x256xf32>
    %cst_71 = arith.constant dense<0xFF800000> : vector<256xf32>
    %137 = vector.multi_reduction <maximumf>, %129, %cst_71 [0] : vector<256x256xf32> to vector<256xf32>
    %138 = vector.shape_cast %137 : vector<256xf32> to vector<1x256xf32>
    %139 = arith.maximumf %111, %138 : vector<1x256xf32>
    %c1_i32_72 = arith.constant 1 : i32
    %c0_73 = arith.constant 0 : index
    %c0_74 = arith.constant 0 : index
    %140 = vector.load %arg11[%c0_73, %c0_74] : memref<2x256xf32, #tpu.memory_space<vmem>>, vector<1x256xf32>
    tpu.vector_store %arg11[%c0_73, %c0_74], %139 {strides = array<i32>} : memref<2x256xf32, #tpu.memory_space<vmem>>, vector<1x256xf32>,
    %cst_75 = arith.constant 0xFF800000 : f32
    %141 = vector.broadcast %cst_75 : f32 to vector<1x256xf32>
    %c0_i32_76 = arith.constant 0 : i32
    %c1_i32_77 = arith.constant 1 : i32
    %142 = arith.addi %c1_i32_77, %c0_i32_76 : i32
    %c256_i32_78 = arith.constant 256 : i32
    %143 = arith.muli %142, %c256_i32_78 : i32
    %144 = tpu.assume_multiple %143, 256 : i32
    %145 = arith.index_cast %144 : i32 to index
    %c0_79 = arith.constant 0 : index
    %146 = vector.load %arg14[%145, %c0_79] : memref<512x128xbf16, #tpu.memory_space<vmem>>, vector<256x128xbf16>
    %147 = arith.extf %146 : vector<256x128xbf16> to vector<256x128xf32>
    %148 = vector.broadcast %107 : vector<1x128xf32> to vector<256x128xf32>
    %149 = arith.mulf %147, %148 : vector<256x128xf32>
    %150 = vector.broadcast %110 : vector<1x128xf32> to vector<256x128xf32>
    %151 = arith.addf %149, %150 : vector<256x128xf32>
    %cst_80 = arith.constant 0.000000e+00 : f32
    %152 = vector.broadcast %cst_80 : f32 to vector<256x128xf32>
    %153 = arith.maximumf %151, %152 : vector<256x128xf32>
    %154 = arith.truncf %153 : vector<256x128xf32> to vector<256x128xbf16>
    %c0_81 = arith.constant 0 : index
    %c0_82 = arith.constant 0 : index
    %155 = vector.load %arg9[%c0_81, %c0_82] : memref<128x256xbf16, #tpu.memory_space<vmem>>, vector<128x256xbf16>
    %cst_83 = arith.constant dense<0.000000e+00> : vector<256x256xf32>
    %156 = tpu.matmul %154, %155, %cst_83 {dimension_numbers = #tpu.dot_dimension_numbers<[1], [0], [0], [1], [0, 0, 1, 1], [], []>} : vector<256x128xbf16>, vector<128x256xbf16>, vector<256x256xf32> -> vector<256x256xf32>
    %c0_84 = arith.constant 0 : index
    %c0_85 = arith.constant 0 : index
    %157 = vector.load %arg10[%c0_84, %c0_85] : memref<1x256xf32, #tpu.memory_space<vmem>>, vector<1x256xf32>
    %158 = vector.broadcast %157 : vector<1x256xf32> to vector<256x256xf32>
    %159 = arith.addf %156, %158 : vector<256x256xf32>
    %cst_86 = arith.constant dense<0.000000e+00> : vector<256xf32>
    %160 = vector.multi_reduction <add>, %159, %cst_86 [0] : vector<256x256xf32> to vector<256xf32>
    %161 = vector.shape_cast %160 : vector<256xf32> to vector<1x256xf32>
    %162 = arith.addf %132, %161 : vector<1x256xf32>
    %163 = arith.mulf %159, %159 : vector<256x256xf32>
    %cst_87 = arith.constant dense<0.000000e+00> : vector<256xf32>
    %164 = vector.multi_reduction <add>, %163, %cst_87 [0] : vector<256x256xf32> to vector<256xf32>
    %165 = vector.shape_cast %164 : vector<256xf32> to vector<1x256xf32>
    %166 = arith.addf %136, %165 : vector<1x256xf32>
    %cst_88 = arith.constant dense<0xFF800000> : vector<256xf32>
    %167 = vector.multi_reduction <maximumf>, %159, %cst_88 [0] : vector<256x256xf32> to vector<256xf32>
    %168 = vector.shape_cast %167 : vector<256xf32> to vector<1x256xf32>
    %169 = arith.maximumf %141, %168 : vector<1x256xf32>
    %c1_i32_89 = arith.constant 1 : i32
    %c1_90 = arith.constant 1 : index
    %c0_91 = arith.constant 0 : index
    %170 = vector.load %arg11[%c1_90, %c0_91] : memref<2x256xf32, #tpu.memory_space<vmem>>, vector<1x256xf32>
    tpu.vector_store %arg11[%c1_90, %c0_91], %169 {strides = array<i32>} : memref<2x256xf32, #tpu.memory_space<vmem>>, vector<1x256xf32>,
    %cst_92 = arith.constant 5.120000e+02 : f32
    %171 = vector.broadcast %cst_92 : f32 to vector<1x256xf32>
    %172 = arith.divf %162, %171 : vector<1x256xf32>
    %cst_93 = arith.constant 5.120000e+02 : f32
    %173 = vector.broadcast %cst_93 : f32 to vector<1x256xf32>
    %174 = arith.divf %166, %173 : vector<1x256xf32>
    %175 = arith.mulf %172, %172 : vector<1x256xf32>
    %176 = arith.subf %174, %175 : vector<1x256xf32>
    %cst_94 = arith.constant 0.000000e+00 : f32
    %177 = vector.broadcast %cst_94 : f32 to vector<1x256xf32>
    %178 = arith.maximumf %176, %177 : vector<1x256xf32>
    %cst_95 = arith.constant 9.99999974E-6 : f32
    %179 = vector.broadcast %cst_95 : f32 to vector<1x256xf32>
    %180 = arith.addf %178, %179 : vector<1x256xf32>
    %181 = math.rsqrt %180 : vector<1x256xf32>
    %cst_96 = arith.constant 0.000000e+00 : f32
    %182 = vector.broadcast %cst_96 : f32 to vector<1x256xf32>
    %183 = arith.subf %182, %172 : vector<1x256xf32>
    %184 = arith.mulf %183, %181 : vector<1x256xf32>
    %c0_97 = arith.constant 0 : index
    %c0_98 = arith.constant 0 : index
    %185 = vector.load %arg11[%c0_97, %c0_98] : memref<2x256xf32, #tpu.memory_space<vmem>>, vector<2x256xf32>
    %186 = vector.broadcast %181 : vector<1x256xf32> to vector<2x256xf32>
    %187 = arith.mulf %185, %186 : vector<2x256xf32>
    %188 = vector.broadcast %184 : vector<1x256xf32> to vector<2x256xf32>
    %189 = arith.addf %187, %188 : vector<2x256xf32>
    %c0_99 = arith.constant 0 : index
    %c0_100 = arith.constant 0 : index
    %190 = vector.load %arg11[%c0_99, %c0_100] : memref<2x256xf32, #tpu.memory_space<vmem>>, vector<2x256xf32>
    tpu.vector_store %arg11[%c0_99, %c0_100], %189 {strides = array<i32>} : memref<2x256xf32, #tpu.memory_space<vmem>>, vector<2x256xf32>,
    return
  }
}

</mosaic_0001>

<llo_original>
// kernel: pointnetfeat_v1.3
$region0: #{pointnetfeat_v1.3}
  #allocation0 [shape = 'u32[]', space=smem, size = 0x4, offset = 0x4, fixed_abs, tag = 'smem constant byte address 0x4 - core index']
  #allocation1 [shape = 'u32[144,128]{1,0:T(1,128)}', space=vmem, size = 0x12000, scoped, tag = 'internal scratch']
  %s0 = inlined_call_operand.vmem [shape: f32[512,8], index: 0, kind: input, shape index: {}]
  %s1 = inlined_call_operand.vmem [shape: bf16[8,64], index: 1, kind: input, shape index: {}]
  %s2 = inlined_call_operand.hbm [shape: f32[1,64], index: 2, kind: input, shape index: {}]
  %s3 = inlined_call_operand.vmem [shape: bf16[64,128], index: 3, kind: input, shape index: {}]
  %s4 = inlined_call_operand.hbm [shape: f32[1,128], index: 4, kind: input, shape index: {}]
  %s5 = inlined_call_operand.vmem [shape: bf16[128,1024], index: 5, kind: input, shape index: {}]
  %s6 = inlined_call_operand.hbm [shape: f32[1,1024], index: 6, kind: input, shape index: {}]
  %s7 = inlined_call_operand.vmem [shape: f32[2,1,1024], index: 7, kind: output, shape index: {}]
  %s8 = sld [smem:[#allocation0]]
  $region77: #{pointnetfeat_v1.3} parent=0
    _
  %s10 = ssub.s32 1, %s8
  %s11 = scalar_select 0, %s10, %s8
  $region1: #{pointnetfeat_v1.3} parent=0
    #allocation2 [shape = 'u8[512]{0}', space=vmem, size = 0x400, scoped, tag = 'input window, operand 2, single buffered']
    #allocation3 [shape = 's32[2]{0}', space=sflag, size = 0x8, scoped, tag = 'scoped memory for pointnetfeat_v1.3']
    #allocation4 [shape = 'u8[512]{0}', space=vmem, size = 0x400, scoped, tag = 'input window, operand 4, single buffered']
    #allocation5 [shape = 's32[1]{0}', space=sflag, size = 0x4, scoped, tag = 'scoped memory for pointnetfeat_v1.3']
    #allocation6 [shape = 'u8[4096]{0}', space=vmem, size = 0x1000, scoped, tag = 'input window, operand 6, single buffered']
    %12 = vsyncpa [#allocation3], 0
    %13 = vsyncpa [#allocation5], 0
    loop: start=0, step=1, limit=4
    $region2: #{pointnetfeat_v1.3} parent=1 // loop_pre_header
      _
    $region3: #{pointnetfeat_v1.3} parent=1 // loop_header
      %s15 = sphi 0, %s19
      %p16 = scmp.ge.s32.totalorder %s15, 4
      %s22 = sphi 0, %s34
      %s23 = sphi 0, %s30
      %s24 = sphi 0, %s22
      %s25 = sphi 0, %s23
      %s26 = sphi 0, %s24
      %s27 = sphi 0, %s25
      %s39 = sphi 0, %s41
      %s42 = sphi 0, %s39
      %s43 = sphi 0, %s42
      %s59 = sphi 0, %s43
      %s63 = sphi 0, %s63
      %s65 = sphi 0, %s63
      %s66 = sphi 0, %s65
      %s80 = sphi 0, %s66
      %s84 = sphi 0, %s84
      %s86 = sphi 0, %s84
      %s87 = sphi 0, %s86
      %s101 = sphi 0, %s87
      %s105 = sphi 0, %s105
      %s107 = sphi 0, %s105
      %s108 = sphi 0, %s107
      %s122 = sphi 0, %s108
      %s126 = sphi 0, %s126
      %s128 = sphi 0, %s126
      %s129 = sphi 0, %s128
      %s143 = sphi 0, %s129
      %s147 = sphi 0, %s147
      %s149 = sphi 0, %s147
      %s150 = sphi 0, %s149
      %s164 = sphi 0, %s150
      %s168 = sphi 0, %s168
      %s170 = sphi 0, %s168
      %s171 = sphi 0, %s170
      %s185 = sphi 0, %s171
      %s191 = sphi 0, %s193
      %s194 = sphi 0, %s191
      %s195 = sphi 0, %s194
      %s211 = sphi 0, %s195
    $region4: #{pointnetfeat_v1.3} parent=1 // loop_header_branch
      %18 = sbr.rel (%p16) target = $region8
    $region5: #{pointnetfeat_v1.3} parent=1 // loop_body
      %s20 = ssub.s32 %s15, 1
      %s21 = ssub.s32 %s15, 2
      %s28 = sadd.s32 1, %s23
      %p29 = scmp.ge.s32.totalorder %s28, 1
      %s30 = scalar_select %p29, 0, %s28
      %s31 = sadd.s32 1, %s22
      %s32 = scalar_select %p29, %s31, %s22
      %p33 = scmp.ge.s32.totalorder %s32, 2
      %s34 = scalar_select %p33, 0, %s32
      %s35 = sadd.s32 %s22, %s23
      %s36 = sadd.s32 %s34, %s30
      %s37 = ssub.s32 %s35, %s36
      %p38 = scmp.eq.s32.totalorder %s37, 0
      %s40 = sadd.s32 %s39, 1
      %s41 = scalar_select %p38, %s39, %s40
      %p44 = pneg %p38
      %p45 = scmp.eq.s32.totalorder %s15, 1
      %p46 = por %p44, %p45
      %p47 = scmp.ne.s32.totalorder %s39, %s42
      %p48 = scmp.eq.s32.totalorder %s15, 0
      %p49 = por %p47, %p48
      %p50 = scmp.ne.s32.totalorder %s39, %s42
      %p51 = scmp.eq.s32.totalorder %s20, 1
      %p52 = por %p50, %p51
      %p53 = scmp.ne.s32.totalorder %s42, %s43
      %p54 = scmp.eq.s32.totalorder %s20, 0
      %p55 = por %p53, %p54
      %p56 = scmp.ne.s32.totalorder %s42, %s43
      %p57 = scmp.eq.s32.totalorder %s21, 1
      %p58 = por %p56, %p57
      %p60 = scmp.ne.s32.totalorder %s43, %s59
      %p61 = scmp.eq.s32.totalorder %s21, 0
      %p62 = por %p60, %p61
      %s64 = sadd.s32 %s63, 1
      %p67 = scmp.eq.s32.totalorder %s15, 1
      %p68 = scmp.ne.s32.totalorder %s63, %s65
      %p69 = scmp.eq.s32.totalorder %s15, 0
      %p70 = por %p68, %p69
      %p71 = scmp.ne.s32.totalorder %s63, %s65
      %p72 = scmp.eq.s32.totalorder %s20, 1
      %p73 = por %p71, %p72
      %p74 = scmp.ne.s32.totalorder %s65, %s66
      %p75 = scmp.eq.s32.totalorder %s20, 0
      %p76 = por %p74, %p75
      %p77 = scmp.ne.s32.totalorder %s65, %s66
      %p78 = scmp.eq.s32.totalorder %s21, 1
      %p79 = por %p77, %p78
      %p81 = scmp.ne.s32.totalorder %s66, %s80
      %p82 = scmp.eq.s32.totalorder %s21, 0
      %p83 = por %p81, %p82
      %s85 = sadd.s32 %s84, 1
      %p88 = scmp.eq.s32.totalorder %s15, 1
      %p89 = scmp.ne.s32.totalorder %s84, %s86
      %p90 = scmp.eq.s32.totalorder %s15, 0
      %p91 = por %p89, %p90
      %p92 = scmp.ne.s32.totalorder %s84, %s86
      %p93 = scmp.eq.s32.totalorder %s20, 1
      %p94 = por %p92, %p93
      %p95 = scmp.ne.s32.totalorder %s86, %s87
      %p96 = scmp.eq.s32.totalorder %s20, 0
      %p97 = por %p95, %p96
      %p98 = scmp.ne.s32.totalorder %s86, %s87
      %p99 = scmp.eq.s32.totalorder %s21, 1
      %p100 = por %p98, %p99
      %p102 = scmp.ne.s32.totalorder %s87, %s101
      %p103 = scmp.eq.s32.totalorder %s21, 0
      %p104 = por %p102, %p103
      %s106 = sadd.s32 %s105, 1
      %p109 = scmp.eq.s32.totalorder %s15, 1
      %p110 = scmp.ne.s32.totalorder %s105, %s107
      %p111 = scmp.eq.s32.totalorder %s15, 0
      %p112 = por %p110, %p111
      %p113 = scmp.ne.s32.totalorder %s105, %s107
      %p114 = scmp.eq.s32.totalorder %s20, 1
      %p115 = por %p113, %p114
      %p116 = scmp.ne.s32.totalorder %s107, %s108
      %p117 = scmp.eq.s32.totalorder %s20, 0
      %p118 = por %p116, %p117
      %p119 = scmp.ne.s32.totalorder %s107, %s108
      %p120 = scmp.eq.s32.totalorder %s21, 1
      %p121 = por %p119, %p120
      %p123 = scmp.ne.s32.totalorder %s108, %s122
      %p124 = scmp.eq.s32.totalorder %s21, 0
      %p125 = por %p123, %p124
      %s127 = sadd.s32 %s126, 1
      %p130 = scmp.eq.s32.totalorder %s15, 1
      %p131 = scmp.ne.s32.totalorder %s126, %s128
      %p132 = scmp.eq.s32.totalorder %s15, 0
      %p133 = por %p131, %p132
      %p134 = scmp.ne.s32.totalorder %s126, %s128
      %p135 = scmp.eq.s32.totalorder %s20, 1
      %p136 = por %p134, %p135
      %p137 = scmp.ne.s32.totalorder %s128, %s129
      %p138 = scmp.eq.s32.totalorder %s20, 0
      %p139 = por %p137, %p138
      %p140 = scmp.ne.s32.totalorder %s128, %s129
      %p141 = scmp.eq.s32.totalorder %s21, 1
      %p142 = por %p140, %p141
      %p144 = scmp.ne.s32.totalorder %s129, %s143
      %p145 = scmp.eq.s32.totalorder %s21, 0
      %p146 = por %p144, %p145
      %s148 = sadd.s32 %s147, 1
      %p151 = scmp.eq.s32.totalorder %s15, 1
      %p152 = scmp.ne.s32.totalorder %s147, %s149
      %p153 = scmp.eq.s32.totalorder %s15, 0
      %p154 = por %p152, %p153
      %p155 = scmp.ne.s32.totalorder %s147, %s149
      %p156 = scmp.eq.s32.totalorder %s20, 1
      %p157 = por %p155, %p156
      %p158 = scmp.ne.s32.totalorder %s149, %s150
      %p159 = scmp.eq.s32.totalorder %s20, 0
      %p160 = por %p158, %p159
      %p161 = scmp.ne.s32.totalorder %s149, %s150
      %p162 = scmp.eq.s32.totalorder %s21, 1
      %p163 = por %p161, %p162
      %p165 = scmp.ne.s32.totalorder %s150, %s164
      %p166 = scmp.eq.s32.totalorder %s21, 0
      %p167 = por %p165, %p166
      %s169 = sadd.s32 %s168, 1
      %p172 = scmp.eq.s32.totalorder %s15, 1
      %p173 = scmp.ne.s32.totalorder %s168, %s170
      %p174 = scmp.eq.s32.totalorder %s15, 0
      %p175 = por %p173, %p174
      %p176 = scmp.ne.s32.totalorder %s168, %s170
      %p177 = scmp.eq.s32.totalorder %s20, 1
      %p178 = por %p176, %p177
      %p179 = scmp.ne.s32.totalorder %s170, %s171
      %p180 = scmp.eq.s32.totalorder %s20, 0
      %p181 = por %p179, %p180
      %p182 = scmp.ne.s32.totalorder %s170, %s171
      %p183 = scmp.eq.s32.totalorder %s21, 1
      %p184 = por %p182, %p183
      %p186 = scmp.ne.s32.totalorder %s171, %s185
      %p187 = scmp.eq.s32.totalorder %s21, 0
      %p188 = por %p186, %p187
      %s189 = ssub.s32 %s22, %s34
      %p190 = scmp.eq.s32.totalorder %s189, 0
      %s192 = sadd.s32 %s191, 1
      %s193 = scalar_select %p190, %s191, %s192
      %p196 = pneg %p190
      %p197 = scmp.eq.s32.totalorder %s15, 1
      %p198 = por %p196, %p197
      %p199 = scmp.ne.s32.totalorder %s191, %s194
      %p200 = scmp.eq.s32.totalorder %s15, 0
      %p201 = por %p199, %p200
      %p202 = scmp.ne.s32.totalorder %s191, %s194
      %p203 = scmp.eq.s32.totalorder %s20, 1
      %p204 = por %p202, %p203
      %p205 = scmp.ne.s32.totalorder %s194, %s195
      %p206 = scmp.eq.s32.totalorder %s20, 0
      %p207 = por %p205, %p206
      %p208 = scmp.ne.s32.totalorder %s194, %s195
      %p209 = scmp.eq.s32.totalorder %s21, 1
      %p210 = por %p208, %p209
      %p212 = scmp.ne.s32.totalorder %s195, %s211
      %p213 = scmp.eq.s32.totalorder %s21, 0
      %p214 = por %p212, %p213
      %p215 = scmp.le.s32.totalorder 1, %s15
      %p216 = scmp.lt.s32.totalorder %s15, 3
      %p217 = pnand %p215, %p216
      %p218 = pneg %p217
      // Predicated region
      $region9: #{pointnetfeat_v1.3} parent=5 // pred_check
        _
      $region10: #{pointnetfeat_v1.3} parent=5 // pred_check_branch
        %220 = sbr.rel (%p217) target = $region12
      $region11: #{pointnetfeat_v1.3} parent=5 // pred_region
        %s221 = ssub.s32 %s15, 1
        // Predicated region
        $region13: #{pointnetfeat_v1.3} parent=11 // pred_check
          %p222 = pneg %p76
        $region14: #{pointnetfeat_v1.3} parent=11 // pred_check_branch
          %224 = sbr.rel (%p222) target = $region16
        $region15: #{pointnetfeat_v1.3} parent=11 // pred_region
          _
        $region16: #{pointnetfeat_v1.3} parent=11 // pred_fallthru
          _
        // Predicated region
        $region17: #{pointnetfeat_v1.3} parent=11 // pred_check
          %p225 = pneg %p97
        $region18: #{pointnetfeat_v1.3} parent=11 // pred_check_branch
          %227 = sbr.rel (%p225) target = $region20
        $region19: #{pointnetfeat_v1.3} parent=11 // pred_region
          %s229 = ssub.s32 16, 16
          %230 = vsyncadd [#allocation3], %s229
          %s232 = sshll.u32 [#allocation2], 4
          %s233 = int_to_ptr.vmem [resolvable:$true] %s232
          %235 = dma.hbm_to_vmem [thread:$0]  %s2, 16, %s233, [#allocation3]
        $region20: #{pointnetfeat_v1.3} parent=11 // pred_fallthru
          _
        // Predicated region
        $region21: #{pointnetfeat_v1.3} parent=11 // pred_check
          %p236 = pneg %p118
        $region22: #{pointnetfeat_v1.3} parent=11 // pred_check_branch
          %238 = sbr.rel (%p236) target = $region24
        $region23: #{pointnetfeat_v1.3} parent=11 // pred_region
          _
        $region24: #{pointnetfeat_v1.3} parent=11 // pred_fallthru
          _
        // Predicated region
        $region25: #{pointnetfeat_v1.3} parent=11 // pred_check
          %p239 = pneg %p139
        $region26: #{pointnetfeat_v1.3} parent=11 // pred_check_branch
          %241 = sbr.rel (%p239) target = $region28
        $region27: #{pointnetfeat_v1.3} parent=11 // pred_region
          %s243 = ssub.s32 16, 16
          %244 = vsyncadd [#allocation5], %s243
          %s246 = sshll.u32 [#allocation4], 4
          %s247 = int_to_ptr.vmem [resolvable:$true] %s246
          %249 = dma.hbm_to_vmem [thread:$0]  %s4, 16, %s247, [#allocation5]
        $region28: #{pointnetfeat_v1.3} parent=11 // pred_fallthru
          _
        // Predicated region
        $region29: #{pointnetfeat_v1.3} parent=11 // pred_check
          %p250 = pneg %p160
        $region30: #{pointnetfeat_v1.3} parent=11 // pred_check_branch
          %252 = sbr.rel (%p250) target = $region32
        $region31: #{pointnetfeat_v1.3} parent=11 // pred_region
          _
        $region32: #{pointnetfeat_v1.3} parent=11 // pred_fallthru
          _
        // Predicated region
        $region33: #{pointnetfeat_v1.3} parent=11 // pred_check
          %p253 = pneg %p181
        $region34: #{pointnetfeat_v1.3} parent=11 // pred_check_branch
          %255 = sbr.rel (%p253) target = $region36
        $region35: #{pointnetfeat_v1.3} parent=11 // pred_region
          %s257 = ssub.s32 128, 128
          %258 = vsyncadd [#allocation5], %s257
          %s260 = sshll.u32 [#allocation6], 4
          %s261 = int_to_ptr.vmem [resolvable:$true] %s260
          %263 = dma.hbm_to_vmem [thread:$0]  %s6, 128, %s261, [#allocation5]
        $region36: #{pointnetfeat_v1.3} parent=11 // pred_fallthru
          _
      $region12: #{pointnetfeat_v1.3} parent=5 // pred_fallthru
        _
      %p264 = scmp.lt.s32.totalorder %s15, 2
      // Predicated region
      $region37: #{pointnetfeat_v1.3} parent=5 // pred_check
        %p265 = pneg %p264
      $region38: #{pointnetfeat_v1.3} parent=5 // pred_check_branch
        %267 = sbr.rel (%p265) target = $region40
      $region39: #{pointnetfeat_v1.3} parent=5 // pred_region
        // Predicated region
        $region41: #{pointnetfeat_v1.3} parent=39 // pred_check
          %p268 = pneg %p49
        $region42: #{pointnetfeat_v1.3} parent=39 // pred_check_branch
          %270 = sbr.rel (%p268) target = $region44
        $region43: #{pointnetfeat_v1.3} parent=39 // pred_region
          %s271 = sadd.s32 %s22, %s23
          %s272 = smul.u32 32, %s271
          %p273 = scmp.lt.s32.totalorder %s272, 63
          %s274 = scalar_select %p273, %s272, 63
          %s275 = smul.addr %s274, 8
          %s276 = scalar_lea.vmem %s0, %s275
          %s277 = sadd.s32 %s22, %s23
          %s278 = smul.u32 32, %s277
        $region44: #{pointnetfeat_v1.3} parent=39 // pred_fallthru
          _
      $region40: #{pointnetfeat_v1.3} parent=5 // pred_fallthru
        _
      %p279 = scmp.le.s32.totalorder 1, %s15
      %p280 = scmp.lt.s32.totalorder %s15, 3
      %p281 = pnand %p279, %p280
      %p282 = pneg %p281
      // Predicated region
      $region45: #{pointnetfeat_v1.3} parent=5 // pred_check
        _
      $region46: #{pointnetfeat_v1.3} parent=5 // pred_check_branch
        %284 = sbr.rel (%p281) target = $region48
      $region47: #{pointnetfeat_v1.3} parent=5 // pred_region
        %s285 = ssub.s32 %s15, 1
        // Predicated region
        $region49: #{pointnetfeat_v1.3} parent=47 // pred_check
          %p286 = pneg %p97
        $region50: #{pointnetfeat_v1.3} parent=47 // pred_check_branch
          %288 = sbr.rel (%p286) target = $region52
        $region51: #{pointnetfeat_v1.3} parent=47 // pred_region
          %289 = dma.done [#allocation3], 16
        $region52: #{pointnetfeat_v1.3} parent=47 // pred_fallthru
          _
        // Predicated region
        $region53: #{pointnetfeat_v1.3} parent=47 // pred_check
          %p290 = pneg %p139
        $region54: #{pointnetfeat_v1.3} parent=47 // pred_check_branch
          %292 = sbr.rel (%p290) target = $region56
        $region55: #{pointnetfeat_v1.3} parent=47 // pred_region
          %293 = dma.done [#allocation5], 16
        $region56: #{pointnetfeat_v1.3} parent=47 // pred_fallthru
          _
        // Predicated region
        $region57: #{pointnetfeat_v1.3} parent=47 // pred_check
          %p294 = pneg %p181
        $region58: #{pointnetfeat_v1.3} parent=47 // pred_check_branch
          %296 = sbr.rel (%p294) target = $region60
        $region59: #{pointnetfeat_v1.3} parent=47 // pred_region
          %297 = dma.done [#allocation5], 128
        $region60: #{pointnetfeat_v1.3} parent=47 // pred_fallthru
          _
        %s298 = sadd.s32 %s24, %s25
        %s299 = smul.u32 32, %s298
        %p300 = scmp.lt.s32.totalorder %s299, 63
        %s301 = scalar_select %p300, %s299, 63
        %s302 = smul.addr %s301, 8
        %s303 = scalar_lea.vmem %s0, %s302
        %p304 = pneg %p55
        %p305 = pneg %p52
        %p306 = pneg %p76
        %p307 = pneg %p73
        %p308 = pneg %p97
        %p309 = pneg %p94
        %p310 = pneg %p118
        %p311 = pneg %p115
        %p312 = pneg %p139
        %p313 = pneg %p136
        %p314 = pneg %p160
        %p315 = pneg %p157
        %p316 = pneg %p181
        %p317 = pneg %p178
        %p318 = pneg %p207
        %p319 = pneg %p204
        %p320 = scmp.lt.s32.totalorder %s24, 1
        %s321 = scalar_select %p320, %s24, 1
        %s322 = smul.addr %s321, 8
        %s323 = scalar_lea.vmem %s7, %s322
        %s324 = sadd.s32 %s24, %s25
        %s325 = smul.u32 32, %s324
        %p326 = scmp.lt.s32.totalorder %s325, 63
        %s327 = scalar_select %p326, %s325, 63
        %s328 = smul.addr %s327, 8
        %s329 = scalar_lea.vmem %s0, %s328
        %s330 = sadd.s32 %s24, %s25
        %s331 = smul.u32 32, %s330
        %p332 = scmp.lt.s32.totalorder %s24, 1
        %s333 = scalar_select %p332, %s24, 1
        %s334 = smul.addr %s333, 8
        %s335 = scalar_lea.vmem %s7, %s334
        %v337 = vld [vmem:[%s329] sm:$0xff]
        %v338 = vld [vmem:[%s329 + $0x8] sm:$0xff]
        %v339 = vld [vmem:[%s329 + $0x10] sm:$0xff]
        %v340 = vld [vmem:[%s329 + $0x18] sm:$0xff]
        %v341 = vld [vmem:[%s329 + $0x20] sm:$0xff]
        %v342 = vld [vmem:[%s329 + $0x28] sm:$0xff]
        %v343 = vld [vmem:[%s329 + $0x30] sm:$0xff]
        %v344 = vld [vmem:[%s329 + $0x38] sm:$0xff]
        %v345 = vld [vmem:[%s329 + $0x40] sm:$0xff]
        %v346 = vld [vmem:[%s329 + $0x48] sm:$0xff]
        %v347 = vld [vmem:[%s329 + $0x50] sm:$0xff]
        %v348 = vld [vmem:[%s329 + $0x58] sm:$0xff]
        %v349 = vld [vmem:[%s329 + $0x60] sm:$0xff]
        %v350 = vld [vmem:[%s329 + $0x68] sm:$0xff]
        %v351 = vld [vmem:[%s329 + $0x70] sm:$0xff]
        %v352 = vld [vmem:[%s329 + $0x78] sm:$0xff]
        %v353 = vld [vmem:[%s329 + $0x80] sm:$0xff]
        %v354 = vld [vmem:[%s329 + $0x88] sm:$0xff]
        %v355 = vld [vmem:[%s329 + $0x90] sm:$0xff]
        %v356 = vld [vmem:[%s329 + $0x98] sm:$0xff]
        %v357 = vld [vmem:[%s329 + $0xa0] sm:$0xff]
        %v358 = vld [vmem:[%s329 + $0xa8] sm:$0xff]
        %v359 = vld [vmem:[%s329 + $0xb0] sm:$0xff]
        %v360 = vld [vmem:[%s329 + $0xb8] sm:$0xff]
        %v361 = vld [vmem:[%s329 + $0xc0] sm:$0xff]
        %v362 = vld [vmem:[%s329 + $0xc8] sm:$0xff]
        %v363 = vld [vmem:[%s329 + $0xd0] sm:$0xff]
        %v364 = vld [vmem:[%s329 + $0xd8] sm:$0xff]
        %v365 = vld [vmem:[%s329 + $0xe0] sm:$0xff]
        %v366 = vld [vmem:[%s329 + $0xe8] sm:$0xff]
        %v367 = vld [vmem:[%s329 + $0xf0] sm:$0xff]
        %v368 = vld [vmem:[%s329 + $0xf8] sm:$0xff]
        %v369 = vpack.c.bf16 %v338, %v337
        %v370 = vpack.c.bf16 %v340, %v339
        %v371 = vpack.c.bf16 %v342, %v341
        %v372 = vpack.c.bf16 %v344, %v343
        %v373 = vpack.c.bf16 %v346, %v345
        %v374 = vpack.c.bf16 %v348, %v347
        %v375 = vpack.c.bf16 %v350, %v349
        %v376 = vpack.c.bf16 %v352, %v351
        %v377 = vpack.c.bf16 %v354, %v353
        %v378 = vpack.c.bf16 %v356, %v355
        %v379 = vpack.c.bf16 %v358, %v357
        %v380 = vpack.c.bf16 %v360, %v359
        %v381 = vpack.c.bf16 %v362, %v361
        %v382 = vpack.c.bf16 %v364, %v363
        %v383 = vpack.c.bf16 %v366, %v365
        %v384 = vpack.c.bf16 %v368, %v367
        %v385 = vld [vmem:[%s1] sm:$0xf]
        %v386 = vld [vmem:[#allocation2] sm:$0x1]
        %v388 = vlaneseq
        %v389 = vshrl.u32 %v388, 7
        %v390 = vsub.s32 0, %v389
        %v391 = vrot.slane %v386, %v390
        %vm393 = vcmask 64512
        %v395 = vsel %vm393, %v369, 0
        %v398 = vsel %vm393, %v370, 0
        %v401 = vsel %vm393, %v371, 0
        %v404 = vsel %vm393, %v372, 0
        %v407 = vsel %vm393, %v373, 0
        %v410 = vsel %vm393, %v374, 0
        %v413 = vsel %vm393, %v375, 0
        %v416 = vsel %vm393, %v376, 0
        %v419 = vsel %vm393, %v377, 0
        %v422 = vsel %vm393, %v378, 0
        %v425 = vsel %vm393, %v379, 0
        %v428 = vsel %vm393, %v380, 0
        %v431 = vsel %vm393, %v381, 0
        %v434 = vsel %vm393, %v382, 0
        %v437 = vsel %vm393, %v383, 0
        %v440 = vsel %vm393, %v384, 0
        %vm442 = vcmask 1043456
        %v444 = vsel %vm442, %v385, 0
        %446 = vmatprep.subr.bf16.mxu0 0
        %447 = vmatpush1.bf16.msra.mxu0 %v444
        %448 = vmatprep.subr.bf16.mxu0 0
        %449 = vmatpush1.bf16.msra.mxu0 0
        %450 = vmatprep.subr.bf16.mxu0 0
        %451 = vmatpush1.bf16.msra.mxu0 0
        %452 = vmatprep.subr.bf16.mxu0 0
        %453 = vmatpush1.bf16.msra.mxu0 0
        %454 = vmatprep.subr.bf16.mxu0 0
        %455 = vmatpush1.bf16.msra.mxu0 0
        %456 = vmatprep.subr.bf16.mxu0 0
        %457 = vmatpush1.bf16.msra.mxu0 0
        %458 = vmatprep.subr.bf16.mxu0 0
        %459 = vmatpush1.bf16.msra.mxu0 0
        %460 = vmatprep.subr.bf16.mxu0 0
        %461 = vmatpush1.bf16.msra.mxu0 0
        %462 = vmatprep.subr.bf16.mxu0 0
        %463 = vmatpush1.bf16.msra.mxu0 0
        %464 = vmatprep.subr.bf16.mxu0 0
        %465 = vmatpush1.bf16.msra.mxu0 0
        %466 = vmatprep.subr.bf16.mxu0 0
        %467 = vmatpush1.bf16.msra.mxu0 0
        %468 = vmatprep.subr.bf16.mxu0 0
        %469 = vmatpush1.bf16.msra.mxu0 0
        %470 = vmatprep.subr.bf16.mxu0 0
        %471 = vmatpush1.bf16.msra.mxu0 0
        %472 = vmatprep.subr.bf16.mxu0 0
        %473 = vmatpush1.bf16.msra.mxu0 0
        %474 = vmatprep.subr.bf16.mxu0 0
        %475 = vmatpush1.bf16.msra.mxu0 0
        %476 = vmatprep.subr.bf16.mxu0 0
        %477 = vmatpush1.bf16.msra.mxu0 0
        %478 = vmatprep.mubr.bf16.mxu0 0
        %479 = vmatmul.mubr.bf16.gmra.mrb[0].mxu0 %v395
        %v480 = vpop.f32.mrb[0].mxu0
        %v481 = vadd.f32 %v391, %v480
        %v482 = vpop.f32.mrb[0].mxu0
        %v483 = vpop.f32.mrb[0].mxu0
        %v484 = vadd.f32 %v391, %v483
        %v485 = vpop.f32.mrb[0].mxu0
        %486 = vmatprep.mubr.bf16.mxu0 0
        %487 = vmatmul.mubr.bf16.gmra.mrb[0].mxu0 %v398
        %v488 = vpop.f32.mrb[0].mxu0
        %v489 = vadd.f32 %v391, %v488
        %v490 = vpop.f32.mrb[0].mxu0
        %v491 = vpop.f32.mrb[0].mxu0
        %v492 = vadd.f32 %v391, %v491
        %v493 = vpop.f32.mrb[0].mxu0
        %494 = vmatprep.mubr.bf16.mxu0 0
        %495 = vmatmul.mubr.bf16.gmra.mrb[0].mxu0 %v401
        %v496 = vpop.f32.mrb[0].mxu0
        %v497 = vadd.f32 %v391, %v496
        %v498 = vpop.f32.mrb[0].mxu0
        %v499 = vpop.f32.mrb[0].mxu0
        %v500 = vadd.f32 %v391, %v499
        %v501 = vpop.f32.mrb[0].mxu0
        %502 = vmatprep.mubr.bf16.mxu0 0
        %503 = vmatmul.mubr.bf16.gmra.mrb[0].mxu0 %v404
        %v504 = vpop.f32.mrb[0].mxu0
        %v505 = vadd.f32 %v391, %v504
        %v506 = vpop.f32.mrb[0].mxu0
        %v507 = vpop.f32.mrb[0].mxu0
        %v508 = vadd.f32 %v391, %v507
        %v509 = vpop.f32.mrb[0].mxu0
        %510 = vmatprep.mubr.bf16.mxu0 0
        %511 = vmatmul.mubr.bf16.gmra.mrb[0].mxu0 %v407
        %v512 = vpop.f32.mrb[0].mxu0
        %v513 = vadd.f32 %v391, %v512
        %v514 = vpop.f32.mrb[0].mxu0
        %v515 = vpop.f32.mrb[0].mxu0
        %v516 = vadd.f32 %v391, %v515
        %v517 = vpop.f32.mrb[0].mxu0
        %518 = vmatprep.mubr.bf16.mxu0 0
        %519 = vmatmul.mubr.bf16.gmra.mrb[0].mxu0 %v410
        %v520 = vpop.f32.mrb[0].mxu0
        %v521 = vadd.f32 %v391, %v520
        %v522 = vpop.f32.mrb[0].mxu0
        %v523 = vpop.f32.mrb[0].mxu0
        %v524 = vadd.f32 %v391, %v523
        %v525 = vpop.f32.mrb[0].mxu0
        %526 = vmatprep.mubr.bf16.mxu0 0
        %527 = vmatmul.mubr.bf16.gmra.mrb[0].mxu0 %v413
        %v528 = vpop.f32.mrb[0].mxu0
        %v529 = vadd.f32 %v391, %v528
        %v530 = vpop.f32.mrb[0].mxu0
        %v531 = vpop.f32.mrb[0].mxu0
        %v532 = vadd.f32 %v391, %v531
        %v533 = vpop.f32.mrb[0].mxu0
        %534 = vmatprep.mubr.bf16.mxu0 0
        %535 = vmatmul.mubr.bf16.gmra.mrb[0].mxu0 %v416
        %v536 = vpop.f32.mrb[0].mxu0
        %v537 = vadd.f32 %v391, %v536
        %v538 = vpop.f32.mrb[0].mxu0
        %v539 = vpop.f32.mrb[0].mxu0
        %v540 = vadd.f32 %v391, %v539
        %v541 = vpop.f32.mrb[0].mxu0
        %542 = vmatprep.mubr.bf16.mxu0 0
        %543 = vmatmul.mubr.bf16.gmra.mrb[0].mxu0 %v419
        %v544 = vpop.f32.mrb[0].mxu0
        %v545 = vadd.f32 %v391, %v544
        %v546 = vpop.f32.mrb[0].mxu0
        %v547 = vpop.f32.mrb[0].mxu0
        %v548 = vadd.f32 %v391, %v547
        %v549 = vpop.f32.mrb[0].mxu0
        %550 = vmatprep.mubr.bf16.mxu0 0
        %551 = vmatmul.mubr.bf16.gmra.mrb[0].mxu0 %v422
        %v552 = vpop.f32.mrb[0].mxu0
        %v553 = vadd.f32 %v391, %v552
        %v554 = vpop.f32.mrb[0].mxu0
        %v555 = vpop.f32.mrb[0].mxu0
        %v556 = vadd.f32 %v391, %v555
        %v557 = vpop.f32.mrb[0].mxu0
        %558 = vmatprep.mubr.bf16.mxu0 0
        %559 = vmatmul.mubr.bf16.gmra.mrb[0].mxu0 %v425
        %v560 = vpop.f32.mrb[0].mxu0
        %v561 = vadd.f32 %v391, %v560
        %v562 = vpop.f32.mrb[0].mxu0
        %v563 = vpop.f32.mrb[0].mxu0
        %v564 = vadd.f32 %v391, %v563
        %v565 = vpop.f32.mrb[0].mxu0
        %566 = vmatprep.mubr.bf16.mxu0 0
        %567 = vmatmul.mubr.bf16.gmra.mrb[0].mxu0 %v428
        %v568 = vpop.f32.mrb[0].mxu0
        %v569 = vadd.f32 %v391, %v568
        %v570 = vpop.f32.mrb[0].mxu0
        %v571 = vpop.f32.mrb[0].mxu0
        %v572 = vadd.f32 %v391, %v571
        %v573 = vpop.f32.mrb[0].mxu0
        %574 = vmatprep.mubr.bf16.mxu0 0
        %575 = vmatmul.mubr.bf16.gmra.mrb[0].mxu0 %v431
        %v576 = vpop.f32.mrb[0].mxu0
        %v577 = vadd.f32 %v391, %v576
        %v578 = vpop.f32.mrb[0].mxu0
        %v579 = vpop.f32.mrb[0].mxu0
        %v580 = vadd.f32 %v391, %v579
        %v581 = vpop.f32.mrb[0].mxu0
        %582 = vmatprep.mubr.bf16.mxu0 0
        %583 = vmatmul.mubr.bf16.gmra.mrb[0].mxu0 %v434
        %v584 = vpop.f32.mrb[0].mxu0
        %v585 = vadd.f32 %v391, %v584
        %v586 = vpop.f32.mrb[0].mxu0
        %v587 = vpop.f32.mrb[0].mxu0
        %v588 = vadd.f32 %v391, %v587
        %v589 = vpop.f32.mrb[0].mxu0
        %590 = vmatprep.mubr.bf16.mxu0 0
        %591 = vmatmul.mubr.bf16.gmra.mrb[0].mxu0 %v437
        %v592 = vpop.f32.mrb[0].mxu0
        %v593 = vadd.f32 %v391, %v592
        %v594 = vpop.f32.mrb[0].mxu0
        %v595 = vpop.f32.mrb[0].mxu0
        %v596 = vadd.f32 %v391, %v595
        %v597 = vpop.f32.mrb[0].mxu0
        %598 = vmatprep.mubr.bf16.mxu0 0
        %599 = vmatmul.mubr.bf16.gmra.mrb[0].mxu0 %v440
        %v600 = vpop.f32.mrb[0].mxu0
        %v601 = vadd.f32 %v391, %v600
        %v602 = vpop.f32.mrb[0].mxu0
        %v603 = vpop.f32.mrb[0].mxu0
        %v604 = vadd.f32 %v391, %v603
        %v605 = vpop.f32.mrb[0].mxu0
        %606 = vdwg.mxu0
        %v607 = vmax.f32 %v481, 0.0
        %v608 = vmax.f32 %v484, 0.0
        %v609 = vmax.f32 %v489, 0.0
        %v610 = vmax.f32 %v492, 0.0
        %v611 = vmax.f32 %v497, 0.0
        %v612 = vmax.f32 %v500, 0.0
        %v613 = vmax.f32 %v505, 0.0
        %v614 = vmax.f32 %v508, 0.0
        %v615 = vmax.f32 %v513, 0.0
        %v616 = vmax.f32 %v516, 0.0
        %v617 = vmax.f32 %v521, 0.0
        %v618 = vmax.f32 %v524, 0.0
        %v619 = vmax.f32 %v529, 0.0
        %v620 = vmax.f32 %v532, 0.0
        %v621 = vmax.f32 %v537, 0.0
        %v622 = vmax.f32 %v540, 0.0
        %v623 = vmax.f32 %v545, 0.0
        %v624 = vmax.f32 %v548, 0.0
        %v625 = vmax.f32 %v553, 0.0
        %v626 = vmax.f32 %v556, 0.0
        %v627 = vmax.f32 %v561, 0.0
        %v628 = vmax.f32 %v564, 0.0
        %v629 = vmax.f32 %v569, 0.0
        %v630 = vmax.f32 %v572, 0.0
        %v631 = vmax.f32 %v577, 0.0
        %v632 = vmax.f32 %v580, 0.0
        %v633 = vmax.f32 %v585, 0.0
        %v634 = vmax.f32 %v588, 0.0
        %v635 = vmax.f32 %v593, 0.0
        %v636 = vmax.f32 %v596, 0.0
        %v637 = vmax.f32 %v601, 0.0
        %v638 = vmax.f32 %v604, 0.0
        %v639 = vpack.c.bf16 %v608, %v607
        %v640 = vpack.c.bf16 %v610, %v609
        %v641 = vpack.c.bf16 %v612, %v611
        %v642 = vpack.c.bf16 %v614, %v613
        %v643 = vpack.c.bf16 %v616, %v615
        %v644 = vpack.c.bf16 %v618, %v617
        %v645 = vpack.c.bf16 %v620, %v619
        %v646 = vpack.c.bf16 %v622, %v621
        %v647 = vpack.c.bf16 %v624, %v623
        %v648 = vpack.c.bf16 %v626, %v625
        %v649 = vpack.c.bf16 %v628, %v627
        %v650 = vpack.c.bf16 %v630, %v629
        %v651 = vpack.c.bf16 %v632, %v631
        %v652 = vpack.c.bf16 %v634, %v633
        %v653 = vpack.c.bf16 %v636, %v635
        %v654 = vpack.c.bf16 %v638, %v637
        %v655 = vld [vmem:[%s3] sm:$0xf]
        %v656 = vld [vmem:[%s3 + $0x4] sm:$0xf]
        %v657 = vld [vmem:[%s3 + $0x8] sm:$0xf]
        %v658 = vld [vmem:[%s3 + $0xc] sm:$0xf]
        %v659 = vld [vmem:[%s3 + $0x10] sm:$0xf]
        %v660 = vld [vmem:[%s3 + $0x14] sm:$0xf]
        %v661 = vld [vmem:[%s3 + $0x18] sm:$0xf]
        %v662 = vld [vmem:[%s3 + $0x1c] sm:$0xf]
        %v663 = vld [vmem:[#allocation4] sm:$0x1]
        %v665 = vlaneseq
        %v666 = vshrl.u32 %v665, 7
        %v667 = vsub.s32 0, %v666
        %v668 = vrot.slane %v663, %v667
        %v678 = vunpack.c.l.b16 %v655
        %v679 = vunpack.c.l.b16 %v656
        %v680 = vunpack.c.l.b16 %v657
        %v681 = vunpack.c.l.b16 %v658
        %v682 = vunpack.c.l.b16 %v659
        %v683 = vunpack.c.l.b16 %v660
        %v684 = vunpack.c.l.b16 %v661
        %v685 = vunpack.c.l.b16 %v662
        %v686 = vpack.c.b16 %v679, %v678
        %v687 = vpack.c.b16 %v681, %v680
        %v688 = vpack.c.b16 %v683, %v682
        %v689 = vpack.c.b16 %v685, %v684
        %vm694 = vcmask 523264
        %v696 = vsel %vm694, %v639, 0
        %v699 = vsel %vm694, %v640, 0
        %v702 = vsel %vm694, %v641, 0
        %v705 = vsel %vm694, %v642, 0
        %v708 = vsel %vm694, %v643, 0
        %v711 = vsel %vm694, %v644, 0
        %v714 = vsel %vm694, %v645, 0
        %v717 = vsel %vm694, %v646, 0
        %v720 = vsel %vm694, %v647, 0
        %v723 = vsel %vm694, %v648, 0
        %v726 = vsel %vm694, %v649, 0
        %v729 = vsel %vm694, %v650, 0
        %v732 = vsel %vm694, %v651, 0
        %v735 = vsel %vm694, %v652, 0
        %v738 = vsel %vm694, %v653, 0
        %v741 = vsel %vm694, %v654, 0
        %743 = vmatprep.subr.bf16.mxu0 0
        %744 = vmatpush1.bf16.msra.mxu0 %v686
        %745 = vmatprep.subr.bf16.mxu0 0
        %746 = vmatpush1.bf16.msra.mxu0 %v687
        %747 = vmatprep.subr.bf16.mxu0 0
        %748 = vmatpush1.bf16.msra.mxu0 %v688
        %749 = vmatprep.subr.bf16.mxu0 0
        %750 = vmatpush1.bf16.msra.mxu0 %v689
        %751 = vmatprep.subr.bf16.mxu0 0
        %752 = vmatpush1.bf16.msra.mxu0 0
        %753 = vmatprep.subr.bf16.mxu0 0
        %754 = vmatpush1.bf16.msra.mxu0 0
        %755 = vmatprep.subr.bf16.mxu0 0
        %756 = vmatpush1.bf16.msra.mxu0 0
        %757 = vmatprep.subr.bf16.mxu0 0
        %758 = vmatpush1.bf16.msra.mxu0 0
        %759 = vmatprep.subr.bf16.mxu0 0
        %760 = vmatpush1.bf16.msra.mxu0 0
        %761 = vmatprep.subr.bf16.mxu0 0
        %762 = vmatpush1.bf16.msra.mxu0 0
        %763 = vmatprep.subr.bf16.mxu0 0
        %764 = vmatpush1.bf16.msra.mxu0 0
        %765 = vmatprep.subr.bf16.mxu0 0
        %766 = vmatpush1.bf16.msra.mxu0 0
        %767 = vmatprep.subr.bf16.mxu0 0
        %768 = vmatpush1.bf16.msra.mxu0 0
        %769 = vmatprep.subr.bf16.mxu0 0
        %770 = vmatpush1.bf16.msra.mxu0 0
        %771 = vmatprep.subr.bf16.mxu0 0
        %772 = vmatpush1.bf16.msra.mxu0 0
        %773 = vmatprep.subr.bf16.mxu0 0
        %774 = vmatpush1.bf16.msra.mxu0 0
        %775 = vmatprep.mubr.bf16.mxu0 0
        %776 = vmatmul.mubr.bf16.gmra.mrb[0].mxu0 %v696
        %v777 = vpop.f32.mrb[0].mxu0
        %v778 = vadd.f32 %v668, %v777
        %v779 = vpop.f32.mrb[0].mxu0
        %v780 = vpop.f32.mrb[0].mxu0
        %v781 = vadd.f32 %v668, %v780
        %v782 = vpop.f32.mrb[0].mxu0
        %783 = vmatprep.mubr.bf16.mxu0 0
        %784 = vmatmul.mubr.bf16.gmra.mrb[0].mxu0 %v699
        %v785 = vpop.f32.mrb[0].mxu0
        %v786 = vadd.f32 %v668, %v785
        %v787 = vpop.f32.mrb[0].mxu0
        %v788 = vpop.f32.mrb[0].mxu0
        %v789 = vadd.f32 %v668, %v788
        %v790 = vpop.f32.mrb[0].mxu0
        %791 = vmatprep.mubr.bf16.mxu0 0
        %792 = vmatmul.mubr.bf16.gmra.mrb[0].mxu0 %v702
        %v793 = vpop.f32.mrb[0].mxu0
        %v794 = vadd.f32 %v668, %v793
        %v795 = vpop.f32.mrb[0].mxu0
        %v796 = vpop.f32.mrb[0].mxu0
        %v797 = vadd.f32 %v668, %v796
        %v798 = vpop.f32.mrb[0].mxu0
        %799 = vmatprep.mubr.bf16.mxu0 0
        %800 = vmatmul.mubr.bf16.gmra.mrb[0].mxu0 %v705
        %v801 = vpop.f32.mrb[0].mxu0
        %v802 = vadd.f32 %v668, %v801
        %v803 = vpop.f32.mrb[0].mxu0
        %v804 = vpop.f32.mrb[0].mxu0
        %v805 = vadd.f32 %v668, %v804
        %v806 = vpop.f32.mrb[0].mxu0
        %807 = vmatprep.mubr.bf16.mxu0 0
        %808 = vmatmul.mubr.bf16.gmra.mrb[0].mxu0 %v708
        %v809 = vpop.f32.mrb[0].mxu0
        %v810 = vadd.f32 %v668, %v809
        %v811 = vpop.f32.mrb[0].mxu0
        %v812 = vpop.f32.mrb[0].mxu0
        %v813 = vadd.f32 %v668, %v812
        %v814 = vpop.f32.mrb[0].mxu0
        %815 = vmatprep.mubr.bf16.mxu0 0
        %816 = vmatmul.mubr.bf16.gmra.mrb[0].mxu0 %v711
        %v817 = vpop.f32.mrb[0].mxu0
        %v818 = vadd.f32 %v668, %v817
        %v819 = vpop.f32.mrb[0].mxu0
        %v820 = vpop.f32.mrb[0].mxu0
        %v821 = vadd.f32 %v668, %v820
        %v822 = vpop.f32.mrb[0].mxu0
        %823 = vmatprep.mubr.bf16.mxu0 0
        %824 = vmatmul.mubr.bf16.gmra.mrb[0].mxu0 %v714
        %v825 = vpop.f32.mrb[0].mxu0
        %v826 = vadd.f32 %v668, %v825
        %v827 = vpop.f32.mrb[0].mxu0
        %v828 = vpop.f32.mrb[0].mxu0
        %v829 = vadd.f32 %v668, %v828
        %v830 = vpop.f32.mrb[0].mxu0
        %831 = vmatprep.mubr.bf16.mxu0 0
        %832 = vmatmul.mubr.bf16.gmra.mrb[0].mxu0 %v717
        %v833 = vpop.f32.mrb[0].mxu0
        %v834 = vadd.f32 %v668, %v833
        %v835 = vpop.f32.mrb[0].mxu0
        %v836 = vpop.f32.mrb[0].mxu0
        %v837 = vadd.f32 %v668, %v836
        %v838 = vpop.f32.mrb[0].mxu0
        %839 = vmatprep.mubr.bf16.mxu0 0
        %840 = vmatmul.mubr.bf16.gmra.mrb[0].mxu0 %v720
        %v841 = vpop.f32.mrb[0].mxu0
        %v842 = vadd.f32 %v668, %v841
        %v843 = vpop.f32.mrb[0].mxu0
        %v844 = vpop.f32.mrb[0].mxu0
        %v845 = vadd.f32 %v668, %v844
        %v846 = vpop.f32.mrb[0].mxu0
        %847 = vmatprep.mubr.bf16.mxu0 0
        %848 = vmatmul.mubr.bf16.gmra.mrb[0].mxu0 %v723
        %v849 = vpop.f32.mrb[0].mxu0
        %v850 = vadd.f32 %v668, %v849
        %v851 = vpop.f32.mrb[0].mxu0
        %v852 = vpop.f32.mrb[0].mxu0
        %v853 = vadd.f32 %v668, %v852
        %v854 = vpop.f32.mrb[0].mxu0
        %855 = vmatprep.mubr.bf16.mxu0 0
        %856 = vmatmul.mubr.bf16.gmra.mrb[0].mxu0 %v726
        %v857 = vpop.f32.mrb[0].mxu0
        %v858 = vadd.f32 %v668, %v857
        %v859 = vpop.f32.mrb[0].mxu0
        %v860 = vpop.f32.mrb[0].mxu0
        %v861 = vadd.f32 %v668, %v860
        %v862 = vpop.f32.mrb[0].mxu0
        %863 = vmatprep.mubr.bf16.mxu0 0
        %864 = vmatmul.mubr.bf16.gmra.mrb[0].mxu0 %v729
        %v865 = vpop.f32.mrb[0].mxu0
        %v866 = vadd.f32 %v668, %v865
        %v867 = vpop.f32.mrb[0].mxu0
        %v868 = vpop.f32.mrb[0].mxu0
        %v869 = vadd.f32 %v668, %v868
        %v870 = vpop.f32.mrb[0].mxu0
        %871 = vmatprep.mubr.bf16.mxu0 0
        %872 = vmatmul.mubr.bf16.gmra.mrb[0].mxu0 %v732
        %v873 = vpop.f32.mrb[0].mxu0
        %v874 = vadd.f32 %v668, %v873
        %v875 = vpop.f32.mrb[0].mxu0
        %v876 = vpop.f32.mrb[0].mxu0
        %v877 = vadd.f32 %v668, %v876
        %v878 = vpop.f32.mrb[0].mxu0
        %879 = vmatprep.mubr.bf16.mxu0 0
        %880 = vmatmul.mubr.bf16.gmra.mrb[0].mxu0 %v735
        %v881 = vpop.f32.mrb[0].mxu0
        %v882 = vadd.f32 %v668, %v881
        %v883 = vpop.f32.mrb[0].mxu0
        %v884 = vpop.f32.mrb[0].mxu0
        %v885 = vadd.f32 %v668, %v884
        %v886 = vpop.f32.mrb[0].mxu0
        %887 = vmatprep.mubr.bf16.mxu0 0
        %888 = vmatmul.mubr.bf16.gmra.mrb[0].mxu0 %v738
        %v889 = vpop.f32.mrb[0].mxu0
        %v890 = vadd.f32 %v668, %v889
        %v891 = vpop.f32.mrb[0].mxu0
        %v892 = vpop.f32.mrb[0].mxu0
        %v893 = vadd.f32 %v668, %v892
        %v894 = vpop.f32.mrb[0].mxu0
        %895 = vmatprep.mubr.bf16.mxu0 0
        %896 = vmatmul.mubr.bf16.gmra.mrb[0].mxu0 %v741
        %v897 = vpop.f32.mrb[0].mxu0
        %v898 = vadd.f32 %v668, %v897
        %v899 = vpop.f32.mrb[0].mxu0
        %v900 = vpop.f32.mrb[0].mxu0
        %v901 = vadd.f32 %v668, %v900
        %v902 = vpop.f32.mrb[0].mxu0
        %903 = vdwg.mxu0
        %v904 = vmax.f32 %v778, 0.0
        %v905 = vmax.f32 %v781, 0.0
        %v906 = vmax.f32 %v786, 0.0
        %v907 = vmax.f32 %v789, 0.0
        %v908 = vmax.f32 %v794, 0.0
        %v909 = vmax.f32 %v797, 0.0
        %v910 = vmax.f32 %v802, 0.0
        %v911 = vmax.f32 %v805, 0.0
        %v912 = vmax.f32 %v810, 0.0
        %v913 = vmax.f32 %v813, 0.0
        %v914 = vmax.f32 %v818, 0.0
        %v915 = vmax.f32 %v821, 0.0
        %v916 = vmax.f32 %v826, 0.0
        %v917 = vmax.f32 %v829, 0.0
        %v918 = vmax.f32 %v834, 0.0
        %v919 = vmax.f32 %v837, 0.0
        %v920 = vmax.f32 %v842, 0.0
        %v921 = vmax.f32 %v845, 0.0
        %v922 = vmax.f32 %v850, 0.0
        %v923 = vmax.f32 %v853, 0.0
        %v924 = vmax.f32 %v858, 0.0
        %v925 = vmax.f32 %v861, 0.0
        %v926 = vmax.f32 %v866, 0.0
        %v927 = vmax.f32 %v869, 0.0
        %v928 = vmax.f32 %v874, 0.0
        %v929 = vmax.f32 %v877, 0.0
        %v930 = vmax.f32 %v882, 0.0
        %v931 = vmax.f32 %v885, 0.0
        %v932 = vmax.f32 %v890, 0.0
        %v933 = vmax.f32 %v893, 0.0
        %v934 = vmax.f32 %v898, 0.0
        %v935 = vmax.f32 %v901, 0.0
        %v936 = vpack.c.bf16 %v905, %v904
        %v937 = vpack.c.bf16 %v907, %v906
        %v938 = vpack.c.bf16 %v909, %v908
        %v939 = vpack.c.bf16 %v911, %v910
        %v940 = vpack.c.bf16 %v913, %v912
        %v941 = vpack.c.bf16 %v915, %v914
        %v942 = vpack.c.bf16 %v917, %v916
        %v943 = vpack.c.bf16 %v919, %v918
        %v944 = vpack.c.bf16 %v921, %v920
        %v945 = vpack.c.bf16 %v923, %v922
        %v946 = vpack.c.bf16 %v925, %v924
        %v947 = vpack.c.bf16 %v927, %v926
        %v948 = vpack.c.bf16 %v929, %v928
        %v949 = vpack.c.bf16 %v931, %v930
        %v950 = vpack.c.bf16 %v933, %v932
        %v951 = vpack.c.bf16 %v935, %v934
        %v952 = vld [vmem:[%s5] sm:$0xff]
        %v953 = vld [vmem:[%s5 + $0x8] sm:$0xff]
        %v954 = vld [vmem:[%s5 + $0x10] sm:$0xff]
        %v955 = vld [vmem:[%s5 + $0x18] sm:$0xff]
        %v956 = vld [vmem:[%s5 + $0x20] sm:$0xff]
        %v957 = vld [vmem:[%s5 + $0x28] sm:$0xff]
        %v958 = vld [vmem:[%s5 + $0x30] sm:$0xff]
        %v959 = vld [vmem:[%s5 + $0x38] sm:$0xff]
        %v960 = vld [vmem:[%s5 + $0x40] sm:$0xff]
        %v961 = vld [vmem:[%s5 + $0x48] sm:$0xff]
        %v962 = vld [vmem:[%s5 + $0x50] sm:$0xff]
        %v963 = vld [vmem:[%s5 + $0x58] sm:$0xff]
        %v964 = vld [vmem:[%s5 + $0x60] sm:$0xff]
        %v965 = vld [vmem:[%s5 + $0x68] sm:$0xff]
        %v966 = vld [vmem:[%s5 + $0x70] sm:$0xff]
        %v967 = vld [vmem:[%s5 + $0x78] sm:$0xff]
        %v968 = vld [vmem:[%s5 + $0x80] sm:$0xff]
        %v969 = vld [vmem:[%s5 + $0x88] sm:$0xff]
        %v970 = vld [vmem:[%s5 + $0x90] sm:$0xff]
        %v971 = vld [vmem:[%s5 + $0x98] sm:$0xff]
        %v972 = vld [vmem:[%s5 + $0xa0] sm:$0xff]
        %v973 = vld [vmem:[%s5 + $0xa8] sm:$0xff]
        %v974 = vld [vmem:[%s5 + $0xb0] sm:$0xff]
        %v975 = vld [vmem:[%s5 + $0xb8] sm:$0xff]
        %v976 = vld [vmem:[%s5 + $0xc0] sm:$0xff]
        %v977 = vld [vmem:[%s5 + $0xc8] sm:$0xff]
        %v978 = vld [vmem:[%s5 + $0xd0] sm:$0xff]
        %v979 = vld [vmem:[%s5 + $0xd8] sm:$0xff]
        %v980 = vld [vmem:[%s5 + $0xe0] sm:$0xff]
        %v981 = vld [vmem:[%s5 + $0xe8] sm:$0xff]
        %v982 = vld [vmem:[%s5 + $0xf0] sm:$0xff]
        %v983 = vld [vmem:[%s5 + $0xf8] sm:$0xff]
        %v984 = vld [vmem:[%s5 + $0x100] sm:$0xff]
        %v985 = vld [vmem:[%s5 + $0x108] sm:$0xff]
        %v986 = vld [vmem:[%s5 + $0x110] sm:$0xff]
        %v987 = vld [vmem:[%s5 + $0x118] sm:$0xff]
        %v988 = vld [vmem:[%s5 + $0x120] sm:$0xff]
        %v989 = vld [vmem:[%s5 + $0x128] sm:$0xff]
        %v990 = vld [vmem:[%s5 + $0x130] sm:$0xff]
        %v991 = vld [vmem:[%s5 + $0x138] sm:$0xff]
        %v992 = vld [vmem:[%s5 + $0x140] sm:$0xff]
        %v993 = vld [vmem:[%s5 + $0x148] sm:$0xff]
        %v994 = vld [vmem:[%s5 + $0x150] sm:$0xff]
        %v995 = vld [vmem:[%s5 + $0x158] sm:$0xff]
        %v996 = vld [vmem:[%s5 + $0x160] sm:$0xff]
        %v997 = vld [vmem:[%s5 + $0x168] sm:$0xff]
        %v998 = vld [vmem:[%s5 + $0x170] sm:$0xff]
        %v999 = vld [vmem:[%s5 + $0x178] sm:$0xff]
        %v1000 = vld [vmem:[%s5 + $0x180] sm:$0xff]
        %v1001 = vld [vmem:[%s5 + $0x188] sm:$0xff]
        %v1002 = vld [vmem:[%s5 + $0x190] sm:$0xff]
        %v1003 = vld [vmem:[%s5 + $0x198] sm:$0xff]
        %v1004 = vld [vmem:[%s5 + $0x1a0] sm:$0xff]
        %v1005 = vld [vmem:[%s5 + $0x1a8] sm:$0xff]
        %v1006 = vld [vmem:[%s5 + $0x1b0] sm:$0xff]
        %v1007 = vld [vmem:[%s5 + $0x1b8] sm:$0xff]
        %v1008 = vld [vmem:[%s5 + $0x1c0] sm:$0xff]
        %v1009 = vld [vmem:[%s5 + $0x1c8] sm:$0xff]
        %v1010 = vld [vmem:[%s5 + $0x1d0] sm:$0xff]
        %v1011 = vld [vmem:[%s5 + $0x1d8] sm:$0xff]
        %v1012 = vld [vmem:[%s5 + $0x1e0] sm:$0xff]
        %v1013 = vld [vmem:[%s5 + $0x1e8] sm:$0xff]
        %v1014 = vld [vmem:[%s5 + $0x1f0] sm:$0xff]
        %v1015 = vld [vmem:[%s5 + $0x1f8] sm:$0xff]
        %v1016 = vld [vmem:[#allocation6] sm:$0xff]
        %v1018 = vlaneseq
        %v1019 = vshrl.u32 %v1018, 7
        %v1020 = vsub.s32 0, %v1019
        %v1021 = vrot.slane %v1016, %v1020
        %v1022 = vlaneseq
        %v1023 = vshrl.u32 %v1022, 7
        %v1024 = vsub.s32 1, %v1023
        %v1025 = vrot.slane %v1016, %v1024
        %v1026 = vlaneseq
        %v1027 = vshrl.u32 %v1026, 7
        %v1028 = vsub.s32 2, %v1027
        %v1029 = vrot.slane %v1016, %v1028
        %v1030 = vlaneseq
        %v1031 = vshrl.u32 %v1030, 7
        %v1032 = vsub.s32 3, %v1031
        %v1033 = vrot.slane %v1016, %v1032
        %v1034 = vlaneseq
        %v1035 = vshrl.u32 %v1034, 7
        %v1036 = vsub.s32 4, %v1035
        %v1037 = vrot.slane %v1016, %v1036
        %v1038 = vlaneseq
        %v1039 = vshrl.u32 %v1038, 7
        %v1040 = vsub.s32 5, %v1039
        %v1041 = vrot.slane %v1016, %v1040
        %v1042 = vlaneseq
        %v1043 = vshrl.u32 %v1042, 7
        %v1044 = vsub.s32 6, %v1043
        %v1045 = vrot.slane %v1016, %v1044
        %v1046 = vlaneseq
        %v1047 = vshrl.u32 %v1046, 7
        %v1048 = vsub.s32 7, %v1047
        %v1049 = vrot.slane %v1016, %v1048
        %v1122 = vunpack.c.l.b16 %v952
        %v1123 = vunpack.c.h.b16 %v952
        %v1124 = vunpack.c.l.b16 %v953
        %v1125 = vunpack.c.h.b16 %v953
        %v1126 = vunpack.c.l.b16 %v954
        %v1127 = vunpack.c.h.b16 %v954
        %v1128 = vunpack.c.l.b16 %v955
        %v1129 = vunpack.c.h.b16 %v955
        %v1130 = vunpack.c.l.b16 %v956
        %v1131 = vunpack.c.h.b16 %v956
        %v1132 = vunpack.c.l.b16 %v957
        %v1133 = vunpack.c.h.b16 %v957
        %v1134 = vunpack.c.l.b16 %v958
        %v1135 = vunpack.c.h.b16 %v958
        %v1136 = vunpack.c.l.b16 %v959
        %v1137 = vunpack.c.h.b16 %v959
        %v1138 = vunpack.c.l.b16 %v960
        %v1139 = vunpack.c.h.b16 %v960
        %v1140 = vunpack.c.l.b16 %v961
        %v1141 = vunpack.c.h.b16 %v961
        %v1142 = vunpack.c.l.b16 %v962
        %v1143 = vunpack.c.h.b16 %v962
        %v1144 = vunpack.c.l.b16 %v963
        %v1145 = vunpack.c.h.b16 %v963
        %v1146 = vunpack.c.l.b16 %v964
        %v1147 = vunpack.c.h.b16 %v964
        %v1148 = vunpack.c.l.b16 %v965
        %v1149 = vunpack.c.h.b16 %v965
        %v1150 = vunpack.c.l.b16 %v966
        %v1151 = vunpack.c.h.b16 %v966
        %v1152 = vunpack.c.l.b16 %v967
        %v1153 = vunpack.c.h.b16 %v967
        %v1154 = vunpack.c.l.b16 %v968
        %v1155 = vunpack.c.h.b16 %v968
        %v1156 = vunpack.c.l.b16 %v969
        %v1157 = vunpack.c.h.b16 %v969
        %v1158 = vunpack.c.l.b16 %v970
        %v1159 = vunpack.c.h.b16 %v970
        %v1160 = vunpack.c.l.b16 %v971
        %v1161 = vunpack.c.h.b16 %v971
        %v1162 = vunpack.c.l.b16 %v972
        %v1163 = vunpack.c.h.b16 %v972
        %v1164 = vunpack.c.l.b16 %v973
        %v1165 = vunpack.c.h.b16 %v973
        %v1166 = vunpack.c.l.b16 %v974
        %v1167 = vunpack.c.h.b16 %v974
        %v1168 = vunpack.c.l.b16 %v975
        %v1169 = vunpack.c.h.b16 %v975
        %v1170 = vunpack.c.l.b16 %v976
        %v1171 = vunpack.c.h.b16 %v976
        %v1172 = vunpack.c.l.b16 %v977
        %v1173 = vunpack.c.h.b16 %v977
        %v1174 = vunpack.c.l.b16 %v978
        %v1175 = vunpack.c.h.b16 %v978
        %v1176 = vunpack.c.l.b16 %v979
        %v1177 = vunpack.c.h.b16 %v979
        %v1178 = vunpack.c.l.b16 %v980
        %v1179 = vunpack.c.h.b16 %v980
        %v1180 = vunpack.c.l.b16 %v981
        %v1181 = vunpack.c.h.b16 %v981
        %v1182 = vunpack.c.l.b16 %v982
        %v1183 = vunpack.c.h.b16 %v982
        %v1184 = vunpack.c.l.b16 %v983
        %v1185 = vunpack.c.h.b16 %v983
        %v1186 = vunpack.c.l.b16 %v984
        %v1187 = vunpack.c.h.b16 %v984
        %v1188 = vunpack.c.l.b16 %v985
        %v1189 = vunpack.c.h.b16 %v985
        %v1190 = vunpack.c.l.b16 %v986
        %v1191 = vunpack.c.h.b16 %v986
        %v1192 = vunpack.c.l.b16 %v987
        %v1193 = vunpack.c.h.b16 %v987
        %v1194 = vunpack.c.l.b16 %v988
        %v1195 = vunpack.c.h.b16 %v988
        %v1196 = vunpack.c.l.b16 %v989
        %v1197 = vunpack.c.h.b16 %v989
        %v1198 = vunpack.c.l.b16 %v990
        %v1199 = vunpack.c.h.b16 %v990
        %v1200 = vunpack.c.l.b16 %v991
        %v1201 = vunpack.c.h.b16 %v991
        %v1202 = vunpack.c.l.b16 %v992
        %v1203 = vunpack.c.h.b16 %v992
        %v1204 = vunpack.c.l.b16 %v993
        %v1205 = vunpack.c.h.b16 %v993
        %v1206 = vunpack.c.l.b16 %v994
        %v1207 = vunpack.c.h.b16 %v994
        %v1208 = vunpack.c.l.b16 %v995
        %v1209 = vunpack.c.h.b16 %v995
        %v1210 = vunpack.c.l.b16 %v996
        %v1211 = vunpack.c.h.b16 %v996
        %v1212 = vunpack.c.l.b16 %v997
        %v1213 = vunpack.c.h.b16 %v997
        %v1214 = vunpack.c.l.b16 %v998
        %v1215 = vunpack.c.h.b16 %v998
        %v1216 = vunpack.c.l.b16 %v999
        %v1217 = vunpack.c.h.b16 %v999
        %v1218 = vunpack.c.l.b16 %v1000
        %v1219 = vunpack.c.h.b16 %v1000
        %v1220 = vunpack.c.l.b16 %v1001
        %v1221 = vunpack.c.h.b16 %v1001
        %v1222 = vunpack.c.l.b16 %v1002
        %v1223 = vunpack.c.h.b16 %v1002
        %v1224 = vunpack.c.l.b16 %v1003
        %v1225 = vunpack.c.h.b16 %v1003
        %v1226 = vunpack.c.l.b16 %v1004
        %v1227 = vunpack.c.h.b16 %v1004
        %v1228 = vunpack.c.l.b16 %v1005
        %v1229 = vunpack.c.h.b16 %v1005
        %v1230 = vunpack.c.l.b16 %v1006
        %v1231 = vunpack.c.h.b16 %v1006
        %v1232 = vunpack.c.l.b16 %v1007
        %v1233 = vunpack.c.h.b16 %v1007
        %v1234 = vunpack.c.l.b16 %v1008
        %v1235 = vunpack.c.h.b16 %v1008
        %v1236 = vunpack.c.l.b16 %v1009
        %v1237 = vunpack.c.h.b16 %v1009
        %v1238 = vunpack.c.l.b16 %v1010
        %v1239 = vunpack.c.h.b16 %v1010
        %v1240 = vunpack.c.l.b16 %v1011
        %v1241 = vunpack.c.h.b16 %v1011
        %v1242 = vunpack.c.l.b16 %v1012
        %v1243 = vunpack.c.h.b16 %v1012
        %v1244 = vunpack.c.l.b16 %v1013
        %v1245 = vunpack.c.h.b16 %v1013
        %v1246 = vunpack.c.l.b16 %v1014
        %v1247 = vunpack.c.h.b16 %v1014
        %v1248 = vunpack.c.l.b16 %v1015
        %v1249 = vunpack.c.h.b16 %v1015
        %v1250 = vpack.c.b16 %v1130, %v1122
        %v1251 = vpack.c.b16 %v1131, %v1123
        %v1252 = vpack.c.b16 %v1132, %v1124
        %v1253 = vpack.c.b16 %v1133, %v1125
        %v1254 = vpack.c.b16 %v1134, %v1126
        %v1255 = vpack.c.b16 %v1135, %v1127
        %v1256 = vpack.c.b16 %v1136, %v1128
        %v1257 = vpack.c.b16 %v1137, %v1129
        %v1258 = vpack.c.b16 %v1146, %v1138
        %v1259 = vpack.c.b16 %v1147, %v1139
        %v1260 = vpack.c.b16 %v1148, %v1140
        %v1261 = vpack.c.b16 %v1149, %v1141
        %v1262 = vpack.c.b16 %v1150, %v1142
        %v1263 = vpack.c.b16 %v1151, %v1143
        %v1264 = vpack.c.b16 %v1152, %v1144
        %v1265 = vpack.c.b16 %v1153, %v1145
        %v1266 = vpack.c.b16 %v1162, %v1154
        %v1267 = vpack.c.b16 %v1163, %v1155
        %v1268 = vpack.c.b16 %v1164, %v1156
        %v1269 = vpack.c.b16 %v1165, %v1157
        %v1270 = vpack.c.b16 %v1166, %v1158
        %v1271 = vpack.c.b16 %v1167, %v1159
        %v1272 = vpack.c.b16 %v1168, %v1160
        %v1273 = vpack.c.b16 %v1169, %v1161
        %v1274 = vpack.c.b16 %v1178, %v1170
        %v1275 = vpack.c.b16 %v1179, %v1171
        %v1276 = vpack.c.b16 %v1180, %v1172
        %v1277 = vpack.c.b16 %v1181, %v1173
        %v1278 = vpack.c.b16 %v1182, %v1174
        %v1279 = vpack.c.b16 %v1183, %v1175
        %v1280 = vpack.c.b16 %v1184, %v1176
        %v1281 = vpack.c.b16 %v1185, %v1177
        %v1282 = vpack.c.b16 %v1194, %v1186
        %v1283 = vpack.c.b16 %v1195, %v1187
        %v1284 = vpack.c.b16 %v1196, %v1188
        %v1285 = vpack.c.b16 %v1197, %v1189
        %v1286 = vpack.c.b16 %v1198, %v1190
        %v1287 = vpack.c.b16 %v1199, %v1191
        %v1288 = vpack.c.b16 %v1200, %v1192
        %v1289 = vpack.c.b16 %v1201, %v1193
        %v1290 = vpack.c.b16 %v1210, %v1202
        %v1291 = vpack.c.b16 %v1211, %v1203
        %v1292 = vpack.c.b16 %v1212, %v1204
        %v1293 = vpack.c.b16 %v1213, %v1205
        %v1294 = vpack.c.b16 %v1214, %v1206
        %v1295 = vpack.c.b16 %v1215, %v1207
        %v1296 = vpack.c.b16 %v1216, %v1208
        %v1297 = vpack.c.b16 %v1217, %v1209
        %v1298 = vpack.c.b16 %v1226, %v1218
        %v1299 = vpack.c.b16 %v1227, %v1219
        %v1300 = vpack.c.b16 %v1228, %v1220
        %v1301 = vpack.c.b16 %v1229, %v1221
        %v1302 = vpack.c.b16 %v1230, %v1222
        %v1303 = vpack.c.b16 %v1231, %v1223
        %v1304 = vpack.c.b16 %v1232, %v1224
        %v1305 = vpack.c.b16 %v1233, %v1225
        %v1306 = vpack.c.b16 %v1242, %v1234
        %v1307 = vpack.c.b16 %v1243, %v1235
        %v1308 = vpack.c.b16 %v1244, %v1236
        %v1309 = vpack.c.b16 %v1245, %v1237
        %v1310 = vpack.c.b16 %v1246, %v1238
        %v1311 = vpack.c.b16 %v1247, %v1239
        %v1312 = vpack.c.b16 %v1248, %v1240
        %v1313 = vpack.c.b16 %v1249, %v1241
        %1378 = vmatprep.subr.bf16.mxu0 %v1251
        %1379 = vmatpush1.bf16.msra.mxu0 %v1250
        %1380 = vmatprep.subr.bf16.mxu0 %v1259
        %1381 = vmatpush1.bf16.msra.mxu0 %v1258
        %1382 = vmatprep.subr.bf16.mxu0 %v1267
        %1383 = vmatpush1.bf16.msra.mxu0 %v1266
        %1384 = vmatprep.subr.bf16.mxu0 %v1275
        %1385 = vmatpush1.bf16.msra.mxu0 %v1274
        %1386 = vmatprep.subr.bf16.mxu0 %v1283
        %1387 = vmatpush1.bf16.msra.mxu0 %v1282
        %1388 = vmatprep.subr.bf16.mxu0 %v1291
        %1389 = vmatpush1.bf16.msra.mxu0 %v1290
        %1390 = vmatprep.subr.bf16.mxu0 %v1299
        %1391 = vmatpush1.bf16.msra.mxu0 %v1298
        %1392 = vmatprep.subr.bf16.mxu0 %v1307
        %1393 = vmatpush1.bf16.msra.mxu0 %v1306
        %1394 = vmatprep.subr.bf16.mxu0 0
        %1395 = vmatpush1.bf16.msra.mxu0 0
        %1396 = vmatprep.subr.bf16.mxu0 0
        %1397 = vmatpush1.bf16.msra.mxu0 0
        %1398 = vmatprep.subr.bf16.mxu0 0
        %1399 = vmatpush1.bf16.msra.mxu0 0
        %1400 = vmatprep.subr.bf16.mxu0 0
        %1401 = vmatpush1.bf16.msra.mxu0 0
        %1402 = vmatprep.subr.bf16.mxu0 0
        %1403 = vmatpush1.bf16.msra.mxu0 0
        %1404 = vmatprep.subr.bf16.mxu0 0
        %1405 = vmatpush1.bf16.msra.mxu0 0
        %1406 = vmatprep.subr.bf16.mxu0 0
        %1407 = vmatpush1.bf16.msra.mxu0 0
        %1408 = vmatprep.subr.bf16.mxu0 0
        %1409 = vmatpush1.bf16.msra.mxu0 0
        %1410 = vmatprep.mubr.bf16.mxu0 0
        %1411 = vmatmul.mubr.bf16.gmra.mrb[0].mxu0 %v936
        %v1412 = vpop.f32.mrb[0].mxu0
        %v1413 = vadd.f32 %v1021, %v1412
        %v1414 = vpop.f32.mrb[0].mxu0
        %v1415 = vadd.f32 %v1025, %v1414
        %v1416 = vpop.f32.mrb[0].mxu0
        %v1417 = vadd.f32 %v1021, %v1416
        %v1418 = vpop.f32.mrb[0].mxu0
        %v1419 = vadd.f32 %v1025, %v1418
        %1420 = vmatprep.mubr.bf16.mxu0 0
        %1421 = vmatmul.mubr.bf16.gmra.mrb[0].mxu0 %v937
        %v1422 = vpop.f32.mrb[0].mxu0
        %v1423 = vadd.f32 %v1021, %v1422
        %v1424 = vpop.f32.mrb[0].mxu0
        %v1425 = vadd.f32 %v1025, %v1424
        %v1426 = vpop.f32.mrb[0].mxu0
        %v1427 = vadd.f32 %v1021, %v1426
        %v1428 = vpop.f32.mrb[0].mxu0
        %v1429 = vadd.f32 %v1025, %v1428
        %1430 = vmatprep.mubr.bf16.mxu0 0
        %1431 = vmatmul.mubr.bf16.gmra.mrb[0].mxu0 %v938
        %v1432 = vpop.f32.mrb[0].mxu0
        %v1433 = vadd.f32 %v1021, %v1432
        %v1434 = vpop.f32.mrb[0].mxu0
        %v1435 = vadd.f32 %v1025, %v1434
        %v1436 = vpop.f32.mrb[0].mxu0
        %v1437 = vadd.f32 %v1021, %v1436
        %v1438 = vpop.f32.mrb[0].mxu0
        %v1439 = vadd.f32 %v1025, %v1438
        %1440 = vmatprep.mubr.bf16.mxu0 0
        %1441 = vmatmul.mubr.bf16.gmra.mrb[0].mxu0 %v939
        %v1442 = vpop.f32.mrb[0].mxu0
        %v1443 = vadd.f32 %v1021, %v1442
        %v1444 = vpop.f32.mrb[0].mxu0
        %v1445 = vadd.f32 %v1025, %v1444
        %v1446 = vpop.f32.mrb[0].mxu0
        %v1447 = vadd.f32 %v1021, %v1446
        %v1448 = vpop.f32.mrb[0].mxu0
        %v1449 = vadd.f32 %v1025, %v1448
        %1450 = vmatprep.mubr.bf16.mxu0 0
        %1451 = vmatmul.mubr.bf16.gmra.mrb[0].mxu0 %v940
        %v1452 = vpop.f32.mrb[0].mxu0
        %v1453 = vadd.f32 %v1021, %v1452
        %v1454 = vpop.f32.mrb[0].mxu0
        %v1455 = vadd.f32 %v1025, %v1454
        %v1456 = vpop.f32.mrb[0].mxu0
        %v1457 = vadd.f32 %v1021, %v1456
        %v1458 = vpop.f32.mrb[0].mxu0
        %v1459 = vadd.f32 %v1025, %v1458
        %1460 = vmatprep.mubr.bf16.mxu0 0
        %1461 = vmatmul.mubr.bf16.gmra.mrb[0].mxu0 %v941
        %v1462 = vpop.f32.mrb[0].mxu0
        %v1463 = vadd.f32 %v1021, %v1462
        %v1464 = vpop.f32.mrb[0].mxu0
        %v1465 = vadd.f32 %v1025, %v1464
        %v1466 = vpop.f32.mrb[0].mxu0
        %v1467 = vadd.f32 %v1021, %v1466
        %v1468 = vpop.f32.mrb[0].mxu0
        %v1469 = vadd.f32 %v1025, %v1468
        %1470 = vmatprep.mubr.bf16.mxu0 0
        %1471 = vmatmul.mubr.bf16.gmra.mrb[0].mxu0 %v942
        %v1472 = vpop.f32.mrb[0].mxu0
        %v1473 = vadd.f32 %v1021, %v1472
        %v1474 = vpop.f32.mrb[0].mxu0
        %v1475 = vadd.f32 %v1025, %v1474
        %v1476 = vpop.f32.mrb[0].mxu0
        %v1477 = vadd.f32 %v1021, %v1476
        %v1478 = vpop.f32.mrb[0].mxu0
        %v1479 = vadd.f32 %v1025, %v1478
        %1480 = vmatprep.mubr.bf16.mxu0 0
        %1481 = vmatmul.mubr.bf16.gmra.mrb[0].mxu0 %v943
        %v1482 = vpop.f32.mrb[0].mxu0
        %v1483 = vadd.f32 %v1021, %v1482
        %v1484 = vpop.f32.mrb[0].mxu0
        %v1485 = vadd.f32 %v1025, %v1484
        %v1486 = vpop.f32.mrb[0].mxu0
        %v1487 = vadd.f32 %v1021, %v1486
        %v1488 = vpop.f32.mrb[0].mxu0
        %v1489 = vadd.f32 %v1025, %v1488
        %1490 = vmatprep.mubr.bf16.mxu0 0
        %1491 = vmatmul.mubr.bf16.gmra.mrb[0].mxu0 %v944
        %v1492 = vpop.f32.mrb[0].mxu0
        %v1493 = vadd.f32 %v1021, %v1492
        %v1494 = vpop.f32.mrb[0].mxu0
        %v1495 = vadd.f32 %v1025, %v1494
        %v1496 = vpop.f32.mrb[0].mxu0
        %v1497 = vadd.f32 %v1021, %v1496
        %v1498 = vpop.f32.mrb[0].mxu0
        %v1499 = vadd.f32 %v1025, %v1498
        %1500 = vmatprep.mubr.bf16.mxu0 0
        %1501 = vmatmul.mubr.bf16.gmra.mrb[0].mxu0 %v945
        %v1502 = vpop.f32.mrb[0].mxu0
        %v1503 = vadd.f32 %v1021, %v1502
        %v1504 = vpop.f32.mrb[0].mxu0
        %v1505 = vadd.f32 %v1025, %v1504
        %v1506 = vpop.f32.mrb[0].mxu0
        %v1507 = vadd.f32 %v1021, %v1506
        %v1508 = vpop.f32.mrb[0].mxu0
        %v1509 = vadd.f32 %v1025, %v1508
        %1510 = vmatprep.mubr.bf16.mxu0 0
        %1511 = vmatmul.mubr.bf16.gmra.mrb[0].mxu0 %v946
        %v1512 = vpop.f32.mrb[0].mxu0
        %v1513 = vadd.f32 %v1021, %v1512
        %v1514 = vpop.f32.mrb[0].mxu0
        %v1515 = vadd.f32 %v1025, %v1514
        %v1516 = vpop.f32.mrb[0].mxu0
        %v1517 = vadd.f32 %v1021, %v1516
        %v1518 = vpop.f32.mrb[0].mxu0
        %v1519 = vadd.f32 %v1025, %v1518
        %1520 = vmatprep.mubr.bf16.mxu0 0
        %1521 = vmatmul.mubr.bf16.gmra.mrb[0].mxu0 %v947
        %v1522 = vpop.f32.mrb[0].mxu0
        %v1523 = vadd.f32 %v1021, %v1522
        %v1524 = vpop.f32.mrb[0].mxu0
        %v1525 = vadd.f32 %v1025, %v1524
        %v1526 = vpop.f32.mrb[0].mxu0
        %v1527 = vadd.f32 %v1021, %v1526
        %v1528 = vpop.f32.mrb[0].mxu0
        %v1529 = vadd.f32 %v1025, %v1528
        %1530 = vmatprep.mubr.bf16.mxu0 0
        %1531 = vmatmul.mubr.bf16.gmra.mrb[0].mxu0 %v948
        %v1532 = vpop.f32.mrb[0].mxu0
        %v1533 = vadd.f32 %v1021, %v1532
        %v1534 = vpop.f32.mrb[0].mxu0
        %v1535 = vadd.f32 %v1025, %v1534
        %v1536 = vpop.f32.mrb[0].mxu0
        %v1537 = vadd.f32 %v1021, %v1536
        %v1538 = vpop.f32.mrb[0].mxu0
        %v1539 = vadd.f32 %v1025, %v1538
        %1540 = vmatprep.mubr.bf16.mxu0 0
        %1541 = vmatmul.mubr.bf16.gmra.mrb[0].mxu0 %v949
        %v1542 = vpop.f32.mrb[0].mxu0
        %v1543 = vadd.f32 %v1021, %v1542
        %v1544 = vpop.f32.mrb[0].mxu0
        %v1545 = vadd.f32 %v1025, %v1544
        %v1546 = vpop.f32.mrb[0].mxu0
        %v1547 = vadd.f32 %v1021, %v1546
        %v1548 = vpop.f32.mrb[0].mxu0
        %v1549 = vadd.f32 %v1025, %v1548
        %1550 = vmatprep.mubr.bf16.mxu0 0
        %1551 = vmatmul.mubr.bf16.gmra.mrb[0].mxu0 %v950
        %v1552 = vpop.f32.mrb[0].mxu0
        %v1553 = vadd.f32 %v1021, %v1552
        %v1554 = vpop.f32.mrb[0].mxu0
        %v1555 = vadd.f32 %v1025, %v1554
        %v1556 = vpop.f32.mrb[0].mxu0
        %v1557 = vadd.f32 %v1021, %v1556
        %v1558 = vpop.f32.mrb[0].mxu0
        %v1559 = vadd.f32 %v1025, %v1558
        %1560 = vmatprep.mubr.bf16.mxu0 0
        %1561 = vmatmul.mubr.bf16.gmra.mrb[0].mxu0 %v951
        %v1562 = vpop.f32.mrb[0].mxu0
        %v1563 = vadd.f32 %v1021, %v1562
        %v1564 = vpop.f32.mrb[0].mxu0
        %v1565 = vadd.f32 %v1025, %v1564
        %v1566 = vpop.f32.mrb[0].mxu0
        %v1567 = vadd.f32 %v1021, %v1566
        %v1568 = vpop.f32.mrb[0].mxu0
        %v1569 = vadd.f32 %v1025, %v1568
        %1570 = vdwg.mxu0
        %1571 = vmatprep.subr.bf16.mxu0 %v1253
        %1572 = vmatpush1.bf16.msra.mxu0 %v1252
        %1573 = vmatprep.subr.bf16.mxu0 %v1261
        %1574 = vmatpush1.bf16.msra.mxu0 %v1260
        %1575 = vmatprep.subr.bf16.mxu0 %v1269
        %1576 = vmatpush1.bf16.msra.mxu0 %v1268
        %1577 = vmatprep.subr.bf16.mxu0 %v1277
        %1578 = vmatpush1.bf16.msra.mxu0 %v1276
        %1579 = vmatprep.subr.bf16.mxu0 %v1285
        %1580 = vmatpush1.bf16.msra.mxu0 %v1284
        %1581 = vmatprep.subr.bf16.mxu0 %v1293
        %1582 = vmatpush1.bf16.msra.mxu0 %v1292
        %1583 = vmatprep.subr.bf16.mxu0 %v1301
        %1584 = vmatpush1.bf16.msra.mxu0 %v1300
        %1585 = vmatprep.subr.bf16.mxu0 %v1309
        %1586 = vmatpush1.bf16.msra.mxu0 %v1308
        %1587 = vmatprep.subr.bf16.mxu0 0
        %1588 = vmatpush1.bf16.msra.mxu0 0
        %1589 = vmatprep.subr.bf16.mxu0 0
        %1590 = vmatpush1.bf16.msra.mxu0 0
        %1591 = vmatprep.subr.bf16.mxu0 0
        %1592 = vmatpush1.bf16.msra.mxu0 0
        %1593 = vmatprep.subr.bf16.mxu0 0
        %1594 = vmatpush1.bf16.msra.mxu0 0
        %1595 = vmatprep.subr.bf16.mxu0 0
        %1596 = vmatpush1.bf16.msra.mxu0 0
        %1597 = vmatprep.subr.bf16.mxu0 0
        %1598 = vmatpush1.bf16.msra.mxu0 0
        %1599 = vmatprep.subr.bf16.mxu0 0
        %1600 = vmatpush1.bf16.msra.mxu0 0
        %1601 = vmatprep.subr.bf16.mxu0 0
        %1602 = vmatpush1.bf16.msra.mxu0 0
        %1603 = vmatprep.mubr.bf16.mxu0 0
        %1604 = vmatmul.mubr.bf16.gmra.mrb[0].mxu0 %v936
        %v1605 = vpop.f32.mrb[0].mxu0
        %v1606 = vadd.f32 %v1029, %v1605
        %v1607 = vpop.f32.mrb[0].mxu0
        %v1608 = vadd.f32 %v1033, %v1607
        %v1609 = vpop.f32.mrb[0].mxu0
        %v1610 = vadd.f32 %v1029, %v1609
        %v1611 = vpop.f32.mrb[0].mxu0
        %v1612 = vadd.f32 %v1033, %v1611
        %1613 = vmatprep.mubr.bf16.mxu0 0
        %1614 = vmatmul.mubr.bf16.gmra.mrb[0].mxu0 %v937
        %v1615 = vpop.f32.mrb[0].mxu0
        %v1616 = vadd.f32 %v1029, %v1615
        %v1617 = vpop.f32.mrb[0].mxu0
        %v1618 = vadd.f32 %v1033, %v1617
        %v1619 = vpop.f32.mrb[0].mxu0
        %v1620 = vadd.f32 %v1029, %v1619
        %v1621 = vpop.f32.mrb[0].mxu0
        %v1622 = vadd.f32 %v1033, %v1621
        %1623 = vmatprep.mubr.bf16.mxu0 0
        %1624 = vmatmul.mubr.bf16.gmra.mrb[0].mxu0 %v938
        %v1625 = vpop.f32.mrb[0].mxu0
        %v1626 = vadd.f32 %v1029, %v1625
        %v1627 = vpop.f32.mrb[0].mxu0
        %v1628 = vadd.f32 %v1033, %v1627
        %v1629 = vpop.f32.mrb[0].mxu0
        %v1630 = vadd.f32 %v1029, %v1629
        %v1631 = vpop.f32.mrb[0].mxu0
        %v1632 = vadd.f32 %v1033, %v1631
        %1633 = vmatprep.mubr.bf16.mxu0 0
        %1634 = vmatmul.mubr.bf16.gmra.mrb[0].mxu0 %v939
        %v1635 = vpop.f32.mrb[0].mxu0
        %v1636 = vadd.f32 %v1029, %v1635
        %v1637 = vpop.f32.mrb[0].mxu0
        %v1638 = vadd.f32 %v1033, %v1637
        %v1639 = vpop.f32.mrb[0].mxu0
        %v1640 = vadd.f32 %v1029, %v1639
        %v1641 = vpop.f32.mrb[0].mxu0
        %v1642 = vadd.f32 %v1033, %v1641
        %1643 = vmatprep.mubr.bf16.mxu0 0
        %1644 = vmatmul.mubr.bf16.gmra.mrb[0].mxu0 %v940
        %v1645 = vpop.f32.mrb[0].mxu0
        %v1646 = vadd.f32 %v1029, %v1645
        %v1647 = vpop.f32.mrb[0].mxu0
        %v1648 = vadd.f32 %v1033, %v1647
        %v1649 = vpop.f32.mrb[0].mxu0
        %v1650 = vadd.f32 %v1029, %v1649
        %v1651 = vpop.f32.mrb[0].mxu0
        %v1652 = vadd.f32 %v1033, %v1651
        %1653 = vmatprep.mubr.bf16.mxu0 0
        %1654 = vmatmul.mubr.bf16.gmra.mrb[0].mxu0 %v941
        %v1655 = vpop.f32.mrb[0].mxu0
        %v1656 = vadd.f32 %v1029, %v1655
        %v1657 = vpop.f32.mrb[0].mxu0
        %v1658 = vadd.f32 %v1033, %v1657
        %v1659 = vpop.f32.mrb[0].mxu0
        %v1660 = vadd.f32 %v1029, %v1659
        %v1661 = vpop.f32.mrb[0].mxu0
        %v1662 = vadd.f32 %v1033, %v1661
        %1663 = vmatprep.mubr.bf16.mxu0 0
        %1664 = vmatmul.mubr.bf16.gmra.mrb[0].mxu0 %v942
        %v1665 = vpop.f32.mrb[0].mxu0
        %v1666 = vadd.f32 %v1029, %v1665
        %v1667 = vpop.f32.mrb[0].mxu0
        %v1668 = vadd.f32 %v1033, %v1667
        %v1669 = vpop.f32.mrb[0].mxu0
        %v1670 = vadd.f32 %v1029, %v1669
        %v1671 = vpop.f32.mrb[0].mxu0
        %v1672 = vadd.f32 %v1033, %v1671
        %1673 = vmatprep.mubr.bf16.mxu0 0
        %1674 = vmatmul.mubr.bf16.gmra.mrb[0].mxu0 %v943
        %v1675 = vpop.f32.mrb[0].mxu0
        %v1676 = vadd.f32 %v1029, %v1675
        %v1677 = vpop.f32.mrb[0].mxu0
        %v1678 = vadd.f32 %v1033, %v1677
        %v1679 = vpop.f32.mrb[0].mxu0
        %v1680 = vadd.f32 %v1029, %v1679
        %v1681 = vpop.f32.mrb[0].mxu0
        %v1682 = vadd.f32 %v1033, %v1681
        %1683 = vmatprep.mubr.bf16.mxu0 0
        %1684 = vmatmul.mubr.bf16.gmra.mrb[0].mxu0 %v944
        %v1685 = vpop.f32.mrb[0].mxu0
        %v1686 = vadd.f32 %v1029, %v1685
        %v1687 = vpop.f32.mrb[0].mxu0
        %v1688 = vadd.f32 %v1033, %v1687
        %v1689 = vpop.f32.mrb[0].mxu0
        %v1690 = vadd.f32 %v1029, %v1689
        %v1691 = vpop.f32.mrb[0].mxu0
        %v1692 = vadd.f32 %v1033, %v1691
        %1693 = vmatprep.mubr.bf16.mxu0 0
        %1694 = vmatmul.mubr.bf16.gmra.mrb[0].mxu0 %v945
        %v1695 = vpop.f32.mrb[0].mxu0
        %v1696 = vadd.f32 %v1029, %v1695
        %v1697 = vpop.f32.mrb[0].mxu0
        %v1698 = vadd.f32 %v1033, %v1697
        %v1699 = vpop.f32.mrb[0].mxu0
        %v1700 = vadd.f32 %v1029, %v1699
        %v1701 = vpop.f32.mrb[0].mxu0
        %v1702 = vadd.f32 %v1033, %v1701
        %1703 = vmatprep.mubr.bf16.mxu0 0
        %1704 = vmatmul.mubr.bf16.gmra.mrb[0].mxu0 %v946
        %v1705 = vpop.f32.mrb[0].mxu0
        %v1706 = vadd.f32 %v1029, %v1705
        %v1707 = vpop.f32.mrb[0].mxu0
        %v1708 = vadd.f32 %v1033, %v1707
        %v1709 = vpop.f32.mrb[0].mxu0
        %v1710 = vadd.f32 %v1029, %v1709
        %v1711 = vpop.f32.mrb[0].mxu0
        %v1712 = vadd.f32 %v1033, %v1711
        %1713 = vmatprep.mubr.bf16.mxu0 0
        %1714 = vmatmul.mubr.bf16.gmra.mrb[0].mxu0 %v947
        %v1715 = vpop.f32.mrb[0].mxu0
        %v1716 = vadd.f32 %v1029, %v1715
        %v1717 = vpop.f32.mrb[0].mxu0
        %v1718 = vadd.f32 %v1033, %v1717
        %v1719 = vpop.f32.mrb[0].mxu0
        %v1720 = vadd.f32 %v1029, %v1719
        %v1721 = vpop.f32.mrb[0].mxu0
        %v1722 = vadd.f32 %v1033, %v1721
        %1723 = vmatprep.mubr.bf16.mxu0 0
        %1724 = vmatmul.mubr.bf16.gmra.mrb[0].mxu0 %v948
        %v1725 = vpop.f32.mrb[0].mxu0
        %v1726 = vadd.f32 %v1029, %v1725
        %v1727 = vpop.f32.mrb[0].mxu0
        %v1728 = vadd.f32 %v1033, %v1727
        %v1729 = vpop.f32.mrb[0].mxu0
        %v1730 = vadd.f32 %v1029, %v1729
        %v1731 = vpop.f32.mrb[0].mxu0
        %v1732 = vadd.f32 %v1033, %v1731
        %1733 = vmatprep.mubr.bf16.mxu0 0
        %1734 = vmatmul.mubr.bf16.gmra.mrb[0].mxu0 %v949
        %v1735 = vpop.f32.mrb[0].mxu0
        %v1736 = vadd.f32 %v1029, %v1735
        %v1737 = vpop.f32.mrb[0].mxu0
        %v1738 = vadd.f32 %v1033, %v1737
        %v1739 = vpop.f32.mrb[0].mxu0
        %v1740 = vadd.f32 %v1029, %v1739
        %v1741 = vpop.f32.mrb[0].mxu0
        %v1742 = vadd.f32 %v1033, %v1741
        %1743 = vmatprep.mubr.bf16.mxu0 0
        %1744 = vmatmul.mubr.bf16.gmra.mrb[0].mxu0 %v950
        %v1745 = vpop.f32.mrb[0].mxu0
        %v1746 = vadd.f32 %v1029, %v1745
        %v1747 = vpop.f32.mrb[0].mxu0
        %v1748 = vadd.f32 %v1033, %v1747
        %v1749 = vpop.f32.mrb[0].mxu0
        %v1750 = vadd.f32 %v1029, %v1749
        %v1751 = vpop.f32.mrb[0].mxu0
        %v1752 = vadd.f32 %v1033, %v1751
        %1753 = vmatprep.mubr.bf16.mxu0 0
        %1754 = vmatmul.mubr.bf16.gmra.mrb[0].mxu0 %v951
        %v1755 = vpop.f32.mrb[0].mxu0
        %v1756 = vadd.f32 %v1029, %v1755
        %v1757 = vpop.f32.mrb[0].mxu0
        %v1758 = vadd.f32 %v1033, %v1757
        %v1759 = vpop.f32.mrb[0].mxu0
        %v1760 = vadd.f32 %v1029, %v1759
        %v1761 = vpop.f32.mrb[0].mxu0
        %v1762 = vadd.f32 %v1033, %v1761
        %1763 = vdwg.mxu0
        %1764 = vmatprep.subr.bf16.mxu0 %v1255
        %1765 = vmatpush1.bf16.msra.mxu0 %v1254
        %1766 = vmatprep.subr.bf16.mxu0 %v1263
        %1767 = vmatpush1.bf16.msra.mxu0 %v1262
        %1768 = vmatprep.subr.bf16.mxu0 %v1271
        %1769 = vmatpush1.bf16.msra.mxu0 %v1270
        %1770 = vmatprep.subr.bf16.mxu0 %v1279
        %1771 = vmatpush1.bf16.msra.mxu0 %v1278
        %1772 = vmatprep.subr.bf16.mxu0 %v1287
        %1773 = vmatpush1.bf16.msra.mxu0 %v1286
        %1774 = vmatprep.subr.bf16.mxu0 %v1295
        %1775 = vmatpush1.bf16.msra.mxu0 %v1294
        %1776 = vmatprep.subr.bf16.mxu0 %v1303
        %1777 = vmatpush1.bf16.msra.mxu0 %v1302
        %1778 = vmatprep.subr.bf16.mxu0 %v1311
        %1779 = vmatpush1.bf16.msra.mxu0 %v1310
        %1780 = vmatprep.subr.bf16.mxu0 0
        %1781 = vmatpush1.bf16.msra.mxu0 0
        %1782 = vmatprep.subr.bf16.mxu0 0
        %1783 = vmatpush1.bf16.msra.mxu0 0
        %1784 = vmatprep.subr.bf16.mxu0 0
        %1785 = vmatpush1.bf16.msra.mxu0 0
        %1786 = vmatprep.subr.bf16.mxu0 0
        %1787 = vmatpush1.bf16.msra.mxu0 0
        %1788 = vmatprep.subr.bf16.mxu0 0
        %1789 = vmatpush1.bf16.msra.mxu0 0
        %1790 = vmatprep.subr.bf16.mxu0 0
        %1791 = vmatpush1.bf16.msra.mxu0 0
        %1792 = vmatprep.subr.bf16.mxu0 0
        %1793 = vmatpush1.bf16.msra.mxu0 0
        %1794 = vmatprep.subr.bf16.mxu0 0
        %1795 = vmatpush1.bf16.msra.mxu0 0
        %1796 = vmatprep.mubr.bf16.mxu0 0
        %1797 = vmatmul.mubr.bf16.gmra.mrb[0].mxu0 %v936
        %v1798 = vpop.f32.mrb[0].mxu0
        %v1799 = vadd.f32 %v1037, %v1798
        %v1800 = vpop.f32.mrb[0].mxu0
        %v1801 = vadd.f32 %v1041, %v1800
        %v1802 = vpop.f32.mrb[0].mxu0
        %v1803 = vadd.f32 %v1037, %v1802
        %v1804 = vpop.f32.mrb[0].mxu0
        %v1805 = vadd.f32 %v1041, %v1804
        %1806 = vmatprep.mubr.bf16.mxu0 0
        %1807 = vmatmul.mubr.bf16.gmra.mrb[0].mxu0 %v937
        %v1808 = vpop.f32.mrb[0].mxu0
        %v1809 = vadd.f32 %v1037, %v1808
        %v1810 = vpop.f32.mrb[0].mxu0
        %v1811 = vadd.f32 %v1041, %v1810
        %v1812 = vpop.f32.mrb[0].mxu0
        %v1813 = vadd.f32 %v1037, %v1812
        %v1814 = vpop.f32.mrb[0].mxu0
        %v1815 = vadd.f32 %v1041, %v1814
        %1816 = vmatprep.mubr.bf16.mxu0 0
        %1817 = vmatmul.mubr.bf16.gmra.mrb[0].mxu0 %v938
        %v1818 = vpop.f32.mrb[0].mxu0
        %v1819 = vadd.f32 %v1037, %v1818
        %v1820 = vpop.f32.mrb[0].mxu0
        %v1821 = vadd.f32 %v1041, %v1820
        %v1822 = vpop.f32.mrb[0].mxu0
        %v1823 = vadd.f32 %v1037, %v1822
        %v1824 = vpop.f32.mrb[0].mxu0
        %v1825 = vadd.f32 %v1041, %v1824
        %1826 = vmatprep.mubr.bf16.mxu0 0
        %1827 = vmatmul.mubr.bf16.gmra.mrb[0].mxu0 %v939
        %v1828 = vpop.f32.mrb[0].mxu0
        %v1829 = vadd.f32 %v1037, %v1828
        %v1830 = vpop.f32.mrb[0].mxu0
        %v1831 = vadd.f32 %v1041, %v1830
        %v1832 = vpop.f32.mrb[0].mxu0
        %v1833 = vadd.f32 %v1037, %v1832
        %v1834 = vpop.f32.mrb[0].mxu0
        %v1835 = vadd.f32 %v1041, %v1834
        %1836 = vmatprep.mubr.bf16.mxu0 0
        %1837 = vmatmul.mubr.bf16.gmra.mrb[0].mxu0 %v940
        %v1838 = vpop.f32.mrb[0].mxu0
        %v1839 = vadd.f32 %v1037, %v1838
        %v1840 = vpop.f32.mrb[0].mxu0
        %v1841 = vadd.f32 %v1041, %v1840
        %v1842 = vpop.f32.mrb[0].mxu0
        %v1843 = vadd.f32 %v1037, %v1842
        %v1844 = vpop.f32.mrb[0].mxu0
        %v1845 = vadd.f32 %v1041, %v1844
        %1846 = vmatprep.mubr.bf16.mxu0 0
        %1847 = vmatmul.mubr.bf16.gmra.mrb[0].mxu0 %v941
        %v1848 = vpop.f32.mrb[0].mxu0
        %v1849 = vadd.f32 %v1037, %v1848
        %v1850 = vpop.f32.mrb[0].mxu0
        %v1851 = vadd.f32 %v1041, %v1850
        %v1852 = vpop.f32.mrb[0].mxu0
        %v1853 = vadd.f32 %v1037, %v1852
        %v1854 = vpop.f32.mrb[0].mxu0
        %v1855 = vadd.f32 %v1041, %v1854
        %1856 = vmatprep.mubr.bf16.mxu0 0
        %1857 = vmatmul.mubr.bf16.gmra.mrb[0].mxu0 %v942
        %v1858 = vpop.f32.mrb[0].mxu0
        %v1859 = vadd.f32 %v1037, %v1858
        %v1860 = vpop.f32.mrb[0].mxu0
        %v1861 = vadd.f32 %v1041, %v1860
        %v1862 = vpop.f32.mrb[0].mxu0
        %v1863 = vadd.f32 %v1037, %v1862
        %v1864 = vpop.f32.mrb[0].mxu0
        %v1865 = vadd.f32 %v1041, %v1864
        %1866 = vmatprep.mubr.bf16.mxu0 0
        %1867 = vmatmul.mubr.bf16.gmra.mrb[0].mxu0 %v943
        %v1868 = vpop.f32.mrb[0].mxu0
        %v1869 = vadd.f32 %v1037, %v1868
        %v1870 = vpop.f32.mrb[0].mxu0
        %v1871 = vadd.f32 %v1041, %v1870
        %v1872 = vpop.f32.mrb[0].mxu0
        %v1873 = vadd.f32 %v1037, %v1872
        %v1874 = vpop.f32.mrb[0].mxu0
        %v1875 = vadd.f32 %v1041, %v1874
        %1876 = vmatprep.mubr.bf16.mxu0 0
        %1877 = vmatmul.mubr.bf16.gmra.mrb[0].mxu0 %v944
        %v1878 = vpop.f32.mrb[0].mxu0
        %v1879 = vadd.f32 %v1037, %v1878
        %v1880 = vpop.f32.mrb[0].mxu0
        %v1881 = vadd.f32 %v1041, %v1880
        %v1882 = vpop.f32.mrb[0].mxu0
        %v1883 = vadd.f32 %v1037, %v1882
        %v1884 = vpop.f32.mrb[0].mxu0
        %v1885 = vadd.f32 %v1041, %v1884
        %1886 = vmatprep.mubr.bf16.mxu0 0
        %1887 = vmatmul.mubr.bf16.gmra.mrb[0].mxu0 %v945
        %v1888 = vpop.f32.mrb[0].mxu0
        %v1889 = vadd.f32 %v1037, %v1888
        %v1890 = vpop.f32.mrb[0].mxu0
        %v1891 = vadd.f32 %v1041, %v1890
        %v1892 = vpop.f32.mrb[0].mxu0
        %v1893 = vadd.f32 %v1037, %v1892
        %v1894 = vpop.f32.mrb[0].mxu0
        %v1895 = vadd.f32 %v1041, %v1894
        %1896 = vmatprep.mubr.bf16.mxu0 0
        %1897 = vmatmul.mubr.bf16.gmra.mrb[0].mxu0 %v946
        %v1898 = vpop.f32.mrb[0].mxu0
        %v1899 = vadd.f32 %v1037, %v1898
        %v1900 = vpop.f32.mrb[0].mxu0
        %v1901 = vadd.f32 %v1041, %v1900
        %v1902 = vpop.f32.mrb[0].mxu0
        %v1903 = vadd.f32 %v1037, %v1902
        %v1904 = vpop.f32.mrb[0].mxu0
        %v1905 = vadd.f32 %v1041, %v1904
        %1906 = vmatprep.mubr.bf16.mxu0 0
        %1907 = vmatmul.mubr.bf16.gmra.mrb[0].mxu0 %v947
        %v1908 = vpop.f32.mrb[0].mxu0
        %v1909 = vadd.f32 %v1037, %v1908
        %v1910 = vpop.f32.mrb[0].mxu0
        %v1911 = vadd.f32 %v1041, %v1910
        %v1912 = vpop.f32.mrb[0].mxu0
        %v1913 = vadd.f32 %v1037, %v1912
        %v1914 = vpop.f32.mrb[0].mxu0
        %v1915 = vadd.f32 %v1041, %v1914
        %1916 = vmatprep.mubr.bf16.mxu0 0
        %1917 = vmatmul.mubr.bf16.gmra.mrb[0].mxu0 %v948
        %v1918 = vpop.f32.mrb[0].mxu0
        %v1919 = vadd.f32 %v1037, %v1918
        %v1920 = vpop.f32.mrb[0].mxu0
        %v1921 = vadd.f32 %v1041, %v1920
        %v1922 = vpop.f32.mrb[0].mxu0
        %v1923 = vadd.f32 %v1037, %v1922
        %v1924 = vpop.f32.mrb[0].mxu0
        %v1925 = vadd.f32 %v1041, %v1924
        %1926 = vmatprep.mubr.bf16.mxu0 0
        %1927 = vmatmul.mubr.bf16.gmra.mrb[0].mxu0 %v949
        %v1928 = vpop.f32.mrb[0].mxu0
        %v1929 = vadd.f32 %v1037, %v1928
        %v1930 = vpop.f32.mrb[0].mxu0
        %v1931 = vadd.f32 %v1041, %v1930
        %v1932 = vpop.f32.mrb[0].mxu0
        %v1933 = vadd.f32 %v1037, %v1932
        %v1934 = vpop.f32.mrb[0].mxu0
        %v1935 = vadd.f32 %v1041, %v1934
        %1936 = vmatprep.mubr.bf16.mxu0 0
        %1937 = vmatmul.mubr.bf16.gmra.mrb[0].mxu0 %v950
        %v1938 = vpop.f32.mrb[0].mxu0
        %v1939 = vadd.f32 %v1037, %v1938
        %v1940 = vpop.f32.mrb[0].mxu0
        %v1941 = vadd.f32 %v1041, %v1940
        %v1942 = vpop.f32.mrb[0].mxu0
        %v1943 = vadd.f32 %v1037, %v1942
        %v1944 = vpop.f32.mrb[0].mxu0
        %v1945 = vadd.f32 %v1041, %v1944
        %1946 = vmatprep.mubr.bf16.mxu0 0
        %1947 = vmatmul.mubr.bf16.gmra.mrb[0].mxu0 %v951
        %v1948 = vpop.f32.mrb[0].mxu0
        %v1949 = vadd.f32 %v1037, %v1948
        %v1950 = vpop.f32.mrb[0].mxu0
        %v1951 = vadd.f32 %v1041, %v1950
        %v1952 = vpop.f32.mrb[0].mxu0
        %v1953 = vadd.f32 %v1037, %v1952
        %v1954 = vpop.f32.mrb[0].mxu0
        %v1955 = vadd.f32 %v1041, %v1954
        %1956 = vdwg.mxu0
        %1957 = vmatprep.subr.bf16.mxu0 %v1257
        %1958 = vmatpush1.bf16.msra.mxu0 %v1256
        %1959 = vmatprep.subr.bf16.mxu0 %v1265
        %1960 = vmatpush1.bf16.msra.mxu0 %v1264
        %1961 = vmatprep.subr.bf16.mxu0 %v1273
        %1962 = vmatpush1.bf16.msra.mxu0 %v1272
        %1963 = vmatprep.subr.bf16.mxu0 %v1281
        %1964 = vmatpush1.bf16.msra.mxu0 %v1280
        %1965 = vmatprep.subr.bf16.mxu0 %v1289
        %1966 = vmatpush1.bf16.msra.mxu0 %v1288
        %1967 = vmatprep.subr.bf16.mxu0 %v1297
        %1968 = vmatpush1.bf16.msra.mxu0 %v1296
        %1969 = vmatprep.subr.bf16.mxu0 %v1305
        %1970 = vmatpush1.bf16.msra.mxu0 %v1304
        %1971 = vmatprep.subr.bf16.mxu0 %v1313
        %1972 = vmatpush1.bf16.msra.mxu0 %v1312
        %1973 = vmatprep.subr.bf16.mxu0 0
        %1974 = vmatpush1.bf16.msra.mxu0 0
        %1975 = vmatprep.subr.bf16.mxu0 0
        %1976 = vmatpush1.bf16.msra.mxu0 0
        %1977 = vmatprep.subr.bf16.mxu0 0
        %1978 = vmatpush1.bf16.msra.mxu0 0
        %1979 = vmatprep.subr.bf16.mxu0 0
        %1980 = vmatpush1.bf16.msra.mxu0 0
        %1981 = vmatprep.subr.bf16.mxu0 0
        %1982 = vmatpush1.bf16.msra.mxu0 0
        %1983 = vmatprep.subr.bf16.mxu0 0
        %1984 = vmatpush1.bf16.msra.mxu0 0
        %1985 = vmatprep.subr.bf16.mxu0 0
        %1986 = vmatpush1.bf16.msra.mxu0 0
        %1987 = vmatprep.subr.bf16.mxu0 0
        %1988 = vmatpush1.bf16.msra.mxu0 0
        %1989 = vmatprep.mubr.bf16.mxu0 0
        %1990 = vmatmul.mubr.bf16.gmra.mrb[0].mxu0 %v936
        %v1991 = vpop.f32.mrb[0].mxu0
        %v1992 = vadd.f32 %v1045, %v1991
        %v1993 = vpop.f32.mrb[0].mxu0
        %v1994 = vadd.f32 %v1049, %v1993
        %v1995 = vpop.f32.mrb[0].mxu0
        %v1996 = vadd.f32 %v1045, %v1995
        %v1997 = vpop.f32.mrb[0].mxu0
        %v1998 = vadd.f32 %v1049, %v1997
        %1999 = vmatprep.mubr.bf16.mxu0 0
        %2000 = vmatmul.mubr.bf16.gmra.mrb[0].mxu0 %v937
        %v2001 = vpop.f32.mrb[0].mxu0
        %v2002 = vadd.f32 %v1045, %v2001
        %v2003 = vpop.f32.mrb[0].mxu0
        %v2004 = vadd.f32 %v1049, %v2003
        %v2005 = vpop.f32.mrb[0].mxu0
        %v2006 = vadd.f32 %v1045, %v2005
        %v2007 = vpop.f32.mrb[0].mxu0
        %v2008 = vadd.f32 %v1049, %v2007
        %2009 = vmatprep.mubr.bf16.mxu0 0
        %2010 = vmatmul.mubr.bf16.gmra.mrb[0].mxu0 %v938
        %v2011 = vpop.f32.mrb[0].mxu0
        %v2012 = vadd.f32 %v1045, %v2011
        %v2013 = vpop.f32.mrb[0].mxu0
        %v2014 = vadd.f32 %v1049, %v2013
        %v2015 = vpop.f32.mrb[0].mxu0
        %v2016 = vadd.f32 %v1045, %v2015
        %v2017 = vpop.f32.mrb[0].mxu0
        %v2018 = vadd.f32 %v1049, %v2017
        %2019 = vmatprep.mubr.bf16.mxu0 0
        %2020 = vmatmul.mubr.bf16.gmra.mrb[0].mxu0 %v939
        %v2021 = vpop.f32.mrb[0].mxu0
        %v2022 = vadd.f32 %v1045, %v2021
        %v2023 = vpop.f32.mrb[0].mxu0
        %v2024 = vadd.f32 %v1049, %v2023
        %v2025 = vpop.f32.mrb[0].mxu0
        %v2026 = vadd.f32 %v1045, %v2025
        %v2027 = vpop.f32.mrb[0].mxu0
        %v2028 = vadd.f32 %v1049, %v2027
        %2029 = vmatprep.mubr.bf16.mxu0 0
        %2030 = vmatmul.mubr.bf16.gmra.mrb[0].mxu0 %v940
        %v2031 = vpop.f32.mrb[0].mxu0
        %v2032 = vadd.f32 %v1045, %v2031
        %v2033 = vpop.f32.mrb[0].mxu0
        %v2034 = vadd.f32 %v1049, %v2033
        %v2035 = vpop.f32.mrb[0].mxu0
        %v2036 = vadd.f32 %v1045, %v2035
        %v2037 = vpop.f32.mrb[0].mxu0
        %v2038 = vadd.f32 %v1049, %v2037
        %2039 = vmatprep.mubr.bf16.mxu0 0
        %2040 = vmatmul.mubr.bf16.gmra.mrb[0].mxu0 %v941
        %v2041 = vpop.f32.mrb[0].mxu0
        %v2042 = vadd.f32 %v1045, %v2041
        %v2043 = vpop.f32.mrb[0].mxu0
        %v2044 = vadd.f32 %v1049, %v2043
        %v2045 = vpop.f32.mrb[0].mxu0
        %v2046 = vadd.f32 %v1045, %v2045
        %v2047 = vpop.f32.mrb[0].mxu0
        %v2048 = vadd.f32 %v1049, %v2047
        %2049 = vmatprep.mubr.bf16.mxu0 0
        %2050 = vmatmul.mubr.bf16.gmra.mrb[0].mxu0 %v942
        %v2051 = vpop.f32.mrb[0].mxu0
        %v2052 = vadd.f32 %v1045, %v2051
        %v2053 = vpop.f32.mrb[0].mxu0
        %v2054 = vadd.f32 %v1049, %v2053
        %v2055 = vpop.f32.mrb[0].mxu0
        %v2056 = vadd.f32 %v1045, %v2055
        %v2057 = vpop.f32.mrb[0].mxu0
        %v2058 = vadd.f32 %v1049, %v2057
        %2059 = vmatprep.mubr.bf16.mxu0 0
        %2060 = vmatmul.mubr.bf16.gmra.mrb[0].mxu0 %v943
        %v2061 = vpop.f32.mrb[0].mxu0
        %v2062 = vadd.f32 %v1045, %v2061
        %v2063 = vpop.f32.mrb[0].mxu0
        %v2064 = vadd.f32 %v1049, %v2063
        %v2065 = vpop.f32.mrb[0].mxu0
        %v2066 = vadd.f32 %v1045, %v2065
        %v2067 = vpop.f32.mrb[0].mxu0
        %v2068 = vadd.f32 %v1049, %v2067
        %2069 = vmatprep.mubr.bf16.mxu0 0
        %2070 = vmatmul.mubr.bf16.gmra.mrb[0].mxu0 %v944
        %v2071 = vpop.f32.mrb[0].mxu0
        %v2072 = vadd.f32 %v1045, %v2071
        %v2073 = vpop.f32.mrb[0].mxu0
        %v2074 = vadd.f32 %v1049, %v2073
        %v2075 = vpop.f32.mrb[0].mxu0
        %v2076 = vadd.f32 %v1045, %v2075
        %v2077 = vpop.f32.mrb[0].mxu0
        %v2078 = vadd.f32 %v1049, %v2077
        %2079 = vmatprep.mubr.bf16.mxu0 0
        %2080 = vmatmul.mubr.bf16.gmra.mrb[0].mxu0 %v945
        %v2081 = vpop.f32.mrb[0].mxu0
        %v2082 = vadd.f32 %v1045, %v2081
        %v2083 = vpop.f32.mrb[0].mxu0
        %v2084 = vadd.f32 %v1049, %v2083
        %v2085 = vpop.f32.mrb[0].mxu0
        %v2086 = vadd.f32 %v1045, %v2085
        %v2087 = vpop.f32.mrb[0].mxu0
        %v2088 = vadd.f32 %v1049, %v2087
        %2089 = vmatprep.mubr.bf16.mxu0 0
        %2090 = vmatmul.mubr.bf16.gmra.mrb[0].mxu0 %v946
        %v2091 = vpop.f32.mrb[0].mxu0
        %v2092 = vadd.f32 %v1045, %v2091
        %v2093 = vpop.f32.mrb[0].mxu0
        %v2094 = vadd.f32 %v1049, %v2093
        %v2095 = vpop.f32.mrb[0].mxu0
        %v2096 = vadd.f32 %v1045, %v2095
        %v2097 = vpop.f32.mrb[0].mxu0
        %v2098 = vadd.f32 %v1049, %v2097
        %2099 = vmatprep.mubr.bf16.mxu0 0
        %2100 = vmatmul.mubr.bf16.gmra.mrb[0].mxu0 %v947
        %v2101 = vpop.f32.mrb[0].mxu0
        %v2102 = vadd.f32 %v1045, %v2101
        %v2103 = vpop.f32.mrb[0].mxu0
        %v2104 = vadd.f32 %v1049, %v2103
        %v2105 = vpop.f32.mrb[0].mxu0
        %v2106 = vadd.f32 %v1045, %v2105
        %v2107 = vpop.f32.mrb[0].mxu0
        %v2108 = vadd.f32 %v1049, %v2107
        %2109 = vmatprep.mubr.bf16.mxu0 0
        %2110 = vmatmul.mubr.bf16.gmra.mrb[0].mxu0 %v948
        %v2111 = vpop.f32.mrb[0].mxu0
        %v2112 = vadd.f32 %v1045, %v2111
        %v2113 = vpop.f32.mrb[0].mxu0
        %v2114 = vadd.f32 %v1049, %v2113
        %v2115 = vpop.f32.mrb[0].mxu0
        %v2116 = vadd.f32 %v1045, %v2115
        %v2117 = vpop.f32.mrb[0].mxu0
        %v2118 = vadd.f32 %v1049, %v2117
        %2119 = vmatprep.mubr.bf16.mxu0 0
        %2120 = vmatmul.mubr.bf16.gmra.mrb[0].mxu0 %v949
        %v2121 = vpop.f32.mrb[0].mxu0
        %v2122 = vadd.f32 %v1045, %v2121
        %v2123 = vpop.f32.mrb[0].mxu0
        %v2124 = vadd.f32 %v1049, %v2123
        %v2125 = vpop.f32.mrb[0].mxu0
        %v2126 = vadd.f32 %v1045, %v2125
        %v2127 = vpop.f32.mrb[0].mxu0
        %v2128 = vadd.f32 %v1049, %v2127
        %2129 = vmatprep.mubr.bf16.mxu0 0
        %2130 = vmatmul.mubr.bf16.gmra.mrb[0].mxu0 %v950
        %v2131 = vpop.f32.mrb[0].mxu0
        %v2132 = vadd.f32 %v1045, %v2131
        %v2133 = vpop.f32.mrb[0].mxu0
        %v2134 = vadd.f32 %v1049, %v2133
        %v2135 = vpop.f32.mrb[0].mxu0
        %v2136 = vadd.f32 %v1045, %v2135
        %v2137 = vpop.f32.mrb[0].mxu0
        %v2138 = vadd.f32 %v1049, %v2137
        %2139 = vmatprep.mubr.bf16.mxu0 0
        %2140 = vmatmul.mubr.bf16.gmra.mrb[0].mxu0 %v951
        %v2141 = vpop.f32.mrb[0].mxu0
        %v2142 = vadd.f32 %v1045, %v2141
        %v2143 = vpop.f32.mrb[0].mxu0
        %v2144 = vadd.f32 %v1049, %v2143
        %v2145 = vpop.f32.mrb[0].mxu0
        %v2146 = vadd.f32 %v1045, %v2145
        %v2147 = vpop.f32.mrb[0].mxu0
        %v2148 = vadd.f32 %v1049, %v2147
        %2149 = vdwg.mxu0
        %v2150 = vmax.f32 %v1413, 0.0
        %v2151 = vmax.f32 %v1415, 0.0
        %v2152 = vmax.f32 %v1606, 0.0
        %v2153 = vmax.f32 %v1608, 0.0
        %v2154 = vmax.f32 %v1799, 0.0
        %v2155 = vmax.f32 %v1801, 0.0
        %v2156 = vmax.f32 %v1992, 0.0
        %v2157 = vmax.f32 %v1994, 0.0
        %v2158 = vmax.f32 %v1417, 0.0
        %v2159 = vmax.f32 %v1419, 0.0
        %v2160 = vmax.f32 %v1610, 0.0
        %v2161 = vmax.f32 %v1612, 0.0
        %v2162 = vmax.f32 %v1803, 0.0
        %v2163 = vmax.f32 %v1805, 0.0
        %v2164 = vmax.f32 %v1996, 0.0
        %v2165 = vmax.f32 %v1998, 0.0
        %v2166 = vmax.f32 %v1423, 0.0
        %v2167 = vmax.f32 %v1425, 0.0
        %v2168 = vmax.f32 %v1616, 0.0
        %v2169 = vmax.f32 %v1618, 0.0
        %v2170 = vmax.f32 %v1809, 0.0
        %v2171 = vmax.f32 %v1811, 0.0
        %v2172 = vmax.f32 %v2002, 0.0
        %v2173 = vmax.f32 %v2004, 0.0
        %v2174 = vmax.f32 %v1427, 0.0
        %v2175 = vmax.f32 %v1429, 0.0
        %v2176 = vmax.f32 %v1620, 0.0
        %v2177 = vmax.f32 %v1622, 0.0
        %v2178 = vmax.f32 %v1813, 0.0
        %v2179 = vmax.f32 %v1815, 0.0
        %v2180 = vmax.f32 %v2006, 0.0
        %v2181 = vmax.f32 %v2008, 0.0
        %v2182 = vmax.f32 %v1433, 0.0
        %v2183 = vmax.f32 %v1435, 0.0
        %v2184 = vmax.f32 %v1626, 0.0
        %v2185 = vmax.f32 %v1628, 0.0
        %v2186 = vmax.f32 %v1819, 0.0
        %v2187 = vmax.f32 %v1821, 0.0
        %v2188 = vmax.f32 %v2012, 0.0
        %v2189 = vmax.f32 %v2014, 0.0
        %v2190 = vmax.f32 %v1437, 0.0
        %v2191 = vmax.f32 %v1439, 0.0
        %v2192 = vmax.f32 %v1630, 0.0
        %v2193 = vmax.f32 %v1632, 0.0
        %v2194 = vmax.f32 %v1823, 0.0
        %v2195 = vmax.f32 %v1825, 0.0
        %v2196 = vmax.f32 %v2016, 0.0
        %v2197 = vmax.f32 %v2018, 0.0
        %v2198 = vmax.f32 %v1443, 0.0
        %v2199 = vmax.f32 %v1445, 0.0
        %v2200 = vmax.f32 %v1636, 0.0
        %v2201 = vmax.f32 %v1638, 0.0
        %v2202 = vmax.f32 %v1829, 0.0
        %v2203 = vmax.f32 %v1831, 0.0
        %v2204 = vmax.f32 %v2022, 0.0
        %v2205 = vmax.f32 %v2024, 0.0
        %v2206 = vmax.f32 %v1447, 0.0
        %v2207 = vmax.f32 %v1449, 0.0
        %v2208 = vmax.f32 %v1640, 0.0
        %v2209 = vmax.f32 %v1642, 0.0
        %v2210 = vmax.f32 %v1833, 0.0
        %v2211 = vmax.f32 %v1835, 0.0
        %v2212 = vmax.f32 %v2026, 0.0
        %v2213 = vmax.f32 %v2028, 0.0
        %v2214 = vmax.f32 %v1453, 0.0
        %v2215 = vmax.f32 %v1455, 0.0
        %v2216 = vmax.f32 %v1646, 0.0
        %v2217 = vmax.f32 %v1648, 0.0
        %v2218 = vmax.f32 %v1839, 0.0
        %v2219 = vmax.f32 %v1841, 0.0
        %v2220 = vmax.f32 %v2032, 0.0
        %v2221 = vmax.f32 %v2034, 0.0
        %v2222 = vmax.f32 %v1457, 0.0
        %v2223 = vmax.f32 %v1459, 0.0
        %v2224 = vmax.f32 %v1650, 0.0
        %v2225 = vmax.f32 %v1652, 0.0
        %v2226 = vmax.f32 %v1843, 0.0
        %v2227 = vmax.f32 %v1845, 0.0
        %v2228 = vmax.f32 %v2036, 0.0
        %v2229 = vmax.f32 %v2038, 0.0
        %v2230 = vmax.f32 %v1463, 0.0
        %v2231 = vmax.f32 %v1465, 0.0
        %v2232 = vmax.f32 %v1656, 0.0
        %v2233 = vmax.f32 %v1658, 0.0
        %v2234 = vmax.f32 %v1849, 0.0
        %v2235 = vmax.f32 %v1851, 0.0
        %v2236 = vmax.f32 %v2042, 0.0
        %v2237 = vmax.f32 %v2044, 0.0
        %v2238 = vmax.f32 %v1467, 0.0
        %v2239 = vmax.f32 %v1469, 0.0
        %v2240 = vmax.f32 %v1660, 0.0
        %v2241 = vmax.f32 %v1662, 0.0
        %v2242 = vmax.f32 %v1853, 0.0
        %v2243 = vmax.f32 %v1855, 0.0
        %v2244 = vmax.f32 %v2046, 0.0
        %v2245 = vmax.f32 %v2048, 0.0
        %v2246 = vmax.f32 %v1473, 0.0
        %v2247 = vmax.f32 %v1475, 0.0
        %v2248 = vmax.f32 %v1666, 0.0
        %v2249 = vmax.f32 %v1668, 0.0
        %v2250 = vmax.f32 %v1859, 0.0
        %v2251 = vmax.f32 %v1861, 0.0
        %v2252 = vmax.f32 %v2052, 0.0
        %v2253 = vmax.f32 %v2054, 0.0
        %v2254 = vmax.f32 %v1477, 0.0
        %v2255 = vmax.f32 %v1479, 0.0
        %v2256 = vmax.f32 %v1670, 0.0
        %v2257 = vmax.f32 %v1672, 0.0
        %v2258 = vmax.f32 %v1863, 0.0
        %v2259 = vmax.f32 %v1865, 0.0
        %v2260 = vmax.f32 %v2056, 0.0
        %v2261 = vmax.f32 %v2058, 0.0
        %v2262 = vmax.f32 %v1483, 0.0
        %v2263 = vmax.f32 %v1485, 0.0
        %v2264 = vmax.f32 %v1676, 0.0
        %v2265 = vmax.f32 %v1678, 0.0
        %v2266 = vmax.f32 %v1869, 0.0
        %v2267 = vmax.f32 %v1871, 0.0
        %v2268 = vmax.f32 %v2062, 0.0
        %v2269 = vmax.f32 %v2064, 0.0
        %v2270 = vmax.f32 %v1487, 0.0
        %v2271 = vmax.f32 %v1489, 0.0
        %v2272 = vmax.f32 %v1680, 0.0
        %v2273 = vmax.f32 %v1682, 0.0
        %v2274 = vmax.f32 %v1873, 0.0
        %v2275 = vmax.f32 %v1875, 0.0
        %v2276 = vmax.f32 %v2066, 0.0
        %v2277 = vmax.f32 %v2068, 0.0
        %v2278 = vmax.f32 %v1493, 0.0
        %v2279 = vmax.f32 %v1495, 0.0
        %v2280 = vmax.f32 %v1686, 0.0
        %v2281 = vmax.f32 %v1688, 0.0
        %v2282 = vmax.f32 %v1879, 0.0
        %v2283 = vmax.f32 %v1881, 0.0
        %v2284 = vmax.f32 %v2072, 0.0
        %v2285 = vmax.f32 %v2074, 0.0
        %v2286 = vmax.f32 %v1497, 0.0
        %v2287 = vmax.f32 %v1499, 0.0
        %v2288 = vmax.f32 %v1690, 0.0
        %v2289 = vmax.f32 %v1692, 0.0
        %v2290 = vmax.f32 %v1883, 0.0
        %v2291 = vmax.f32 %v1885, 0.0
        %v2292 = vmax.f32 %v2076, 0.0
        %v2293 = vmax.f32 %v2078, 0.0
        %v2294 = vmax.f32 %v1503, 0.0
        %v2295 = vmax.f32 %v1505, 0.0
        %v2296 = vmax.f32 %v1696, 0.0
        %v2297 = vmax.f32 %v1698, 0.0
        %v2298 = vmax.f32 %v1889, 0.0
        %v2299 = vmax.f32 %v1891, 0.0
        %v2300 = vmax.f32 %v2082, 0.0
        %v2301 = vmax.f32 %v2084, 0.0
        %v2302 = vmax.f32 %v1507, 0.0
        %v2303 = vmax.f32 %v1509, 0.0
        %v2304 = vmax.f32 %v1700, 0.0
        %v2305 = vmax.f32 %v1702, 0.0
        %v2306 = vmax.f32 %v1893, 0.0
        %v2307 = vmax.f32 %v1895, 0.0
        %v2308 = vmax.f32 %v2086, 0.0
        %v2309 = vmax.f32 %v2088, 0.0
        %v2310 = vmax.f32 %v1513, 0.0
        %v2311 = vmax.f32 %v1515, 0.0
        %v2312 = vmax.f32 %v1706, 0.0
        %v2313 = vmax.f32 %v1708, 0.0
        %v2314 = vmax.f32 %v1899, 0.0
        %v2315 = vmax.f32 %v1901, 0.0
        %v2316 = vmax.f32 %v2092, 0.0
        %v2317 = vmax.f32 %v2094, 0.0
        %v2318 = vmax.f32 %v1517, 0.0
        %v2319 = vmax.f32 %v1519, 0.0
        %v2320 = vmax.f32 %v1710, 0.0
        %v2321 = vmax.f32 %v1712, 0.0
        %v2322 = vmax.f32 %v1903, 0.0
        %v2323 = vmax.f32 %v1905, 0.0
        %v2324 = vmax.f32 %v2096, 0.0
        %v2325 = vmax.f32 %v2098, 0.0
        %v2326 = vmax.f32 %v1523, 0.0
        %v2327 = vmax.f32 %v1525, 0.0
        %v2328 = vmax.f32 %v1716, 0.0
        %v2329 = vmax.f32 %v1718, 0.0
        %v2330 = vmax.f32 %v1909, 0.0
        %v2331 = vmax.f32 %v1911, 0.0
        %v2332 = vmax.f32 %v2102, 0.0
        %v2333 = vmax.f32 %v2104, 0.0
        %v2334 = vmax.f32 %v1527, 0.0
        %v2335 = vmax.f32 %v1529, 0.0
        %v2336 = vmax.f32 %v1720, 0.0
        %v2337 = vmax.f32 %v1722, 0.0
        %v2338 = vmax.f32 %v1913, 0.0
        %v2339 = vmax.f32 %v1915, 0.0
        %v2340 = vmax.f32 %v2106, 0.0
        %v2341 = vmax.f32 %v2108, 0.0
        %v2342 = vmax.f32 %v1533, 0.0
        %v2343 = vmax.f32 %v1535, 0.0
        %v2344 = vmax.f32 %v1726, 0.0
        %v2345 = vmax.f32 %v1728, 0.0
        %v2346 = vmax.f32 %v1919, 0.0
        %v2347 = vmax.f32 %v1921, 0.0
        %v2348 = vmax.f32 %v2112, 0.0
        %v2349 = vmax.f32 %v2114, 0.0
        %v2350 = vmax.f32 %v1537, 0.0
        %v2351 = vmax.f32 %v1539, 0.0
        %v2352 = vmax.f32 %v1730, 0.0
        %v2353 = vmax.f32 %v1732, 0.0
        %v2354 = vmax.f32 %v1923, 0.0
        %v2355 = vmax.f32 %v1925, 0.0
        %v2356 = vmax.f32 %v2116, 0.0
        %v2357 = vmax.f32 %v2118, 0.0
        %v2358 = vmax.f32 %v1543, 0.0
        %v2359 = vmax.f32 %v1545, 0.0
        %v2360 = vmax.f32 %v1736, 0.0
        %v2361 = vmax.f32 %v1738, 0.0
        %v2362 = vmax.f32 %v1929, 0.0
        %v2363 = vmax.f32 %v1931, 0.0
        %v2364 = vmax.f32 %v2122, 0.0
        %v2365 = vmax.f32 %v2124, 0.0
        %v2366 = vmax.f32 %v1547, 0.0
        %v2367 = vmax.f32 %v1549, 0.0
        %v2368 = vmax.f32 %v1740, 0.0
        %v2369 = vmax.f32 %v1742, 0.0
        %v2370 = vmax.f32 %v1933, 0.0
        %v2371 = vmax.f32 %v1935, 0.0
        %v2372 = vmax.f32 %v2126, 0.0
        %v2373 = vmax.f32 %v2128, 0.0
        %v2374 = vmax.f32 %v1553, 0.0
        %v2375 = vmax.f32 %v1555, 0.0
        %v2376 = vmax.f32 %v1746, 0.0
        %v2377 = vmax.f32 %v1748, 0.0
        %v2378 = vmax.f32 %v1939, 0.0
        %v2379 = vmax.f32 %v1941, 0.0
        %v2380 = vmax.f32 %v2132, 0.0
        %v2381 = vmax.f32 %v2134, 0.0
        %v2382 = vmax.f32 %v1557, 0.0
        %v2383 = vmax.f32 %v1559, 0.0
        %v2384 = vmax.f32 %v1750, 0.0
        %v2385 = vmax.f32 %v1752, 0.0
        %v2386 = vmax.f32 %v1943, 0.0
        %v2387 = vmax.f32 %v1945, 0.0
        %v2388 = vmax.f32 %v2136, 0.0
        %v2389 = vmax.f32 %v2138, 0.0
        %v2390 = vmax.f32 %v1563, 0.0
        %v2391 = vmax.f32 %v1565, 0.0
        %v2392 = vmax.f32 %v1756, 0.0
        %v2393 = vmax.f32 %v1758, 0.0
        %v2394 = vmax.f32 %v1949, 0.0
        %v2395 = vmax.f32 %v1951, 0.0
        %v2396 = vmax.f32 %v2142, 0.0
        %v2397 = vmax.f32 %v2144, 0.0
        %v2398 = vmax.f32 %v1567, 0.0
        %v2399 = vmax.f32 %v1569, 0.0
        %v2400 = vmax.f32 %v1760, 0.0
        %v2401 = vmax.f32 %v1762, 0.0
        %v2402 = vmax.f32 %v1953, 0.0
        %v2403 = vmax.f32 %v1955, 0.0
        %v2404 = vmax.f32 %v2146, 0.0
        %v2405 = vmax.f32 %v2148, 0.0
        %p2406 = scmp.eq.s32.totalorder %s25, 0
        // Predicated region
        $region61: #{pointnetfeat_v1.3} parent=47 // pred_check
          %p2407 = pneg %p2406
        $region62: #{pointnetfeat_v1.3} parent=47 // pred_check_branch
          %2409 = sbr.rel (%p2407) target = $region64
        $region63: #{pointnetfeat_v1.3} parent=47 // pred_region
          %2410 = vst [vmem:[%s335] sm:$0xff] -inf
        $region64: #{pointnetfeat_v1.3} parent=47 // pred_fallthru
          _
        %v2411 = vmax.f32 %v2150, %v2158
        %v2412 = vmax.f32 %v2411, %v2166
        %v2413 = vmax.f32 %v2412, %v2174
        %v2414 = vmax.f32 %v2413, %v2182
        %v2415 = vmax.f32 %v2414, %v2190
        %v2416 = vmax.f32 %v2415, %v2198
        %v2417 = vmax.f32 %v2416, %v2206
        %v2418 = vmax.f32 %v2417, %v2214
        %v2419 = vmax.f32 %v2418, %v2222
        %v2420 = vmax.f32 %v2419, %v2230
        %v2421 = vmax.f32 %v2420, %v2238
        %v2422 = vmax.f32 %v2421, %v2246
        %v2423 = vmax.f32 %v2422, %v2254
        %v2424 = vmax.f32 %v2423, %v2262
        %v2425 = vmax.f32 %v2424, %v2270
        %v2426 = vmax.f32 %v2425, %v2278
        %v2427 = vmax.f32 %v2426, %v2286
        %v2428 = vmax.f32 %v2427, %v2294
        %v2429 = vmax.f32 %v2428, %v2302
        %v2430 = vmax.f32 %v2429, %v2310
        %v2431 = vmax.f32 %v2430, %v2318
        %v2432 = vmax.f32 %v2431, %v2326
        %v2433 = vmax.f32 %v2432, %v2334
        %v2434 = vmax.f32 %v2433, %v2342
        %v2435 = vmax.f32 %v2434, %v2350
        %v2436 = vmax.f32 %v2435, %v2358
        %v2437 = vmax.f32 %v2436, %v2366
        %v2438 = vmax.f32 %v2437, %v2374
        %v2439 = vmax.f32 %v2438, %v2382
        %v2440 = vmax.f32 %v2439, %v2390
        %v2441 = vmax.f32 %v2440, %v2398
        %v2442 = vrot.slane %v2441, 4
        %v2443 = vmax.f32 %v2441, %v2442
        %v2444 = vrot.slane %v2443, 2
        %v2445 = vmax.f32 %v2443, %v2444
        %v2446 = vrot.slane %v2445, 1
        %v2447 = vmax.f32 %v2445, %v2446
        %v2448 = vmax.f32 %v2151, %v2159
        %v2449 = vmax.f32 %v2448, %v2167
        %v2450 = vmax.f32 %v2449, %v2175
        %v2451 = vmax.f32 %v2450, %v2183
        %v2452 = vmax.f32 %v2451, %v2191
        %v2453 = vmax.f32 %v2452, %v2199
        %v2454 = vmax.f32 %v2453, %v2207
        %v2455 = vmax.f32 %v2454, %v2215
        %v2456 = vmax.f32 %v2455, %v2223
        %v2457 = vmax.f32 %v2456, %v2231
        %v2458 = vmax.f32 %v2457, %v2239
        %v2459 = vmax.f32 %v2458, %v2247
        %v2460 = vmax.f32 %v2459, %v2255
        %v2461 = vmax.f32 %v2460, %v2263
        %v2462 = vmax.f32 %v2461, %v2271
        %v2463 = vmax.f32 %v2462, %v2279
        %v2464 = vmax.f32 %v2463, %v2287
        %v2465 = vmax.f32 %v2464, %v2295
        %v2466 = vmax.f32 %v2465, %v2303
        %v2467 = vmax.f32 %v2466, %v2311
        %v2468 = vmax.f32 %v2467, %v2319
        %v2469 = vmax.f32 %v2468, %v2327
        %v2470 = vmax.f32 %v2469, %v2335
        %v2471 = vmax.f32 %v2470, %v2343
        %v2472 = vmax.f32 %v2471, %v2351
        %v2473 = vmax.f32 %v2472, %v2359
        %v2474 = vmax.f32 %v2473, %v2367
        %v2475 = vmax.f32 %v2474, %v2375
        %v2476 = vmax.f32 %v2475, %v2383
        %v2477 = vmax.f32 %v2476, %v2391
        %v2478 = vmax.f32 %v2477, %v2399
        %v2479 = vrot.slane %v2478, 4
        %v2480 = vmax.f32 %v2478, %v2479
        %v2481 = vrot.slane %v2480, 2
        %v2482 = vmax.f32 %v2480, %v2481
        %v2483 = vrot.slane %v2482, 1
        %v2484 = vmax.f32 %v2482, %v2483
        %v2485 = vmax.f32 %v2152, %v2160
        %v2486 = vmax.f32 %v2485, %v2168
        %v2487 = vmax.f32 %v2486, %v2176
        %v2488 = vmax.f32 %v2487, %v2184
        %v2489 = vmax.f32 %v2488, %v2192
        %v2490 = vmax.f32 %v2489, %v2200
        %v2491 = vmax.f32 %v2490, %v2208
        %v2492 = vmax.f32 %v2491, %v2216
        %v2493 = vmax.f32 %v2492, %v2224
        %v2494 = vmax.f32 %v2493, %v2232
        %v2495 = vmax.f32 %v2494, %v2240
        %v2496 = vmax.f32 %v2495, %v2248
        %v2497 = vmax.f32 %v2496, %v2256
        %v2498 = vmax.f32 %v2497, %v2264
        %v2499 = vmax.f32 %v2498, %v2272
        %v2500 = vmax.f32 %v2499, %v2280
        %v2501 = vmax.f32 %v2500, %v2288
        %v2502 = vmax.f32 %v2501, %v2296
        %v2503 = vmax.f32 %v2502, %v2304
        %v2504 = vmax.f32 %v2503, %v2312
        %v2505 = vmax.f32 %v2504, %v2320
        %v2506 = vmax.f32 %v2505, %v2328
        %v2507 = vmax.f32 %v2506, %v2336
        %v2508 = vmax.f32 %v2507, %v2344
        %v2509 = vmax.f32 %v2508, %v2352
        %v2510 = vmax.f32 %v2509, %v2360
        %v2511 = vmax.f32 %v2510, %v2368
        %v2512 = vmax.f32 %v2511, %v2376
        %v2513 = vmax.f32 %v2512, %v2384
        %v2514 = vmax.f32 %v2513, %v2392
        %v2515 = vmax.f32 %v2514, %v2400
        %v2516 = vrot.slane %v2515, 4
        %v2517 = vmax.f32 %v2515, %v2516
        %v2518 = vrot.slane %v2517, 2
        %v2519 = vmax.f32 %v2517, %v2518
        %v2520 = vrot.slane %v2519, 1
        %v2521 = vmax.f32 %v2519, %v2520
        %v2522 = vmax.f32 %v2153, %v2161
        %v2523 = vmax.f32 %v2522, %v2169
        %v2524 = vmax.f32 %v2523, %v2177
        %v2525 = vmax.f32 %v2524, %v2185
        %v2526 = vmax.f32 %v2525, %v2193
        %v2527 = vmax.f32 %v2526, %v2201
        %v2528 = vmax.f32 %v2527, %v2209
        %v2529 = vmax.f32 %v2528, %v2217
        %v2530 = vmax.f32 %v2529, %v2225
        %v2531 = vmax.f32 %v2530, %v2233
        %v2532 = vmax.f32 %v2531, %v2241
        %v2533 = vmax.f32 %v2532, %v2249
        %v2534 = vmax.f32 %v2533, %v2257
        %v2535 = vmax.f32 %v2534, %v2265
        %v2536 = vmax.f32 %v2535, %v2273
        %v2537 = vmax.f32 %v2536, %v2281
        %v2538 = vmax.f32 %v2537, %v2289
        %v2539 = vmax.f32 %v2538, %v2297
        %v2540 = vmax.f32 %v2539, %v2305
        %v2541 = vmax.f32 %v2540, %v2313
        %v2542 = vmax.f32 %v2541, %v2321
        %v2543 = vmax.f32 %v2542, %v2329
        %v2544 = vmax.f32 %v2543, %v2337
        %v2545 = vmax.f32 %v2544, %v2345
        %v2546 = vmax.f32 %v2545, %v2353
        %v2547 = vmax.f32 %v2546, %v2361
        %v2548 = vmax.f32 %v2547, %v2369
        %v2549 = vmax.f32 %v2548, %v2377
        %v2550 = vmax.f32 %v2549, %v2385
        %v2551 = vmax.f32 %v2550, %v2393
        %v2552 = vmax.f32 %v2551, %v2401
        %v2553 = vrot.slane %v2552, 4
        %v2554 = vmax.f32 %v2552, %v2553
        %v2555 = vrot.slane %v2554, 2
        %v2556 = vmax.f32 %v2554, %v2555
        %v2557 = vrot.slane %v2556, 1
        %v2558 = vmax.f32 %v2556, %v2557
        %v2559 = vmax.f32 %v2154, %v2162
        %v2560 = vmax.f32 %v2559, %v2170
        %v2561 = vmax.f32 %v2560, %v2178
        %v2562 = vmax.f32 %v2561, %v2186
        %v2563 = vmax.f32 %v2562, %v2194
        %v2564 = vmax.f32 %v2563, %v2202
        %v2565 = vmax.f32 %v2564, %v2210
        %v2566 = vmax.f32 %v2565, %v2218
        %v2567 = vmax.f32 %v2566, %v2226
        %v2568 = vmax.f32 %v2567, %v2234
        %v2569 = vmax.f32 %v2568, %v2242
        %v2570 = vmax.f32 %v2569, %v2250
        %v2571 = vmax.f32 %v2570, %v2258
        %v2572 = vmax.f32 %v2571, %v2266
        %v2573 = vmax.f32 %v2572, %v2274
        %v2574 = vmax.f32 %v2573, %v2282
        %v2575 = vmax.f32 %v2574, %v2290
        %v2576 = vmax.f32 %v2575, %v2298
        %v2577 = vmax.f32 %v2576, %v2306
        %v2578 = vmax.f32 %v2577, %v2314
        %v2579 = vmax.f32 %v2578, %v2322
        %v2580 = vmax.f32 %v2579, %v2330
        %v2581 = vmax.f32 %v2580, %v2338
        %v2582 = vmax.f32 %v2581, %v2346
        %v2583 = vmax.f32 %v2582, %v2354
        %v2584 = vmax.f32 %v2583, %v2362
        %v2585 = vmax.f32 %v2584, %v2370
        %v2586 = vmax.f32 %v2585, %v2378
        %v2587 = vmax.f32 %v2586, %v2386
        %v2588 = vmax.f32 %v2587, %v2394
        %v2589 = vmax.f32 %v2588, %v2402
        %v2590 = vrot.slane %v2589, 4
        %v2591 = vmax.f32 %v2589, %v2590
        %v2592 = vrot.slane %v2591, 2
        %v2593 = vmax.f32 %v2591, %v2592
        %v2594 = vrot.slane %v2593, 1
        %v2595 = vmax.f32 %v2593, %v2594
        %v2596 = vmax.f32 %v2155, %v2163
        %v2597 = vmax.f32 %v2596, %v2171
        %v2598 = vmax.f32 %v2597, %v2179
        %v2599 = vmax.f32 %v2598, %v2187
        %v2600 = vmax.f32 %v2599, %v2195
        %v2601 = vmax.f32 %v2600, %v2203
        %v2602 = vmax.f32 %v2601, %v2211
        %v2603 = vmax.f32 %v2602, %v2219
        %v2604 = vmax.f32 %v2603, %v2227
        %v2605 = vmax.f32 %v2604, %v2235
        %v2606 = vmax.f32 %v2605, %v2243
        %v2607 = vmax.f32 %v2606, %v2251
        %v2608 = vmax.f32 %v2607, %v2259
        %v2609 = vmax.f32 %v2608, %v2267
        %v2610 = vmax.f32 %v2609, %v2275
        %v2611 = vmax.f32 %v2610, %v2283
        %v2612 = vmax.f32 %v2611, %v2291
        %v2613 = vmax.f32 %v2612, %v2299
        %v2614 = vmax.f32 %v2613, %v2307
        %v2615 = vmax.f32 %v2614, %v2315
        %v2616 = vmax.f32 %v2615, %v2323
        %v2617 = vmax.f32 %v2616, %v2331
        %v2618 = vmax.f32 %v2617, %v2339
        %v2619 = vmax.f32 %v2618, %v2347
        %v2620 = vmax.f32 %v2619, %v2355
        %v2621 = vmax.f32 %v2620, %v2363
        %v2622 = vmax.f32 %v2621, %v2371
        %v2623 = vmax.f32 %v2622, %v2379
        %v2624 = vmax.f32 %v2623, %v2387
        %v2625 = vmax.f32 %v2624, %v2395
        %v2626 = vmax.f32 %v2625, %v2403
        %v2627 = vrot.slane %v2626, 4
        %v2628 = vmax.f32 %v2626, %v2627
        %v2629 = vrot.slane %v2628, 2
        %v2630 = vmax.f32 %v2628, %v2629
        %v2631 = vrot.slane %v2630, 1
        %v2632 = vmax.f32 %v2630, %v2631
        %v2633 = vmax.f32 %v2156, %v2164
        %v2634 = vmax.f32 %v2633, %v2172
        %v2635 = vmax.f32 %v2634, %v2180
        %v2636 = vmax.f32 %v2635, %v2188
        %v2637 = vmax.f32 %v2636, %v2196
        %v2638 = vmax.f32 %v2637, %v2204
        %v2639 = vmax.f32 %v2638, %v2212
        %v2640 = vmax.f32 %v2639, %v2220
        %v2641 = vmax.f32 %v2640, %v2228
        %v2642 = vmax.f32 %v2641, %v2236
        %v2643 = vmax.f32 %v2642, %v2244
        %v2644 = vmax.f32 %v2643, %v2252
        %v2645 = vmax.f32 %v2644, %v2260
        %v2646 = vmax.f32 %v2645, %v2268
        %v2647 = vmax.f32 %v2646, %v2276
        %v2648 = vmax.f32 %v2647, %v2284
        %v2649 = vmax.f32 %v2648, %v2292
        %v2650 = vmax.f32 %v2649, %v2300
        %v2651 = vmax.f32 %v2650, %v2308
        %v2652 = vmax.f32 %v2651, %v2316
        %v2653 = vmax.f32 %v2652, %v2324
        %v2654 = vmax.f32 %v2653, %v2332
        %v2655 = vmax.f32 %v2654, %v2340
        %v2656 = vmax.f32 %v2655, %v2348
        %v2657 = vmax.f32 %v2656, %v2356
        %v2658 = vmax.f32 %v2657, %v2364
        %v2659 = vmax.f32 %v2658, %v2372
        %v2660 = vmax.f32 %v2659, %v2380
        %v2661 = vmax.f32 %v2660, %v2388
        %v2662 = vmax.f32 %v2661, %v2396
        %v2663 = vmax.f32 %v2662, %v2404
        %v2664 = vrot.slane %v2663, 4
        %v2665 = vmax.f32 %v2663, %v2664
        %v2666 = vrot.slane %v2665, 2
        %v2667 = vmax.f32 %v2665, %v2666
        %v2668 = vrot.slane %v2667, 1
        %v2669 = vmax.f32 %v2667, %v2668
        %v2670 = vmax.f32 %v2157, %v2165
        %v2671 = vmax.f32 %v2670, %v2173
        %v2672 = vmax.f32 %v2671, %v2181
        %v2673 = vmax.f32 %v2672, %v2189
        %v2674 = vmax.f32 %v2673, %v2197
        %v2675 = vmax.f32 %v2674, %v2205
        %v2676 = vmax.f32 %v2675, %v2213
        %v2677 = vmax.f32 %v2676, %v2221
        %v2678 = vmax.f32 %v2677, %v2229
        %v2679 = vmax.f32 %v2678, %v2237
        %v2680 = vmax.f32 %v2679, %v2245
        %v2681 = vmax.f32 %v2680, %v2253
        %v2682 = vmax.f32 %v2681, %v2261
        %v2683 = vmax.f32 %v2682, %v2269
        %v2684 = vmax.f32 %v2683, %v2277
        %v2685 = vmax.f32 %v2684, %v2285
        %v2686 = vmax.f32 %v2685, %v2293
        %v2687 = vmax.f32 %v2686, %v2301
        %v2688 = vmax.f32 %v2687, %v2309
        %v2689 = vmax.f32 %v2688, %v2317
        %v2690 = vmax.f32 %v2689, %v2325
        %v2691 = vmax.f32 %v2690, %v2333
        %v2692 = vmax.f32 %v2691, %v2341
        %v2693 = vmax.f32 %v2692, %v2349
        %v2694 = vmax.f32 %v2693, %v2357
        %v2695 = vmax.f32 %v2694, %v2365
        %v2696 = vmax.f32 %v2695, %v2373
        %v2697 = vmax.f32 %v2696, %v2381
        %v2698 = vmax.f32 %v2697, %v2389
        %v2699 = vmax.f32 %v2698, %v2397
        %v2700 = vmax.f32 %v2699, %v2405
        %v2701 = vrot.slane %v2700, 4
        %v2702 = vmax.f32 %v2700, %v2701
        %v2703 = vrot.slane %v2702, 2
        %v2704 = vmax.f32 %v2702, %v2703
        %v2705 = vrot.slane %v2704, 1
        %v2706 = vmax.f32 %v2704, %v2705
        %v2707 = vld [vmem:[%s335] sm:$0xff]
        %v2716 = vcombine.low %v2447, %v2484
        %v2717 = vcombine.low %v2521, %v2558
        %v2718 = vcombine.low %v2595, %v2632
        %v2719 = vcombine.low %v2669, %v2706
        %v2721 = vunpack.c.l.s4 1966171168
        %v2722 = vunpack.c.0.s8 %v2721
        %v2723 = vlaneseq
        %v2724 = vshrl.u32 %v2723, 7
        %v2725 = vsub.s32 %v2722, %v2724
        %v2726 = vrot.slane %v2716, %v2725
        %v2728 = vunpack.c.l.s4 1966171168
        %v2729 = vunpack.c.0.s8 %v2728
        %v2730 = vlaneseq
        %v2731 = vshrl.u32 %v2730, 7
        %v2732 = vsub.s32 %v2729, %v2731
        %v2733 = vrot.slane %v2717, %v2732
        %v2735 = vunpack.c.l.s4 1966171168
        %v2736 = vunpack.c.0.s8 %v2735
        %v2737 = vlaneseq
        %v2738 = vshrl.u32 %v2737, 7
        %v2739 = vsub.s32 %v2736, %v2738
        %v2740 = vrot.slane %v2718, %v2739
        %v2742 = vunpack.c.l.s4 1966171168
        %v2743 = vunpack.c.0.s8 %v2742
        %v2744 = vlaneseq
        %v2745 = vshrl.u32 %v2744, 7
        %v2746 = vsub.s32 %v2743, %v2745
        %v2747 = vrot.slane %v2719, %v2746
        %v2748 = vcombine.low %v2726, %v2733
        %v2749 = vcombine.low %v2740, %v2747
        %v2751 = vunpack.c.l.s4 1966171168
        %v2752 = vunpack.c.0.s8 %v2751
        %v2753 = vlaneseq
        %v2754 = vshrl.u32 %v2753, 7
        %v2755 = vsub.s32 %v2752, %v2754
        %v2756 = vrot.slane %v2748, %v2755
        %v2758 = vunpack.c.l.s4 1966171168
        %v2759 = vunpack.c.0.s8 %v2758
        %v2760 = vlaneseq
        %v2761 = vshrl.u32 %v2760, 7
        %v2762 = vsub.s32 %v2759, %v2761
        %v2763 = vrot.slane %v2749, %v2762
        %v2764 = vcombine.low %v2756, %v2763
        %v2766 = vmax.f32 %v2707, %v2764
        %2767 = vst [vmem:[%s335] sm:$0xff] %v2766
        %p2768 = scmp.lt.s32.totalorder %s24, 1
        %s2769 = scalar_select %p2768, %s24, 1
        %s2770 = smul.addr %s2769, 8
        %s2771 = scalar_lea.vmem %s7, %s2770
        // Predicated region
        $region65: #{pointnetfeat_v1.3} parent=47 // pred_check
          %p2772 = pneg %p204
        $region66: #{pointnetfeat_v1.3} parent=47 // pred_check_branch
          %2774 = sbr.rel (%p2772) target = $region68
        $region67: #{pointnetfeat_v1.3} parent=47 // pred_region
          _
        $region68: #{pointnetfeat_v1.3} parent=47 // pred_fallthru
          _
      $region48: #{pointnetfeat_v1.3} parent=5 // pred_fallthru
        _
      %p2775 = scmp.le.s32.totalorder 2, %s15
      // Predicated region
      $region69: #{pointnetfeat_v1.3} parent=5 // pred_check
        %p2776 = pneg %p2775
      $region70: #{pointnetfeat_v1.3} parent=5 // pred_check_branch
        %2778 = sbr.rel (%p2776) target = $region72
      $region71: #{pointnetfeat_v1.3} parent=5 // pred_region
        %s2779 = ssub.s32 %s15, 2
        // Predicated region
        $region73: #{pointnetfeat_v1.3} parent=71 // pred_check
          %p2780 = pneg %p210
        $region74: #{pointnetfeat_v1.3} parent=71 // pred_check_branch
          %2782 = sbr.rel (%p2780) target = $region76
        $region75: #{pointnetfeat_v1.3} parent=71 // pred_region
          %p2783 = scmp.lt.s32.totalorder %s26, 1
          %s2784 = scalar_select %p2783, %s26, 1
          %s2785 = smul.addr %s2784, 8
          %s2786 = scalar_lea.vmem %s7, %s2785
        $region76: #{pointnetfeat_v1.3} parent=71 // pred_fallthru
          _
      $region72: #{pointnetfeat_v1.3} parent=5 // pred_fallthru
        _
    $region6: #{pointnetfeat_v1.3} parent=1 // loop_footer
      %s19 = sadd.s32 1, %s15
    $region7: #{pointnetfeat_v1.3} parent=1 // loop_footer_branch
      %14 = sbr.rel target = $region3
    $region8: #{pointnetfeat_v1.3} parent=1 // loop_exit
      _
    %2787 = vsyncpa [#allocation3], 1
    %s2788 = scalar_lea.sflag [#allocation3], 1
    %2789 = vsyncpa %s2788, 1
    %2790 = vsyncpa [#allocation5], 1

// kernel: pointnetfeat_v1.4
$region0: #{pointnetfeat_v1.4}
  #allocation0 [shape = 'u32[]', space=smem, size = 0x4, offset = 0x4, fixed_abs, tag = 'smem constant byte address 0x4 - core index']
  #allocation1 [shape = 'u32[144,128]{1,0:T(1,128)}', space=vmem, size = 0x12000, scoped, tag = 'internal scratch']
  %s0 = inlined_call_operand.vmem [shape: f32[2,1024], index: 0, kind: input, shape index: {}]
  %s1 = inlined_call_operand.vmem [shape: bf16[1024,512], index: 1, kind: input, shape index: {}]
  %s2 = inlined_call_operand.vmem [shape: f32[1,512], index: 2, kind: input, shape index: {}]
  %s3 = inlined_call_operand.vmem [shape: bf16[512,256], index: 3, kind: input, shape index: {}]
  %s4 = inlined_call_operand.vmem [shape: f32[1,256], index: 4, kind: input, shape index: {}]
  %s5 = inlined_call_operand.vmem [shape: bf16[256,9], index: 5, kind: input, shape index: {}]
  %s6 = inlined_call_operand.vmem [shape: f32[1,9], index: 6, kind: input, shape index: {}]
  %s7 = inlined_call_operand.vmem [shape: f32[1,9], index: 7, kind: input, shape index: {}]
  %s8 = inlined_call_operand.vmem [shape: f32[2,9], index: 8, kind: output, shape index: {}]
  %s9 = sld [smem:[#allocation0]]
  $region42: #{pointnetfeat_v1.4} parent=0
    _
  %s11 = ssub.s32 1, %s9
  %s12 = scalar_select 0, %s11, %s9
  // Predicated region
  $region2: #{pointnetfeat_v1.4} parent=0 // pred_check
    _
  $region3: #{pointnetfeat_v1.4} parent=0 // pred_check_branch
    %14 = sbr.rel (0) target = $region5
  $region4: #{pointnetfeat_v1.4} parent=0 // pred_region
    _
  $region5: #{pointnetfeat_v1.4} parent=0 // pred_fallthru
    _
  // Predicated region
  $region6: #{pointnetfeat_v1.4} parent=0 // pred_check
    _
  $region7: #{pointnetfeat_v1.4} parent=0 // pred_check_branch
    %16 = sbr.rel (0) target = $region9
  $region8: #{pointnetfeat_v1.4} parent=0 // pred_region
    _
  $region9: #{pointnetfeat_v1.4} parent=0 // pred_fallthru
    _
  // Predicated region
  $region10: #{pointnetfeat_v1.4} parent=0 // pred_check
    _
  $region11: #{pointnetfeat_v1.4} parent=0 // pred_check_branch
    %18 = sbr.rel (0) target = $region13
  $region12: #{pointnetfeat_v1.4} parent=0 // pred_region
    _
  $region13: #{pointnetfeat_v1.4} parent=0 // pred_fallthru
    _
  // Predicated region
  $region14: #{pointnetfeat_v1.4} parent=0 // pred_check
    _
  $region15: #{pointnetfeat_v1.4} parent=0 // pred_check_branch
    %20 = sbr.rel (0) target = $region17
  $region16: #{pointnetfeat_v1.4} parent=0 // pred_region
    _
  $region17: #{pointnetfeat_v1.4} parent=0 // pred_fallthru
    _
  // Predicated region
  $region18: #{pointnetfeat_v1.4} parent=0 // pred_check
    _
  $region19: #{pointnetfeat_v1.4} parent=0 // pred_check_branch
    %22 = sbr.rel (0) target = $region21
  $region20: #{pointnetfeat_v1.4} parent=0 // pred_region
    _
  $region21: #{pointnetfeat_v1.4} parent=0 // pred_fallthru
    _
  // Predicated region
  $region22: #{pointnetfeat_v1.4} parent=0 // pred_check
    _
  $region23: #{pointnetfeat_v1.4} parent=0 // pred_check_branch
    %24 = sbr.rel (0) target = $region25
  $region24: #{pointnetfeat_v1.4} parent=0 // pred_region
    _
  $region25: #{pointnetfeat_v1.4} parent=0 // pred_fallthru
    _
  // Predicated region
  $region26: #{pointnetfeat_v1.4} parent=0 // pred_check
    _
  $region27: #{pointnetfeat_v1.4} parent=0 // pred_check_branch
    %26 = sbr.rel (0) target = $region29
  $region28: #{pointnetfeat_v1.4} parent=0 // pred_region
    _
  $region29: #{pointnetfeat_v1.4} parent=0 // pred_fallthru
    _
  // Predicated region
  $region30: #{pointnetfeat_v1.4} parent=0 // pred_check
    _
  $region31: #{pointnetfeat_v1.4} parent=0 // pred_check_branch
    %28 = sbr.rel (0) target = $region33
  $region32: #{pointnetfeat_v1.4} parent=0 // pred_region
    _
  $region33: #{pointnetfeat_v1.4} parent=0 // pred_fallthru
    _
  %v30 = vld [vmem:[%s0] sm:$0xff]
  %v31 = vld [vmem:[%s0 + $0x8] sm:$0xff]
  %v34 = vcombine.high %v30, %v30
  %v36 = vunpack.c.l.s4 1983009808
  %v37 = vunpack.c.0.s8 %v36
  %v38 = vlaneseq
  %v39 = vshrl.u32 %v38, 7
  %v40 = vsub.s32 %v37, %v39
  %v41 = vrot.slane %v30, %v40
  %v43 = vunpack.c.l.s4 1983009808
  %v44 = vunpack.c.0.s8 %v43
  %v45 = vlaneseq
  %v46 = vshrl.u32 %v45, 7
  %v47 = vsub.s32 %v44, %v46
  %v48 = vrot.slane %v34, %v47
  %v49 = vcombine.high %v41, %v41
  %v50 = vcombine.high %v48, %v48
  %v51 = vcombine.high %v31, %v31
  %v53 = vunpack.c.l.s4 1983009808
  %v54 = vunpack.c.0.s8 %v53
  %v55 = vlaneseq
  %v56 = vshrl.u32 %v55, 7
  %v57 = vsub.s32 %v54, %v56
  %v58 = vrot.slane %v31, %v57
  %v60 = vunpack.c.l.s4 1983009808
  %v61 = vunpack.c.0.s8 %v60
  %v62 = vlaneseq
  %v63 = vshrl.u32 %v62, 7
  %v64 = vsub.s32 %v61, %v63
  %v65 = vrot.slane %v51, %v64
  %v66 = vcombine.high %v58, %v58
  %v67 = vcombine.high %v65, %v65
  %v76 = vpack.c.bf16 %v41, %v41
  %v77 = vpack.c.bf16 %v49, %v49
  %v78 = vpack.c.bf16 %v48, %v48
  %v79 = vpack.c.bf16 %v50, %v50
  %v80 = vpack.c.bf16 %v58, %v58
  %v81 = vpack.c.bf16 %v66, %v66
  %v82 = vpack.c.bf16 %v65, %v65
  %v83 = vpack.c.bf16 %v67, %v67
  %v84 = vld [vmem:[%s1] sm:$0xff]
  %v85 = vld [vmem:[%s1 + $0x8] sm:$0xff]
  %v86 = vld [vmem:[%s1 + $0x10] sm:$0xff]
  %v87 = vld [vmem:[%s1 + $0x18] sm:$0xff]
  %v88 = vld [vmem:[%s1 + $0x20] sm:$0xff]
  %v89 = vld [vmem:[%s1 + $0x28] sm:$0xff]
  %v90 = vld [vmem:[%s1 + $0x30] sm:$0xff]
  %v91 = vld [vmem:[%s1 + $0x38] sm:$0xff]
  %v92 = vld [vmem:[%s1 + $0x40] sm:$0xff]
  %v93 = vld [vmem:[%s1 + $0x48] sm:$0xff]
  %v94 = vld [vmem:[%s1 + $0x50] sm:$0xff]
  %v95 = vld [vmem:[%s1 + $0x58] sm:$0xff]
  %v96 = vld [vmem:[%s1 + $0x60] sm:$0xff]
  %v97 = vld [vmem:[%s1 + $0x68] sm:$0xff]
  %v98 = vld [vmem:[%s1 + $0x70] sm:$0xff]
  %v99 = vld [vmem:[%s1 + $0x78] sm:$0xff]
  %v100 = vld [vmem:[%s1 + $0x80] sm:$0xff]
  %v101 = vld [vmem:[%s1 + $0x88] sm:$0xff]
  %v102 = vld [vmem:[%s1 + $0x90] sm:$0xff]
  %v103 = vld [vmem:[%s1 + $0x98] sm:$0xff]
  %v104 = vld [vmem:[%s1 + $0xa0] sm:$0xff]
  %v105 = vld [vmem:[%s1 + $0xa8] sm:$0xff]
  %v106 = vld [vmem:[%s1 + $0xb0] sm:$0xff]
  %v107 = vld [vmem:[%s1 + $0xb8] sm:$0xff]
  %v108 = vld [vmem:[%s1 + $0xc0] sm:$0xff]
  %v109 = vld [vmem:[%s1 + $0xc8] sm:$0xff]
  %v110 = vld [vmem:[%s1 + $0xd0] sm:$0xff]
  %v111 = vld [vmem:[%s1 + $0xd8] sm:$0xff]
  %v112 = vld [vmem:[%s1 + $0xe0] sm:$0xff]
  %v113 = vld [vmem:[%s1 + $0xe8] sm:$0xff]
  %v114 = vld [vmem:[%s1 + $0xf0] sm:$0xff]
  %v115 = vld [vmem:[%s1 + $0xf8] sm:$0xff]
  %v116 = vld [vmem:[%s1 + $0x100] sm:$0xff]
  %v117 = vld [vmem:[%s1 + $0x108] sm:$0xff]
  %v118 = vld [vmem:[%s1 + $0x110] sm:$0xff]
  %v119 = vld [vmem:[%s1 + $0x118] sm:$0xff]
  %v120 = vld [vmem:[%s1 + $0x120] sm:$0xff]
  %v121 = vld [vmem:[%s1 + $0x128] sm:$0xff]
  %v122 = vld [vmem:[%s1 + $0x130] sm:$0xff]
  %v123 = vld [vmem:[%s1 + $0x138] sm:$0xff]
  %v124 = vld [vmem:[%s1 + $0x140] sm:$0xff]
  %v125 = vld [vmem:[%s1 + $0x148] sm:$0xff]
  %v126 = vld [vmem:[%s1 + $0x150] sm:$0xff]
  %v127 = vld [vmem:[%s1 + $0x158] sm:$0xff]
  %v128 = vld [vmem:[%s1 + $0x160] sm:$0xff]
  %v129 = vld [vmem:[%s1 + $0x168] sm:$0xff]
  %v130 = vld [vmem:[%s1 + $0x170] sm:$0xff]
  %v131 = vld [vmem:[%s1 + $0x178] sm:$0xff]
  %v132 = vld [vmem:[%s1 + $0x180] sm:$0xff]
  %v133 = vld [vmem:[%s1 + $0x188] sm:$0xff]
  %v134 = vld [vmem:[%s1 + $0x190] sm:$0xff]
  %v135 = vld [vmem:[%s1 + $0x198] sm:$0xff]
  %v136 = vld [vmem:[%s1 + $0x1a0] sm:$0xff]
  %v137 = vld [vmem:[%s1 + $0x1a8] sm:$0xff]
  %v138 = vld [vmem:[%s1 + $0x1b0] sm:$0xff]
  %v139 = vld [vmem:[%s1 + $0x1b8] sm:$0xff]
  %v140 = vld [vmem:[%s1 + $0x1c0] sm:$0xff]
  %v141 = vld [vmem:[%s1 + $0x1c8] sm:$0xff]
  %v142 = vld [vmem:[%s1 + $0x1d0] sm:$0xff]
  %v143 = vld [vmem:[%s1 + $0x1d8] sm:$0xff]
  %v144 = vld [vmem:[%s1 + $0x1e0] sm:$0xff]
  %v145 = vld [vmem:[%s1 + $0x1e8] sm:$0xff]
  %v146 = vld [vmem:[%s1 + $0x1f0] sm:$0xff]
  %v147 = vld [vmem:[%s1 + $0x1f8] sm:$0xff]
  %v148 = vld [vmem:[%s1 + $0x200] sm:$0xff]
  %v149 = vld [vmem:[%s1 + $0x208] sm:$0xff]
  %v150 = vld [vmem:[%s1 + $0x210] sm:$0xff]
  %v151 = vld [vmem:[%s1 + $0x218] sm:$0xff]
  %v152 = vld [vmem:[%s1 + $0x220] sm:$0xff]
  %v153 = vld [vmem:[%s1 + $0x228] sm:$0xff]
  %v154 = vld [vmem:[%s1 + $0x230] sm:$0xff]
  %v155 = vld [vmem:[%s1 + $0x238] sm:$0xff]
  %v156 = vld [vmem:[%s1 + $0x240] sm:$0xff]
  %v157 = vld [vmem:[%s1 + $0x248] sm:$0xff]
  %v158 = vld [vmem:[%s1 + $0x250] sm:$0xff]
  %v159 = vld [vmem:[%s1 + $0x258] sm:$0xff]
  %v160 = vld [vmem:[%s1 + $0x260] sm:$0xff]
  %v161 = vld [vmem:[%s1 + $0x268] sm:$0xff]
  %v162 = vld [vmem:[%s1 + $0x270] sm:$0xff]
  %v163 = vld [vmem:[%s1 + $0x278] sm:$0xff]
  %v164 = vld [vmem:[%s1 + $0x280] sm:$0xff]
  %v165 = vld [vmem:[%s1 + $0x288] sm:$0xff]
  %v166 = vld [vmem:[%s1 + $0x290] sm:$0xff]
  %v167 = vld [vmem:[%s1 + $0x298] sm:$0xff]
  %v168 = vld [vmem:[%s1 + $0x2a0] sm:$0xff]
  %v169 = vld [vmem:[%s1 + $0x2a8] sm:$0xff]
  %v170 = vld [vmem:[%s1 + $0x2b0] sm:$0xff]
  %v171 = vld [vmem:[%s1 + $0x2b8] sm:$0xff]
  %v172 = vld [vmem:[%s1 + $0x2c0] sm:$0xff]
  %v173 = vld [vmem:[%s1 + $0x2c8] sm:$0xff]
  %v174 = vld [vmem:[%s1 + $0x2d0] sm:$0xff]
  %v175 = vld [vmem:[%s1 + $0x2d8] sm:$0xff]
  %v176 = vld [vmem:[%s1 + $0x2e0] sm:$0xff]
  %v177 = vld [vmem:[%s1 + $0x2e8] sm:$0xff]
  %v178 = vld [vmem:[%s1 + $0x2f0] sm:$0xff]
  %v179 = vld [vmem:[%s1 + $0x2f8] sm:$0xff]
  %v180 = vld [vmem:[%s1 + $0x300] sm:$0xff]
  %v181 = vld [vmem:[%s1 + $0x308] sm:$0xff]
  %v182 = vld [vmem:[%s1 + $0x310] sm:$0xff]
  %v183 = vld [vmem:[%s1 + $0x318] sm:$0xff]
  %v184 = vld [vmem:[%s1 + $0x320] sm:$0xff]
  %v185 = vld [vmem:[%s1 + $0x328] sm:$0xff]
  %v186 = vld [vmem:[%s1 + $0x330] sm:$0xff]
  %v187 = vld [vmem:[%s1 + $0x338] sm:$0xff]
  %v188 = vld [vmem:[%s1 + $0x340] sm:$0xff]
  %v189 = vld [vmem:[%s1 + $0x348] sm:$0xff]
  %v190 = vld [vmem:[%s1 + $0x350] sm:$0xff]
  %v191 = vld [vmem:[%s1 + $0x358] sm:$0xff]
  %v192 = vld [vmem:[%s1 + $0x360] sm:$0xff]
  %v193 = vld [vmem:[%s1 + $0x368] sm:$0xff]
  %v194 = vld [vmem:[%s1 + $0x370] sm:$0xff]
  %v195 = vld [vmem:[%s1 + $0x378] sm:$0xff]
  %v196 = vld [vmem:[%s1 + $0x380] sm:$0xff]
  %v197 = vld [vmem:[%s1 + $0x388] sm:$0xff]
  %v198 = vld [vmem:[%s1 + $0x390] sm:$0xff]
  %v199 = vld [vmem:[%s1 + $0x398] sm:$0xff]
  %v200 = vld [vmem:[%s1 + $0x3a0] sm:$0xff]
  %v201 = vld [vmem:[%s1 + $0x3a8] sm:$0xff]
  %v202 = vld [vmem:[%s1 + $0x3b0] sm:$0xff]
  %v203 = vld [vmem:[%s1 + $0x3b8] sm:$0xff]
  %v204 = vld [vmem:[%s1 + $0x3c0] sm:$0xff]
  %v205 = vld [vmem:[%s1 + $0x3c8] sm:$0xff]
  %v206 = vld [vmem:[%s1 + $0x3d0] sm:$0xff]
  %v207 = vld [vmem:[%s1 + $0x3d8] sm:$0xff]
  %v208 = vld [vmem:[%s1 + $0x3e0] sm:$0xff]
  %v209 = vld [vmem:[%s1 + $0x3e8] sm:$0xff]
  %v210 = vld [vmem:[%s1 + $0x3f0] sm:$0xff]
  %v211 = vld [vmem:[%s1 + $0x3f8] sm:$0xff]
  %v212 = vld [vmem:[%s1 + $0x400] sm:$0xff]
  %v213 = vld [vmem:[%s1 + $0x408] sm:$0xff]
  %v214 = vld [vmem:[%s1 + $0x410] sm:$0xff]
  %v215 = vld [vmem:[%s1 + $0x418] sm:$0xff]
  %v216 = vld [vmem:[%s1 + $0x420] sm:$0xff]
  %v217 = vld [vmem:[%s1 + $0x428] sm:$0xff]
  %v218 = vld [vmem:[%s1 + $0x430] sm:$0xff]
  %v219 = vld [vmem:[%s1 + $0x438] sm:$0xff]
  %v220 = vld [vmem:[%s1 + $0x440] sm:$0xff]
  %v221 = vld [vmem:[%s1 + $0x448] sm:$0xff]
  %v222 = vld [vmem:[%s1 + $0x450] sm:$0xff]
  %v223 = vld [vmem:[%s1 + $0x458] sm:$0xff]
  %v224 = vld [vmem:[%s1 + $0x460] sm:$0xff]
  %v225 = vld [vmem:[%s1 + $0x468] sm:$0xff]
  %v226 = vld [vmem:[%s1 + $0x470] sm:$0xff]
  %v227 = vld [vmem:[%s1 + $0x478] sm:$0xff]
  %v228 = vld [vmem:[%s1 + $0x480] sm:$0xff]
  %v229 = vld [vmem:[%s1 + $0x488] sm:$0xff]
  %v230 = vld [vmem:[%s1 + $0x490] sm:$0xff]
  %v231 = vld [vmem:[%s1 + $0x498] sm:$0xff]
  %v232 = vld [vmem:[%s1 + $0x4a0] sm:$0xff]
  %v233 = vld [vmem:[%s1 + $0x4a8] sm:$0xff]
  %v234 = vld [vmem:[%s1 + $0x4b0] sm:$0xff]
  %v235 = vld [vmem:[%s1 + $0x4b8] sm:$0xff]
  %v236 = vld [vmem:[%s1 + $0x4c0] sm:$0xff]
  %v237 = vld [vmem:[%s1 + $0x4c8] sm:$0xff]
  %v238 = vld [vmem:[%s1 + $0x4d0] sm:$0xff]
  %v239 = vld [vmem:[%s1 + $0x4d8] sm:$0xff]
  %v240 = vld [vmem:[%s1 + $0x4e0] sm:$0xff]
  %v241 = vld [vmem:[%s1 + $0x4e8] sm:$0xff]
  %v242 = vld [vmem:[%s1 + $0x4f0] sm:$0xff]
  %v243 = vld [vmem:[%s1 + $0x4f8] sm:$0xff]
  %v244 = vld [vmem:[%s1 + $0x500] sm:$0xff]
  %v245 = vld [vmem:[%s1 + $0x508] sm:$0xff]
  %v246 = vld [vmem:[%s1 + $0x510] sm:$0xff]
  %v247 = vld [vmem:[%s1 + $0x518] sm:$0xff]
  %v248 = vld [vmem:[%s1 + $0x520] sm:$0xff]
  %v249 = vld [vmem:[%s1 + $0x528] sm:$0xff]
  %v250 = vld [vmem:[%s1 + $0x530] sm:$0xff]
  %v251 = vld [vmem:[%s1 + $0x538] sm:$0xff]
  %v252 = vld [vmem:[%s1 + $0x540] sm:$0xff]
  %v253 = vld [vmem:[%s1 + $0x548] sm:$0xff]
  %v254 = vld [vmem:[%s1 + $0x550] sm:$0xff]
  %v255 = vld [vmem:[%s1 + $0x558] sm:$0xff]
  %v256 = vld [vmem:[%s1 + $0x560] sm:$0xff]
  %v257 = vld [vmem:[%s1 + $0x568] sm:$0xff]
  %v258 = vld [vmem:[%s1 + $0x570] sm:$0xff]
  %v259 = vld [vmem:[%s1 + $0x578] sm:$0xff]
  %v260 = vld [vmem:[%s1 + $0x580] sm:$0xff]
  %v261 = vld [vmem:[%s1 + $0x588] sm:$0xff]
  %v262 = vld [vmem:[%s1 + $0x590] sm:$0xff]
  %v263 = vld [vmem:[%s1 + $0x598] sm:$0xff]
  %v264 = vld [vmem:[%s1 + $0x5a0] sm:$0xff]
  %v265 = vld [vmem:[%s1 + $0x5a8] sm:$0xff]
  %v266 = vld [vmem:[%s1 + $0x5b0] sm:$0xff]
  %v267 = vld [vmem:[%s1 + $0x5b8] sm:$0xff]
  %v268 = vld [vmem:[%s1 + $0x5c0] sm:$0xff]
  %v269 = vld [vmem:[%s1 + $0x5c8] sm:$0xff]
  %v270 = vld [vmem:[%s1 + $0x5d0] sm:$0xff]
  %v271 = vld [vmem:[%s1 + $0x5d8] sm:$0xff]
  %v272 = vld [vmem:[%s1 + $0x5e0] sm:$0xff]
  %v273 = vld [vmem:[%s1 + $0x5e8] sm:$0xff]
  %v274 = vld [vmem:[%s1 + $0x5f0] sm:$0xff]
  %v275 = vld [vmem:[%s1 + $0x5f8] sm:$0xff]
  %v276 = vld [vmem:[%s1 + $0x600] sm:$0xff]
  %v277 = vld [vmem:[%s1 + $0x608] sm:$0xff]
  %v278 = vld [vmem:[%s1 + $0x610] sm:$0xff]
  %v279 = vld [vmem:[%s1 + $0x618] sm:$0xff]
  %v280 = vld [vmem:[%s1 + $0x620] sm:$0xff]
  %v281 = vld [vmem:[%s1 + $0x628] sm:$0xff]
  %v282 = vld [vmem:[%s1 + $0x630] sm:$0xff]
  %v283 = vld [vmem:[%s1 + $0x638] sm:$0xff]
  %v284 = vld [vmem:[%s1 + $0x640] sm:$0xff]
  %v285 = vld [vmem:[%s1 + $0x648] sm:$0xff]
  %v286 = vld [vmem:[%s1 + $0x650] sm:$0xff]
  %v287 = vld [vmem:[%s1 + $0x658] sm:$0xff]
  %v288 = vld [vmem:[%s1 + $0x660] sm:$0xff]
  %v289 = vld [vmem:[%s1 + $0x668] sm:$0xff]
  %v290 = vld [vmem:[%s1 + $0x670] sm:$0xff]
  %v291 = vld [vmem:[%s1 + $0x678] sm:$0xff]
  %v292 = vld [vmem:[%s1 + $0x680] sm:$0xff]
  %v293 = vld [vmem:[%s1 + $0x688] sm:$0xff]
  %v294 = vld [vmem:[%s1 + $0x690] sm:$0xff]
  %v295 = vld [vmem:[%s1 + $0x698] sm:$0xff]
  %v296 = vld [vmem:[%s1 + $0x6a0] sm:$0xff]
  %v297 = vld [vmem:[%s1 + $0x6a8] sm:$0xff]
  %v298 = vld [vmem:[%s1 + $0x6b0] sm:$0xff]
  %v299 = vld [vmem:[%s1 + $0x6b8] sm:$0xff]
  %v300 = vld [vmem:[%s1 + $0x6c0] sm:$0xff]
  %v301 = vld [vmem:[%s1 + $0x6c8] sm:$0xff]
  %v302 = vld [vmem:[%s1 + $0x6d0] sm:$0xff]
  %v303 = vld [vmem:[%s1 + $0x6d8] sm:$0xff]
  %v304 = vld [vmem:[%s1 + $0x6e0] sm:$0xff]
  %v305 = vld [vmem:[%s1 + $0x6e8] sm:$0xff]
  %v306 = vld [vmem:[%s1 + $0x6f0] sm:$0xff]
  %v307 = vld [vmem:[%s1 + $0x6f8] sm:$0xff]
  %v308 = vld [vmem:[%s1 + $0x700] sm:$0xff]
  %v309 = vld [vmem:[%s1 + $0x708] sm:$0xff]
  %v310 = vld [vmem:[%s1 + $0x710] sm:$0xff]
  %v311 = vld [vmem:[%s1 + $0x718] sm:$0xff]
  %v312 = vld [vmem:[%s1 + $0x720] sm:$0xff]
  %v313 = vld [vmem:[%s1 + $0x728] sm:$0xff]
  %v314 = vld [vmem:[%s1 + $0x730] sm:$0xff]
  %v315 = vld [vmem:[%s1 + $0x738] sm:$0xff]
  %v316 = vld [vmem:[%s1 + $0x740] sm:$0xff]
  %v317 = vld [vmem:[%s1 + $0x748] sm:$0xff]
  %v318 = vld [vmem:[%s1 + $0x750] sm:$0xff]
  %v319 = vld [vmem:[%s1 + $0x758] sm:$0xff]
  %v320 = vld [vmem:[%s1 + $0x760] sm:$0xff]
  %v321 = vld [vmem:[%s1 + $0x768] sm:$0xff]
  %v322 = vld [vmem:[%s1 + $0x770] sm:$0xff]
  %v323 = vld [vmem:[%s1 + $0x778] sm:$0xff]
  %v324 = vld [vmem:[%s1 + $0x780] sm:$0xff]
  %v325 = vld [vmem:[%s1 + $0x788] sm:$0xff]
  %v326 = vld [vmem:[%s1 + $0x790] sm:$0xff]
  %v327 = vld [vmem:[%s1 + $0x798] sm:$0xff]
  %v328 = vld [vmem:[%s1 + $0x7a0] sm:$0xff]
  %v329 = vld [vmem:[%s1 + $0x7a8] sm:$0xff]
  %v330 = vld [vmem:[%s1 + $0x7b0] sm:$0xff]
  %v331 = vld [vmem:[%s1 + $0x7b8] sm:$0xff]
  %v332 = vld [vmem:[%s1 + $0x7c0] sm:$0xff]
  %v333 = vld [vmem:[%s1 + $0x7c8] sm:$0xff]
  %v334 = vld [vmem:[%s1 + $0x7d0] sm:$0xff]
  %v335 = vld [vmem:[%s1 + $0x7d8] sm:$0xff]
  %v336 = vld [vmem:[%s1 + $0x7e0] sm:$0xff]
  %v337 = vld [vmem:[%s1 + $0x7e8] sm:$0xff]
  %v338 = vld [vmem:[%s1 + $0x7f0] sm:$0xff]
  %v339 = vld [vmem:[%s1 + $0x7f8] sm:$0xff]
  %v340 = vld [vmem:[%s2] sm:$0xf]
  %v342 = vlaneseq
  %v343 = vshrl.u32 %v342, 7
  %v344 = vsub.s32 0, %v343
  %v345 = vrot.slane %v340, %v344
  %v346 = vlaneseq
  %v347 = vshrl.u32 %v346, 7
  %v348 = vsub.s32 1, %v347
  %v349 = vrot.slane %v340, %v348
  %v350 = vlaneseq
  %v351 = vshrl.u32 %v350, 7
  %v352 = vsub.s32 2, %v351
  %v353 = vrot.slane %v340, %v352
  %v354 = vlaneseq
  %v355 = vshrl.u32 %v354, 7
  %v356 = vsub.s32 3, %v355
  %v357 = vrot.slane %v340, %v356
  %v618 = vunpack.c.l.b16 %v84
  %v619 = vunpack.c.h.b16 %v84
  %v620 = vunpack.c.l.b16 %v85
  %v621 = vunpack.c.h.b16 %v85
  %v622 = vunpack.c.l.b16 %v86
  %v623 = vunpack.c.h.b16 %v86
  %v624 = vunpack.c.l.b16 %v87
  %v625 = vunpack.c.h.b16 %v87
  %v626 = vunpack.c.l.b16 %v88
  %v627 = vunpack.c.h.b16 %v88
  %v628 = vunpack.c.l.b16 %v89
  %v629 = vunpack.c.h.b16 %v89
  %v630 = vunpack.c.l.b16 %v90
  %v631 = vunpack.c.h.b16 %v90
  %v632 = vunpack.c.l.b16 %v91
  %v633 = vunpack.c.h.b16 %v91
  %v634 = vunpack.c.l.b16 %v92
  %v635 = vunpack.c.h.b16 %v92
  %v636 = vunpack.c.l.b16 %v93
  %v637 = vunpack.c.h.b16 %v93
  %v638 = vunpack.c.l.b16 %v94
  %v639 = vunpack.c.h.b16 %v94
  %v640 = vunpack.c.l.b16 %v95
  %v641 = vunpack.c.h.b16 %v95
  %v642 = vunpack.c.l.b16 %v96
  %v643 = vunpack.c.h.b16 %v96
  %v644 = vunpack.c.l.b16 %v97
  %v645 = vunpack.c.h.b16 %v97
  %v646 = vunpack.c.l.b16 %v98
  %v647 = vunpack.c.h.b16 %v98
  %v648 = vunpack.c.l.b16 %v99
  %v649 = vunpack.c.h.b16 %v99
  %v650 = vunpack.c.l.b16 %v100
  %v651 = vunpack.c.h.b16 %v100
  %v652 = vunpack.c.l.b16 %v101
  %v653 = vunpack.c.h.b16 %v101
  %v654 = vunpack.c.l.b16 %v102
  %v655 = vunpack.c.h.b16 %v102
  %v656 = vunpack.c.l.b16 %v103
  %v657 = vunpack.c.h.b16 %v103
  %v658 = vunpack.c.l.b16 %v104
  %v659 = vunpack.c.h.b16 %v104
  %v660 = vunpack.c.l.b16 %v105
  %v661 = vunpack.c.h.b16 %v105
  %v662 = vunpack.c.l.b16 %v106
  %v663 = vunpack.c.h.b16 %v106
  %v664 = vunpack.c.l.b16 %v107
  %v665 = vunpack.c.h.b16 %v107
  %v666 = vunpack.c.l.b16 %v108
  %v667 = vunpack.c.h.b16 %v108
  %v668 = vunpack.c.l.b16 %v109
  %v669 = vunpack.c.h.b16 %v109
  %v670 = vunpack.c.l.b16 %v110
  %v671 = vunpack.c.h.b16 %v110
  %v672 = vunpack.c.l.b16 %v111
  %v673 = vunpack.c.h.b16 %v111
  %v674 = vunpack.c.l.b16 %v112
  %v675 = vunpack.c.h.b16 %v112
  %v676 = vunpack.c.l.b16 %v113
  %v677 = vunpack.c.h.b16 %v113
  %v678 = vunpack.c.l.b16 %v114
  %v679 = vunpack.c.h.b16 %v114
  %v680 = vunpack.c.l.b16 %v115
  %v681 = vunpack.c.h.b16 %v115
  %v682 = vunpack.c.l.b16 %v116
  %v683 = vunpack.c.h.b16 %v116
  %v684 = vunpack.c.l.b16 %v117
  %v685 = vunpack.c.h.b16 %v117
  %v686 = vunpack.c.l.b16 %v118
  %v687 = vunpack.c.h.b16 %v118
  %v688 = vunpack.c.l.b16 %v119
  %v689 = vunpack.c.h.b16 %v119
  %v690 = vunpack.c.l.b16 %v120
  %v691 = vunpack.c.h.b16 %v120
  %v692 = vunpack.c.l.b16 %v121
  %v693 = vunpack.c.h.b16 %v121
  %v694 = vunpack.c.l.b16 %v122
  %v695 = vunpack.c.h.b16 %v122
  %v696 = vunpack.c.l.b16 %v123
  %v697 = vunpack.c.h.b16 %v123
  %v698 = vunpack.c.l.b16 %v124
  %v699 = vunpack.c.h.b16 %v124
  %v700 = vunpack.c.l.b16 %v125
  %v701 = vunpack.c.h.b16 %v125
  %v702 = vunpack.c.l.b16 %v126
  %v703 = vunpack.c.h.b16 %v126
  %v704 = vunpack.c.l.b16 %v127
  %v705 = vunpack.c.h.b16 %v127
  %v706 = vunpack.c.l.b16 %v128
  %v707 = vunpack.c.h.b16 %v128
  %v708 = vunpack.c.l.b16 %v129
  %v709 = vunpack.c.h.b16 %v129
  %v710 = vunpack.c.l.b16 %v130
  %v711 = vunpack.c.h.b16 %v130
  %v712 = vunpack.c.l.b16 %v131
  %v713 = vunpack.c.h.b16 %v131
  %v714 = vunpack.c.l.b16 %v132
  %v715 = vunpack.c.h.b16 %v132
  %v716 = vunpack.c.l.b16 %v133
  %v717 = vunpack.c.h.b16 %v133
  %v718 = vunpack.c.l.b16 %v134
  %v719 = vunpack.c.h.b16 %v134
  %v720 = vunpack.c.l.b16 %v135
  %v721 = vunpack.c.h.b16 %v135
  %v722 = vunpack.c.l.b16 %v136
  %v723 = vunpack.c.h.b16 %v136
  %v724 = vunpack.c.l.b16 %v137
  %v725 = vunpack.c.h.b16 %v137
  %v726 = vunpack.c.l.b16 %v138
  %v727 = vunpack.c.h.b16 %v138
  %v728 = vunpack.c.l.b16 %v139
  %v729 = vunpack.c.h.b16 %v139
  %v730 = vunpack.c.l.b16 %v140
  %v731 = vunpack.c.h.b16 %v140
  %v732 = vunpack.c.l.b16 %v141
  %v733 = vunpack.c.h.b16 %v141
  %v734 = vunpack.c.l.b16 %v142
  %v735 = vunpack.c.h.b16 %v142
  %v736 = vunpack.c.l.b16 %v143
  %v737 = vunpack.c.h.b16 %v143
  %v738 = vunpack.c.l.b16 %v144
  %v739 = vunpack.c.h.b16 %v144
  %v740 = vunpack.c.l.b16 %v145
  %v741 = vunpack.c.h.b16 %v145
  %v742 = vunpack.c.l.b16 %v146
  %v743 = vunpack.c.h.b16 %v146
  %v744 = vunpack.c.l.b16 %v147
  %v745 = vunpack.c.h.b16 %v147
  %v746 = vunpack.c.l.b16 %v148
  %v747 = vunpack.c.h.b16 %v148
  %v748 = vunpack.c.l.b16 %v149
  %v749 = vunpack.c.h.b16 %v149
  %v750 = vunpack.c.l.b16 %v150
  %v751 = vunpack.c.h.b16 %v150
  %v752 = vunpack.c.l.b16 %v151
  %v753 = vunpack.c.h.b16 %v151
  %v754 = vunpack.c.l.b16 %v152
  %v755 = vunpack.c.h.b16 %v152
  %v756 = vunpack.c.l.b16 %v153
  %v757 = vunpack.c.h.b16 %v153
  %v758 = vunpack.c.l.b16 %v154
  %v759 = vunpack.c.h.b16 %v154
  %v760 = vunpack.c.l.b16 %v155
  %v761 = vunpack.c.h.b16 %v155
  %v762 = vunpack.c.l.b16 %v156
  %v763 = vunpack.c.h.b16 %v156
  %v764 = vunpack.c.l.b16 %v157
  %v765 = vunpack.c.h.b16 %v157
  %v766 = vunpack.c.l.b16 %v158
  %v767 = vunpack.c.h.b16 %v158
  %v768 = vunpack.c.l.b16 %v159
  %v769 = vunpack.c.h.b16 %v159
  %v770 = vunpack.c.l.b16 %v160
  %v771 = vunpack.c.h.b16 %v160
  %v772 = vunpack.c.l.b16 %v161
  %v773 = vunpack.c.h.b16 %v161
  %v774 = vunpack.c.l.b16 %v162
  %v775 = vunpack.c.h.b16 %v162
  %v776 = vunpack.c.l.b16 %v163
  %v777 = vunpack.c.h.b16 %v163
  %v778 = vunpack.c.l.b16 %v164
  %v779 = vunpack.c.h.b16 %v164
  %v780 = vunpack.c.l.b16 %v165
  %v781 = vunpack.c.h.b16 %v165
  %v782 = vunpack.c.l.b16 %v166
  %v783 = vunpack.c.h.b16 %v166
  %v784 = vunpack.c.l.b16 %v167
  %v785 = vunpack.c.h.b16 %v167
  %v786 = vunpack.c.l.b16 %v168
  %v787 = vunpack.c.h.b16 %v168
  %v788 = vunpack.c.l.b16 %v169
  %v789 = vunpack.c.h.b16 %v169
  %v790 = vunpack.c.l.b16 %v170
  %v791 = vunpack.c.h.b16 %v170
  %v792 = vunpack.c.l.b16 %v171
  %v793 = vunpack.c.h.b16 %v171
  %v794 = vunpack.c.l.b16 %v172
  %v795 = vunpack.c.h.b16 %v172
  %v796 = vunpack.c.l.b16 %v173
  %v797 = vunpack.c.h.b16 %v173
  %v798 = vunpack.c.l.b16 %v174
  %v799 = vunpack.c.h.b16 %v174
  %v800 = vunpack.c.l.b16 %v175
  %v801 = vunpack.c.h.b16 %v175
  %v802 = vunpack.c.l.b16 %v176
  %v803 = vunpack.c.h.b16 %v176
  %v804 = vunpack.c.l.b16 %v177
  %v805 = vunpack.c.h.b16 %v177
  %v806 = vunpack.c.l.b16 %v178
  %v807 = vunpack.c.h.b16 %v178
  %v808 = vunpack.c.l.b16 %v179
  %v809 = vunpack.c.h.b16 %v179
  %v810 = vunpack.c.l.b16 %v180
  %v811 = vunpack.c.h.b16 %v180
  %v812 = vunpack.c.l.b16 %v181
  %v813 = vunpack.c.h.b16 %v181
  %v814 = vunpack.c.l.b16 %v182
  %v815 = vunpack.c.h.b16 %v182
  %v816 = vunpack.c.l.b16 %v183
  %v817 = vunpack.c.h.b16 %v183
  %v818 = vunpack.c.l.b16 %v184
  %v819 = vunpack.c.h.b16 %v184
  %v820 = vunpack.c.l.b16 %v185
  %v821 = vunpack.c.h.b16 %v185
  %v822 = vunpack.c.l.b16 %v186
  %v823 = vunpack.c.h.b16 %v186
  %v824 = vunpack.c.l.b16 %v187
  %v825 = vunpack.c.h.b16 %v187
  %v826 = vunpack.c.l.b16 %v188
  %v827 = vunpack.c.h.b16 %v188
  %v828 = vunpack.c.l.b16 %v189
  %v829 = vunpack.c.h.b16 %v189
  %v830 = vunpack.c.l.b16 %v190
  %v831 = vunpack.c.h.b16 %v190
  %v832 = vunpack.c.l.b16 %v191
  %v833 = vunpack.c.h.b16 %v191
  %v834 = vunpack.c.l.b16 %v192
  %v835 = vunpack.c.h.b16 %v192
  %v836 = vunpack.c.l.b16 %v193
  %v837 = vunpack.c.h.b16 %v193
  %v838 = vunpack.c.l.b16 %v194
  %v839 = vunpack.c.h.b16 %v194
  %v840 = vunpack.c.l.b16 %v195
  %v841 = vunpack.c.h.b16 %v195
  %v842 = vunpack.c.l.b16 %v196
  %v843 = vunpack.c.h.b16 %v196
  %v844 = vunpack.c.l.b16 %v197
  %v845 = vunpack.c.h.b16 %v197
  %v846 = vunpack.c.l.b16 %v198
  %v847 = vunpack.c.h.b16 %v198
  %v848 = vunpack.c.l.b16 %v199
  %v849 = vunpack.c.h.b16 %v199
  %v850 = vunpack.c.l.b16 %v200
  %v851 = vunpack.c.h.b16 %v200
  %v852 = vunpack.c.l.b16 %v201
  %v853 = vunpack.c.h.b16 %v201
  %v854 = vunpack.c.l.b16 %v202
  %v855 = vunpack.c.h.b16 %v202
  %v856 = vunpack.c.l.b16 %v203
  %v857 = vunpack.c.h.b16 %v203
  %v858 = vunpack.c.l.b16 %v204
  %v859 = vunpack.c.h.b16 %v204
  %v860 = vunpack.c.l.b16 %v205
  %v861 = vunpack.c.h.b16 %v205
  %v862 = vunpack.c.l.b16 %v206
  %v863 = vunpack.c.h.b16 %v206
  %v864 = vunpack.c.l.b16 %v207
  %v865 = vunpack.c.h.b16 %v207
  %v866 = vunpack.c.l.b16 %v208
  %v867 = vunpack.c.h.b16 %v208
  %v868 = vunpack.c.l.b16 %v209
  %v869 = vunpack.c.h.b16 %v209
  %v870 = vunpack.c.l.b16 %v210
  %v871 = vunpack.c.h.b16 %v210
  %v872 = vunpack.c.l.b16 %v211
  %v873 = vunpack.c.h.b16 %v211
  %v874 = vunpack.c.l.b16 %v212
  %v875 = vunpack.c.h.b16 %v212
  %v876 = vunpack.c.l.b16 %v213
  %v877 = vunpack.c.h.b16 %v213
  %v878 = vunpack.c.l.b16 %v214
  %v879 = vunpack.c.h.b16 %v214
  %v880 = vunpack.c.l.b16 %v215
  %v881 = vunpack.c.h.b16 %v215
  %v882 = vunpack.c.l.b16 %v216
  %v883 = vunpack.c.h.b16 %v216
  %v884 = vunpack.c.l.b16 %v217
  %v885 = vunpack.c.h.b16 %v217
  %v886 = vunpack.c.l.b16 %v218
  %v887 = vunpack.c.h.b16 %v218
  %v888 = vunpack.c.l.b16 %v219
  %v889 = vunpack.c.h.b16 %v219
  %v890 = vunpack.c.l.b16 %v220
  %v891 = vunpack.c.h.b16 %v220
  %v892 = vunpack.c.l.b16 %v221
  %v893 = vunpack.c.h.b16 %v221
  %v894 = vunpack.c.l.b16 %v222
  %v895 = vunpack.c.h.b16 %v222
  %v896 = vunpack.c.l.b16 %v223
  %v897 = vunpack.c.h.b16 %v223
  %v898 = vunpack.c.l.b16 %v224
  %v899 = vunpack.c.h.b16 %v224
  %v900 = vunpack.c.l.b16 %v225
  %v901 = vunpack.c.h.b16 %v225
  %v902 = vunpack.c.l.b16 %v226
  %v903 = vunpack.c.h.b16 %v226
  %v904 = vunpack.c.l.b16 %v227
  %v905 = vunpack.c.h.b16 %v227
  %v906 = vunpack.c.l.b16 %v228
  %v907 = vunpack.c.h.b16 %v228
  %v908 = vunpack.c.l.b16 %v229
  %v909 = vunpack.c.h.b16 %v229
  %v910 = vunpack.c.l.b16 %v230
  %v911 = vunpack.c.h.b16 %v230
  %v912 = vunpack.c.l.b16 %v231
  %v913 = vunpack.c.h.b16 %v231
  %v914 = vunpack.c.l.b16 %v232
  %v915 = vunpack.c.h.b16 %v232
  %v916 = vunpack.c.l.b16 %v233
  %v917 = vunpack.c.h.b16 %v233
  %v918 = vunpack.c.l.b16 %v234
  %v919 = vunpack.c.h.b16 %v234
  %v920 = vunpack.c.l.b16 %v235
  %v921 = vunpack.c.h.b16 %v235
  %v922 = vunpack.c.l.b16 %v236
  %v923 = vunpack.c.h.b16 %v236
  %v924 = vunpack.c.l.b16 %v237
  %v925 = vunpack.c.h.b16 %v237
  %v926 = vunpack.c.l.b16 %v238
  %v927 = vunpack.c.h.b16 %v238
  %v928 = vunpack.c.l.b16 %v239
  %v929 = vunpack.c.h.b16 %v239
  %v930 = vunpack.c.l.b16 %v240
  %v931 = vunpack.c.h.b16 %v240
  %v932 = vunpack.c.l.b16 %v241
  %v933 = vunpack.c.h.b16 %v241
  %v934 = vunpack.c.l.b16 %v242
  %v935 = vunpack.c.h.b16 %v242
  %v936 = vunpack.c.l.b16 %v243
  %v937 = vunpack.c.h.b16 %v243
  %v938 = vunpack.c.l.b16 %v244
  %v939 = vunpack.c.h.b16 %v244
  %v940 = vunpack.c.l.b16 %v245
  %v941 = vunpack.c.h.b16 %v245
  %v942 = vunpack.c.l.b16 %v246
  %v943 = vunpack.c.h.b16 %v246
  %v944 = vunpack.c.l.b16 %v247
  %v945 = vunpack.c.h.b16 %v247
  %v946 = vunpack.c.l.b16 %v248
  %v947 = vunpack.c.h.b16 %v248
  %v948 = vunpack.c.l.b16 %v249
  %v949 = vunpack.c.h.b16 %v249
  %v950 = vunpack.c.l.b16 %v250
  %v951 = vunpack.c.h.b16 %v250
  %v952 = vunpack.c.l.b16 %v251
  %v953 = vunpack.c.h.b16 %v251
  %v954 = vunpack.c.l.b16 %v252
  %v955 = vunpack.c.h.b16 %v252
  %v956 = vunpack.c.l.b16 %v253
  %v957 = vunpack.c.h.b16 %v253
  %v958 = vunpack.c.l.b16 %v254
  %v959 = vunpack.c.h.b16 %v254
  %v960 = vunpack.c.l.b16 %v255
  %v961 = vunpack.c.h.b16 %v255
  %v962 = vunpack.c.l.b16 %v256
  %v963 = vunpack.c.h.b16 %v256
  %v964 = vunpack.c.l.b16 %v257
  %v965 = vunpack.c.h.b16 %v257
  %v966 = vunpack.c.l.b16 %v258
  %v967 = vunpack.c.h.b16 %v258
  %v968 = vunpack.c.l.b16 %v259
  %v969 = vunpack.c.h.b16 %v259
  %v970 = vunpack.c.l.b16 %v260
  %v971 = vunpack.c.h.b16 %v260
  %v972 = vunpack.c.l.b16 %v261
  %v973 = vunpack.c.h.b16 %v261
  %v974 = vunpack.c.l.b16 %v262
  %v975 = vunpack.c.h.b16 %v262
  %v976 = vunpack.c.l.b16 %v263
  %v977 = vunpack.c.h.b16 %v263
  %v978 = vunpack.c.l.b16 %v264
  %v979 = vunpack.c.h.b16 %v264
  %v980 = vunpack.c.l.b16 %v265
  %v981 = vunpack.c.h.b16 %v265
  %v982 = vunpack.c.l.b16 %v266
  %v983 = vunpack.c.h.b16 %v266
  %v984 = vunpack.c.l.b16 %v267
  %v985 = vunpack.c.h.b16 %v267
  %v986 = vunpack.c.l.b16 %v268
  %v987 = vunpack.c.h.b16 %v268
  %v988 = vunpack.c.l.b16 %v269
  %v989 = vunpack.c.h.b16 %v269
  %v990 = vunpack.c.l.b16 %v270
  %v991 = vunpack.c.h.b16 %v270
  %v992 = vunpack.c.l.b16 %v271
  %v993 = vunpack.c.h.b16 %v271
  %v994 = vunpack.c.l.b16 %v272
  %v995 = vunpack.c.h.b16 %v272
  %v996 = vunpack.c.l.b16 %v273
  %v997 = vunpack.c.h.b16 %v273
  %v998 = vunpack.c.l.b16 %v274
  %v999 = vunpack.c.h.b16 %v274
  %v1000 = vunpack.c.l.b16 %v275
  %v1001 = vunpack.c.h.b16 %v275
  %v1002 = vunpack.c.l.b16 %v276
  %v1003 = vunpack.c.h.b16 %v276
  %v1004 = vunpack.c.l.b16 %v277
  %v1005 = vunpack.c.h.b16 %v277
  %v1006 = vunpack.c.l.b16 %v278
  %v1007 = vunpack.c.h.b16 %v278
  %v1008 = vunpack.c.l.b16 %v279
  %v1009 = vunpack.c.h.b16 %v279
  %v1010 = vunpack.c.l.b16 %v280
  %v1011 = vunpack.c.h.b16 %v280
  %v1012 = vunpack.c.l.b16 %v281
  %v1013 = vunpack.c.h.b16 %v281
  %v1014 = vunpack.c.l.b16 %v282
  %v1015 = vunpack.c.h.b16 %v282
  %v1016 = vunpack.c.l.b16 %v283
  %v1017 = vunpack.c.h.b16 %v283
  %v1018 = vunpack.c.l.b16 %v284
  %v1019 = vunpack.c.h.b16 %v284
  %v1020 = vunpack.c.l.b16 %v285
  %v1021 = vunpack.c.h.b16 %v285
  %v1022 = vunpack.c.l.b16 %v286
  %v1023 = vunpack.c.h.b16 %v286
  %v1024 = vunpack.c.l.b16 %v287
  %v1025 = vunpack.c.h.b16 %v287
  %v1026 = vunpack.c.l.b16 %v288
  %v1027 = vunpack.c.h.b16 %v288
  %v1028 = vunpack.c.l.b16 %v289
  %v1029 = vunpack.c.h.b16 %v289
  %v1030 = vunpack.c.l.b16 %v290
  %v1031 = vunpack.c.h.b16 %v290
  %v1032 = vunpack.c.l.b16 %v291
  %v1033 = vunpack.c.h.b16 %v291
  %v1034 = vunpack.c.l.b16 %v292
  %v1035 = vunpack.c.h.b16 %v292
  %v1036 = vunpack.c.l.b16 %v293
  %v1037 = vunpack.c.h.b16 %v293
  %v1038 = vunpack.c.l.b16 %v294
  %v1039 = vunpack.c.h.b16 %v294
  %v1040 = vunpack.c.l.b16 %v295
  %v1041 = vunpack.c.h.b16 %v295
  %v1042 = vunpack.c.l.b16 %v296
  %v1043 = vunpack.c.h.b16 %v296
  %v1044 = vunpack.c.l.b16 %v297
  %v1045 = vunpack.c.h.b16 %v297
  %v1046 = vunpack.c.l.b16 %v298
  %v1047 = vunpack.c.h.b16 %v298
  %v1048 = vunpack.c.l.b16 %v299
  %v1049 = vunpack.c.h.b16 %v299
  %v1050 = vunpack.c.l.b16 %v300
  %v1051 = vunpack.c.h.b16 %v300
  %v1052 = vunpack.c.l.b16 %v301
  %v1053 = vunpack.c.h.b16 %v301
  %v1054 = vunpack.c.l.b16 %v302
  %v1055 = vunpack.c.h.b16 %v302
  %v1056 = vunpack.c.l.b16 %v303
  %v1057 = vunpack.c.h.b16 %v303
  %v1058 = vunpack.c.l.b16 %v304
  %v1059 = vunpack.c.h.b16 %v304
  %v1060 = vunpack.c.l.b16 %v305
  %v1061 = vunpack.c.h.b16 %v305
  %v1062 = vunpack.c.l.b16 %v306
  %v1063 = vunpack.c.h.b16 %v306
  %v1064 = vunpack.c.l.b16 %v307
  %v1065 = vunpack.c.h.b16 %v307
  %v1066 = vunpack.c.l.b16 %v308
  %v1067 = vunpack.c.h.b16 %v308
  %v1068 = vunpack.c.l.b16 %v309
  %v1069 = vunpack.c.h.b16 %v309
  %v1070 = vunpack.c.l.b16 %v310
  %v1071 = vunpack.c.h.b16 %v310
  %v1072 = vunpack.c.l.b16 %v311
  %v1073 = vunpack.c.h.b16 %v311
  %v1074 = vunpack.c.l.b16 %v312
  %v1075 = vunpack.c.h.b16 %v312
  %v1076 = vunpack.c.l.b16 %v313
  %v1077 = vunpack.c.h.b16 %v313
  %v1078 = vunpack.c.l.b16 %v314
  %v1079 = vunpack.c.h.b16 %v314
  %v1080 = vunpack.c.l.b16 %v315
  %v1081 = vunpack.c.h.b16 %v315
  %v1082 = vunpack.c.l.b16 %v316
  %v1083 = vunpack.c.h.b16 %v316
  %v1084 = vunpack.c.l.b16 %v317
  %v1085 = vunpack.c.h.b16 %v317
  %v1086 = vunpack.c.l.b16 %v318
  %v1087 = vunpack.c.h.b16 %v318
  %v1088 = vunpack.c.l.b16 %v319
  %v1089 = vunpack.c.h.b16 %v319
  %v1090 = vunpack.c.l.b16 %v320
  %v1091 = vunpack.c.h.b16 %v320
  %v1092 = vunpack.c.l.b16 %v321
  %v1093 = vunpack.c.h.b16 %v321
  %v1094 = vunpack.c.l.b16 %v322
  %v1095 = vunpack.c.h.b16 %v322
  %v1096 = vunpack.c.l.b16 %v323
  %v1097 = vunpack.c.h.b16 %v323
  %v1098 = vunpack.c.l.b16 %v324
  %v1099 = vunpack.c.h.b16 %v324
  %v1100 = vunpack.c.l.b16 %v325
  %v1101 = vunpack.c.h.b16 %v325
  %v1102 = vunpack.c.l.b16 %v326
  %v1103 = vunpack.c.h.b16 %v326
  %v1104 = vunpack.c.l.b16 %v327
  %v1105 = vunpack.c.h.b16 %v327
  %v1106 = vunpack.c.l.b16 %v328
  %v1107 = vunpack.c.h.b16 %v328
  %v1108 = vunpack.c.l.b16 %v329
  %v1109 = vunpack.c.h.b16 %v329
  %v1110 = vunpack.c.l.b16 %v330
  %v1111 = vunpack.c.h.b16 %v330
  %v1112 = vunpack.c.l.b16 %v331
  %v1113 = vunpack.c.h.b16 %v331
  %v1114 = vunpack.c.l.b16 %v332
  %v1115 = vunpack.c.h.b16 %v332
  %v1116 = vunpack.c.l.b16 %v333
  %v1117 = vunpack.c.h.b16 %v333
  %v1118 = vunpack.c.l.b16 %v334
  %v1119 = vunpack.c.h.b16 %v334
  %v1120 = vunpack.c.l.b16 %v335
  %v1121 = vunpack.c.h.b16 %v335
  %v1122 = vunpack.c.l.b16 %v336
  %v1123 = vunpack.c.h.b16 %v336
  %v1124 = vunpack.c.l.b16 %v337
  %v1125 = vunpack.c.h.b16 %v337
  %v1126 = vunpack.c.l.b16 %v338
  %v1127 = vunpack.c.h.b16 %v338
  %v1128 = vunpack.c.l.b16 %v339
  %v1129 = vunpack.c.h.b16 %v339
  %v1130 = vpack.c.b16 %v622, %v618
  %v1131 = vpack.c.b16 %v623, %v619
  %v1132 = vpack.c.b16 %v624, %v620
  %v1133 = vpack.c.b16 %v625, %v621
  %v1134 = vpack.c.b16 %v630, %v626
  %v1135 = vpack.c.b16 %v631, %v627
  %v1136 = vpack.c.b16 %v632, %v628
  %v1137 = vpack.c.b16 %v633, %v629
  %v1138 = vpack.c.b16 %v638, %v634
  %v1139 = vpack.c.b16 %v639, %v635
  %v1140 = vpack.c.b16 %v640, %v636
  %v1141 = vpack.c.b16 %v641, %v637
  %v1142 = vpack.c.b16 %v646, %v642
  %v1143 = vpack.c.b16 %v647, %v643
  %v1144 = vpack.c.b16 %v648, %v644
  %v1145 = vpack.c.b16 %v649, %v645
  %v1146 = vpack.c.b16 %v654, %v650
  %v1147 = vpack.c.b16 %v655, %v651
  %v1148 = vpack.c.b16 %v656, %v652
  %v1149 = vpack.c.b16 %v657, %v653
  %v1150 = vpack.c.b16 %v662, %v658
  %v1151 = vpack.c.b16 %v663, %v659
  %v1152 = vpack.c.b16 %v664, %v660
  %v1153 = vpack.c.b16 %v665, %v661
  %v1154 = vpack.c.b16 %v670, %v666
  %v1155 = vpack.c.b16 %v671, %v667
  %v1156 = vpack.c.b16 %v672, %v668
  %v1157 = vpack.c.b16 %v673, %v669
  %v1158 = vpack.c.b16 %v678, %v674
  %v1159 = vpack.c.b16 %v679, %v675
  %v1160 = vpack.c.b16 %v680, %v676
  %v1161 = vpack.c.b16 %v681, %v677
  %v1162 = vpack.c.b16 %v686, %v682
  %v1163 = vpack.c.b16 %v687, %v683
  %v1164 = vpack.c.b16 %v688, %v684
  %v1165 = vpack.c.b16 %v689, %v685
  %v1166 = vpack.c.b16 %v694, %v690
  %v1167 = vpack.c.b16 %v695, %v691
  %v1168 = vpack.c.b16 %v696, %v692
  %v1169 = vpack.c.b16 %v697, %v693
  %v1170 = vpack.c.b16 %v702, %v698
  %v1171 = vpack.c.b16 %v703, %v699
  %v1172 = vpack.c.b16 %v704, %v700
  %v1173 = vpack.c.b16 %v705, %v701
  %v1174 = vpack.c.b16 %v710, %v706
  %v1175 = vpack.c.b16 %v711, %v707
  %v1176 = vpack.c.b16 %v712, %v708
  %v1177 = vpack.c.b16 %v713, %v709
  %v1178 = vpack.c.b16 %v718, %v714
  %v1179 = vpack.c.b16 %v719, %v715
  %v1180 = vpack.c.b16 %v720, %v716
  %v1181 = vpack.c.b16 %v721, %v717
  %v1182 = vpack.c.b16 %v726, %v722
  %v1183 = vpack.c.b16 %v727, %v723
  %v1184 = vpack.c.b16 %v728, %v724
  %v1185 = vpack.c.b16 %v729, %v725
  %v1186 = vpack.c.b16 %v734, %v730
  %v1187 = vpack.c.b16 %v735, %v731
  %v1188 = vpack.c.b16 %v736, %v732
  %v1189 = vpack.c.b16 %v737, %v733
  %v1190 = vpack.c.b16 %v742, %v738
  %v1191 = vpack.c.b16 %v743, %v739
  %v1192 = vpack.c.b16 %v744, %v740
  %v1193 = vpack.c.b16 %v745, %v741
  %v1194 = vpack.c.b16 %v750, %v746
  %v1195 = vpack.c.b16 %v751, %v747
  %v1196 = vpack.c.b16 %v752, %v748
  %v1197 = vpack.c.b16 %v753, %v749
  %v1198 = vpack.c.b16 %v758, %v754
  %v1199 = vpack.c.b16 %v759, %v755
  %v1200 = vpack.c.b16 %v760, %v756
  %v1201 = vpack.c.b16 %v761, %v757
  %v1202 = vpack.c.b16 %v766, %v762
  %v1203 = vpack.c.b16 %v767, %v763
  %v1204 = vpack.c.b16 %v768, %v764
  %v1205 = vpack.c.b16 %v769, %v765
  %v1206 = vpack.c.b16 %v774, %v770
  %v1207 = vpack.c.b16 %v775, %v771
  %v1208 = vpack.c.b16 %v776, %v772
  %v1209 = vpack.c.b16 %v777, %v773
  %v1210 = vpack.c.b16 %v782, %v778
  %v1211 = vpack.c.b16 %v783, %v779
  %v1212 = vpack.c.b16 %v784, %v780
  %v1213 = vpack.c.b16 %v785, %v781
  %v1214 = vpack.c.b16 %v790, %v786
  %v1215 = vpack.c.b16 %v791, %v787
  %v1216 = vpack.c.b16 %v792, %v788
  %v1217 = vpack.c.b16 %v793, %v789
  %v1218 = vpack.c.b16 %v798, %v794
  %v1219 = vpack.c.b16 %v799, %v795
  %v1220 = vpack.c.b16 %v800, %v796
  %v1221 = vpack.c.b16 %v801, %v797
  %v1222 = vpack.c.b16 %v806, %v802
  %v1223 = vpack.c.b16 %v807, %v803
  %v1224 = vpack.c.b16 %v808, %v804
  %v1225 = vpack.c.b16 %v809, %v805
  %v1226 = vpack.c.b16 %v814, %v810
  %v1227 = vpack.c.b16 %v815, %v811
  %v1228 = vpack.c.b16 %v816, %v812
  %v1229 = vpack.c.b16 %v817, %v813
  %v1230 = vpack.c.b16 %v822, %v818
  %v1231 = vpack.c.b16 %v823, %v819
  %v1232 = vpack.c.b16 %v824, %v820
  %v1233 = vpack.c.b16 %v825, %v821
  %v1234 = vpack.c.b16 %v830, %v826
  %v1235 = vpack.c.b16 %v831, %v827
  %v1236 = vpack.c.b16 %v832, %v828
  %v1237 = vpack.c.b16 %v833, %v829
  %v1238 = vpack.c.b16 %v838, %v834
  %v1239 = vpack.c.b16 %v839, %v835
  %v1240 = vpack.c.b16 %v840, %v836
  %v1241 = vpack.c.b16 %v841, %v837
  %v1242 = vpack.c.b16 %v846, %v842
  %v1243 = vpack.c.b16 %v847, %v843
  %v1244 = vpack.c.b16 %v848, %v844
  %v1245 = vpack.c.b16 %v849, %v845
  %v1246 = vpack.c.b16 %v854, %v850
  %v1247 = vpack.c.b16 %v855, %v851
  %v1248 = vpack.c.b16 %v856, %v852
  %v1249 = vpack.c.b16 %v857, %v853
  %v1250 = vpack.c.b16 %v862, %v858
  %v1251 = vpack.c.b16 %v863, %v859
  %v1252 = vpack.c.b16 %v864, %v860
  %v1253 = vpack.c.b16 %v865, %v861
  %v1254 = vpack.c.b16 %v870, %v866
  %v1255 = vpack.c.b16 %v871, %v867
  %v1256 = vpack.c.b16 %v872, %v868
  %v1257 = vpack.c.b16 %v873, %v869
  %v1258 = vpack.c.b16 %v878, %v874
  %v1259 = vpack.c.b16 %v879, %v875
  %v1260 = vpack.c.b16 %v880, %v876
  %v1261 = vpack.c.b16 %v881, %v877
  %v1262 = vpack.c.b16 %v886, %v882
  %v1263 = vpack.c.b16 %v887, %v883
  %v1264 = vpack.c.b16 %v888, %v884
  %v1265 = vpack.c.b16 %v889, %v885
  %v1266 = vpack.c.b16 %v894, %v890
  %v1267 = vpack.c.b16 %v895, %v891
  %v1268 = vpack.c.b16 %v896, %v892
  %v1269 = vpack.c.b16 %v897, %v893
  %v1270 = vpack.c.b16 %v902, %v898
  %v1271 = vpack.c.b16 %v903, %v899
  %v1272 = vpack.c.b16 %v904, %v900
  %v1273 = vpack.c.b16 %v905, %v901
  %v1274 = vpack.c.b16 %v910, %v906
  %v1275 = vpack.c.b16 %v911, %v907
  %v1276 = vpack.c.b16 %v912, %v908
  %v1277 = vpack.c.b16 %v913, %v909
  %v1278 = vpack.c.b16 %v918, %v914
  %v1279 = vpack.c.b16 %v919, %v915
  %v1280 = vpack.c.b16 %v920, %v916
  %v1281 = vpack.c.b16 %v921, %v917
  %v1282 = vpack.c.b16 %v926, %v922
  %v1283 = vpack.c.b16 %v927, %v923
  %v1284 = vpack.c.b16 %v928, %v924
  %v1285 = vpack.c.b16 %v929, %v925
  %v1286 = vpack.c.b16 %v934, %v930
  %v1287 = vpack.c.b16 %v935, %v931
  %v1288 = vpack.c.b16 %v936, %v932
  %v1289 = vpack.c.b16 %v937, %v933
  %v1290 = vpack.c.b16 %v942, %v938
  %v1291 = vpack.c.b16 %v943, %v939
  %v1292 = vpack.c.b16 %v944, %v940
  %v1293 = vpack.c.b16 %v945, %v941
  %v1294 = vpack.c.b16 %v950, %v946
  %v1295 = vpack.c.b16 %v951, %v947
  %v1296 = vpack.c.b16 %v952, %v948
  %v1297 = vpack.c.b16 %v953, %v949
  %v1298 = vpack.c.b16 %v958, %v954
  %v1299 = vpack.c.b16 %v959, %v955
  %v1300 = vpack.c.b16 %v960, %v956
  %v1301 = vpack.c.b16 %v961, %v957
  %v1302 = vpack.c.b16 %v966, %v962
  %v1303 = vpack.c.b16 %v967, %v963
  %v1304 = vpack.c.b16 %v968, %v964
  %v1305 = vpack.c.b16 %v969, %v965
  %v1306 = vpack.c.b16 %v974, %v970
  %v1307 = vpack.c.b16 %v975, %v971
  %v1308 = vpack.c.b16 %v976, %v972
  %v1309 = vpack.c.b16 %v977, %v973
  %v1310 = vpack.c.b16 %v982, %v978
  %v1311 = vpack.c.b16 %v983, %v979
  %v1312 = vpack.c.b16 %v984, %v980
  %v1313 = vpack.c.b16 %v985, %v981
  %v1314 = vpack.c.b16 %v990, %v986
  %v1315 = vpack.c.b16 %v991, %v987
  %v1316 = vpack.c.b16 %v992, %v988
  %v1317 = vpack.c.b16 %v993, %v989
  %v1318 = vpack.c.b16 %v998, %v994
  %v1319 = vpack.c.b16 %v999, %v995
  %v1320 = vpack.c.b16 %v1000, %v996
  %v1321 = vpack.c.b16 %v1001, %v997
  %v1322 = vpack.c.b16 %v1006, %v1002
  %v1323 = vpack.c.b16 %v1007, %v1003
  %v1324 = vpack.c.b16 %v1008, %v1004
  %v1325 = vpack.c.b16 %v1009, %v1005
  %v1326 = vpack.c.b16 %v1014, %v1010
  %v1327 = vpack.c.b16 %v1015, %v1011
  %v1328 = vpack.c.b16 %v1016, %v1012
  %v1329 = vpack.c.b16 %v1017, %v1013
  %v1330 = vpack.c.b16 %v1022, %v1018
  %v1331 = vpack.c.b16 %v1023, %v1019
  %v1332 = vpack.c.b16 %v1024, %v1020
  %v1333 = vpack.c.b16 %v1025, %v1021
  %v1334 = vpack.c.b16 %v1030, %v1026
  %v1335 = vpack.c.b16 %v1031, %v1027
  %v1336 = vpack.c.b16 %v1032, %v1028
  %v1337 = vpack.c.b16 %v1033, %v1029
  %v1338 = vpack.c.b16 %v1038, %v1034
  %v1339 = vpack.c.b16 %v1039, %v1035
  %v1340 = vpack.c.b16 %v1040, %v1036
  %v1341 = vpack.c.b16 %v1041, %v1037
  %v1342 = vpack.c.b16 %v1046, %v1042
  %v1343 = vpack.c.b16 %v1047, %v1043
  %v1344 = vpack.c.b16 %v1048, %v1044
  %v1345 = vpack.c.b16 %v1049, %v1045
  %v1346 = vpack.c.b16 %v1054, %v1050
  %v1347 = vpack.c.b16 %v1055, %v1051
  %v1348 = vpack.c.b16 %v1056, %v1052
  %v1349 = vpack.c.b16 %v1057, %v1053
  %v1350 = vpack.c.b16 %v1062, %v1058
  %v1351 = vpack.c.b16 %v1063, %v1059
  %v1352 = vpack.c.b16 %v1064, %v1060
  %v1353 = vpack.c.b16 %v1065, %v1061
  %v1354 = vpack.c.b16 %v1070, %v1066
  %v1355 = vpack.c.b16 %v1071, %v1067
  %v1356 = vpack.c.b16 %v1072, %v1068
  %v1357 = vpack.c.b16 %v1073, %v1069
  %v1358 = vpack.c.b16 %v1078, %v1074
  %v1359 = vpack.c.b16 %v1079, %v1075
  %v1360 = vpack.c.b16 %v1080, %v1076
  %v1361 = vpack.c.b16 %v1081, %v1077
  %v1362 = vpack.c.b16 %v1086, %v1082
  %v1363 = vpack.c.b16 %v1087, %v1083
  %v1364 = vpack.c.b16 %v1088, %v1084
  %v1365 = vpack.c.b16 %v1089, %v1085
  %v1366 = vpack.c.b16 %v1094, %v1090
  %v1367 = vpack.c.b16 %v1095, %v1091
  %v1368 = vpack.c.b16 %v1096, %v1092
  %v1369 = vpack.c.b16 %v1097, %v1093
  %v1370 = vpack.c.b16 %v1102, %v1098
  %v1371 = vpack.c.b16 %v1103, %v1099
  %v1372 = vpack.c.b16 %v1104, %v1100
  %v1373 = vpack.c.b16 %v1105, %v1101
  %v1374 = vpack.c.b16 %v1110, %v1106
  %v1375 = vpack.c.b16 %v1111, %v1107
  %v1376 = vpack.c.b16 %v1112, %v1108
  %v1377 = vpack.c.b16 %v1113, %v1109
  %v1378 = vpack.c.b16 %v1118, %v1114
  %v1379 = vpack.c.b16 %v1119, %v1115
  %v1380 = vpack.c.b16 %v1120, %v1116
  %v1381 = vpack.c.b16 %v1121, %v1117
  %v1382 = vpack.c.b16 %v1126, %v1122
  %v1383 = vpack.c.b16 %v1127, %v1123
  %v1384 = vpack.c.b16 %v1128, %v1124
  %v1385 = vpack.c.b16 %v1129, %v1125
  %1642 = vmatprep.subr.bf16.mxu0 %v1131
  %1643 = vmatpush1.bf16.msra.mxu0 %v1130
  %1644 = vmatprep.subr.bf16.mxu0 %v1135
  %1645 = vmatpush1.bf16.msra.mxu0 %v1134
  %1646 = vmatprep.subr.bf16.mxu0 %v1139
  %1647 = vmatpush1.bf16.msra.mxu0 %v1138
  %1648 = vmatprep.subr.bf16.mxu0 %v1143
  %1649 = vmatpush1.bf16.msra.mxu0 %v1142
  %1650 = vmatprep.subr.bf16.mxu0 %v1147
  %1651 = vmatpush1.bf16.msra.mxu0 %v1146
  %1652 = vmatprep.subr.bf16.mxu0 %v1151
  %1653 = vmatpush1.bf16.msra.mxu0 %v1150
  %1654 = vmatprep.subr.bf16.mxu0 %v1155
  %1655 = vmatpush1.bf16.msra.mxu0 %v1154
  %1656 = vmatprep.subr.bf16.mxu0 %v1159
  %1657 = vmatpush1.bf16.msra.mxu0 %v1158
  %1658 = vmatprep.subr.bf16.mxu0 %v1163
  %1659 = vmatpush1.bf16.msra.mxu0 %v1162
  %1660 = vmatprep.subr.bf16.mxu0 %v1167
  %1661 = vmatpush1.bf16.msra.mxu0 %v1166
  %1662 = vmatprep.subr.bf16.mxu0 %v1171
  %1663 = vmatpush1.bf16.msra.mxu0 %v1170
  %1664 = vmatprep.subr.bf16.mxu0 %v1175
  %1665 = vmatpush1.bf16.msra.mxu0 %v1174
  %1666 = vmatprep.subr.bf16.mxu0 %v1179
  %1667 = vmatpush1.bf16.msra.mxu0 %v1178
  %1668 = vmatprep.subr.bf16.mxu0 %v1183
  %1669 = vmatpush1.bf16.msra.mxu0 %v1182
  %1670 = vmatprep.subr.bf16.mxu0 %v1187
  %1671 = vmatpush1.bf16.msra.mxu0 %v1186
  %1672 = vmatprep.subr.bf16.mxu0 %v1191
  %1673 = vmatpush1.bf16.msra.mxu0 %v1190
  %1674 = vmatprep.mubr.bf16.mxu0 %v77
  %1675 = vmatmul.mubr.bf16.gmra.mrb[0].mxu0 %v76
  %v1676 = vpop.f32.mrb[0].mxu0
  %v1677 = vadd.f32 %v345, %v1676
  %v1678 = vpop.f32.mrb[0].mxu0
  %v1679 = vadd.f32 %v349, %v1678
  %v1680 = vpop.f32.mrb[0].mxu0
  %v1681 = vpop.f32.mrb[0].mxu0
  %1682 = vdwg.mxu0
  %1683 = vmatprep.subr.bf16.mxu0 %v1195
  %1684 = vmatpush1.bf16.msra.mxu0 %v1194
  %1685 = vmatprep.subr.bf16.mxu0 %v1199
  %1686 = vmatpush1.bf16.msra.mxu0 %v1198
  %1687 = vmatprep.subr.bf16.mxu0 %v1203
  %1688 = vmatpush1.bf16.msra.mxu0 %v1202
  %1689 = vmatprep.subr.bf16.mxu0 %v1207
  %1690 = vmatpush1.bf16.msra.mxu0 %v1206
  %1691 = vmatprep.subr.bf16.mxu0 %v1211
  %1692 = vmatpush1.bf16.msra.mxu0 %v1210
  %1693 = vmatprep.subr.bf16.mxu0 %v1215
  %1694 = vmatpush1.bf16.msra.mxu0 %v1214
  %1695 = vmatprep.subr.bf16.mxu0 %v1219
  %1696 = vmatpush1.bf16.msra.mxu0 %v1218
  %1697 = vmatprep.subr.bf16.mxu0 %v1223
  %1698 = vmatpush1.bf16.msra.mxu0 %v1222
  %1699 = vmatprep.subr.bf16.mxu0 %v1227
  %1700 = vmatpush1.bf16.msra.mxu0 %v1226
  %1701 = vmatprep.subr.bf16.mxu0 %v1231
  %1702 = vmatpush1.bf16.msra.mxu0 %v1230
  %1703 = vmatprep.subr.bf16.mxu0 %v1235
  %1704 = vmatpush1.bf16.msra.mxu0 %v1234
  %1705 = vmatprep.subr.bf16.mxu0 %v1239
  %1706 = vmatpush1.bf16.msra.mxu0 %v1238
  %1707 = vmatprep.subr.bf16.mxu0 %v1243
  %1708 = vmatpush1.bf16.msra.mxu0 %v1242
  %1709 = vmatprep.subr.bf16.mxu0 %v1247
  %1710 = vmatpush1.bf16.msra.mxu0 %v1246
  %1711 = vmatprep.subr.bf16.mxu0 %v1251
  %1712 = vmatpush1.bf16.msra.mxu0 %v1250
  %1713 = vmatprep.subr.bf16.mxu0 %v1255
  %1714 = vmatpush1.bf16.msra.mxu0 %v1254
  %1715 = vmatprep.mubr.bf16.mxu0 %v79
  %1716 = vmatmul.mubr.bf16.gmra.mrb[0].mxu0 %v78
  %v1717 = vpop.f32.mrb[0].mxu0
  %v1718 = vadd.f32 %v1677, %v1717
  %v1719 = vpop.f32.mrb[0].mxu0
  %v1720 = vadd.f32 %v1679, %v1719
  %v1721 = vpop.f32.mrb[0].mxu0
  %v1722 = vpop.f32.mrb[0].mxu0
  %1723 = vdwg.mxu0
  %1724 = vmatprep.subr.bf16.mxu0 %v1259
  %1725 = vmatpush1.bf16.msra.mxu0 %v1258
  %1726 = vmatprep.subr.bf16.mxu0 %v1263
  %1727 = vmatpush1.bf16.msra.mxu0 %v1262
  %1728 = vmatprep.subr.bf16.mxu0 %v1267
  %1729 = vmatpush1.bf16.msra.mxu0 %v1266
  %1730 = vmatprep.subr.bf16.mxu0 %v1271
  %1731 = vmatpush1.bf16.msra.mxu0 %v1270
  %1732 = vmatprep.subr.bf16.mxu0 %v1275
  %1733 = vmatpush1.bf16.msra.mxu0 %v1274
  %1734 = vmatprep.subr.bf16.mxu0 %v1279
  %1735 = vmatpush1.bf16.msra.mxu0 %v1278
  %1736 = vmatprep.subr.bf16.mxu0 %v1283
  %1737 = vmatpush1.bf16.msra.mxu0 %v1282
  %1738 = vmatprep.subr.bf16.mxu0 %v1287
  %1739 = vmatpush1.bf16.msra.mxu0 %v1286
  %1740 = vmatprep.subr.bf16.mxu0 %v1291
  %1741 = vmatpush1.bf16.msra.mxu0 %v1290
  %1742 = vmatprep.subr.bf16.mxu0 %v1295
  %1743 = vmatpush1.bf16.msra.mxu0 %v1294
  %1744 = vmatprep.subr.bf16.mxu0 %v1299
  %1745 = vmatpush1.bf16.msra.mxu0 %v1298
  %1746 = vmatprep.subr.bf16.mxu0 %v1303
  %1747 = vmatpush1.bf16.msra.mxu0 %v1302
  %1748 = vmatprep.subr.bf16.mxu0 %v1307
  %1749 = vmatpush1.bf16.msra.mxu0 %v1306
  %1750 = vmatprep.subr.bf16.mxu0 %v1311
  %1751 = vmatpush1.bf16.msra.mxu0 %v1310
  %1752 = vmatprep.subr.bf16.mxu0 %v1315
  %1753 = vmatpush1.bf16.msra.mxu0 %v1314
  %1754 = vmatprep.subr.bf16.mxu0 %v1319
  %1755 = vmatpush1.bf16.msra.mxu0 %v1318
  %1756 = vmatprep.mubr.bf16.mxu0 %v81
  %1757 = vmatmul.mubr.bf16.gmra.mrb[0].mxu0 %v80
  %v1758 = vpop.f32.mrb[0].mxu0
  %v1759 = vadd.f32 %v1718, %v1758
  %v1760 = vpop.f32.mrb[0].mxu0
  %v1761 = vadd.f32 %v1720, %v1760
  %v1762 = vpop.f32.mrb[0].mxu0
  %v1763 = vpop.f32.mrb[0].mxu0
  %1764 = vdwg.mxu0
  %1765 = vmatprep.subr.bf16.mxu0 %v1323
  %1766 = vmatpush1.bf16.msra.mxu0 %v1322
  %1767 = vmatprep.subr.bf16.mxu0 %v1327
  %1768 = vmatpush1.bf16.msra.mxu0 %v1326
  %1769 = vmatprep.subr.bf16.mxu0 %v1331
  %1770 = vmatpush1.bf16.msra.mxu0 %v1330
  %1771 = vmatprep.subr.bf16.mxu0 %v1335
  %1772 = vmatpush1.bf16.msra.mxu0 %v1334
  %1773 = vmatprep.subr.bf16.mxu0 %v1339
  %1774 = vmatpush1.bf16.msra.mxu0 %v1338
  %1775 = vmatprep.subr.bf16.mxu0 %v1343
  %1776 = vmatpush1.bf16.msra.mxu0 %v1342
  %1777 = vmatprep.subr.bf16.mxu0 %v1347
  %1778 = vmatpush1.bf16.msra.mxu0 %v1346
  %1779 = vmatprep.subr.bf16.mxu0 %v1351
  %1780 = vmatpush1.bf16.msra.mxu0 %v1350
  %1781 = vmatprep.subr.bf16.mxu0 %v1355
  %1782 = vmatpush1.bf16.msra.mxu0 %v1354
  %1783 = vmatprep.subr.bf16.mxu0 %v1359
  %1784 = vmatpush1.bf16.msra.mxu0 %v1358
  %1785 = vmatprep.subr.bf16.mxu0 %v1363
  %1786 = vmatpush1.bf16.msra.mxu0 %v1362
  %1787 = vmatprep.subr.bf16.mxu0 %v1367
  %1788 = vmatpush1.bf16.msra.mxu0 %v1366
  %1789 = vmatprep.subr.bf16.mxu0 %v1371
  %1790 = vmatpush1.bf16.msra.mxu0 %v1370
  %1791 = vmatprep.subr.bf16.mxu0 %v1375
  %1792 = vmatpush1.bf16.msra.mxu0 %v1374
  %1793 = vmatprep.subr.bf16.mxu0 %v1379
  %1794 = vmatpush1.bf16.msra.mxu0 %v1378
  %1795 = vmatprep.subr.bf16.mxu0 %v1383
  %1796 = vmatpush1.bf16.msra.mxu0 %v1382
  %1797 = vmatprep.mubr.bf16.mxu0 %v83
  %1798 = vmatmul.mubr.bf16.gmra.mrb[0].mxu0 %v82
  %v1799 = vpop.f32.mrb[0].mxu0
  %v1800 = vadd.f32 %v1759, %v1799
  %v1801 = vpop.f32.mrb[0].mxu0
  %v1802 = vadd.f32 %v1761, %v1801
  %v1803 = vpop.f32.mrb[0].mxu0
  %v1804 = vpop.f32.mrb[0].mxu0
  %1805 = vdwg.mxu0
  %1806 = vmatprep.subr.bf16.mxu0 %v1133
  %1807 = vmatpush1.bf16.msra.mxu0 %v1132
  %1808 = vmatprep.subr.bf16.mxu0 %v1137
  %1809 = vmatpush1.bf16.msra.mxu0 %v1136
  %1810 = vmatprep.subr.bf16.mxu0 %v1141
  %1811 = vmatpush1.bf16.msra.mxu0 %v1140
  %1812 = vmatprep.subr.bf16.mxu0 %v1145
  %1813 = vmatpush1.bf16.msra.mxu0 %v1144
  %1814 = vmatprep.subr.bf16.mxu0 %v1149
  %1815 = vmatpush1.bf16.msra.mxu0 %v1148
  %1816 = vmatprep.subr.bf16.mxu0 %v1153
  %1817 = vmatpush1.bf16.msra.mxu0 %v1152
  %1818 = vmatprep.subr.bf16.mxu0 %v1157
  %1819 = vmatpush1.bf16.msra.mxu0 %v1156
  %1820 = vmatprep.subr.bf16.mxu0 %v1161
  %1821 = vmatpush1.bf16.msra.mxu0 %v1160
  %1822 = vmatprep.subr.bf16.mxu0 %v1165
  %1823 = vmatpush1.bf16.msra.mxu0 %v1164
  %1824 = vmatprep.subr.bf16.mxu0 %v1169
  %1825 = vmatpush1.bf16.msra.mxu0 %v1168
  %1826 = vmatprep.subr.bf16.mxu0 %v1173
  %1827 = vmatpush1.bf16.msra.mxu0 %v1172
  %1828 = vmatprep.subr.bf16.mxu0 %v1177
  %1829 = vmatpush1.bf16.msra.mxu0 %v1176
  %1830 = vmatprep.subr.bf16.mxu0 %v1181
  %1831 = vmatpush1.bf16.msra.mxu0 %v1180
  %1832 = vmatprep.subr.bf16.mxu0 %v1185
  %1833 = vmatpush1.bf16.msra.mxu0 %v1184
  %1834 = vmatprep.subr.bf16.mxu0 %v1189
  %1835 = vmatpush1.bf16.msra.mxu0 %v1188
  %1836 = vmatprep.subr.bf16.mxu0 %v1193
  %1837 = vmatpush1.bf16.msra.mxu0 %v1192
  %1838 = vmatprep.mubr.bf16.mxu0 %v77
  %1839 = vmatmul.mubr.bf16.gmra.mrb[0].mxu0 %v76
  %v1840 = vpop.f32.mrb[0].mxu0
  %v1841 = vadd.f32 %v353, %v1840
  %v1842 = vpop.f32.mrb[0].mxu0
  %v1843 = vadd.f32 %v357, %v1842
  %v1844 = vpop.f32.mrb[0].mxu0
  %v1845 = vpop.f32.mrb[0].mxu0
  %1846 = vdwg.mxu0
  %1847 = vmatprep.subr.bf16.mxu0 %v1197
  %1848 = vmatpush1.bf16.msra.mxu0 %v1196
  %1849 = vmatprep.subr.bf16.mxu0 %v1201
  %1850 = vmatpush1.bf16.msra.mxu0 %v1200
  %1851 = vmatprep.subr.bf16.mxu0 %v1205
  %1852 = vmatpush1.bf16.msra.mxu0 %v1204
  %1853 = vmatprep.subr.bf16.mxu0 %v1209
  %1854 = vmatpush1.bf16.msra.mxu0 %v1208
  %1855 = vmatprep.subr.bf16.mxu0 %v1213
  %1856 = vmatpush1.bf16.msra.mxu0 %v1212
  %1857 = vmatprep.subr.bf16.mxu0 %v1217
  %1858 = vmatpush1.bf16.msra.mxu0 %v1216
  %1859 = vmatprep.subr.bf16.mxu0 %v1221
  %1860 = vmatpush1.bf16.msra.mxu0 %v1220
  %1861 = vmatprep.subr.bf16.mxu0 %v1225
  %1862 = vmatpush1.bf16.msra.mxu0 %v1224
  %1863 = vmatprep.subr.bf16.mxu0 %v1229
  %1864 = vmatpush1.bf16.msra.mxu0 %v1228
  %1865 = vmatprep.subr.bf16.mxu0 %v1233
  %1866 = vmatpush1.bf16.msra.mxu0 %v1232
  %1867 = vmatprep.subr.bf16.mxu0 %v1237
  %1868 = vmatpush1.bf16.msra.mxu0 %v1236
  %1869 = vmatprep.subr.bf16.mxu0 %v1241
  %1870 = vmatpush1.bf16.msra.mxu0 %v1240
  %1871 = vmatprep.subr.bf16.mxu0 %v1245
  %1872 = vmatpush1.bf16.msra.mxu0 %v1244
  %1873 = vmatprep.subr.bf16.mxu0 %v1249
  %1874 = vmatpush1.bf16.msra.mxu0 %v1248
  %1875 = vmatprep.subr.bf16.mxu0 %v1253
  %1876 = vmatpush1.bf16.msra.mxu0 %v1252
  %1877 = vmatprep.subr.bf16.mxu0 %v1257
  %1878 = vmatpush1.bf16.msra.mxu0 %v1256
  %1879 = vmatprep.mubr.bf16.mxu0 %v79
  %1880 = vmatmul.mubr.bf16.gmra.mrb[0].mxu0 %v78
  %v1881 = vpop.f32.mrb[0].mxu0
  %v1882 = vadd.f32 %v1841, %v1881
  %v1883 = vpop.f32.mrb[0].mxu0
  %v1884 = vadd.f32 %v1843, %v1883
  %v1885 = vpop.f32.mrb[0].mxu0
  %v1886 = vpop.f32.mrb[0].mxu0
  %1887 = vdwg.mxu0
  %1888 = vmatprep.subr.bf16.mxu0 %v1261
  %1889 = vmatpush1.bf16.msra.mxu0 %v1260
  %1890 = vmatprep.subr.bf16.mxu0 %v1265
  %1891 = vmatpush1.bf16.msra.mxu0 %v1264
  %1892 = vmatprep.subr.bf16.mxu0 %v1269
  %1893 = vmatpush1.bf16.msra.mxu0 %v1268
  %1894 = vmatprep.subr.bf16.mxu0 %v1273
  %1895 = vmatpush1.bf16.msra.mxu0 %v1272
  %1896 = vmatprep.subr.bf16.mxu0 %v1277
  %1897 = vmatpush1.bf16.msra.mxu0 %v1276
  %1898 = vmatprep.subr.bf16.mxu0 %v1281
  %1899 = vmatpush1.bf16.msra.mxu0 %v1280
  %1900 = vmatprep.subr.bf16.mxu0 %v1285
  %1901 = vmatpush1.bf16.msra.mxu0 %v1284
  %1902 = vmatprep.subr.bf16.mxu0 %v1289
  %1903 = vmatpush1.bf16.msra.mxu0 %v1288
  %1904 = vmatprep.subr.bf16.mxu0 %v1293
  %1905 = vmatpush1.bf16.msra.mxu0 %v1292
  %1906 = vmatprep.subr.bf16.mxu0 %v1297
  %1907 = vmatpush1.bf16.msra.mxu0 %v1296
  %1908 = vmatprep.subr.bf16.mxu0 %v1301
  %1909 = vmatpush1.bf16.msra.mxu0 %v1300
  %1910 = vmatprep.subr.bf16.mxu0 %v1305
  %1911 = vmatpush1.bf16.msra.mxu0 %v1304
  %1912 = vmatprep.subr.bf16.mxu0 %v1309
  %1913 = vmatpush1.bf16.msra.mxu0 %v1308
  %1914 = vmatprep.subr.bf16.mxu0 %v1313
  %1915 = vmatpush1.bf16.msra.mxu0 %v1312
  %1916 = vmatprep.subr.bf16.mxu0 %v1317
  %1917 = vmatpush1.bf16.msra.mxu0 %v1316
  %1918 = vmatprep.subr.bf16.mxu0 %v1321
  %1919 = vmatpush1.bf16.msra.mxu0 %v1320
  %1920 = vmatprep.mubr.bf16.mxu0 %v81
  %1921 = vmatmul.mubr.bf16.gmra.mrb[0].mxu0 %v80
  %v1922 = vpop.f32.mrb[0].mxu0
  %v1923 = vadd.f32 %v1882, %v1922
  %v1924 = vpop.f32.mrb[0].mxu0
  %v1925 = vadd.f32 %v1884, %v1924
  %v1926 = vpop.f32.mrb[0].mxu0
  %v1927 = vpop.f32.mrb[0].mxu0
  %1928 = vdwg.mxu0
  %1929 = vmatprep.subr.bf16.mxu0 %v1325
  %1930 = vmatpush1.bf16.msra.mxu0 %v1324
  %1931 = vmatprep.subr.bf16.mxu0 %v1329
  %1932 = vmatpush1.bf16.msra.mxu0 %v1328
  %1933 = vmatprep.subr.bf16.mxu0 %v1333
  %1934 = vmatpush1.bf16.msra.mxu0 %v1332
  %1935 = vmatprep.subr.bf16.mxu0 %v1337
  %1936 = vmatpush1.bf16.msra.mxu0 %v1336
  %1937 = vmatprep.subr.bf16.mxu0 %v1341
  %1938 = vmatpush1.bf16.msra.mxu0 %v1340
  %1939 = vmatprep.subr.bf16.mxu0 %v1345
  %1940 = vmatpush1.bf16.msra.mxu0 %v1344
  %1941 = vmatprep.subr.bf16.mxu0 %v1349
  %1942 = vmatpush1.bf16.msra.mxu0 %v1348
  %1943 = vmatprep.subr.bf16.mxu0 %v1353
  %1944 = vmatpush1.bf16.msra.mxu0 %v1352
  %1945 = vmatprep.subr.bf16.mxu0 %v1357
  %1946 = vmatpush1.bf16.msra.mxu0 %v1356
  %1947 = vmatprep.subr.bf16.mxu0 %v1361
  %1948 = vmatpush1.bf16.msra.mxu0 %v1360
  %1949 = vmatprep.subr.bf16.mxu0 %v1365
  %1950 = vmatpush1.bf16.msra.mxu0 %v1364
  %1951 = vmatprep.subr.bf16.mxu0 %v1369
  %1952 = vmatpush1.bf16.msra.mxu0 %v1368
  %1953 = vmatprep.subr.bf16.mxu0 %v1373
  %1954 = vmatpush1.bf16.msra.mxu0 %v1372
  %1955 = vmatprep.subr.bf16.mxu0 %v1377
  %1956 = vmatpush1.bf16.msra.mxu0 %v1376
  %1957 = vmatprep.subr.bf16.mxu0 %v1381
  %1958 = vmatpush1.bf16.msra.mxu0 %v1380
  %1959 = vmatprep.subr.bf16.mxu0 %v1385
  %1960 = vmatpush1.bf16.msra.mxu0 %v1384
  %1961 = vmatprep.mubr.bf16.mxu0 %v83
  %1962 = vmatmul.mubr.bf16.gmra.mrb[0].mxu0 %v82
  %v1963 = vpop.f32.mrb[0].mxu0
  %v1964 = vadd.f32 %v1923, %v1963
  %v1965 = vpop.f32.mrb[0].mxu0
  %v1966 = vadd.f32 %v1925, %v1965
  %v1967 = vpop.f32.mrb[0].mxu0
  %v1968 = vpop.f32.mrb[0].mxu0
  %1969 = vdwg.mxu0
  %v1970 = vmax.f32 %v1800, 0.0
  %v1971 = vmax.f32 %v1802, 0.0
  %v1972 = vmax.f32 %v1964, 0.0
  %v1973 = vmax.f32 %v1966, 0.0
  %v1974 = vpack.c.bf16 %v1970, %v1970
  %v1975 = vpack.c.bf16 %v1971, %v1971
  %v1976 = vpack.c.bf16 %v1972, %v1972
  %v1977 = vpack.c.bf16 %v1973, %v1973
  %v1978 = vld [vmem:[%s3] sm:$0xff]
  %v1979 = vld [vmem:[%s3 + $0x8] sm:$0xff]
  %v1980 = vld [vmem:[%s3 + $0x10] sm:$0xff]
  %v1981 = vld [vmem:[%s3 + $0x18] sm:$0xff]
  %v1982 = vld [vmem:[%s3 + $0x20] sm:$0xff]
  %v1983 = vld [vmem:[%s3 + $0x28] sm:$0xff]
  %v1984 = vld [vmem:[%s3 + $0x30] sm:$0xff]
  %v1985 = vld [vmem:[%s3 + $0x38] sm:$0xff]
  %v1986 = vld [vmem:[%s3 + $0x40] sm:$0xff]
  %v1987 = vld [vmem:[%s3 + $0x48] sm:$0xff]
  %v1988 = vld [vmem:[%s3 + $0x50] sm:$0xff]
  %v1989 = vld [vmem:[%s3 + $0x58] sm:$0xff]
  %v1990 = vld [vmem:[%s3 + $0x60] sm:$0xff]
  %v1991 = vld [vmem:[%s3 + $0x68] sm:$0xff]
  %v1992 = vld [vmem:[%s3 + $0x70] sm:$0xff]
  %v1993 = vld [vmem:[%s3 + $0x78] sm:$0xff]
  %v1994 = vld [vmem:[%s3 + $0x80] sm:$0xff]
  %v1995 = vld [vmem:[%s3 + $0x88] sm:$0xff]
  %v1996 = vld [vmem:[%s3 + $0x90] sm:$0xff]
  %v1997 = vld [vmem:[%s3 + $0x98] sm:$0xff]
  %v1998 = vld [vmem:[%s3 + $0xa0] sm:$0xff]
  %v1999 = vld [vmem:[%s3 + $0xa8] sm:$0xff]
  %v2000 = vld [vmem:[%s3 + $0xb0] sm:$0xff]
  %v2001 = vld [vmem:[%s3 + $0xb8] sm:$0xff]
  %v2002 = vld [vmem:[%s3 + $0xc0] sm:$0xff]
  %v2003 = vld [vmem:[%s3 + $0xc8] sm:$0xff]
  %v2004 = vld [vmem:[%s3 + $0xd0] sm:$0xff]
  %v2005 = vld [vmem:[%s3 + $0xd8] sm:$0xff]
  %v2006 = vld [vmem:[%s3 + $0xe0] sm:$0xff]
  %v2007 = vld [vmem:[%s3 + $0xe8] sm:$0xff]
  %v2008 = vld [vmem:[%s3 + $0xf0] sm:$0xff]
  %v2009 = vld [vmem:[%s3 + $0xf8] sm:$0xff]
  %v2010 = vld [vmem:[%s3 + $0x100] sm:$0xff]
  %v2011 = vld [vmem:[%s3 + $0x108] sm:$0xff]
  %v2012 = vld [vmem:[%s3 + $0x110] sm:$0xff]
  %v2013 = vld [vmem:[%s3 + $0x118] sm:$0xff]
  %v2014 = vld [vmem:[%s3 + $0x120] sm:$0xff]
  %v2015 = vld [vmem:[%s3 + $0x128] sm:$0xff]
  %v2016 = vld [vmem:[%s3 + $0x130] sm:$0xff]
  %v2017 = vld [vmem:[%s3 + $0x138] sm:$0xff]
  %v2018 = vld [vmem:[%s3 + $0x140] sm:$0xff]
  %v2019 = vld [vmem:[%s3 + $0x148] sm:$0xff]
  %v2020 = vld [vmem:[%s3 + $0x150] sm:$0xff]
  %v2021 = vld [vmem:[%s3 + $0x158] sm:$0xff]
  %v2022 = vld [vmem:[%s3 + $0x160] sm:$0xff]
  %v2023 = vld [vmem:[%s3 + $0x168] sm:$0xff]
  %v2024 = vld [vmem:[%s3 + $0x170] sm:$0xff]
  %v2025 = vld [vmem:[%s3 + $0x178] sm:$0xff]
  %v2026 = vld [vmem:[%s3 + $0x180] sm:$0xff]
  %v2027 = vld [vmem:[%s3 + $0x188] sm:$0xff]
  %v2028 = vld [vmem:[%s3 + $0x190] sm:$0xff]
  %v2029 = vld [vmem:[%s3 + $0x198] sm:$0xff]
  %v2030 = vld [vmem:[%s3 + $0x1a0] sm:$0xff]
  %v2031 = vld [vmem:[%s3 + $0x1a8] sm:$0xff]
  %v2032 = vld [vmem:[%s3 + $0x1b0] sm:$0xff]
  %v2033 = vld [vmem:[%s3 + $0x1b8] sm:$0xff]
  %v2034 = vld [vmem:[%s3 + $0x1c0] sm:$0xff]
  %v2035 = vld [vmem:[%s3 + $0x1c8] sm:$0xff]
  %v2036 = vld [vmem:[%s3 + $0x1d0] sm:$0xff]
  %v2037 = vld [vmem:[%s3 + $0x1d8] sm:$0xff]
  %v2038 = vld [vmem:[%s3 + $0x1e0] sm:$0xff]
  %v2039 = vld [vmem:[%s3 + $0x1e8] sm:$0xff]
  %v2040 = vld [vmem:[%s3 + $0x1f0] sm:$0xff]
  %v2041 = vld [vmem:[%s3 + $0x1f8] sm:$0xff]
  %v2042 = vld [vmem:[%s4] sm:$0x3]
  %v2044 = vlaneseq
  %v2045 = vshrl.u32 %v2044, 7
  %v2046 = vsub.s32 0, %v2045
  %v2047 = vrot.slane %v2042, %v2046
  %v2048 = vlaneseq
  %v2049 = vshrl.u32 %v2048, 7
  %v2050 = vsub.s32 1, %v2049
  %v2051 = vrot.slane %v2042, %v2050
  %v2118 = vunpack.c.l.b16 %v1978
  %v2119 = vunpack.c.h.b16 %v1978
  %v2120 = vunpack.c.l.b16 %v1979
  %v2121 = vunpack.c.h.b16 %v1979
  %v2122 = vunpack.c.l.b16 %v1980
  %v2123 = vunpack.c.h.b16 %v1980
  %v2124 = vunpack.c.l.b16 %v1981
  %v2125 = vunpack.c.h.b16 %v1981
  %v2126 = vunpack.c.l.b16 %v1982
  %v2127 = vunpack.c.h.b16 %v1982
  %v2128 = vunpack.c.l.b16 %v1983
  %v2129 = vunpack.c.h.b16 %v1983
  %v2130 = vunpack.c.l.b16 %v1984
  %v2131 = vunpack.c.h.b16 %v1984
  %v2132 = vunpack.c.l.b16 %v1985
  %v2133 = vunpack.c.h.b16 %v1985
  %v2134 = vunpack.c.l.b16 %v1986
  %v2135 = vunpack.c.h.b16 %v1986
  %v2136 = vunpack.c.l.b16 %v1987
  %v2137 = vunpack.c.h.b16 %v1987
  %v2138 = vunpack.c.l.b16 %v1988
  %v2139 = vunpack.c.h.b16 %v1988
  %v2140 = vunpack.c.l.b16 %v1989
  %v2141 = vunpack.c.h.b16 %v1989
  %v2142 = vunpack.c.l.b16 %v1990
  %v2143 = vunpack.c.h.b16 %v1990
  %v2144 = vunpack.c.l.b16 %v1991
  %v2145 = vunpack.c.h.b16 %v1991
  %v2146 = vunpack.c.l.b16 %v1992
  %v2147 = vunpack.c.h.b16 %v1992
  %v2148 = vunpack.c.l.b16 %v1993
  %v2149 = vunpack.c.h.b16 %v1993
  %v2150 = vunpack.c.l.b16 %v1994
  %v2151 = vunpack.c.h.b16 %v1994
  %v2152 = vunpack.c.l.b16 %v1995
  %v2153 = vunpack.c.h.b16 %v1995
  %v2154 = vunpack.c.l.b16 %v1996
  %v2155 = vunpack.c.h.b16 %v1996
  %v2156 = vunpack.c.l.b16 %v1997
  %v2157 = vunpack.c.h.b16 %v1997
  %v2158 = vunpack.c.l.b16 %v1998
  %v2159 = vunpack.c.h.b16 %v1998
  %v2160 = vunpack.c.l.b16 %v1999
  %v2161 = vunpack.c.h.b16 %v1999
  %v2162 = vunpack.c.l.b16 %v2000
  %v2163 = vunpack.c.h.b16 %v2000
  %v2164 = vunpack.c.l.b16 %v2001
  %v2165 = vunpack.c.h.b16 %v2001
  %v2166 = vunpack.c.l.b16 %v2002
  %v2167 = vunpack.c.h.b16 %v2002
  %v2168 = vunpack.c.l.b16 %v2003
  %v2169 = vunpack.c.h.b16 %v2003
  %v2170 = vunpack.c.l.b16 %v2004
  %v2171 = vunpack.c.h.b16 %v2004
  %v2172 = vunpack.c.l.b16 %v2005
  %v2173 = vunpack.c.h.b16 %v2005
  %v2174 = vunpack.c.l.b16 %v2006
  %v2175 = vunpack.c.h.b16 %v2006
  %v2176 = vunpack.c.l.b16 %v2007
  %v2177 = vunpack.c.h.b16 %v2007
  %v2178 = vunpack.c.l.b16 %v2008
  %v2179 = vunpack.c.h.b16 %v2008
  %v2180 = vunpack.c.l.b16 %v2009
  %v2181 = vunpack.c.h.b16 %v2009
  %v2182 = vunpack.c.l.b16 %v2010
  %v2183 = vunpack.c.h.b16 %v2010
  %v2184 = vunpack.c.l.b16 %v2011
  %v2185 = vunpack.c.h.b16 %v2011
  %v2186 = vunpack.c.l.b16 %v2012
  %v2187 = vunpack.c.h.b16 %v2012
  %v2188 = vunpack.c.l.b16 %v2013
  %v2189 = vunpack.c.h.b16 %v2013
  %v2190 = vunpack.c.l.b16 %v2014
  %v2191 = vunpack.c.h.b16 %v2014
  %v2192 = vunpack.c.l.b16 %v2015
  %v2193 = vunpack.c.h.b16 %v2015
  %v2194 = vunpack.c.l.b16 %v2016
  %v2195 = vunpack.c.h.b16 %v2016
  %v2196 = vunpack.c.l.b16 %v2017
  %v2197 = vunpack.c.h.b16 %v2017
  %v2198 = vunpack.c.l.b16 %v2018
  %v2199 = vunpack.c.h.b16 %v2018
  %v2200 = vunpack.c.l.b16 %v2019
  %v2201 = vunpack.c.h.b16 %v2019
  %v2202 = vunpack.c.l.b16 %v2020
  %v2203 = vunpack.c.h.b16 %v2020
  %v2204 = vunpack.c.l.b16 %v2021
  %v2205 = vunpack.c.h.b16 %v2021
  %v2206 = vunpack.c.l.b16 %v2022
  %v2207 = vunpack.c.h.b16 %v2022
  %v2208 = vunpack.c.l.b16 %v2023
  %v2209 = vunpack.c.h.b16 %v2023
  %v2210 = vunpack.c.l.b16 %v2024
  %v2211 = vunpack.c.h.b16 %v2024
  %v2212 = vunpack.c.l.b16 %v2025
  %v2213 = vunpack.c.h.b16 %v2025
  %v2214 = vunpack.c.l.b16 %v2026
  %v2215 = vunpack.c.h.b16 %v2026
  %v2216 = vunpack.c.l.b16 %v2027
  %v2217 = vunpack.c.h.b16 %v2027
  %v2218 = vunpack.c.l.b16 %v2028
  %v2219 = vunpack.c.h.b16 %v2028
  %v2220 = vunpack.c.l.b16 %v2029
  %v2221 = vunpack.c.h.b16 %v2029
  %v2222 = vunpack.c.l.b16 %v2030
  %v2223 = vunpack.c.h.b16 %v2030
  %v2224 = vunpack.c.l.b16 %v2031
  %v2225 = vunpack.c.h.b16 %v2031
  %v2226 = vunpack.c.l.b16 %v2032
  %v2227 = vunpack.c.h.b16 %v2032
  %v2228 = vunpack.c.l.b16 %v2033
  %v2229 = vunpack.c.h.b16 %v2033
  %v2230 = vunpack.c.l.b16 %v2034
  %v2231 = vunpack.c.h.b16 %v2034
  %v2232 = vunpack.c.l.b16 %v2035
  %v2233 = vunpack.c.h.b16 %v2035
  %v2234 = vunpack.c.l.b16 %v2036
  %v2235 = vunpack.c.h.b16 %v2036
  %v2236 = vunpack.c.l.b16 %v2037
  %v2237 = vunpack.c.h.b16 %v2037
  %v2238 = vunpack.c.l.b16 %v2038
  %v2239 = vunpack.c.h.b16 %v2038
  %v2240 = vunpack.c.l.b16 %v2039
  %v2241 = vunpack.c.h.b16 %v2039
  %v2242 = vunpack.c.l.b16 %v2040
  %v2243 = vunpack.c.h.b16 %v2040
  %v2244 = vunpack.c.l.b16 %v2041
  %v2245 = vunpack.c.h.b16 %v2041
  %v2246 = vpack.c.b16 %v2120, %v2118
  %v2247 = vpack.c.b16 %v2121, %v2119
  %v2248 = vpack.c.b16 %v2124, %v2122
  %v2249 = vpack.c.b16 %v2125, %v2123
  %v2250 = vpack.c.b16 %v2128, %v2126
  %v2251 = vpack.c.b16 %v2129, %v2127
  %v2252 = vpack.c.b16 %v2132, %v2130
  %v2253 = vpack.c.b16 %v2133, %v2131
  %v2254 = vpack.c.b16 %v2136, %v2134
  %v2255 = vpack.c.b16 %v2137, %v2135
  %v2256 = vpack.c.b16 %v2140, %v2138
  %v2257 = vpack.c.b16 %v2141, %v2139
  %v2258 = vpack.c.b16 %v2144, %v2142
  %v2259 = vpack.c.b16 %v2145, %v2143
  %v2260 = vpack.c.b16 %v2148, %v2146
  %v2261 = vpack.c.b16 %v2149, %v2147
  %v2262 = vpack.c.b16 %v2152, %v2150
  %v2263 = vpack.c.b16 %v2153, %v2151
  %v2264 = vpack.c.b16 %v2156, %v2154
  %v2265 = vpack.c.b16 %v2157, %v2155
  %v2266 = vpack.c.b16 %v2160, %v2158
  %v2267 = vpack.c.b16 %v2161, %v2159
  %v2268 = vpack.c.b16 %v2164, %v2162
  %v2269 = vpack.c.b16 %v2165, %v2163
  %v2270 = vpack.c.b16 %v2168, %v2166
  %v2271 = vpack.c.b16 %v2169, %v2167
  %v2272 = vpack.c.b16 %v2172, %v2170
  %v2273 = vpack.c.b16 %v2173, %v2171
  %v2274 = vpack.c.b16 %v2176, %v2174
  %v2275 = vpack.c.b16 %v2177, %v2175
  %v2276 = vpack.c.b16 %v2180, %v2178
  %v2277 = vpack.c.b16 %v2181, %v2179
  %v2278 = vpack.c.b16 %v2184, %v2182
  %v2279 = vpack.c.b16 %v2185, %v2183
  %v2280 = vpack.c.b16 %v2188, %v2186
  %v2281 = vpack.c.b16 %v2189, %v2187
  %v2282 = vpack.c.b16 %v2192, %v2190
  %v2283 = vpack.c.b16 %v2193, %v2191
  %v2284 = vpack.c.b16 %v2196, %v2194
  %v2285 = vpack.c.b16 %v2197, %v2195
  %v2286 = vpack.c.b16 %v2200, %v2198
  %v2287 = vpack.c.b16 %v2201, %v2199
  %v2288 = vpack.c.b16 %v2204, %v2202
  %v2289 = vpack.c.b16 %v2205, %v2203
  %v2290 = vpack.c.b16 %v2208, %v2206
  %v2291 = vpack.c.b16 %v2209, %v2207
  %v2292 = vpack.c.b16 %v2212, %v2210
  %v2293 = vpack.c.b16 %v2213, %v2211
  %v2294 = vpack.c.b16 %v2216, %v2214
  %v2295 = vpack.c.b16 %v2217, %v2215
  %v2296 = vpack.c.b16 %v2220, %v2218
  %v2297 = vpack.c.b16 %v2221, %v2219
  %v2298 = vpack.c.b16 %v2224, %v2222
  %v2299 = vpack.c.b16 %v2225, %v2223
  %v2300 = vpack.c.b16 %v2228, %v2226
  %v2301 = vpack.c.b16 %v2229, %v2227
  %v2302 = vpack.c.b16 %v2232, %v2230
  %v2303 = vpack.c.b16 %v2233, %v2231
  %v2304 = vpack.c.b16 %v2236, %v2234
  %v2305 = vpack.c.b16 %v2237, %v2235
  %v2306 = vpack.c.b16 %v2240, %v2238
  %v2307 = vpack.c.b16 %v2241, %v2239
  %v2308 = vpack.c.b16 %v2244, %v2242
  %v2309 = vpack.c.b16 %v2245, %v2243
  %2374 = vmatprep.subr.bf16.mxu0 %v2247
  %2375 = vmatpush1.bf16.msra.mxu0 %v2246
  %2376 = vmatprep.subr.bf16.mxu0 %v2249
  %2377 = vmatpush1.bf16.msra.mxu0 %v2248
  %2378 = vmatprep.subr.bf16.mxu0 %v2251
  %2379 = vmatpush1.bf16.msra.mxu0 %v2250
  %2380 = vmatprep.subr.bf16.mxu0 %v2253
  %2381 = vmatpush1.bf16.msra.mxu0 %v2252
  %2382 = vmatprep.subr.bf16.mxu0 %v2255
  %2383 = vmatpush1.bf16.msra.mxu0 %v2254
  %2384 = vmatprep.subr.bf16.mxu0 %v2257
  %2385 = vmatpush1.bf16.msra.mxu0 %v2256
  %2386 = vmatprep.subr.bf16.mxu0 %v2259
  %2387 = vmatpush1.bf16.msra.mxu0 %v2258
  %2388 = vmatprep.subr.bf16.mxu0 %v2261
  %2389 = vmatpush1.bf16.msra.mxu0 %v2260
  %2390 = vmatprep.subr.bf16.mxu0 %v2263
  %2391 = vmatpush1.bf16.msra.mxu0 %v2262
  %2392 = vmatprep.subr.bf16.mxu0 %v2265
  %2393 = vmatpush1.bf16.msra.mxu0 %v2264
  %2394 = vmatprep.subr.bf16.mxu0 %v2267
  %2395 = vmatpush1.bf16.msra.mxu0 %v2266
  %2396 = vmatprep.subr.bf16.mxu0 %v2269
  %2397 = vmatpush1.bf16.msra.mxu0 %v2268
  %2398 = vmatprep.subr.bf16.mxu0 %v2271
  %2399 = vmatpush1.bf16.msra.mxu0 %v2270
  %2400 = vmatprep.subr.bf16.mxu0 %v2273
  %2401 = vmatpush1.bf16.msra.mxu0 %v2272
  %2402 = vmatprep.subr.bf16.mxu0 %v2275
  %2403 = vmatpush1.bf16.msra.mxu0 %v2274
  %2404 = vmatprep.subr.bf16.mxu0 %v2277
  %2405 = vmatpush1.bf16.msra.mxu0 %v2276
  %2406 = vmatprep.mubr.bf16.mxu0 %v1975
  %2407 = vmatmul.mubr.bf16.gmra.mrb[0].mxu0 %v1974
  %v2408 = vpop.f32.mrb[0].mxu0
  %v2409 = vadd.f32 %v2047, %v2408
  %v2410 = vpop.f32.mrb[0].mxu0
  %v2411 = vadd.f32 %v2051, %v2410
  %v2412 = vpop.f32.mrb[0].mxu0
  %v2413 = vpop.f32.mrb[0].mxu0
  %2414 = vdwg.mxu0
  %2415 = vmatprep.subr.bf16.mxu0 %v2279
  %2416 = vmatpush1.bf16.msra.mxu0 %v2278
  %2417 = vmatprep.subr.bf16.mxu0 %v2281
  %2418 = vmatpush1.bf16.msra.mxu0 %v2280
  %2419 = vmatprep.subr.bf16.mxu0 %v2283
  %2420 = vmatpush1.bf16.msra.mxu0 %v2282
  %2421 = vmatprep.subr.bf16.mxu0 %v2285
  %2422 = vmatpush1.bf16.msra.mxu0 %v2284
  %2423 = vmatprep.subr.bf16.mxu0 %v2287
  %2424 = vmatpush1.bf16.msra.mxu0 %v2286
  %2425 = vmatprep.subr.bf16.mxu0 %v2289
  %2426 = vmatpush1.bf16.msra.mxu0 %v2288
  %2427 = vmatprep.subr.bf16.mxu0 %v2291
  %2428 = vmatpush1.bf16.msra.mxu0 %v2290
  %2429 = vmatprep.subr.bf16.mxu0 %v2293
  %2430 = vmatpush1.bf16.msra.mxu0 %v2292
  %2431 = vmatprep.subr.bf16.mxu0 %v2295
  %2432 = vmatpush1.bf16.msra.mxu0 %v2294
  %2433 = vmatprep.subr.bf16.mxu0 %v2297
  %2434 = vmatpush1.bf16.msra.mxu0 %v2296
  %2435 = vmatprep.subr.bf16.mxu0 %v2299
  %2436 = vmatpush1.bf16.msra.mxu0 %v2298
  %2437 = vmatprep.subr.bf16.mxu0 %v2301
  %2438 = vmatpush1.bf16.msra.mxu0 %v2300
  %2439 = vmatprep.subr.bf16.mxu0 %v2303
  %2440 = vmatpush1.bf16.msra.mxu0 %v2302
  %2441 = vmatprep.subr.bf16.mxu0 %v2305
  %2442 = vmatpush1.bf16.msra.mxu0 %v2304
  %2443 = vmatprep.subr.bf16.mxu0 %v2307
  %2444 = vmatpush1.bf16.msra.mxu0 %v2306
  %2445 = vmatprep.subr.bf16.mxu0 %v2309
  %2446 = vmatpush1.bf16.msra.mxu0 %v2308
  %2447 = vmatprep.mubr.bf16.mxu0 %v1977
  %2448 = vmatmul.mubr.bf16.gmra.mrb[0].mxu0 %v1976
  %v2449 = vpop.f32.mrb[0].mxu0
  %v2450 = vadd.f32 %v2409, %v2449
  %v2451 = vpop.f32.mrb[0].mxu0
  %v2452 = vadd.f32 %v2411, %v2451
  %v2453 = vpop.f32.mrb[0].mxu0
  %v2454 = vpop.f32.mrb[0].mxu0
  %2455 = vdwg.mxu0
  %v2456 = vmax.f32 %v2450, 0.0
  %v2457 = vmax.f32 %v2452, 0.0
  %v2458 = vpack.c.bf16 %v2456, %v2456
  %v2459 = vpack.c.bf16 %v2457, %v2457
  %v2460 = vld [vmem:[%s5] sm:$0xf]
  %v2461 = vld [vmem:[%s5 + $0x4] sm:$0xf]
  %v2462 = vld [vmem:[%s5 + $0x8] sm:$0xf]
  %v2463 = vld [vmem:[%s5 + $0xc] sm:$0xf]
  %v2464 = vld [vmem:[%s5 + $0x10] sm:$0xf]
  %v2465 = vld [vmem:[%s5 + $0x14] sm:$0xf]
  %v2466 = vld [vmem:[%s5 + $0x18] sm:$0xf]
  %v2467 = vld [vmem:[%s5 + $0x1c] sm:$0xf]
  %v2468 = vld [vmem:[%s5 + $0x20] sm:$0xf]
  %v2469 = vld [vmem:[%s5 + $0x24] sm:$0xf]
  %v2470 = vld [vmem:[%s5 + $0x28] sm:$0xf]
  %v2471 = vld [vmem:[%s5 + $0x2c] sm:$0xf]
  %v2472 = vld [vmem:[%s5 + $0x30] sm:$0xf]
  %v2473 = vld [vmem:[%s5 + $0x34] sm:$0xf]
  %v2474 = vld [vmem:[%s5 + $0x38] sm:$0xf]
  %v2475 = vld [vmem:[%s5 + $0x3c] sm:$0xf]
  %v2476 = vld [vmem:[%s5 + $0x40] sm:$0xf]
  %v2477 = vld [vmem:[%s5 + $0x44] sm:$0xf]
  %v2478 = vld [vmem:[%s5 + $0x48] sm:$0xf]
  %v2479 = vld [vmem:[%s5 + $0x4c] sm:$0xf]
  %v2480 = vld [vmem:[%s5 + $0x50] sm:$0xf]
  %v2481 = vld [vmem:[%s5 + $0x54] sm:$0xf]
  %v2482 = vld [vmem:[%s5 + $0x58] sm:$0xf]
  %v2483 = vld [vmem:[%s5 + $0x5c] sm:$0xf]
  %v2484 = vld [vmem:[%s5 + $0x60] sm:$0xf]
  %v2485 = vld [vmem:[%s5 + $0x64] sm:$0xf]
  %v2486 = vld [vmem:[%s5 + $0x68] sm:$0xf]
  %v2487 = vld [vmem:[%s5 + $0x6c] sm:$0xf]
  %v2488 = vld [vmem:[%s5 + $0x70] sm:$0xf]
  %v2489 = vld [vmem:[%s5 + $0x74] sm:$0xf]
  %v2490 = vld [vmem:[%s5 + $0x78] sm:$0xf]
  %v2491 = vld [vmem:[%s5 + $0x7c] sm:$0xf]
  %v2492 = vld [vmem:[%s6] sm:$0x1]
  %v2494 = vlaneseq
  %v2495 = vshrl.u32 %v2494, 7
  %v2496 = vsub.s32 0, %v2495
  %v2497 = vrot.slane %v2492, %v2496
  %v2531 = vunpack.c.l.b16 %v2460
  %v2532 = vunpack.c.l.b16 %v2461
  %v2533 = vunpack.c.l.b16 %v2462
  %v2534 = vunpack.c.l.b16 %v2463
  %v2535 = vunpack.c.l.b16 %v2464
  %v2536 = vunpack.c.l.b16 %v2465
  %v2537 = vunpack.c.l.b16 %v2466
  %v2538 = vunpack.c.l.b16 %v2467
  %v2539 = vunpack.c.l.b16 %v2468
  %v2540 = vunpack.c.l.b16 %v2469
  %v2541 = vunpack.c.l.b16 %v2470
  %v2542 = vunpack.c.l.b16 %v2471
  %v2543 = vunpack.c.l.b16 %v2472
  %v2544 = vunpack.c.l.b16 %v2473
  %v2545 = vunpack.c.l.b16 %v2474
  %v2546 = vunpack.c.l.b16 %v2475
  %v2547 = vunpack.c.l.b16 %v2476
  %v2548 = vunpack.c.l.b16 %v2477
  %v2549 = vunpack.c.l.b16 %v2478
  %v2550 = vunpack.c.l.b16 %v2479
  %v2551 = vunpack.c.l.b16 %v2480
  %v2552 = vunpack.c.l.b16 %v2481
  %v2553 = vunpack.c.l.b16 %v2482
  %v2554 = vunpack.c.l.b16 %v2483
  %v2555 = vunpack.c.l.b16 %v2484
  %v2556 = vunpack.c.l.b16 %v2485
  %v2557 = vunpack.c.l.b16 %v2486
  %v2558 = vunpack.c.l.b16 %v2487
  %v2559 = vunpack.c.l.b16 %v2488
  %v2560 = vunpack.c.l.b16 %v2489
  %v2561 = vunpack.c.l.b16 %v2490
  %v2562 = vunpack.c.l.b16 %v2491
  %v2563 = vpack.c.b16 %v2532, %v2531
  %v2564 = vpack.c.b16 %v2534, %v2533
  %v2565 = vpack.c.b16 %v2536, %v2535
  %v2566 = vpack.c.b16 %v2538, %v2537
  %v2567 = vpack.c.b16 %v2540, %v2539
  %v2568 = vpack.c.b16 %v2542, %v2541
  %v2569 = vpack.c.b16 %v2544, %v2543
  %v2570 = vpack.c.b16 %v2546, %v2545
  %v2571 = vpack.c.b16 %v2548, %v2547
  %v2572 = vpack.c.b16 %v2550, %v2549
  %v2573 = vpack.c.b16 %v2552, %v2551
  %v2574 = vpack.c.b16 %v2554, %v2553
  %v2575 = vpack.c.b16 %v2556, %v2555
  %v2576 = vpack.c.b16 %v2558, %v2557
  %v2577 = vpack.c.b16 %v2560, %v2559
  %v2578 = vpack.c.b16 %v2562, %v2561
  %2595 = vmatprep.subr.bf16.mxu0 0
  %2596 = vmatpush1.bf16.msra.mxu0 %v2563
  %2597 = vmatprep.subr.bf16.mxu0 0
  %2598 = vmatpush1.bf16.msra.mxu0 %v2564
  %2599 = vmatprep.subr.bf16.mxu0 0
  %2600 = vmatpush1.bf16.msra.mxu0 %v2565
  %2601 = vmatprep.subr.bf16.mxu0 0
  %2602 = vmatpush1.bf16.msra.mxu0 %v2566
  %2603 = vmatprep.subr.bf16.mxu0 0
  %2604 = vmatpush1.bf16.msra.mxu0 %v2567
  %2605 = vmatprep.subr.bf16.mxu0 0
  %2606 = vmatpush1.bf16.msra.mxu0 %v2568
  %2607 = vmatprep.subr.bf16.mxu0 0
  %2608 = vmatpush1.bf16.msra.mxu0 %v2569
  %2609 = vmatprep.subr.bf16.mxu0 0
  %2610 = vmatpush1.bf16.msra.mxu0 %v2570
  %2611 = vmatprep.subr.bf16.mxu0 0
  %2612 = vmatpush1.bf16.msra.mxu0 %v2571
  %2613 = vmatprep.subr.bf16.mxu0 0
  %2614 = vmatpush1.bf16.msra.mxu0 %v2572
  %2615 = vmatprep.subr.bf16.mxu0 0
  %2616 = vmatpush1.bf16.msra.mxu0 %v2573
  %2617 = vmatprep.subr.bf16.mxu0 0
  %2618 = vmatpush1.bf16.msra.mxu0 %v2574
  %2619 = vmatprep.subr.bf16.mxu0 0
  %2620 = vmatpush1.bf16.msra.mxu0 %v2575
  %2621 = vmatprep.subr.bf16.mxu0 0
  %2622 = vmatpush1.bf16.msra.mxu0 %v2576
  %2623 = vmatprep.subr.bf16.mxu0 0
  %2624 = vmatpush1.bf16.msra.mxu0 %v2577
  %2625 = vmatprep.subr.bf16.mxu0 0
  %2626 = vmatpush1.bf16.msra.mxu0 %v2578
  %2627 = vmatprep.mubr.bf16.mxu0 %v2459
  %2628 = vmatmul.mubr.bf16.gmra.mrb[0].mxu0 %v2458
  %v2629 = vpop.f32.mrb[0].mxu0
  %v2630 = vadd.f32 %v2497, %v2629
  %v2631 = vpop.f32.mrb[0].mxu0
  %v2632 = vpop.f32.mrb[0].mxu0
  %v2633 = vpop.f32.mrb[0].mxu0
  %2634 = vdwg.mxu0
  %v2635 = vld [vmem:[%s7] sm:$0x1]
  %v2637 = vlaneseq
  %v2638 = vshrl.u32 %v2637, 7
  %v2639 = vsub.s32 0, %v2638
  %v2640 = vrot.slane %v2635, %v2639
  %v2642 = vadd.f32 %v2630, %v2640
  %vm2643 = vcmask 66560
  %2644 = vst.msk [vmem:[%s8] sm:$0x3] %vm2643, %v2642
  // Predicated region
  $region34: #{pointnetfeat_v1.4} parent=0 // pred_check
    _
  $region35: #{pointnetfeat_v1.4} parent=0 // pred_check_branch
    %2646 = sbr.rel (0) target = $region37
  $region36: #{pointnetfeat_v1.4} parent=0 // pred_region
    _
  $region37: #{pointnetfeat_v1.4} parent=0 // pred_fallthru
    _
  // Predicated region
  $region38: #{pointnetfeat_v1.4} parent=0 // pred_check
    _
  $region39: #{pointnetfeat_v1.4} parent=0 // pred_check_branch
    %2648 = sbr.rel (0) target = $region41
  $region40: #{pointnetfeat_v1.4} parent=0 // pred_region
    _
  $region41: #{pointnetfeat_v1.4} parent=0 // pred_fallthru
    _

// kernel: pointnetfeat_v1.5
$region0: #{pointnetfeat_v1.5}
  #allocation0 [shape = 'u32[]', space=smem, size = 0x4, offset = 0x4, fixed_abs, tag = 'smem constant byte address 0x4 - core index']
  #allocation1 [shape = 'u32[144,128]{1,0:T(1,128)}', space=vmem, size = 0x12000, scoped, tag = 'internal scratch']
  #allocation2 [shape = 'bf16[512,64]{1,0:T(16,128)(2,1)}', space=vmem, size = 0x20000, scoped, tag = 'scratch operand']
  #allocation3 [shape = 'bf16[512,64]{1,0:T(16,128)(2,1)}', space=vmem, size = 0x20000, scoped, tag = 'scratch operand']
  #allocation4 [shape = 'bf16[512,128]{1,0:T(16,128)(2,1)}', space=vmem, size = 0x20000, scoped, tag = 'scratch operand']
  %s0 = inlined_call_operand.vmem [shape: f32[512,8], index: 0, kind: input, shape index: {}]
  %s1 = inlined_call_operand.vmem [shape: bf16[2,8,64], index: 1, kind: input, shape index: {}]
  %s2 = inlined_call_operand.vmem [shape: f32[1,64], index: 2, kind: input, shape index: {}]
  %s3 = inlined_call_operand.vmem [shape: bf16[64,64], index: 3, kind: input, shape index: {}]
  %s4 = inlined_call_operand.vmem [shape: f32[1,64], index: 4, kind: input, shape index: {}]
  %s5 = inlined_call_operand.vmem [shape: bf16[64,64], index: 5, kind: input, shape index: {}]
  %s6 = inlined_call_operand.vmem [shape: f32[1,64], index: 6, kind: input, shape index: {}]
  %s7 = inlined_call_operand.vmem [shape: bf16[64,128], index: 7, kind: input, shape index: {}]
  %s8 = inlined_call_operand.vmem [shape: f32[1,128], index: 8, kind: input, shape index: {}]
  %s9 = inlined_call_operand.vmem [shape: bf16[128,256], index: 9, kind: input, shape index: {}]
  %s10 = inlined_call_operand.vmem [shape: f32[1,256], index: 10, kind: input, shape index: {}]
  %s11 = inlined_call_operand.hbm [shape: f32[2,256], index: 11, kind: output, shape index: {}]
  %s12 = sld [smem:[#allocation0]]
  $region75: #{pointnetfeat_v1.5} parent=0
    _
  %s14 = ssub.s32 1, %s12
  %s15 = scalar_select 0, %s14, %s12
  $region1: #{pointnetfeat_v1.5} parent=0
    #allocation5 [shape = 'u8[2048]{0}', space=vmem, size = 0x800, scoped, tag = 'output window, operand 0, single buffered']
    #allocation6 [shape = 's32[1]{0}', space=sflag, size = 0x4, scoped, tag = 'scoped memory for pointnetfeat_v1.5']
    %16 = vsyncpa [#allocation6], 0
    // Predicated region
    $region2: #{pointnetfeat_v1.5} parent=1 // pred_check
      _
    $region3: #{pointnetfeat_v1.5} parent=1 // pred_check_branch
      %18 = sbr.rel (0) target = $region5
    $region4: #{pointnetfeat_v1.5} parent=1 // pred_region
      _
    $region5: #{pointnetfeat_v1.5} parent=1 // pred_fallthru
      _
    // Predicated region
    $region6: #{pointnetfeat_v1.5} parent=1 // pred_check
      _
    $region7: #{pointnetfeat_v1.5} parent=1 // pred_check_branch
      %20 = sbr.rel (0) target = $region9
    $region8: #{pointnetfeat_v1.5} parent=1 // pred_region
      _
    $region9: #{pointnetfeat_v1.5} parent=1 // pred_fallthru
      _
    // Predicated region
    $region10: #{pointnetfeat_v1.5} parent=1 // pred_check
      _
    $region11: #{pointnetfeat_v1.5} parent=1 // pred_check_branch
      %22 = sbr.rel (0) target = $region13
    $region12: #{pointnetfeat_v1.5} parent=1 // pred_region
      _
    $region13: #{pointnetfeat_v1.5} parent=1 // pred_fallthru
      _
    // Predicated region
    $region14: #{pointnetfeat_v1.5} parent=1 // pred_check
      _
    $region15: #{pointnetfeat_v1.5} parent=1 // pred_check_branch
      %24 = sbr.rel (0) target = $region17
    $region16: #{pointnetfeat_v1.5} parent=1 // pred_region
      _
    $region17: #{pointnetfeat_v1.5} parent=1 // pred_fallthru
      _
    // Predicated region
    $region18: #{pointnetfeat_v1.5} parent=1 // pred_check
      _
    $region19: #{pointnetfeat_v1.5} parent=1 // pred_check_branch
      %26 = sbr.rel (0) target = $region21
    $region20: #{pointnetfeat_v1.5} parent=1 // pred_region
      _
    $region21: #{pointnetfeat_v1.5} parent=1 // pred_fallthru
      _
    // Predicated region
    $region22: #{pointnetfeat_v1.5} parent=1 // pred_check
      _
    $region23: #{pointnetfeat_v1.5} parent=1 // pred_check_branch
      %28 = sbr.rel (0) target = $region25
    $region24: #{pointnetfeat_v1.5} parent=1 // pred_region
      _
    $region25: #{pointnetfeat_v1.5} parent=1 // pred_fallthru
      _
    // Predicated region
    $region26: #{pointnetfeat_v1.5} parent=1 // pred_check
      _
    $region27: #{pointnetfeat_v1.5} parent=1 // pred_check_branch
      %30 = sbr.rel (0) target = $region29
    $region28: #{pointnetfeat_v1.5} parent=1 // pred_region
      _
    $region29: #{pointnetfeat_v1.5} parent=1 // pred_fallthru
      _
    // Predicated region
    $region30: #{pointnetfeat_v1.5} parent=1 // pred_check
      _
    $region31: #{pointnetfeat_v1.5} parent=1 // pred_check_branch
      %32 = sbr.rel (0) target = $region33
    $region32: #{pointnetfeat_v1.5} parent=1 // pred_region
      _
    $region33: #{pointnetfeat_v1.5} parent=1 // pred_fallthru
      _
    // Predicated region
    $region34: #{pointnetfeat_v1.5} parent=1 // pred_check
      _
    $region35: #{pointnetfeat_v1.5} parent=1 // pred_check_branch
      %34 = sbr.rel (0) target = $region37
    $region36: #{pointnetfeat_v1.5} parent=1 // pred_region
      _
    $region37: #{pointnetfeat_v1.5} parent=1 // pred_fallthru
      _
    // Predicated region
    $region38: #{pointnetfeat_v1.5} parent=1 // pred_check
      _
    $region39: #{pointnetfeat_v1.5} parent=1 // pred_check_branch
      %36 = sbr.rel (0) target = $region41
    $region40: #{pointnetfeat_v1.5} parent=1 // pred_region
      _
    $region41: #{pointnetfeat_v1.5} parent=1 // pred_fallthru
      _
    // Predicated region
    $region42: #{pointnetfeat_v1.5} parent=1 // pred_check
      _
    $region43: #{pointnetfeat_v1.5} parent=1 // pred_check_branch
      %38 = sbr.rel (0) target = $region45
    $region44: #{pointnetfeat_v1.5} parent=1 // pred_region
      _
    $region45: #{pointnetfeat_v1.5} parent=1 // pred_fallthru
      _
    %v40 = vld [vmem:[%s1] sm:$0xf]
    %v41 = vld [vmem:[%s0] sm:$0xff]
    %v42 = vld [vmem:[%s0 + $0x8] sm:$0xff]
    %v43 = vld [vmem:[%s0 + $0x10] sm:$0xff]
    %v44 = vld [vmem:[%s0 + $0x18] sm:$0xff]
    %v45 = vld [vmem:[%s0 + $0x20] sm:$0xff]
    %v46 = vld [vmem:[%s0 + $0x28] sm:$0xff]
    %v47 = vld [vmem:[%s0 + $0x30] sm:$0xff]
    %v48 = vld [vmem:[%s0 + $0x38] sm:$0xff]
    %v49 = vld [vmem:[%s0 + $0x40] sm:$0xff]
    %v50 = vld [vmem:[%s0 + $0x48] sm:$0xff]
    %v51 = vld [vmem:[%s0 + $0x50] sm:$0xff]
    %v52 = vld [vmem:[%s0 + $0x58] sm:$0xff]
    %v53 = vld [vmem:[%s0 + $0x60] sm:$0xff]
    %v54 = vld [vmem:[%s0 + $0x68] sm:$0xff]
    %v55 = vld [vmem:[%s0 + $0x70] sm:$0xff]
    %v56 = vld [vmem:[%s0 + $0x78] sm:$0xff]
    %v57 = vld [vmem:[%s0 + $0x80] sm:$0xff]
    %v58 = vld [vmem:[%s0 + $0x88] sm:$0xff]
    %v59 = vld [vmem:[%s0 + $0x90] sm:$0xff]
    %v60 = vld [vmem:[%s0 + $0x98] sm:$0xff]
    %v61 = vld [vmem:[%s0 + $0xa0] sm:$0xff]
    %v62 = vld [vmem:[%s0 + $0xa8] sm:$0xff]
    %v63 = vld [vmem:[%s0 + $0xb0] sm:$0xff]
    %v64 = vld [vmem:[%s0 + $0xb8] sm:$0xff]
    %v65 = vld [vmem:[%s0 + $0xc0] sm:$0xff]
    %v66 = vld [vmem:[%s0 + $0xc8] sm:$0xff]
    %v67 = vld [vmem:[%s0 + $0xd0] sm:$0xff]
    %v68 = vld [vmem:[%s0 + $0xd8] sm:$0xff]
    %v69 = vld [vmem:[%s0 + $0xe0] sm:$0xff]
    %v70 = vld [vmem:[%s0 + $0xe8] sm:$0xff]
    %v71 = vld [vmem:[%s0 + $0xf0] sm:$0xff]
    %v72 = vld [vmem:[%s0 + $0xf8] sm:$0xff]
    %v73 = vpack.c.bf16 %v42, %v41
    %v74 = vpack.c.bf16 %v44, %v43
    %v75 = vpack.c.bf16 %v46, %v45
    %v76 = vpack.c.bf16 %v48, %v47
    %v77 = vpack.c.bf16 %v50, %v49
    %v78 = vpack.c.bf16 %v52, %v51
    %v79 = vpack.c.bf16 %v54, %v53
    %v80 = vpack.c.bf16 %v56, %v55
    %v81 = vpack.c.bf16 %v58, %v57
    %v82 = vpack.c.bf16 %v60, %v59
    %v83 = vpack.c.bf16 %v62, %v61
    %v84 = vpack.c.bf16 %v64, %v63
    %v85 = vpack.c.bf16 %v66, %v65
    %v86 = vpack.c.bf16 %v68, %v67
    %v87 = vpack.c.bf16 %v70, %v69
    %v88 = vpack.c.bf16 %v72, %v71
    %v89 = vld [vmem:[%s2] sm:$0x1]
    %v91 = vlaneseq
    %v92 = vshrl.u32 %v91, 7
    %v93 = vsub.s32 0, %v92
    %v94 = vrot.slane %v89, %v93
    %vm96 = vcmask 64512
    %v98 = vsel %vm96, %v73, 0
    %v101 = vsel %vm96, %v74, 0
    %v104 = vsel %vm96, %v75, 0
    %v107 = vsel %vm96, %v76, 0
    %v110 = vsel %vm96, %v77, 0
    %v113 = vsel %vm96, %v78, 0
    %v116 = vsel %vm96, %v79, 0
    %v119 = vsel %vm96, %v80, 0
    %v122 = vsel %vm96, %v81, 0
    %v125 = vsel %vm96, %v82, 0
    %v128 = vsel %vm96, %v83, 0
    %v131 = vsel %vm96, %v84, 0
    %v134 = vsel %vm96, %v85, 0
    %v137 = vsel %vm96, %v86, 0
    %v140 = vsel %vm96, %v87, 0
    %v143 = vsel %vm96, %v88, 0
    %vm145 = vcmask 1043456
    %v147 = vsel %vm145, %v40, 0
    %149 = vmatprep.subr.bf16.mxu0 0
    %150 = vmatpush1.bf16.msra.mxu0 %v147
    %151 = vmatprep.subr.bf16.mxu0 0
    %152 = vmatpush1.bf16.msra.mxu0 0
    %153 = vmatprep.subr.bf16.mxu0 0
    %154 = vmatpush1.bf16.msra.mxu0 0
    %155 = vmatprep.subr.bf16.mxu0 0
    %156 = vmatpush1.bf16.msra.mxu0 0
    %157 = vmatprep.subr.bf16.mxu0 0
    %158 = vmatpush1.bf16.msra.mxu0 0
    %159 = vmatprep.subr.bf16.mxu0 0
    %160 = vmatpush1.bf16.msra.mxu0 0
    %161 = vmatprep.subr.bf16.mxu0 0
    %162 = vmatpush1.bf16.msra.mxu0 0
    %163 = vmatprep.subr.bf16.mxu0 0
    %164 = vmatpush1.bf16.msra.mxu0 0
    %165 = vmatprep.subr.bf16.mxu0 0
    %166 = vmatpush1.bf16.msra.mxu0 0
    %167 = vmatprep.subr.bf16.mxu0 0
    %168 = vmatpush1.bf16.msra.mxu0 0
    %169 = vmatprep.subr.bf16.mxu0 0
    %170 = vmatpush1.bf16.msra.mxu0 0
    %171 = vmatprep.subr.bf16.mxu0 0
    %172 = vmatpush1.bf16.msra.mxu0 0
    %173 = vmatprep.subr.bf16.mxu0 0
    %174 = vmatpush1.bf16.msra.mxu0 0
    %175 = vmatprep.subr.bf16.mxu0 0
    %176 = vmatpush1.bf16.msra.mxu0 0
    %177 = vmatprep.subr.bf16.mxu0 0
    %178 = vmatpush1.bf16.msra.mxu0 0
    %179 = vmatprep.subr.bf16.mxu0 0
    %180 = vmatpush1.bf16.msra.mxu0 0
    %181 = vmatprep.mubr.bf16.mxu0 0
    %182 = vmatmul.mubr.bf16.gmra.mrb[0].mxu0 %v98
    %v183 = vpop.f32.mrb[0].mxu0
    %v184 = vadd.f32 %v94, %v183
    %v185 = vpop.f32.mrb[0].mxu0
    %v186 = vpop.f32.mrb[0].mxu0
    %v187 = vadd.f32 %v94, %v186
    %v188 = vpop.f32.mrb[0].mxu0
    %189 = vmatprep.mubr.bf16.mxu0 0
    %190 = vmatmul.mubr.bf16.gmra.mrb[0].mxu0 %v101
    %v191 = vpop.f32.mrb[0].mxu0
    %v192 = vadd.f32 %v94, %v191
    %v193 = vpop.f32.mrb[0].mxu0
    %v194 = vpop.f32.mrb[0].mxu0
    %v195 = vadd.f32 %v94, %v194
    %v196 = vpop.f32.mrb[0].mxu0
    %197 = vmatprep.mubr.bf16.mxu0 0
    %198 = vmatmul.mubr.bf16.gmra.mrb[0].mxu0 %v104
    %v199 = vpop.f32.mrb[0].mxu0
    %v200 = vadd.f32 %v94, %v199
    %v201 = vpop.f32.mrb[0].mxu0
    %v202 = vpop.f32.mrb[0].mxu0
    %v203 = vadd.f32 %v94, %v202
    %v204 = vpop.f32.mrb[0].mxu0
    %205 = vmatprep.mubr.bf16.mxu0 0
    %206 = vmatmul.mubr.bf16.gmra.mrb[0].mxu0 %v107
    %v207 = vpop.f32.mrb[0].mxu0
    %v208 = vadd.f32 %v94, %v207
    %v209 = vpop.f32.mrb[0].mxu0
    %v210 = vpop.f32.mrb[0].mxu0
    %v211 = vadd.f32 %v94, %v210
    %v212 = vpop.f32.mrb[0].mxu0
    %213 = vmatprep.mubr.bf16.mxu0 0
    %214 = vmatmul.mubr.bf16.gmra.mrb[0].mxu0 %v110
    %v215 = vpop.f32.mrb[0].mxu0
    %v216 = vadd.f32 %v94, %v215
    %v217 = vpop.f32.mrb[0].mxu0
    %v218 = vpop.f32.mrb[0].mxu0
    %v219 = vadd.f32 %v94, %v218
    %v220 = vpop.f32.mrb[0].mxu0
    %221 = vmatprep.mubr.bf16.mxu0 0
    %222 = vmatmul.mubr.bf16.gmra.mrb[0].mxu0 %v113
    %v223 = vpop.f32.mrb[0].mxu0
    %v224 = vadd.f32 %v94, %v223
    %v225 = vpop.f32.mrb[0].mxu0
    %v226 = vpop.f32.mrb[0].mxu0
    %v227 = vadd.f32 %v94, %v226
    %v228 = vpop.f32.mrb[0].mxu0
    %229 = vmatprep.mubr.bf16.mxu0 0
    %230 = vmatmul.mubr.bf16.gmra.mrb[0].mxu0 %v116
    %v231 = vpop.f32.mrb[0].mxu0
    %v232 = vadd.f32 %v94, %v231
    %v233 = vpop.f32.mrb[0].mxu0
    %v234 = vpop.f32.mrb[0].mxu0
    %v235 = vadd.f32 %v94, %v234
    %v236 = vpop.f32.mrb[0].mxu0
    %237 = vmatprep.mubr.bf16.mxu0 0
    %238 = vmatmul.mubr.bf16.gmra.mrb[0].mxu0 %v119
    %v239 = vpop.f32.mrb[0].mxu0
    %v240 = vadd.f32 %v94, %v239
    %v241 = vpop.f32.mrb[0].mxu0
    %v242 = vpop.f32.mrb[0].mxu0
    %v243 = vadd.f32 %v94, %v242
    %v244 = vpop.f32.mrb[0].mxu0
    %245 = vmatprep.mubr.bf16.mxu0 0
    %246 = vmatmul.mubr.bf16.gmra.mrb[0].mxu0 %v122
    %v247 = vpop.f32.mrb[0].mxu0
    %v248 = vadd.f32 %v94, %v247
    %v249 = vpop.f32.mrb[0].mxu0
    %v250 = vpop.f32.mrb[0].mxu0
    %v251 = vadd.f32 %v94, %v250
    %v252 = vpop.f32.mrb[0].mxu0
    %253 = vmatprep.mubr.bf16.mxu0 0
    %254 = vmatmul.mubr.bf16.gmra.mrb[0].mxu0 %v125
    %v255 = vpop.f32.mrb[0].mxu0
    %v256 = vadd.f32 %v94, %v255
    %v257 = vpop.f32.mrb[0].mxu0
    %v258 = vpop.f32.mrb[0].mxu0
    %v259 = vadd.f32 %v94, %v258
    %v260 = vpop.f32.mrb[0].mxu0
    %261 = vmatprep.mubr.bf16.mxu0 0
    %262 = vmatmul.mubr.bf16.gmra.mrb[0].mxu0 %v128
    %v263 = vpop.f32.mrb[0].mxu0
    %v264 = vadd.f32 %v94, %v263
    %v265 = vpop.f32.mrb[0].mxu0
    %v266 = vpop.f32.mrb[0].mxu0
    %v267 = vadd.f32 %v94, %v266
    %v268 = vpop.f32.mrb[0].mxu0
    %269 = vmatprep.mubr.bf16.mxu0 0
    %270 = vmatmul.mubr.bf16.gmra.mrb[0].mxu0 %v131
    %v271 = vpop.f32.mrb[0].mxu0
    %v272 = vadd.f32 %v94, %v271
    %v273 = vpop.f32.mrb[0].mxu0
    %v274 = vpop.f32.mrb[0].mxu0
    %v275 = vadd.f32 %v94, %v274
    %v276 = vpop.f32.mrb[0].mxu0
    %277 = vmatprep.mubr.bf16.mxu0 0
    %278 = vmatmul.mubr.bf16.gmra.mrb[0].mxu0 %v134
    %v279 = vpop.f32.mrb[0].mxu0
    %v280 = vadd.f32 %v94, %v279
    %v281 = vpop.f32.mrb[0].mxu0
    %v282 = vpop.f32.mrb[0].mxu0
    %v283 = vadd.f32 %v94, %v282
    %v284 = vpop.f32.mrb[0].mxu0
    %285 = vmatprep.mubr.bf16.mxu0 0
    %286 = vmatmul.mubr.bf16.gmra.mrb[0].mxu0 %v137
    %v287 = vpop.f32.mrb[0].mxu0
    %v288 = vadd.f32 %v94, %v287
    %v289 = vpop.f32.mrb[0].mxu0
    %v290 = vpop.f32.mrb[0].mxu0
    %v291 = vadd.f32 %v94, %v290
    %v292 = vpop.f32.mrb[0].mxu0
    %293 = vmatprep.mubr.bf16.mxu0 0
    %294 = vmatmul.mubr.bf16.gmra.mrb[0].mxu0 %v140
    %v295 = vpop.f32.mrb[0].mxu0
    %v296 = vadd.f32 %v94, %v295
    %v297 = vpop.f32.mrb[0].mxu0
    %v298 = vpop.f32.mrb[0].mxu0
    %v299 = vadd.f32 %v94, %v298
    %v300 = vpop.f32.mrb[0].mxu0
    %301 = vmatprep.mubr.bf16.mxu0 0
    %302 = vmatmul.mubr.bf16.gmra.mrb[0].mxu0 %v143
    %v303 = vpop.f32.mrb[0].mxu0
    %v304 = vadd.f32 %v94, %v303
    %v305 = vpop.f32.mrb[0].mxu0
    %v306 = vpop.f32.mrb[0].mxu0
    %v307 = vadd.f32 %v94, %v306
    %v308 = vpop.f32.mrb[0].mxu0
    %309 = vdwg.mxu0
    %v310 = vpack.c.bf16 %v187, %v184
    %v311 = vpack.c.bf16 %v195, %v192
    %v312 = vpack.c.bf16 %v203, %v200
    %v313 = vpack.c.bf16 %v211, %v208
    %v314 = vpack.c.bf16 %v219, %v216
    %v315 = vpack.c.bf16 %v227, %v224
    %v316 = vpack.c.bf16 %v235, %v232
    %v317 = vpack.c.bf16 %v243, %v240
    %v318 = vpack.c.bf16 %v251, %v248
    %v319 = vpack.c.bf16 %v259, %v256
    %v320 = vpack.c.bf16 %v267, %v264
    %v321 = vpack.c.bf16 %v275, %v272
    %v322 = vpack.c.bf16 %v283, %v280
    %v323 = vpack.c.bf16 %v291, %v288
    %v324 = vpack.c.bf16 %v299, %v296
    %v325 = vpack.c.bf16 %v307, %v304
    %vm326 = vcmask 523264
    %327 = vst.msk [vmem:[#allocation2] sm:$0xff] %vm326, %v310
    %328 = vst.msk [vmem:[#allocation2 + $0x8] sm:$0xff] %vm326, %v311
    %329 = vst.msk [vmem:[#allocation2 + $0x10] sm:$0xff] %vm326, %v312
    %330 = vst.msk [vmem:[#allocation2 + $0x18] sm:$0xff] %vm326, %v313
    %331 = vst.msk [vmem:[#allocation2 + $0x20] sm:$0xff] %vm326, %v314
    %332 = vst.msk [vmem:[#allocation2 + $0x28] sm:$0xff] %vm326, %v315
    %333 = vst.msk [vmem:[#allocation2 + $0x30] sm:$0xff] %vm326, %v316
    %334 = vst.msk [vmem:[#allocation2 + $0x38] sm:$0xff] %vm326, %v317
    %335 = vst.msk [vmem:[#allocation2 + $0x40] sm:$0xff] %vm326, %v318
    %336 = vst.msk [vmem:[#allocation2 + $0x48] sm:$0xff] %vm326, %v319
    %337 = vst.msk [vmem:[#allocation2 + $0x50] sm:$0xff] %vm326, %v320
    %338 = vst.msk [vmem:[#allocation2 + $0x58] sm:$0xff] %vm326, %v321
    %339 = vst.msk [vmem:[#allocation2 + $0x60] sm:$0xff] %vm326, %v322
    %340 = vst.msk [vmem:[#allocation2 + $0x68] sm:$0xff] %vm326, %v323
    %341 = vst.msk [vmem:[#allocation2 + $0x70] sm:$0xff] %vm326, %v324
    %342 = vst.msk [vmem:[#allocation2 + $0x78] sm:$0xff] %vm326, %v325
    %v343 = vsel %vm326, %v184, 0.0
    %v344 = vsel %vm326, %v187, 0.0
    %v345 = vadd.f32 %v343, %v344
    %v346 = vsel %vm326, %v192, 0.0
    %v347 = vadd.f32 %v345, %v346
    %v348 = vsel %vm326, %v195, 0.0
    %v349 = vadd.f32 %v347, %v348
    %v350 = vsel %vm326, %v200, 0.0
    %v351 = vadd.f32 %v349, %v350
    %v352 = vsel %vm326, %v203, 0.0
    %v353 = vadd.f32 %v351, %v352
    %v354 = vsel %vm326, %v208, 0.0
    %v355 = vadd.f32 %v353, %v354
    %v356 = vsel %vm326, %v211, 0.0
    %v357 = vadd.f32 %v355, %v356
    %v358 = vsel %vm326, %v216, 0.0
    %v359 = vadd.f32 %v357, %v358
    %v360 = vsel %vm326, %v219, 0.0
    %v361 = vadd.f32 %v359, %v360
    %v362 = vsel %vm326, %v224, 0.0
    %v363 = vadd.f32 %v361, %v362
    %v364 = vsel %vm326, %v227, 0.0
    %v365 = vadd.f32 %v363, %v364
    %v366 = vsel %vm326, %v232, 0.0
    %v367 = vadd.f32 %v365, %v366
    %v368 = vsel %vm326, %v235, 0.0
    %v369 = vadd.f32 %v367, %v368
    %v370 = vsel %vm326, %v240, 0.0
    %v371 = vadd.f32 %v369, %v370
    %v372 = vsel %vm326, %v243, 0.0
    %v373 = vadd.f32 %v371, %v372
    %v374 = vsel %vm326, %v248, 0.0
    %v375 = vadd.f32 %v373, %v374
    %v376 = vsel %vm326, %v251, 0.0
    %v377 = vadd.f32 %v375, %v376
    %v378 = vsel %vm326, %v256, 0.0
    %v379 = vadd.f32 %v377, %v378
    %v380 = vsel %vm326, %v259, 0.0
    %v381 = vadd.f32 %v379, %v380
    %v382 = vsel %vm326, %v264, 0.0
    %v383 = vadd.f32 %v381, %v382
    %v384 = vsel %vm326, %v267, 0.0
    %v385 = vadd.f32 %v383, %v384
    %v386 = vsel %vm326, %v272, 0.0
    %v387 = vadd.f32 %v385, %v386
    %v388 = vsel %vm326, %v275, 0.0
    %v389 = vadd.f32 %v387, %v388
    %v390 = vsel %vm326, %v280, 0.0
    %v391 = vadd.f32 %v389, %v390
    %v392 = vsel %vm326, %v283, 0.0
    %v393 = vadd.f32 %v391, %v392
    %v394 = vsel %vm326, %v288, 0.0
    %v395 = vadd.f32 %v393, %v394
    %v396 = vsel %vm326, %v291, 0.0
    %v397 = vadd.f32 %v395, %v396
    %v398 = vsel %vm326, %v296, 0.0
    %v399 = vadd.f32 %v397, %v398
    %v400 = vsel %vm326, %v299, 0.0
    %v401 = vadd.f32 %v399, %v400
    %v402 = vsel %vm326, %v304, 0.0
    %v403 = vadd.f32 %v401, %v402
    %v404 = vsel %vm326, %v307, 0.0
    %v405 = vadd.f32 %v403, %v404
    %v406 = vrot.slane %v405, 4
    %v407 = vadd.f32 %v405, %v406
    %v408 = vrot.slane %v407, 2
    %v409 = vadd.f32 %v407, %v408
    %v410 = vrot.slane %v409, 1
    %v411 = vadd.f32 %v409, %v410
    %v412 = vadd.f32 %v411, 0.0
    %v413 = vmul.f32 %v184, %v184
    %v414 = vmul.f32 %v187, %v187
    %v415 = vmul.f32 %v192, %v192
    %v416 = vmul.f32 %v195, %v195
    %v417 = vmul.f32 %v200, %v200
    %v418 = vmul.f32 %v203, %v203
    %v419 = vmul.f32 %v208, %v208
    %v420 = vmul.f32 %v211, %v211
    %v421 = vmul.f32 %v216, %v216
    %v422 = vmul.f32 %v219, %v219
    %v423 = vmul.f32 %v224, %v224
    %v424 = vmul.f32 %v227, %v227
    %v425 = vmul.f32 %v232, %v232
    %v426 = vmul.f32 %v235, %v235
    %v427 = vmul.f32 %v240, %v240
    %v428 = vmul.f32 %v243, %v243
    %v429 = vmul.f32 %v248, %v248
    %v430 = vmul.f32 %v251, %v251
    %v431 = vmul.f32 %v256, %v256
    %v432 = vmul.f32 %v259, %v259
    %v433 = vmul.f32 %v264, %v264
    %v434 = vmul.f32 %v267, %v267
    %v435 = vmul.f32 %v272, %v272
    %v436 = vmul.f32 %v275, %v275
    %v437 = vmul.f32 %v280, %v280
    %v438 = vmul.f32 %v283, %v283
    %v439 = vmul.f32 %v288, %v288
    %v440 = vmul.f32 %v291, %v291
    %v441 = vmul.f32 %v296, %v296
    %v442 = vmul.f32 %v299, %v299
    %v443 = vmul.f32 %v304, %v304
    %v444 = vmul.f32 %v307, %v307
    %v445 = vsel %vm326, %v413, 0.0
    %v446 = vsel %vm326, %v414, 0.0
    %v447 = vadd.f32 %v445, %v446
    %v448 = vsel %vm326, %v415, 0.0
    %v449 = vadd.f32 %v447, %v448
    %v450 = vsel %vm326, %v416, 0.0
    %v451 = vadd.f32 %v449, %v450
    %v452 = vsel %vm326, %v417, 0.0
    %v453 = vadd.f32 %v451, %v452
    %v454 = vsel %vm326, %v418, 0.0
    %v455 = vadd.f32 %v453, %v454
    %v456 = vsel %vm326, %v419, 0.0
    %v457 = vadd.f32 %v455, %v456
    %v458 = vsel %vm326, %v420, 0.0
    %v459 = vadd.f32 %v457, %v458
    %v460 = vsel %vm326, %v421, 0.0
    %v461 = vadd.f32 %v459, %v460
    %v462 = vsel %vm326, %v422, 0.0
    %v463 = vadd.f32 %v461, %v462
    %v464 = vsel %vm326, %v423, 0.0
    %v465 = vadd.f32 %v463, %v464
    %v466 = vsel %vm326, %v424, 0.0
    %v467 = vadd.f32 %v465, %v466
    %v468 = vsel %vm326, %v425, 0.0
    %v469 = vadd.f32 %v467, %v468
    %v470 = vsel %vm326, %v426, 0.0
    %v471 = vadd.f32 %v469, %v470
    %v472 = vsel %vm326, %v427, 0.0
    %v473 = vadd.f32 %v471, %v472
    %v474 = vsel %vm326, %v428, 0.0
    %v475 = vadd.f32 %v473, %v474
    %v476 = vsel %vm326, %v429, 0.0
    %v477 = vadd.f32 %v475, %v476
    %v478 = vsel %vm326, %v430, 0.0
    %v479 = vadd.f32 %v477, %v478
    %v480 = vsel %vm326, %v431, 0.0
    %v481 = vadd.f32 %v479, %v480
    %v482 = vsel %vm326, %v432, 0.0
    %v483 = vadd.f32 %v481, %v482
    %v484 = vsel %vm326, %v433, 0.0
    %v485 = vadd.f32 %v483, %v484
    %v486 = vsel %vm326, %v434, 0.0
    %v487 = vadd.f32 %v485, %v486
    %v488 = vsel %vm326, %v435, 0.0
    %v489 = vadd.f32 %v487, %v488
    %v490 = vsel %vm326, %v436, 0.0
    %v491 = vadd.f32 %v489, %v490
    %v492 = vsel %vm326, %v437, 0.0
    %v493 = vadd.f32 %v491, %v492
    %v494 = vsel %vm326, %v438, 0.0
    %v495 = vadd.f32 %v493, %v494
    %v496 = vsel %vm326, %v439, 0.0
    %v497 = vadd.f32 %v495, %v496
    %v498 = vsel %vm326, %v440, 0.0
    %v499 = vadd.f32 %v497, %v498
    %v500 = vsel %vm326, %v441, 0.0
    %v501 = vadd.f32 %v499, %v500
    %v502 = vsel %vm326, %v442, 0.0
    %v503 = vadd.f32 %v501, %v502
    %v504 = vsel %vm326, %v443, 0.0
    %v505 = vadd.f32 %v503, %v504
    %v506 = vsel %vm326, %v444, 0.0
    %v507 = vadd.f32 %v505, %v506
    %v508 = vrot.slane %v507, 4
    %v509 = vadd.f32 %v507, %v508
    %v510 = vrot.slane %v509, 2
    %v511 = vadd.f32 %v509, %v510
    %v512 = vrot.slane %v511, 1
    %v513 = vadd.f32 %v511, %v512
    %v514 = vadd.f32 %v513, 0.0
    %s515 = scalar_lea.vmem %s1, 4
    %v516 = vld [vmem:[%s515] sm:$0xf]
    %s517 = scalar_lea.vmem %s0, 256
    %v518 = vld [vmem:[%s517] sm:$0xff]
    %v519 = vld [vmem:[%s517 + $0x8] sm:$0xff]
    %v520 = vld [vmem:[%s517 + $0x10] sm:$0xff]
    %v521 = vld [vmem:[%s517 + $0x18] sm:$0xff]
    %v522 = vld [vmem:[%s517 + $0x20] sm:$0xff]
    %v523 = vld [vmem:[%s517 + $0x28] sm:$0xff]
    %v524 = vld [vmem:[%s517 + $0x30] sm:$0xff]
    %v525 = vld [vmem:[%s517 + $0x38] sm:$0xff]
    %v526 = vld [vmem:[%s517 + $0x40] sm:$0xff]
    %v527 = vld [vmem:[%s517 + $0x48] sm:$0xff]
    %v528 = vld [vmem:[%s517 + $0x50] sm:$0xff]
    %v529 = vld [vmem:[%s517 + $0x58] sm:$0xff]
    %v530 = vld [vmem:[%s517 + $0x60] sm:$0xff]
    %v531 = vld [vmem:[%s517 + $0x68] sm:$0xff]
    %v532 = vld [vmem:[%s517 + $0x70] sm:$0xff]
    %v533 = vld [vmem:[%s517 + $0x78] sm:$0xff]
    %v534 = vld [vmem:[%s517 + $0x80] sm:$0xff]
    %v535 = vld [vmem:[%s517 + $0x88] sm:$0xff]
    %v536 = vld [vmem:[%s517 + $0x90] sm:$0xff]
    %v537 = vld [vmem:[%s517 + $0x98] sm:$0xff]
    %v538 = vld [vmem:[%s517 + $0xa0] sm:$0xff]
    %v539 = vld [vmem:[%s517 + $0xa8] sm:$0xff]
    %v540 = vld [vmem:[%s517 + $0xb0] sm:$0xff]
    %v541 = vld [vmem:[%s517 + $0xb8] sm:$0xff]
    %v542 = vld [vmem:[%s517 + $0xc0] sm:$0xff]
    %v543 = vld [vmem:[%s517 + $0xc8] sm:$0xff]
    %v544 = vld [vmem:[%s517 + $0xd0] sm:$0xff]
    %v545 = vld [vmem:[%s517 + $0xd8] sm:$0xff]
    %v546 = vld [vmem:[%s517 + $0xe0] sm:$0xff]
    %v547 = vld [vmem:[%s517 + $0xe8] sm:$0xff]
    %v548 = vld [vmem:[%s517 + $0xf0] sm:$0xff]
    %v549 = vld [vmem:[%s517 + $0xf8] sm:$0xff]
    %v550 = vpack.c.bf16 %v519, %v518
    %v551 = vpack.c.bf16 %v521, %v520
    %v552 = vpack.c.bf16 %v523, %v522
    %v553 = vpack.c.bf16 %v525, %v524
    %v554 = vpack.c.bf16 %v527, %v526
    %v555 = vpack.c.bf16 %v529, %v528
    %v556 = vpack.c.bf16 %v531, %v530
    %v557 = vpack.c.bf16 %v533, %v532
    %v558 = vpack.c.bf16 %v535, %v534
    %v559 = vpack.c.bf16 %v537, %v536
    %v560 = vpack.c.bf16 %v539, %v538
    %v561 = vpack.c.bf16 %v541, %v540
    %v562 = vpack.c.bf16 %v543, %v542
    %v563 = vpack.c.bf16 %v545, %v544
    %v564 = vpack.c.bf16 %v547, %v546
    %v565 = vpack.c.bf16 %v549, %v548
    %v566 = vld [vmem:[%s2] sm:$0x1]
    %v568 = vlaneseq
    %v569 = vshrl.u32 %v568, 7
    %v570 = vsub.s32 0, %v569
    %v571 = vrot.slane %v566, %v570
    %v574 = vsel %vm96, %v550, 0
    %v577 = vsel %vm96, %v551, 0
    %v580 = vsel %vm96, %v552, 0
    %v583 = vsel %vm96, %v553, 0
    %v586 = vsel %vm96, %v554, 0
    %v589 = vsel %vm96, %v555, 0
    %v592 = vsel %vm96, %v556, 0
    %v595 = vsel %vm96, %v557, 0
    %v598 = vsel %vm96, %v558, 0
    %v601 = vsel %vm96, %v559, 0
    %v604 = vsel %vm96, %v560, 0
    %v607 = vsel %vm96, %v561, 0
    %v610 = vsel %vm96, %v562, 0
    %v613 = vsel %vm96, %v563, 0
    %v616 = vsel %vm96, %v564, 0
    %v619 = vsel %vm96, %v565, 0
    %v622 = vsel %vm145, %v516, 0
    %624 = vmatprep.subr.bf16.mxu0 0
    %625 = vmatpush1.bf16.msra.mxu0 %v622
    %626 = vmatprep.subr.bf16.mxu0 0
    %627 = vmatpush1.bf16.msra.mxu0 0
    %628 = vmatprep.subr.bf16.mxu0 0
    %629 = vmatpush1.bf16.msra.mxu0 0
    %630 = vmatprep.subr.bf16.mxu0 0
    %631 = vmatpush1.bf16.msra.mxu0 0
    %632 = vmatprep.subr.bf16.mxu0 0
    %633 = vmatpush1.bf16.msra.mxu0 0
    %634 = vmatprep.subr.bf16.mxu0 0
    %635 = vmatpush1.bf16.msra.mxu0 0
    %636 = vmatprep.subr.bf16.mxu0 0
    %637 = vmatpush1.bf16.msra.mxu0 0
    %638 = vmatprep.subr.bf16.mxu0 0
    %639 = vmatpush1.bf16.msra.mxu0 0
    %640 = vmatprep.subr.bf16.mxu0 0
    %641 = vmatpush1.bf16.msra.mxu0 0
    %642 = vmatprep.subr.bf16.mxu0 0
    %643 = vmatpush1.bf16.msra.mxu0 0
    %644 = vmatprep.subr.bf16.mxu0 0
    %645 = vmatpush1.bf16.msra.mxu0 0
    %646 = vmatprep.subr.bf16.mxu0 0
    %647 = vmatpush1.bf16.msra.mxu0 0
    %648 = vmatprep.subr.bf16.mxu0 0
    %649 = vmatpush1.bf16.msra.mxu0 0
    %650 = vmatprep.subr.bf16.mxu0 0
    %651 = vmatpush1.bf16.msra.mxu0 0
    %652 = vmatprep.subr.bf16.mxu0 0
    %653 = vmatpush1.bf16.msra.mxu0 0
    %654 = vmatprep.subr.bf16.mxu0 0
    %655 = vmatpush1.bf16.msra.mxu0 0
    %656 = vmatprep.mubr.bf16.mxu0 0
    %657 = vmatmul.mubr.bf16.gmra.mrb[0].mxu0 %v574
    %v658 = vpop.f32.mrb[0].mxu0
    %v659 = vadd.f32 %v571, %v658
    %v660 = vpop.f32.mrb[0].mxu0
    %v661 = vpop.f32.mrb[0].mxu0
    %v662 = vadd.f32 %v571, %v661
    %v663 = vpop.f32.mrb[0].mxu0
    %664 = vmatprep.mubr.bf16.mxu0 0
    %665 = vmatmul.mubr.bf16.gmra.mrb[0].mxu0 %v577
    %v666 = vpop.f32.mrb[0].mxu0
    %v667 = vadd.f32 %v571, %v666
    %v668 = vpop.f32.mrb[0].mxu0
    %v669 = vpop.f32.mrb[0].mxu0
    %v670 = vadd.f32 %v571, %v669
    %v671 = vpop.f32.mrb[0].mxu0
    %672 = vmatprep.mubr.bf16.mxu0 0
    %673 = vmatmul.mubr.bf16.gmra.mrb[0].mxu0 %v580
    %v674 = vpop.f32.mrb[0].mxu0
    %v675 = vadd.f32 %v571, %v674
    %v676 = vpop.f32.mrb[0].mxu0
    %v677 = vpop.f32.mrb[0].mxu0
    %v678 = vadd.f32 %v571, %v677
    %v679 = vpop.f32.mrb[0].mxu0
    %680 = vmatprep.mubr.bf16.mxu0 0
    %681 = vmatmul.mubr.bf16.gmra.mrb[0].mxu0 %v583
    %v682 = vpop.f32.mrb[0].mxu0
    %v683 = vadd.f32 %v571, %v682
    %v684 = vpop.f32.mrb[0].mxu0
    %v685 = vpop.f32.mrb[0].mxu0
    %v686 = vadd.f32 %v571, %v685
    %v687 = vpop.f32.mrb[0].mxu0
    %688 = vmatprep.mubr.bf16.mxu0 0
    %689 = vmatmul.mubr.bf16.gmra.mrb[0].mxu0 %v586
    %v690 = vpop.f32.mrb[0].mxu0
    %v691 = vadd.f32 %v571, %v690
    %v692 = vpop.f32.mrb[0].mxu0
    %v693 = vpop.f32.mrb[0].mxu0
    %v694 = vadd.f32 %v571, %v693
    %v695 = vpop.f32.mrb[0].mxu0
    %696 = vmatprep.mubr.bf16.mxu0 0
    %697 = vmatmul.mubr.bf16.gmra.mrb[0].mxu0 %v589
    %v698 = vpop.f32.mrb[0].mxu0
    %v699 = vadd.f32 %v571, %v698
    %v700 = vpop.f32.mrb[0].mxu0
    %v701 = vpop.f32.mrb[0].mxu0
    %v702 = vadd.f32 %v571, %v701
    %v703 = vpop.f32.mrb[0].mxu0
    %704 = vmatprep.mubr.bf16.mxu0 0
    %705 = vmatmul.mubr.bf16.gmra.mrb[0].mxu0 %v592
    %v706 = vpop.f32.mrb[0].mxu0
    %v707 = vadd.f32 %v571, %v706
    %v708 = vpop.f32.mrb[0].mxu0
    %v709 = vpop.f32.mrb[0].mxu0
    %v710 = vadd.f32 %v571, %v709
    %v711 = vpop.f32.mrb[0].mxu0
    %712 = vmatprep.mubr.bf16.mxu0 0
    %713 = vmatmul.mubr.bf16.gmra.mrb[0].mxu0 %v595
    %v714 = vpop.f32.mrb[0].mxu0
    %v715 = vadd.f32 %v571, %v714
    %v716 = vpop.f32.mrb[0].mxu0
    %v717 = vpop.f32.mrb[0].mxu0
    %v718 = vadd.f32 %v571, %v717
    %v719 = vpop.f32.mrb[0].mxu0
    %720 = vmatprep.mubr.bf16.mxu0 0
    %721 = vmatmul.mubr.bf16.gmra.mrb[0].mxu0 %v598
    %v722 = vpop.f32.mrb[0].mxu0
    %v723 = vadd.f32 %v571, %v722
    %v724 = vpop.f32.mrb[0].mxu0
    %v725 = vpop.f32.mrb[0].mxu0
    %v726 = vadd.f32 %v571, %v725
    %v727 = vpop.f32.mrb[0].mxu0
    %728 = vmatprep.mubr.bf16.mxu0 0
    %729 = vmatmul.mubr.bf16.gmra.mrb[0].mxu0 %v601
    %v730 = vpop.f32.mrb[0].mxu0
    %v731 = vadd.f32 %v571, %v730
    %v732 = vpop.f32.mrb[0].mxu0
    %v733 = vpop.f32.mrb[0].mxu0
    %v734 = vadd.f32 %v571, %v733
    %v735 = vpop.f32.mrb[0].mxu0
    %736 = vmatprep.mubr.bf16.mxu0 0
    %737 = vmatmul.mubr.bf16.gmra.mrb[0].mxu0 %v604
    %v738 = vpop.f32.mrb[0].mxu0
    %v739 = vadd.f32 %v571, %v738
    %v740 = vpop.f32.mrb[0].mxu0
    %v741 = vpop.f32.mrb[0].mxu0
    %v742 = vadd.f32 %v571, %v741
    %v743 = vpop.f32.mrb[0].mxu0
    %744 = vmatprep.mubr.bf16.mxu0 0
    %745 = vmatmul.mubr.bf16.gmra.mrb[0].mxu0 %v607
    %v746 = vpop.f32.mrb[0].mxu0
    %v747 = vadd.f32 %v571, %v746
    %v748 = vpop.f32.mrb[0].mxu0
    %v749 = vpop.f32.mrb[0].mxu0
    %v750 = vadd.f32 %v571, %v749
    %v751 = vpop.f32.mrb[0].mxu0
    %752 = vmatprep.mubr.bf16.mxu0 0
    %753 = vmatmul.mubr.bf16.gmra.mrb[0].mxu0 %v610
    %v754 = vpop.f32.mrb[0].mxu0
    %v755 = vadd.f32 %v571, %v754
    %v756 = vpop.f32.mrb[0].mxu0
    %v757 = vpop.f32.mrb[0].mxu0
    %v758 = vadd.f32 %v571, %v757
    %v759 = vpop.f32.mrb[0].mxu0
    %760 = vmatprep.mubr.bf16.mxu0 0
    %761 = vmatmul.mubr.bf16.gmra.mrb[0].mxu0 %v613
    %v762 = vpop.f32.mrb[0].mxu0
    %v763 = vadd.f32 %v571, %v762
    %v764 = vpop.f32.mrb[0].mxu0
    %v765 = vpop.f32.mrb[0].mxu0
    %v766 = vadd.f32 %v571, %v765
    %v767 = vpop.f32.mrb[0].mxu0
    %768 = vmatprep.mubr.bf16.mxu0 0
    %769 = vmatmul.mubr.bf16.gmra.mrb[0].mxu0 %v616
    %v770 = vpop.f32.mrb[0].mxu0
    %v771 = vadd.f32 %v571, %v770
    %v772 = vpop.f32.mrb[0].mxu0
    %v773 = vpop.f32.mrb[0].mxu0
    %v774 = vadd.f32 %v571, %v773
    %v775 = vpop.f32.mrb[0].mxu0
    %776 = vmatprep.mubr.bf16.mxu0 0
    %777 = vmatmul.mubr.bf16.gmra.mrb[0].mxu0 %v619
    %v778 = vpop.f32.mrb[0].mxu0
    %v779 = vadd.f32 %v571, %v778
    %v780 = vpop.f32.mrb[0].mxu0
    %v781 = vpop.f32.mrb[0].mxu0
    %v782 = vadd.f32 %v571, %v781
    %v783 = vpop.f32.mrb[0].mxu0
    %784 = vdwg.mxu0
    %v785 = vpack.c.bf16 %v662, %v659
    %v786 = vpack.c.bf16 %v670, %v667
    %v787 = vpack.c.bf16 %v678, %v675
    %v788 = vpack.c.bf16 %v686, %v683
    %v789 = vpack.c.bf16 %v694, %v691
    %v790 = vpack.c.bf16 %v702, %v699
    %v791 = vpack.c.bf16 %v710, %v707
    %v792 = vpack.c.bf16 %v718, %v715
    %v793 = vpack.c.bf16 %v726, %v723
    %v794 = vpack.c.bf16 %v734, %v731
    %v795 = vpack.c.bf16 %v742, %v739
    %v796 = vpack.c.bf16 %v750, %v747
    %v797 = vpack.c.bf16 %v758, %v755
    %v798 = vpack.c.bf16 %v766, %v763
    %v799 = vpack.c.bf16 %v774, %v771
    %v800 = vpack.c.bf16 %v782, %v779
    %s801 = scalar_lea.vmem [#allocation2], 128
    %802 = vst.msk [vmem:[%s801] sm:$0xff] %vm326, %v785
    %803 = vst.msk [vmem:[%s801 + $0x8] sm:$0xff] %vm326, %v786
    %804 = vst.msk [vmem:[%s801 + $0x10] sm:$0xff] %vm326, %v787
    %805 = vst.msk [vmem:[%s801 + $0x18] sm:$0xff] %vm326, %v788
    %806 = vst.msk [vmem:[%s801 + $0x20] sm:$0xff] %vm326, %v789
    %807 = vst.msk [vmem:[%s801 + $0x28] sm:$0xff] %vm326, %v790
    %808 = vst.msk [vmem:[%s801 + $0x30] sm:$0xff] %vm326, %v791
    %809 = vst.msk [vmem:[%s801 + $0x38] sm:$0xff] %vm326, %v792
    %810 = vst.msk [vmem:[%s801 + $0x40] sm:$0xff] %vm326, %v793
    %811 = vst.msk [vmem:[%s801 + $0x48] sm:$0xff] %vm326, %v794
    %812 = vst.msk [vmem:[%s801 + $0x50] sm:$0xff] %vm326, %v795
    %813 = vst.msk [vmem:[%s801 + $0x58] sm:$0xff] %vm326, %v796
    %814 = vst.msk [vmem:[%s801 + $0x60] sm:$0xff] %vm326, %v797
    %815 = vst.msk [vmem:[%s801 + $0x68] sm:$0xff] %vm326, %v798
    %816 = vst.msk [vmem:[%s801 + $0x70] sm:$0xff] %vm326, %v799
    %817 = vst.msk [vmem:[%s801 + $0x78] sm:$0xff] %vm326, %v800
    %v818 = vsel %vm326, %v659, 0.0
    %v819 = vsel %vm326, %v662, 0.0
    %v820 = vadd.f32 %v818, %v819
    %v821 = vsel %vm326, %v667, 0.0
    %v822 = vadd.f32 %v820, %v821
    %v823 = vsel %vm326, %v670, 0.0
    %v824 = vadd.f32 %v822, %v823
    %v825 = vsel %vm326, %v675, 0.0
    %v826 = vadd.f32 %v824, %v825
    %v827 = vsel %vm326, %v678, 0.0
    %v828 = vadd.f32 %v826, %v827
    %v829 = vsel %vm326, %v683, 0.0
    %v830 = vadd.f32 %v828, %v829
    %v831 = vsel %vm326, %v686, 0.0
    %v832 = vadd.f32 %v830, %v831
    %v833 = vsel %vm326, %v691, 0.0
    %v834 = vadd.f32 %v832, %v833
    %v835 = vsel %vm326, %v694, 0.0
    %v836 = vadd.f32 %v834, %v835
    %v837 = vsel %vm326, %v699, 0.0
    %v838 = vadd.f32 %v836, %v837
    %v839 = vsel %vm326, %v702, 0.0
    %v840 = vadd.f32 %v838, %v839
    %v841 = vsel %vm326, %v707, 0.0
    %v842 = vadd.f32 %v840, %v841
    %v843 = vsel %vm326, %v710, 0.0
    %v844 = vadd.f32 %v842, %v843
    %v845 = vsel %vm326, %v715, 0.0
    %v846 = vadd.f32 %v844, %v845
    %v847 = vsel %vm326, %v718, 0.0
    %v848 = vadd.f32 %v846, %v847
    %v849 = vsel %vm326, %v723, 0.0
    %v850 = vadd.f32 %v848, %v849
    %v851 = vsel %vm326, %v726, 0.0
    %v852 = vadd.f32 %v850, %v851
    %v853 = vsel %vm326, %v731, 0.0
    %v854 = vadd.f32 %v852, %v853
    %v855 = vsel %vm326, %v734, 0.0
    %v856 = vadd.f32 %v854, %v855
    %v857 = vsel %vm326, %v739, 0.0
    %v858 = vadd.f32 %v856, %v857
    %v859 = vsel %vm326, %v742, 0.0
    %v860 = vadd.f32 %v858, %v859
    %v861 = vsel %vm326, %v747, 0.0
    %v862 = vadd.f32 %v860, %v861
    %v863 = vsel %vm326, %v750, 0.0
    %v864 = vadd.f32 %v862, %v863
    %v865 = vsel %vm326, %v755, 0.0
    %v866 = vadd.f32 %v864, %v865
    %v867 = vsel %vm326, %v758, 0.0
    %v868 = vadd.f32 %v866, %v867
    %v869 = vsel %vm326, %v763, 0.0
    %v870 = vadd.f32 %v868, %v869
    %v871 = vsel %vm326, %v766, 0.0
    %v872 = vadd.f32 %v870, %v871
    %v873 = vsel %vm326, %v771, 0.0
    %v874 = vadd.f32 %v872, %v873
    %v875 = vsel %vm326, %v774, 0.0
    %v876 = vadd.f32 %v874, %v875
    %v877 = vsel %vm326, %v779, 0.0
    %v878 = vadd.f32 %v876, %v877
    %v879 = vsel %vm326, %v782, 0.0
    %v880 = vadd.f32 %v878, %v879
    %v881 = vrot.slane %v880, 4
    %v882 = vadd.f32 %v880, %v881
    %v883 = vrot.slane %v882, 2
    %v884 = vadd.f32 %v882, %v883
    %v885 = vrot.slane %v884, 1
    %v886 = vadd.f32 %v884, %v885
    %v887 = vadd.f32 %v412, %v886
    %v888 = vmul.f32 %v659, %v659
    %v889 = vmul.f32 %v662, %v662
    %v890 = vmul.f32 %v667, %v667
    %v891 = vmul.f32 %v670, %v670
    %v892 = vmul.f32 %v675, %v675
    %v893 = vmul.f32 %v678, %v678
    %v894 = vmul.f32 %v683, %v683
    %v895 = vmul.f32 %v686, %v686
    %v896 = vmul.f32 %v691, %v691
    %v897 = vmul.f32 %v694, %v694
    %v898 = vmul.f32 %v699, %v699
    %v899 = vmul.f32 %v702, %v702
    %v900 = vmul.f32 %v707, %v707
    %v901 = vmul.f32 %v710, %v710
    %v902 = vmul.f32 %v715, %v715
    %v903 = vmul.f32 %v718, %v718
    %v904 = vmul.f32 %v723, %v723
    %v905 = vmul.f32 %v726, %v726
    %v906 = vmul.f32 %v731, %v731
    %v907 = vmul.f32 %v734, %v734
    %v908 = vmul.f32 %v739, %v739
    %v909 = vmul.f32 %v742, %v742
    %v910 = vmul.f32 %v747, %v747
    %v911 = vmul.f32 %v750, %v750
    %v912 = vmul.f32 %v755, %v755
    %v913 = vmul.f32 %v758, %v758
    %v914 = vmul.f32 %v763, %v763
    %v915 = vmul.f32 %v766, %v766
    %v916 = vmul.f32 %v771, %v771
    %v917 = vmul.f32 %v774, %v774
    %v918 = vmul.f32 %v779, %v779
    %v919 = vmul.f32 %v782, %v782
    %v920 = vsel %vm326, %v888, 0.0
    %v921 = vsel %vm326, %v889, 0.0
    %v922 = vadd.f32 %v920, %v921
    %v923 = vsel %vm326, %v890, 0.0
    %v924 = vadd.f32 %v922, %v923
    %v925 = vsel %vm326, %v891, 0.0
    %v926 = vadd.f32 %v924, %v925
    %v927 = vsel %vm326, %v892, 0.0
    %v928 = vadd.f32 %v926, %v927
    %v929 = vsel %vm326, %v893, 0.0
    %v930 = vadd.f32 %v928, %v929
    %v931 = vsel %vm326, %v894, 0.0
    %v932 = vadd.f32 %v930, %v931
    %v933 = vsel %vm326, %v895, 0.0
    %v934 = vadd.f32 %v932, %v933
    %v935 = vsel %vm326, %v896, 0.0
    %v936 = vadd.f32 %v934, %v935
    %v937 = vsel %vm326, %v897, 0.0
    %v938 = vadd.f32 %v936, %v937
    %v939 = vsel %vm326, %v898, 0.0
    %v940 = vadd.f32 %v938, %v939
    %v941 = vsel %vm326, %v899, 0.0
    %v942 = vadd.f32 %v940, %v941
    %v943 = vsel %vm326, %v900, 0.0
    %v944 = vadd.f32 %v942, %v943
    %v945 = vsel %vm326, %v901, 0.0
    %v946 = vadd.f32 %v944, %v945
    %v947 = vsel %vm326, %v902, 0.0
    %v948 = vadd.f32 %v946, %v947
    %v949 = vsel %vm326, %v903, 0.0
    %v950 = vadd.f32 %v948, %v949
    %v951 = vsel %vm326, %v904, 0.0
    %v952 = vadd.f32 %v950, %v951
    %v953 = vsel %vm326, %v905, 0.0
    %v954 = vadd.f32 %v952, %v953
    %v955 = vsel %vm326, %v906, 0.0
    %v956 = vadd.f32 %v954, %v955
    %v957 = vsel %vm326, %v907, 0.0
    %v958 = vadd.f32 %v956, %v957
    %v959 = vsel %vm326, %v908, 0.0
    %v960 = vadd.f32 %v958, %v959
    %v961 = vsel %vm326, %v909, 0.0
    %v962 = vadd.f32 %v960, %v961
    %v963 = vsel %vm326, %v910, 0.0
    %v964 = vadd.f32 %v962, %v963
    %v965 = vsel %vm326, %v911, 0.0
    %v966 = vadd.f32 %v964, %v965
    %v967 = vsel %vm326, %v912, 0.0
    %v968 = vadd.f32 %v966, %v967
    %v969 = vsel %vm326, %v913, 0.0
    %v970 = vadd.f32 %v968, %v969
    %v971 = vsel %vm326, %v914, 0.0
    %v972 = vadd.f32 %v970, %v971
    %v973 = vsel %vm326, %v915, 0.0
    %v974 = vadd.f32 %v972, %v973
    %v975 = vsel %vm326, %v916, 0.0
    %v976 = vadd.f32 %v974, %v975
    %v977 = vsel %vm326, %v917, 0.0
    %v978 = vadd.f32 %v976, %v977
    %v979 = vsel %vm326, %v918, 0.0
    %v980 = vadd.f32 %v978, %v979
    %v981 = vsel %vm326, %v919, 0.0
    %v982 = vadd.f32 %v980, %v981
    %v983 = vrot.slane %v982, 4
    %v984 = vadd.f32 %v982, %v983
    %v985 = vrot.slane %v984, 2
    %v986 = vadd.f32 %v984, %v985
    %v987 = vrot.slane %v986, 1
    %v988 = vadd.f32 %v986, %v987
    %v989 = vadd.f32 %v514, %v988
    %v990 = vrcp.pop 512.0
    %v991 = vmul.f32 %v887, %v990
    %v992 = vmul.f32 %v989, %v990
    %v993 = vmul.f32 %v991, %v991
    %v994 = vsub.f32 %v992, %v993
    %v995 = vmax.f32 %v994, 0.0
    %v996 = vadd.f32 %v995, 1e-05
    %v997 = vrsqrt.pop %v996
    %v998 = vsub.f32 0.0, %v991
    %v999 = vmul.f32 %v998, %v997
    loop: start=0, step=1, limit=2
    $region46: #{pointnetfeat_v1.5} parent=1 // loop_pre_header
      _
    $region47: #{pointnetfeat_v1.5} parent=1 // loop_header
      %s1001 = sphi 0, %s1005
      %p1002 = scmp.ge.s32.totalorder %s1001, 2
      %v1006 = vphi 0.0, %v1524
      %v1007 = vphi 0.0, %v1626
    $region48: #{pointnetfeat_v1.5} parent=1 // loop_header_branch
      %1004 = sbr.rel (%p1002) target = $region52
    $region49: #{pointnetfeat_v1.5} parent=1 // loop_body
      %s1008 = smul.u32 %s1001, 256
      %s1009 = sshra.s32 %s1008, 4
      %s1010 = sand.u32 %s1008, 15
      %s1011 = smul.addr %s1009, 8
      %s1012 = scalar_lea.vmem [#allocation2], %s1011
      %v1013 = vld [vmem:[%s1012] sm:$0xff]
      %v1014 = vld [vmem:[%s1012 + $0x8] sm:$0xff]
      %v1015 = vld [vmem:[%s1012 + $0x10] sm:$0xff]
      %v1016 = vld [vmem:[%s1012 + $0x18] sm:$0xff]
      %v1017 = vld [vmem:[%s1012 + $0x20] sm:$0xff]
      %v1018 = vld [vmem:[%s1012 + $0x28] sm:$0xff]
      %v1019 = vld [vmem:[%s1012 + $0x30] sm:$0xff]
      %v1020 = vld [vmem:[%s1012 + $0x38] sm:$0xff]
      %v1021 = vld [vmem:[%s1012 + $0x40] sm:$0xff]
      %v1022 = vld [vmem:[%s1012 + $0x48] sm:$0xff]
      %v1023 = vld [vmem:[%s1012 + $0x50] sm:$0xff]
      %v1024 = vld [vmem:[%s1012 + $0x58] sm:$0xff]
      %v1025 = vld [vmem:[%s1012 + $0x60] sm:$0xff]
      %v1026 = vld [vmem:[%s1012 + $0x68] sm:$0xff]
      %v1027 = vld [vmem:[%s1012 + $0x70] sm:$0xff]
      %v1028 = vld [vmem:[%s1012 + $0x78] sm:$0xff]
      %v1029 = vunpack.c.l.bf16 %v1013
      %v1030 = vunpack.c.h.bf16 %v1013
      %v1031 = vunpack.c.l.bf16 %v1014
      %v1032 = vunpack.c.h.bf16 %v1014
      %v1033 = vunpack.c.l.bf16 %v1015
      %v1034 = vunpack.c.h.bf16 %v1015
      %v1035 = vunpack.c.l.bf16 %v1016
      %v1036 = vunpack.c.h.bf16 %v1016
      %v1037 = vunpack.c.l.bf16 %v1017
      %v1038 = vunpack.c.h.bf16 %v1017
      %v1039 = vunpack.c.l.bf16 %v1018
      %v1040 = vunpack.c.h.bf16 %v1018
      %v1041 = vunpack.c.l.bf16 %v1019
      %v1042 = vunpack.c.h.bf16 %v1019
      %v1043 = vunpack.c.l.bf16 %v1020
      %v1044 = vunpack.c.h.bf16 %v1020
      %v1045 = vunpack.c.l.bf16 %v1021
      %v1046 = vunpack.c.h.bf16 %v1021
      %v1047 = vunpack.c.l.bf16 %v1022
      %v1048 = vunpack.c.h.bf16 %v1022
      %v1049 = vunpack.c.l.bf16 %v1023
      %v1050 = vunpack.c.h.bf16 %v1023
      %v1051 = vunpack.c.l.bf16 %v1024
      %v1052 = vunpack.c.h.bf16 %v1024
      %v1053 = vunpack.c.l.bf16 %v1025
      %v1054 = vunpack.c.h.bf16 %v1025
      %v1055 = vunpack.c.l.bf16 %v1026
      %v1056 = vunpack.c.h.bf16 %v1026
      %v1057 = vunpack.c.l.bf16 %v1027
      %v1058 = vunpack.c.h.bf16 %v1027
      %v1059 = vunpack.c.l.bf16 %v1028
      %v1060 = vunpack.c.h.bf16 %v1028
      %v1061 = vmul.f32 %v1029, %v997
      %v1062 = vmul.f32 %v1030, %v997
      %v1063 = vmul.f32 %v1031, %v997
      %v1064 = vmul.f32 %v1032, %v997
      %v1065 = vmul.f32 %v1033, %v997
      %v1066 = vmul.f32 %v1034, %v997
      %v1067 = vmul.f32 %v1035, %v997
      %v1068 = vmul.f32 %v1036, %v997
      %v1069 = vmul.f32 %v1037, %v997
      %v1070 = vmul.f32 %v1038, %v997
      %v1071 = vmul.f32 %v1039, %v997
      %v1072 = vmul.f32 %v1040, %v997
      %v1073 = vmul.f32 %v1041, %v997
      %v1074 = vmul.f32 %v1042, %v997
      %v1075 = vmul.f32 %v1043, %v997
      %v1076 = vmul.f32 %v1044, %v997
      %v1077 = vmul.f32 %v1045, %v997
      %v1078 = vmul.f32 %v1046, %v997
      %v1079 = vmul.f32 %v1047, %v997
      %v1080 = vmul.f32 %v1048, %v997
      %v1081 = vmul.f32 %v1049, %v997
      %v1082 = vmul.f32 %v1050, %v997
      %v1083 = vmul.f32 %v1051, %v997
      %v1084 = vmul.f32 %v1052, %v997
      %v1085 = vmul.f32 %v1053, %v997
      %v1086 = vmul.f32 %v1054, %v997
      %v1087 = vmul.f32 %v1055, %v997
      %v1088 = vmul.f32 %v1056, %v997
      %v1089 = vmul.f32 %v1057, %v997
      %v1090 = vmul.f32 %v1058, %v997
      %v1091 = vmul.f32 %v1059, %v997
      %v1092 = vmul.f32 %v1060, %v997
      %v1093 = vadd.f32 %v1061, %v999
      %v1094 = vadd.f32 %v1062, %v999
      %v1095 = vadd.f32 %v1063, %v999
      %v1096 = vadd.f32 %v1064, %v999
      %v1097 = vadd.f32 %v1065, %v999
      %v1098 = vadd.f32 %v1066, %v999
      %v1099 = vadd.f32 %v1067, %v999
      %v1100 = vadd.f32 %v1068, %v999
      %v1101 = vadd.f32 %v1069, %v999
      %v1102 = vadd.f32 %v1070, %v999
      %v1103 = vadd.f32 %v1071, %v999
      %v1104 = vadd.f32 %v1072, %v999
      %v1105 = vadd.f32 %v1073, %v999
      %v1106 = vadd.f32 %v1074, %v999
      %v1107 = vadd.f32 %v1075, %v999
      %v1108 = vadd.f32 %v1076, %v999
      %v1109 = vadd.f32 %v1077, %v999
      %v1110 = vadd.f32 %v1078, %v999
      %v1111 = vadd.f32 %v1079, %v999
      %v1112 = vadd.f32 %v1080, %v999
      %v1113 = vadd.f32 %v1081, %v999
      %v1114 = vadd.f32 %v1082, %v999
      %v1115 = vadd.f32 %v1083, %v999
      %v1116 = vadd.f32 %v1084, %v999
      %v1117 = vadd.f32 %v1085, %v999
      %v1118 = vadd.f32 %v1086, %v999
      %v1119 = vadd.f32 %v1087, %v999
      %v1120 = vadd.f32 %v1088, %v999
      %v1121 = vadd.f32 %v1089, %v999
      %v1122 = vadd.f32 %v1090, %v999
      %v1123 = vadd.f32 %v1091, %v999
      %v1124 = vadd.f32 %v1092, %v999
      %v1125 = vmax.f32 %v1093, 0.0
      %v1126 = vmax.f32 %v1094, 0.0
      %v1127 = vmax.f32 %v1095, 0.0
      %v1128 = vmax.f32 %v1096, 0.0
      %v1129 = vmax.f32 %v1097, 0.0
      %v1130 = vmax.f32 %v1098, 0.0
      %v1131 = vmax.f32 %v1099, 0.0
      %v1132 = vmax.f32 %v1100, 0.0
      %v1133 = vmax.f32 %v1101, 0.0
      %v1134 = vmax.f32 %v1102, 0.0
      %v1135 = vmax.f32 %v1103, 0.0
      %v1136 = vmax.f32 %v1104, 0.0
      %v1137 = vmax.f32 %v1105, 0.0
      %v1138 = vmax.f32 %v1106, 0.0
      %v1139 = vmax.f32 %v1107, 0.0
      %v1140 = vmax.f32 %v1108, 0.0
      %v1141 = vmax.f32 %v1109, 0.0
      %v1142 = vmax.f32 %v1110, 0.0
      %v1143 = vmax.f32 %v1111, 0.0
      %v1144 = vmax.f32 %v1112, 0.0
      %v1145 = vmax.f32 %v1113, 0.0
      %v1146 = vmax.f32 %v1114, 0.0
      %v1147 = vmax.f32 %v1115, 0.0
      %v1148 = vmax.f32 %v1116, 0.0
      %v1149 = vmax.f32 %v1117, 0.0
      %v1150 = vmax.f32 %v1118, 0.0
      %v1151 = vmax.f32 %v1119, 0.0
      %v1152 = vmax.f32 %v1120, 0.0
      %v1153 = vmax.f32 %v1121, 0.0
      %v1154 = vmax.f32 %v1122, 0.0
      %v1155 = vmax.f32 %v1123, 0.0
      %v1156 = vmax.f32 %v1124, 0.0
      %v1157 = vpack.c.bf16 %v1126, %v1125
      %v1158 = vpack.c.bf16 %v1128, %v1127
      %v1159 = vpack.c.bf16 %v1130, %v1129
      %v1160 = vpack.c.bf16 %v1132, %v1131
      %v1161 = vpack.c.bf16 %v1134, %v1133
      %v1162 = vpack.c.bf16 %v1136, %v1135
      %v1163 = vpack.c.bf16 %v1138, %v1137
      %v1164 = vpack.c.bf16 %v1140, %v1139
      %v1165 = vpack.c.bf16 %v1142, %v1141
      %v1166 = vpack.c.bf16 %v1144, %v1143
      %v1167 = vpack.c.bf16 %v1146, %v1145
      %v1168 = vpack.c.bf16 %v1148, %v1147
      %v1169 = vpack.c.bf16 %v1150, %v1149
      %v1170 = vpack.c.bf16 %v1152, %v1151
      %v1171 = vpack.c.bf16 %v1154, %v1153
      %v1172 = vpack.c.bf16 %v1156, %v1155
      %v1173 = vld [vmem:[%s3] sm:$0xf]
      %v1174 = vld [vmem:[%s3 + $0x4] sm:$0xf]
      %v1175 = vld [vmem:[%s3 + $0x8] sm:$0xf]
      %v1176 = vld [vmem:[%s3 + $0xc] sm:$0xf]
      %v1177 = vld [vmem:[%s3 + $0x10] sm:$0xf]
      %v1178 = vld [vmem:[%s3 + $0x14] sm:$0xf]
      %v1179 = vld [vmem:[%s3 + $0x18] sm:$0xf]
      %v1180 = vld [vmem:[%s3 + $0x1c] sm:$0xf]
      %v1181 = vld [vmem:[%s4] sm:$0x1]
      %v1183 = vlaneseq
      %v1184 = vshrl.u32 %v1183, 7
      %v1185 = vsub.s32 0, %v1184
      %v1186 = vrot.slane %v1181, %v1185
      %v1196 = vunpack.c.l.b16 %v1173
      %v1197 = vunpack.c.l.b16 %v1174
      %v1198 = vunpack.c.l.b16 %v1175
      %v1199 = vunpack.c.l.b16 %v1176
      %v1200 = vunpack.c.l.b16 %v1177
      %v1201 = vunpack.c.l.b16 %v1178
      %v1202 = vunpack.c.l.b16 %v1179
      %v1203 = vunpack.c.l.b16 %v1180
      %v1204 = vpack.c.b16 %v1197, %v1196
      %v1205 = vpack.c.b16 %v1199, %v1198
      %v1206 = vpack.c.b16 %v1201, %v1200
      %v1207 = vpack.c.b16 %v1203, %v1202
      %v1213 = vsel %vm326, %v1157, 0
      %v1216 = vsel %vm326, %v1158, 0
      %v1219 = vsel %vm326, %v1159, 0
      %v1222 = vsel %vm326, %v1160, 0
      %v1225 = vsel %vm326, %v1161, 0
      %v1228 = vsel %vm326, %v1162, 0
      %v1231 = vsel %vm326, %v1163, 0
      %v1234 = vsel %vm326, %v1164, 0
      %v1237 = vsel %vm326, %v1165, 0
      %v1240 = vsel %vm326, %v1166, 0
      %v1243 = vsel %vm326, %v1167, 0
      %v1246 = vsel %vm326, %v1168, 0
      %v1249 = vsel %vm326, %v1169, 0
      %v1252 = vsel %vm326, %v1170, 0
      %v1255 = vsel %vm326, %v1171, 0
      %v1258 = vsel %vm326, %v1172, 0
      %1260 = vmatprep.subr.bf16.mxu0 0
      %1261 = vmatpush1.bf16.msra.mxu0 %v1204
      %1262 = vmatprep.subr.bf16.mxu0 0
      %1263 = vmatpush1.bf16.msra.mxu0 %v1205
      %1264 = vmatprep.subr.bf16.mxu0 0
      %1265 = vmatpush1.bf16.msra.mxu0 %v1206
      %1266 = vmatprep.subr.bf16.mxu0 0
      %1267 = vmatpush1.bf16.msra.mxu0 %v1207
      %1268 = vmatprep.subr.bf16.mxu0 0
      %1269 = vmatpush1.bf16.msra.mxu0 0
      %1270 = vmatprep.subr.bf16.mxu0 0
      %1271 = vmatpush1.bf16.msra.mxu0 0
      %1272 = vmatprep.subr.bf16.mxu0 0
      %1273 = vmatpush1.bf16.msra.mxu0 0
      %1274 = vmatprep.subr.bf16.mxu0 0
      %1275 = vmatpush1.bf16.msra.mxu0 0
      %1276 = vmatprep.subr.bf16.mxu0 0
      %1277 = vmatpush1.bf16.msra.mxu0 0
      %1278 = vmatprep.subr.bf16.mxu0 0
      %1279 = vmatpush1.bf16.msra.mxu0 0
      %1280 = vmatprep.subr.bf16.mxu0 0
      %1281 = vmatpush1.bf16.msra.mxu0 0
      %1282 = vmatprep.subr.bf16.mxu0 0
      %1283 = vmatpush1.bf16.msra.mxu0 0
      %1284 = vmatprep.subr.bf16.mxu0 0
      %1285 = vmatpush1.bf16.msra.mxu0 0
      %1286 = vmatprep.subr.bf16.mxu0 0
      %1287 = vmatpush1.bf16.msra.mxu0 0
      %1288 = vmatprep.subr.bf16.mxu0 0
      %1289 = vmatpush1.bf16.msra.mxu0 0
      %1290 = vmatprep.subr.bf16.mxu0 0
      %1291 = vmatpush1.bf16.msra.mxu0 0
      %1292 = vmatprep.mubr.bf16.mxu0 0
      %1293 = vmatmul.mubr.bf16.gmra.mrb[0].mxu0 %v1213
      %v1294 = vpop.f32.mrb[0].mxu0
      %v1295 = vadd.f32 %v1186, %v1294
      %v1296 = vpop.f32.mrb[0].mxu0
      %v1297 = vpop.f32.mrb[0].mxu0
      %v1298 = vadd.f32 %v1186, %v1297
      %v1299 = vpop.f32.mrb[0].mxu0
      %1300 = vmatprep.mubr.bf16.mxu0 0
      %1301 = vmatmul.mubr.bf16.gmra.mrb[0].mxu0 %v1216
      %v1302 = vpop.f32.mrb[0].mxu0
      %v1303 = vadd.f32 %v1186, %v1302
      %v1304 = vpop.f32.mrb[0].mxu0
      %v1305 = vpop.f32.mrb[0].mxu0
      %v1306 = vadd.f32 %v1186, %v1305
      %v1307 = vpop.f32.mrb[0].mxu0
      %1308 = vmatprep.mubr.bf16.mxu0 0
      %1309 = vmatmul.mubr.bf16.gmra.mrb[0].mxu0 %v1219
      %v1310 = vpop.f32.mrb[0].mxu0
      %v1311 = vadd.f32 %v1186, %v1310
      %v1312 = vpop.f32.mrb[0].mxu0
      %v1313 = vpop.f32.mrb[0].mxu0
      %v1314 = vadd.f32 %v1186, %v1313
      %v1315 = vpop.f32.mrb[0].mxu0
      %1316 = vmatprep.mubr.bf16.mxu0 0
      %1317 = vmatmul.mubr.bf16.gmra.mrb[0].mxu0 %v1222
      %v1318 = vpop.f32.mrb[0].mxu0
      %v1319 = vadd.f32 %v1186, %v1318
      %v1320 = vpop.f32.mrb[0].mxu0
      %v1321 = vpop.f32.mrb[0].mxu0
      %v1322 = vadd.f32 %v1186, %v1321
      %v1323 = vpop.f32.mrb[0].mxu0
      %1324 = vmatprep.mubr.bf16.mxu0 0
      %1325 = vmatmul.mubr.bf16.gmra.mrb[0].mxu0 %v1225
      %v1326 = vpop.f32.mrb[0].mxu0
      %v1327 = vadd.f32 %v1186, %v1326
      %v1328 = vpop.f32.mrb[0].mxu0
      %v1329 = vpop.f32.mrb[0].mxu0
      %v1330 = vadd.f32 %v1186, %v1329
      %v1331 = vpop.f32.mrb[0].mxu0
      %1332 = vmatprep.mubr.bf16.mxu0 0
      %1333 = vmatmul.mubr.bf16.gmra.mrb[0].mxu0 %v1228
      %v1334 = vpop.f32.mrb[0].mxu0
      %v1335 = vadd.f32 %v1186, %v1334
      %v1336 = vpop.f32.mrb[0].mxu0
      %v1337 = vpop.f32.mrb[0].mxu0
      %v1338 = vadd.f32 %v1186, %v1337
      %v1339 = vpop.f32.mrb[0].mxu0
      %1340 = vmatprep.mubr.bf16.mxu0 0
      %1341 = vmatmul.mubr.bf16.gmra.mrb[0].mxu0 %v1231
      %v1342 = vpop.f32.mrb[0].mxu0
      %v1343 = vadd.f32 %v1186, %v1342
      %v1344 = vpop.f32.mrb[0].mxu0
      %v1345 = vpop.f32.mrb[0].mxu0
      %v1346 = vadd.f32 %v1186, %v1345
      %v1347 = vpop.f32.mrb[0].mxu0
      %1348 = vmatprep.mubr.bf16.mxu0 0
      %1349 = vmatmul.mubr.bf16.gmra.mrb[0].mxu0 %v1234
      %v1350 = vpop.f32.mrb[0].mxu0
      %v1351 = vadd.f32 %v1186, %v1350
      %v1352 = vpop.f32.mrb[0].mxu0
      %v1353 = vpop.f32.mrb[0].mxu0
      %v1354 = vadd.f32 %v1186, %v1353
      %v1355 = vpop.f32.mrb[0].mxu0
      %1356 = vmatprep.mubr.bf16.mxu0 0
      %1357 = vmatmul.mubr.bf16.gmra.mrb[0].mxu0 %v1237
      %v1358 = vpop.f32.mrb[0].mxu0
      %v1359 = vadd.f32 %v1186, %v1358
      %v1360 = vpop.f32.mrb[0].mxu0
      %v1361 = vpop.f32.mrb[0].mxu0
      %v1362 = vadd.f32 %v1186, %v1361
      %v1363 = vpop.f32.mrb[0].mxu0
      %1364 = vmatprep.mubr.bf16.mxu0 0
      %1365 = vmatmul.mubr.bf16.gmra.mrb[0].mxu0 %v1240
      %v1366 = vpop.f32.mrb[0].mxu0
      %v1367 = vadd.f32 %v1186, %v1366
      %v1368 = vpop.f32.mrb[0].mxu0
      %v1369 = vpop.f32.mrb[0].mxu0
      %v1370 = vadd.f32 %v1186, %v1369
      %v1371 = vpop.f32.mrb[0].mxu0
      %1372 = vmatprep.mubr.bf16.mxu0 0
      %1373 = vmatmul.mubr.bf16.gmra.mrb[0].mxu0 %v1243
      %v1374 = vpop.f32.mrb[0].mxu0
      %v1375 = vadd.f32 %v1186, %v1374
      %v1376 = vpop.f32.mrb[0].mxu0
      %v1377 = vpop.f32.mrb[0].mxu0
      %v1378 = vadd.f32 %v1186, %v1377
      %v1379 = vpop.f32.mrb[0].mxu0
      %1380 = vmatprep.mubr.bf16.mxu0 0
      %1381 = vmatmul.mubr.bf16.gmra.mrb[0].mxu0 %v1246
      %v1382 = vpop.f32.mrb[0].mxu0
      %v1383 = vadd.f32 %v1186, %v1382
      %v1384 = vpop.f32.mrb[0].mxu0
      %v1385 = vpop.f32.mrb[0].mxu0
      %v1386 = vadd.f32 %v1186, %v1385
      %v1387 = vpop.f32.mrb[0].mxu0
      %1388 = vmatprep.mubr.bf16.mxu0 0
      %1389 = vmatmul.mubr.bf16.gmra.mrb[0].mxu0 %v1249
      %v1390 = vpop.f32.mrb[0].mxu0
      %v1391 = vadd.f32 %v1186, %v1390
      %v1392 = vpop.f32.mrb[0].mxu0
      %v1393 = vpop.f32.mrb[0].mxu0
      %v1394 = vadd.f32 %v1186, %v1393
      %v1395 = vpop.f32.mrb[0].mxu0
      %1396 = vmatprep.mubr.bf16.mxu0 0
      %1397 = vmatmul.mubr.bf16.gmra.mrb[0].mxu0 %v1252
      %v1398 = vpop.f32.mrb[0].mxu0
      %v1399 = vadd.f32 %v1186, %v1398
      %v1400 = vpop.f32.mrb[0].mxu0
      %v1401 = vpop.f32.mrb[0].mxu0
      %v1402 = vadd.f32 %v1186, %v1401
      %v1403 = vpop.f32.mrb[0].mxu0
      %1404 = vmatprep.mubr.bf16.mxu0 0
      %1405 = vmatmul.mubr.bf16.gmra.mrb[0].mxu0 %v1255
      %v1406 = vpop.f32.mrb[0].mxu0
      %v1407 = vadd.f32 %v1186, %v1406
      %v1408 = vpop.f32.mrb[0].mxu0
      %v1409 = vpop.f32.mrb[0].mxu0
      %v1410 = vadd.f32 %v1186, %v1409
      %v1411 = vpop.f32.mrb[0].mxu0
      %1412 = vmatprep.mubr.bf16.mxu0 0
      %1413 = vmatmul.mubr.bf16.gmra.mrb[0].mxu0 %v1258
      %v1414 = vpop.f32.mrb[0].mxu0
      %v1415 = vadd.f32 %v1186, %v1414
      %v1416 = vpop.f32.mrb[0].mxu0
      %v1417 = vpop.f32.mrb[0].mxu0
      %v1418 = vadd.f32 %v1186, %v1417
      %v1419 = vpop.f32.mrb[0].mxu0
      %1420 = vdwg.mxu0
      %v1421 = vpack.c.bf16 %v1298, %v1295
      %v1422 = vpack.c.bf16 %v1306, %v1303
      %v1423 = vpack.c.bf16 %v1314, %v1311
      %v1424 = vpack.c.bf16 %v1322, %v1319
      %v1425 = vpack.c.bf16 %v1330, %v1327
      %v1426 = vpack.c.bf16 %v1338, %v1335
      %v1427 = vpack.c.bf16 %v1346, %v1343
      %v1428 = vpack.c.bf16 %v1354, %v1351
      %v1429 = vpack.c.bf16 %v1362, %v1359
      %v1430 = vpack.c.bf16 %v1370, %v1367
      %v1431 = vpack.c.bf16 %v1378, %v1375
      %v1432 = vpack.c.bf16 %v1386, %v1383
      %v1433 = vpack.c.bf16 %v1394, %v1391
      %v1434 = vpack.c.bf16 %v1402, %v1399
      %v1435 = vpack.c.bf16 %v1410, %v1407
      %v1436 = vpack.c.bf16 %v1418, %v1415
      %s1437 = smul.addr %s1009, 8
      %s1438 = scalar_lea.vmem [#allocation3], %s1437
      %1439 = vst.msk [vmem:[%s1438] sm:$0xff] %vm326, %v1421
      %1440 = vst.msk [vmem:[%s1438 + $0x8] sm:$0xff] %vm326, %v1422
      %1441 = vst.msk [vmem:[%s1438 + $0x10] sm:$0xff] %vm326, %v1423
      %1442 = vst.msk [vmem:[%s1438 + $0x18] sm:$0xff] %vm326, %v1424
      %1443 = vst.msk [vmem:[%s1438 + $0x20] sm:$0xff] %vm326, %v1425
      %1444 = vst.msk [vmem:[%s1438 + $0x28] sm:$0xff] %vm326, %v1426
      %1445 = vst.msk [vmem:[%s1438 + $0x30] sm:$0xff] %vm326, %v1427
      %1446 = vst.msk [vmem:[%s1438 + $0x38] sm:$0xff] %vm326, %v1428
      %1447 = vst.msk [vmem:[%s1438 + $0x40] sm:$0xff] %vm326, %v1429
      %1448 = vst.msk [vmem:[%s1438 + $0x48] sm:$0xff] %vm326, %v1430
      %1449 = vst.msk [vmem:[%s1438 + $0x50] sm:$0xff] %vm326, %v1431
      %1450 = vst.msk [vmem:[%s1438 + $0x58] sm:$0xff] %vm326, %v1432
      %1451 = vst.msk [vmem:[%s1438 + $0x60] sm:$0xff] %vm326, %v1433
      %1452 = vst.msk [vmem:[%s1438 + $0x68] sm:$0xff] %vm326, %v1434
      %1453 = vst.msk [vmem:[%s1438 + $0x70] sm:$0xff] %vm326, %v1435
      %1454 = vst.msk [vmem:[%s1438 + $0x78] sm:$0xff] %vm326, %v1436
      %v1455 = vsel %vm326, %v1295, 0.0
      %v1456 = vsel %vm326, %v1298, 0.0
      %v1457 = vadd.f32 %v1455, %v1456
      %v1458 = vsel %vm326, %v1303, 0.0
      %v1459 = vadd.f32 %v1457, %v1458
      %v1460 = vsel %vm326, %v1306, 0.0
      %v1461 = vadd.f32 %v1459, %v1460
      %v1462 = vsel %vm326, %v1311, 0.0
      %v1463 = vadd.f32 %v1461, %v1462
      %v1464 = vsel %vm326, %v1314, 0.0
      %v1465 = vadd.f32 %v1463, %v1464
      %v1466 = vsel %vm326, %v1319, 0.0
      %v1467 = vadd.f32 %v1465, %v1466
      %v1468 = vsel %vm326, %v1322, 0.0
      %v1469 = vadd.f32 %v1467, %v1468
      %v1470 = vsel %vm326, %v1327, 0.0
      %v1471 = vadd.f32 %v1469, %v1470
      %v1472 = vsel %vm326, %v1330, 0.0
      %v1473 = vadd.f32 %v1471, %v1472
      %v1474 = vsel %vm326, %v1335, 0.0
      %v1475 = vadd.f32 %v1473, %v1474
      %v1476 = vsel %vm326, %v1338, 0.0
      %v1477 = vadd.f32 %v1475, %v1476
      %v1478 = vsel %vm326, %v1343, 0.0
      %v1479 = vadd.f32 %v1477, %v1478
      %v1480 = vsel %vm326, %v1346, 0.0
      %v1481 = vadd.f32 %v1479, %v1480
      %v1482 = vsel %vm326, %v1351, 0.0
      %v1483 = vadd.f32 %v1481, %v1482
      %v1484 = vsel %vm326, %v1354, 0.0
      %v1485 = vadd.f32 %v1483, %v1484
      %v1486 = vsel %vm326, %v1359, 0.0
      %v1487 = vadd.f32 %v1485, %v1486
      %v1488 = vsel %vm326, %v1362, 0.0
      %v1489 = vadd.f32 %v1487, %v1488
      %v1490 = vsel %vm326, %v1367, 0.0
      %v1491 = vadd.f32 %v1489, %v1490
      %v1492 = vsel %vm326, %v1370, 0.0
      %v1493 = vadd.f32 %v1491, %v1492
      %v1494 = vsel %vm326, %v1375, 0.0
      %v1495 = vadd.f32 %v1493, %v1494
      %v1496 = vsel %vm326, %v1378, 0.0
      %v1497 = vadd.f32 %v1495, %v1496
      %v1498 = vsel %vm326, %v1383, 0.0
      %v1499 = vadd.f32 %v1497, %v1498
      %v1500 = vsel %vm326, %v1386, 0.0
      %v1501 = vadd.f32 %v1499, %v1500
      %v1502 = vsel %vm326, %v1391, 0.0
      %v1503 = vadd.f32 %v1501, %v1502
      %v1504 = vsel %vm326, %v1394, 0.0
      %v1505 = vadd.f32 %v1503, %v1504
      %v1506 = vsel %vm326, %v1399, 0.0
      %v1507 = vadd.f32 %v1505, %v1506
      %v1508 = vsel %vm326, %v1402, 0.0
      %v1509 = vadd.f32 %v1507, %v1508
      %v1510 = vsel %vm326, %v1407, 0.0
      %v1511 = vadd.f32 %v1509, %v1510
      %v1512 = vsel %vm326, %v1410, 0.0
      %v1513 = vadd.f32 %v1511, %v1512
      %v1514 = vsel %vm326, %v1415, 0.0
      %v1515 = vadd.f32 %v1513, %v1514
      %v1516 = vsel %vm326, %v1418, 0.0
      %v1517 = vadd.f32 %v1515, %v1516
      %v1518 = vrot.slane %v1517, 4
      %v1519 = vadd.f32 %v1517, %v1518
      %v1520 = vrot.slane %v1519, 2
      %v1521 = vadd.f32 %v1519, %v1520
      %v1522 = vrot.slane %v1521, 1
      %v1523 = vadd.f32 %v1521, %v1522
      %v1524 = vadd.f32 %v1006, %v1523
      %v1525 = vmul.f32 %v1295, %v1295
      %v1526 = vmul.f32 %v1298, %v1298
      %v1527 = vmul.f32 %v1303, %v1303
      %v1528 = vmul.f32 %v1306, %v1306
      %v1529 = vmul.f32 %v1311, %v1311
      %v1530 = vmul.f32 %v1314, %v1314
      %v1531 = vmul.f32 %v1319, %v1319
      %v1532 = vmul.f32 %v1322, %v1322
      %v1533 = vmul.f32 %v1327, %v1327
      %v1534 = vmul.f32 %v1330, %v1330
      %v1535 = vmul.f32 %v1335, %v1335
      %v1536 = vmul.f32 %v1338, %v1338
      %v1537 = vmul.f32 %v1343, %v1343
      %v1538 = vmul.f32 %v1346, %v1346
      %v1539 = vmul.f32 %v1351, %v1351
      %v1540 = vmul.f32 %v1354, %v1354
      %v1541 = vmul.f32 %v1359, %v1359
      %v1542 = vmul.f32 %v1362, %v1362
      %v1543 = vmul.f32 %v1367, %v1367
      %v1544 = vmul.f32 %v1370, %v1370
      %v1545 = vmul.f32 %v1375, %v1375
      %v1546 = vmul.f32 %v1378, %v1378
      %v1547 = vmul.f32 %v1383, %v1383
      %v1548 = vmul.f32 %v1386, %v1386
      %v1549 = vmul.f32 %v1391, %v1391
      %v1550 = vmul.f32 %v1394, %v1394
      %v1551 = vmul.f32 %v1399, %v1399
      %v1552 = vmul.f32 %v1402, %v1402
      %v1553 = vmul.f32 %v1407, %v1407
      %v1554 = vmul.f32 %v1410, %v1410
      %v1555 = vmul.f32 %v1415, %v1415
      %v1556 = vmul.f32 %v1418, %v1418
      %v1557 = vsel %vm326, %v1525, 0.0
      %v1558 = vsel %vm326, %v1526, 0.0
      %v1559 = vadd.f32 %v1557, %v1558
      %v1560 = vsel %vm326, %v1527, 0.0
      %v1561 = vadd.f32 %v1559, %v1560
      %v1562 = vsel %vm326, %v1528, 0.0
      %v1563 = vadd.f32 %v1561, %v1562
      %v1564 = vsel %vm326, %v1529, 0.0
      %v1565 = vadd.f32 %v1563, %v1564
      %v1566 = vsel %vm326, %v1530, 0.0
      %v1567 = vadd.f32 %v1565, %v1566
      %v1568 = vsel %vm326, %v1531, 0.0
      %v1569 = vadd.f32 %v1567, %v1568
      %v1570 = vsel %vm326, %v1532, 0.0
      %v1571 = vadd.f32 %v1569, %v1570
      %v1572 = vsel %vm326, %v1533, 0.0
      %v1573 = vadd.f32 %v1571, %v1572
      %v1574 = vsel %vm326, %v1534, 0.0
      %v1575 = vadd.f32 %v1573, %v1574
      %v1576 = vsel %vm326, %v1535, 0.0
      %v1577 = vadd.f32 %v1575, %v1576
      %v1578 = vsel %vm326, %v1536, 0.0
      %v1579 = vadd.f32 %v1577, %v1578
      %v1580 = vsel %vm326, %v1537, 0.0
      %v1581 = vadd.f32 %v1579, %v1580
      %v1582 = vsel %vm326, %v1538, 0.0
      %v1583 = vadd.f32 %v1581, %v1582
      %v1584 = vsel %vm326, %v1539, 0.0
      %v1585 = vadd.f32 %v1583, %v1584
      %v1586 = vsel %vm326, %v1540, 0.0
      %v1587 = vadd.f32 %v1585, %v1586
      %v1588 = vsel %vm326, %v1541, 0.0
      %v1589 = vadd.f32 %v1587, %v1588
      %v1590 = vsel %vm326, %v1542, 0.0
      %v1591 = vadd.f32 %v1589, %v1590
      %v1592 = vsel %vm326, %v1543, 0.0
      %v1593 = vadd.f32 %v1591, %v1592
      %v1594 = vsel %vm326, %v1544, 0.0
      %v1595 = vadd.f32 %v1593, %v1594
      %v1596 = vsel %vm326, %v1545, 0.0
      %v1597 = vadd.f32 %v1595, %v1596
      %v1598 = vsel %vm326, %v1546, 0.0
      %v1599 = vadd.f32 %v1597, %v1598
      %v1600 = vsel %vm326, %v1547, 0.0
      %v1601 = vadd.f32 %v1599, %v1600
      %v1602 = vsel %vm326, %v1548, 0.0
      %v1603 = vadd.f32 %v1601, %v1602
      %v1604 = vsel %vm326, %v1549, 0.0
      %v1605 = vadd.f32 %v1603, %v1604
      %v1606 = vsel %vm326, %v1550, 0.0
      %v1607 = vadd.f32 %v1605, %v1606
      %v1608 = vsel %vm326, %v1551, 0.0
      %v1609 = vadd.f32 %v1607, %v1608
      %v1610 = vsel %vm326, %v1552, 0.0
      %v1611 = vadd.f32 %v1609, %v1610
      %v1612 = vsel %vm326, %v1553, 0.0
      %v1613 = vadd.f32 %v1611, %v1612
      %v1614 = vsel %vm326, %v1554, 0.0
      %v1615 = vadd.f32 %v1613, %v1614
      %v1616 = vsel %vm326, %v1555, 0.0
      %v1617 = vadd.f32 %v1615, %v1616
      %v1618 = vsel %vm326, %v1556, 0.0
      %v1619 = vadd.f32 %v1617, %v1618
      %v1620 = vrot.slane %v1619, 4
      %v1621 = vadd.f32 %v1619, %v1620
      %v1622 = vrot.slane %v1621, 2
      %v1623 = vadd.f32 %v1621, %v1622
      %v1624 = vrot.slane %v1623, 1
      %v1625 = vadd.f32 %v1623, %v1624
      %v1626 = vadd.f32 %v1007, %v1625
    $region50: #{pointnetfeat_v1.5} parent=1 // loop_footer
      %s1005 = sadd.s32 1, %s1001
    $region51: #{pointnetfeat_v1.5} parent=1 // loop_footer_branch
      %1000 = sbr.rel target = $region47
    $region52: #{pointnetfeat_v1.5} parent=1 // loop_exit
      _
    %v1627 = vmul.f32 %v1006, %v990
    %v1628 = vmul.f32 %v1007, %v990
    %v1629 = vmul.f32 %v1627, %v1627
    %v1630 = vsub.f32 %v1628, %v1629
    %v1631 = vmax.f32 %v1630, 0.0
    %v1632 = vadd.f32 %v1631, 1e-05
    %v1633 = vrsqrt.pop %v1632
    %v1634 = vsub.f32 0.0, %v1627
    %v1635 = vmul.f32 %v1634, %v1633
    loop: start=0, step=1, limit=2
    $region53: #{pointnetfeat_v1.5} parent=1 // loop_pre_header
      _
    $region54: #{pointnetfeat_v1.5} parent=1 // loop_header
      %s1637 = sphi 0, %s1641
      %p1638 = scmp.ge.s32.totalorder %s1637, 2
      %v1642 = vphi 0.0, %v2160
      %v1643 = vphi 0.0, %v2262
    $region55: #{pointnetfeat_v1.5} parent=1 // loop_header_branch
      %1640 = sbr.rel (%p1638) target = $region59
    $region56: #{pointnetfeat_v1.5} parent=1 // loop_body
      %s1644 = smul.u32 %s1637, 256
      %s1645 = sshra.s32 %s1644, 4
      %s1646 = sand.u32 %s1644, 15
      %s1647 = smul.addr %s1645, 8
      %s1648 = scalar_lea.vmem [#allocation3], %s1647
      %v1649 = vld [vmem:[%s1648] sm:$0xff]
      %v1650 = vld [vmem:[%s1648 + $0x8] sm:$0xff]
      %v1651 = vld [vmem:[%s1648 + $0x10] sm:$0xff]
      %v1652 = vld [vmem:[%s1648 + $0x18] sm:$0xff]
      %v1653 = vld [vmem:[%s1648 + $0x20] sm:$0xff]
      %v1654 = vld [vmem:[%s1648 + $0x28] sm:$0xff]
      %v1655 = vld [vmem:[%s1648 + $0x30] sm:$0xff]
      %v1656 = vld [vmem:[%s1648 + $0x38] sm:$0xff]
      %v1657 = vld [vmem:[%s1648 + $0x40] sm:$0xff]
      %v1658 = vld [vmem:[%s1648 + $0x48] sm:$0xff]
      %v1659 = vld [vmem:[%s1648 + $0x50] sm:$0xff]
      %v1660 = vld [vmem:[%s1648 + $0x58] sm:$0xff]
      %v1661 = vld [vmem:[%s1648 + $0x60] sm:$0xff]
      %v1662 = vld [vmem:[%s1648 + $0x68] sm:$0xff]
      %v1663 = vld [vmem:[%s1648 + $0x70] sm:$0xff]
      %v1664 = vld [vmem:[%s1648 + $0x78] sm:$0xff]
      %v1665 = vunpack.c.l.bf16 %v1649
      %v1666 = vunpack.c.h.bf16 %v1649
      %v1667 = vunpack.c.l.bf16 %v1650
      %v1668 = vunpack.c.h.bf16 %v1650
      %v1669 = vunpack.c.l.bf16 %v1651
      %v1670 = vunpack.c.h.bf16 %v1651
      %v1671 = vunpack.c.l.bf16 %v1652
      %v1672 = vunpack.c.h.bf16 %v1652
      %v1673 = vunpack.c.l.bf16 %v1653
      %v1674 = vunpack.c.h.bf16 %v1653
      %v1675 = vunpack.c.l.bf16 %v1654
      %v1676 = vunpack.c.h.bf16 %v1654
      %v1677 = vunpack.c.l.bf16 %v1655
      %v1678 = vunpack.c.h.bf16 %v1655
      %v1679 = vunpack.c.l.bf16 %v1656
      %v1680 = vunpack.c.h.bf16 %v1656
      %v1681 = vunpack.c.l.bf16 %v1657
      %v1682 = vunpack.c.h.bf16 %v1657
      %v1683 = vunpack.c.l.bf16 %v1658
      %v1684 = vunpack.c.h.bf16 %v1658
      %v1685 = vunpack.c.l.bf16 %v1659
      %v1686 = vunpack.c.h.bf16 %v1659
      %v1687 = vunpack.c.l.bf16 %v1660
      %v1688 = vunpack.c.h.bf16 %v1660
      %v1689 = vunpack.c.l.bf16 %v1661
      %v1690 = vunpack.c.h.bf16 %v1661
      %v1691 = vunpack.c.l.bf16 %v1662
      %v1692 = vunpack.c.h.bf16 %v1662
      %v1693 = vunpack.c.l.bf16 %v1663
      %v1694 = vunpack.c.h.bf16 %v1663
      %v1695 = vunpack.c.l.bf16 %v1664
      %v1696 = vunpack.c.h.bf16 %v1664
      %v1697 = vmul.f32 %v1665, %v1633
      %v1698 = vmul.f32 %v1666, %v1633
      %v1699 = vmul.f32 %v1667, %v1633
      %v1700 = vmul.f32 %v1668, %v1633
      %v1701 = vmul.f32 %v1669, %v1633
      %v1702 = vmul.f32 %v1670, %v1633
      %v1703 = vmul.f32 %v1671, %v1633
      %v1704 = vmul.f32 %v1672, %v1633
      %v1705 = vmul.f32 %v1673, %v1633
      %v1706 = vmul.f32 %v1674, %v1633
      %v1707 = vmul.f32 %v1675, %v1633
      %v1708 = vmul.f32 %v1676, %v1633
      %v1709 = vmul.f32 %v1677, %v1633
      %v1710 = vmul.f32 %v1678, %v1633
      %v1711 = vmul.f32 %v1679, %v1633
      %v1712 = vmul.f32 %v1680, %v1633
      %v1713 = vmul.f32 %v1681, %v1633
      %v1714 = vmul.f32 %v1682, %v1633
      %v1715 = vmul.f32 %v1683, %v1633
      %v1716 = vmul.f32 %v1684, %v1633
      %v1717 = vmul.f32 %v1685, %v1633
      %v1718 = vmul.f32 %v1686, %v1633
      %v1719 = vmul.f32 %v1687, %v1633
      %v1720 = vmul.f32 %v1688, %v1633
      %v1721 = vmul.f32 %v1689, %v1633
      %v1722 = vmul.f32 %v1690, %v1633
      %v1723 = vmul.f32 %v1691, %v1633
      %v1724 = vmul.f32 %v1692, %v1633
      %v1725 = vmul.f32 %v1693, %v1633
      %v1726 = vmul.f32 %v1694, %v1633
      %v1727 = vmul.f32 %v1695, %v1633
      %v1728 = vmul.f32 %v1696, %v1633
      %v1729 = vadd.f32 %v1697, %v1635
      %v1730 = vadd.f32 %v1698, %v1635
      %v1731 = vadd.f32 %v1699, %v1635
      %v1732 = vadd.f32 %v1700, %v1635
      %v1733 = vadd.f32 %v1701, %v1635
      %v1734 = vadd.f32 %v1702, %v1635
      %v1735 = vadd.f32 %v1703, %v1635
      %v1736 = vadd.f32 %v1704, %v1635
      %v1737 = vadd.f32 %v1705, %v1635
      %v1738 = vadd.f32 %v1706, %v1635
      %v1739 = vadd.f32 %v1707, %v1635
      %v1740 = vadd.f32 %v1708, %v1635
      %v1741 = vadd.f32 %v1709, %v1635
      %v1742 = vadd.f32 %v1710, %v1635
      %v1743 = vadd.f32 %v1711, %v1635
      %v1744 = vadd.f32 %v1712, %v1635
      %v1745 = vadd.f32 %v1713, %v1635
      %v1746 = vadd.f32 %v1714, %v1635
      %v1747 = vadd.f32 %v1715, %v1635
      %v1748 = vadd.f32 %v1716, %v1635
      %v1749 = vadd.f32 %v1717, %v1635
      %v1750 = vadd.f32 %v1718, %v1635
      %v1751 = vadd.f32 %v1719, %v1635
      %v1752 = vadd.f32 %v1720, %v1635
      %v1753 = vadd.f32 %v1721, %v1635
      %v1754 = vadd.f32 %v1722, %v1635
      %v1755 = vadd.f32 %v1723, %v1635
      %v1756 = vadd.f32 %v1724, %v1635
      %v1757 = vadd.f32 %v1725, %v1635
      %v1758 = vadd.f32 %v1726, %v1635
      %v1759 = vadd.f32 %v1727, %v1635
      %v1760 = vadd.f32 %v1728, %v1635
      %v1761 = vmax.f32 %v1729, 0.0
      %v1762 = vmax.f32 %v1730, 0.0
      %v1763 = vmax.f32 %v1731, 0.0
      %v1764 = vmax.f32 %v1732, 0.0
      %v1765 = vmax.f32 %v1733, 0.0
      %v1766 = vmax.f32 %v1734, 0.0
      %v1767 = vmax.f32 %v1735, 0.0
      %v1768 = vmax.f32 %v1736, 0.0
      %v1769 = vmax.f32 %v1737, 0.0
      %v1770 = vmax.f32 %v1738, 0.0
      %v1771 = vmax.f32 %v1739, 0.0
      %v1772 = vmax.f32 %v1740, 0.0
      %v1773 = vmax.f32 %v1741, 0.0
      %v1774 = vmax.f32 %v1742, 0.0
      %v1775 = vmax.f32 %v1743, 0.0
      %v1776 = vmax.f32 %v1744, 0.0
      %v1777 = vmax.f32 %v1745, 0.0
      %v1778 = vmax.f32 %v1746, 0.0
      %v1779 = vmax.f32 %v1747, 0.0
      %v1780 = vmax.f32 %v1748, 0.0
      %v1781 = vmax.f32 %v1749, 0.0
      %v1782 = vmax.f32 %v1750, 0.0
      %v1783 = vmax.f32 %v1751, 0.0
      %v1784 = vmax.f32 %v1752, 0.0
      %v1785 = vmax.f32 %v1753, 0.0
      %v1786 = vmax.f32 %v1754, 0.0
      %v1787 = vmax.f32 %v1755, 0.0
      %v1788 = vmax.f32 %v1756, 0.0
      %v1789 = vmax.f32 %v1757, 0.0
      %v1790 = vmax.f32 %v1758, 0.0
      %v1791 = vmax.f32 %v1759, 0.0
      %v1792 = vmax.f32 %v1760, 0.0
      %v1793 = vpack.c.bf16 %v1762, %v1761
      %v1794 = vpack.c.bf16 %v1764, %v1763
      %v1795 = vpack.c.bf16 %v1766, %v1765
      %v1796 = vpack.c.bf16 %v1768, %v1767
      %v1797 = vpack.c.bf16 %v1770, %v1769
      %v1798 = vpack.c.bf16 %v1772, %v1771
      %v1799 = vpack.c.bf16 %v1774, %v1773
      %v1800 = vpack.c.bf16 %v1776, %v1775
      %v1801 = vpack.c.bf16 %v1778, %v1777
      %v1802 = vpack.c.bf16 %v1780, %v1779
      %v1803 = vpack.c.bf16 %v1782, %v1781
      %v1804 = vpack.c.bf16 %v1784, %v1783
      %v1805 = vpack.c.bf16 %v1786, %v1785
      %v1806 = vpack.c.bf16 %v1788, %v1787
      %v1807 = vpack.c.bf16 %v1790, %v1789
      %v1808 = vpack.c.bf16 %v1792, %v1791
      %v1809 = vld [vmem:[%s5] sm:$0xf]
      %v1810 = vld [vmem:[%s5 + $0x4] sm:$0xf]
      %v1811 = vld [vmem:[%s5 + $0x8] sm:$0xf]
      %v1812 = vld [vmem:[%s5 + $0xc] sm:$0xf]
      %v1813 = vld [vmem:[%s5 + $0x10] sm:$0xf]
      %v1814 = vld [vmem:[%s5 + $0x14] sm:$0xf]
      %v1815 = vld [vmem:[%s5 + $0x18] sm:$0xf]
      %v1816 = vld [vmem:[%s5 + $0x1c] sm:$0xf]
      %v1817 = vld [vmem:[%s6] sm:$0x1]
      %v1819 = vlaneseq
      %v1820 = vshrl.u32 %v1819, 7
      %v1821 = vsub.s32 0, %v1820
      %v1822 = vrot.slane %v1817, %v1821
      %v1832 = vunpack.c.l.b16 %v1809
      %v1833 = vunpack.c.l.b16 %v1810
      %v1834 = vunpack.c.l.b16 %v1811
      %v1835 = vunpack.c.l.b16 %v1812
      %v1836 = vunpack.c.l.b16 %v1813
      %v1837 = vunpack.c.l.b16 %v1814
      %v1838 = vunpack.c.l.b16 %v1815
      %v1839 = vunpack.c.l.b16 %v1816
      %v1840 = vpack.c.b16 %v1833, %v1832
      %v1841 = vpack.c.b16 %v1835, %v1834
      %v1842 = vpack.c.b16 %v1837, %v1836
      %v1843 = vpack.c.b16 %v1839, %v1838
      %v1849 = vsel %vm326, %v1793, 0
      %v1852 = vsel %vm326, %v1794, 0
      %v1855 = vsel %vm326, %v1795, 0
      %v1858 = vsel %vm326, %v1796, 0
      %v1861 = vsel %vm326, %v1797, 0
      %v1864 = vsel %vm326, %v1798, 0
      %v1867 = vsel %vm326, %v1799, 0
      %v1870 = vsel %vm326, %v1800, 0
      %v1873 = vsel %vm326, %v1801, 0
      %v1876 = vsel %vm326, %v1802, 0
      %v1879 = vsel %vm326, %v1803, 0
      %v1882 = vsel %vm326, %v1804, 0
      %v1885 = vsel %vm326, %v1805, 0
      %v1888 = vsel %vm326, %v1806, 0
      %v1891 = vsel %vm326, %v1807, 0
      %v1894 = vsel %vm326, %v1808, 0
      %1896 = vmatprep.subr.bf16.mxu0 0
      %1897 = vmatpush1.bf16.msra.mxu0 %v1840
      %1898 = vmatprep.subr.bf16.mxu0 0
      %1899 = vmatpush1.bf16.msra.mxu0 %v1841
      %1900 = vmatprep.subr.bf16.mxu0 0
      %1901 = vmatpush1.bf16.msra.mxu0 %v1842
      %1902 = vmatprep.subr.bf16.mxu0 0
      %1903 = vmatpush1.bf16.msra.mxu0 %v1843
      %1904 = vmatprep.subr.bf16.mxu0 0
      %1905 = vmatpush1.bf16.msra.mxu0 0
      %1906 = vmatprep.subr.bf16.mxu0 0
      %1907 = vmatpush1.bf16.msra.mxu0 0
      %1908 = vmatprep.subr.bf16.mxu0 0
      %1909 = vmatpush1.bf16.msra.mxu0 0
      %1910 = vmatprep.subr.bf16.mxu0 0
      %1911 = vmatpush1.bf16.msra.mxu0 0
      %1912 = vmatprep.subr.bf16.mxu0 0
      %1913 = vmatpush1.bf16.msra.mxu0 0
      %1914 = vmatprep.subr.bf16.mxu0 0
      %1915 = vmatpush1.bf16.msra.mxu0 0
      %1916 = vmatprep.subr.bf16.mxu0 0
      %1917 = vmatpush1.bf16.msra.mxu0 0
      %1918 = vmatprep.subr.bf16.mxu0 0
      %1919 = vmatpush1.bf16.msra.mxu0 0
      %1920 = vmatprep.subr.bf16.mxu0 0
      %1921 = vmatpush1.bf16.msra.mxu0 0
      %1922 = vmatprep.subr.bf16.mxu0 0
      %1923 = vmatpush1.bf16.msra.mxu0 0
      %1924 = vmatprep.subr.bf16.mxu0 0
      %1925 = vmatpush1.bf16.msra.mxu0 0
      %1926 = vmatprep.subr.bf16.mxu0 0
      %1927 = vmatpush1.bf16.msra.mxu0 0
      %1928 = vmatprep.mubr.bf16.mxu0 0
      %1929 = vmatmul.mubr.bf16.gmra.mrb[0].mxu0 %v1849
      %v1930 = vpop.f32.mrb[0].mxu0
      %v1931 = vadd.f32 %v1822, %v1930
      %v1932 = vpop.f32.mrb[0].mxu0
      %v1933 = vpop.f32.mrb[0].mxu0
      %v1934 = vadd.f32 %v1822, %v1933
      %v1935 = vpop.f32.mrb[0].mxu0
      %1936 = vmatprep.mubr.bf16.mxu0 0
      %1937 = vmatmul.mubr.bf16.gmra.mrb[0].mxu0 %v1852
      %v1938 = vpop.f32.mrb[0].mxu0
      %v1939 = vadd.f32 %v1822, %v1938
      %v1940 = vpop.f32.mrb[0].mxu0
      %v1941 = vpop.f32.mrb[0].mxu0
      %v1942 = vadd.f32 %v1822, %v1941
      %v1943 = vpop.f32.mrb[0].mxu0
      %1944 = vmatprep.mubr.bf16.mxu0 0
      %1945 = vmatmul.mubr.bf16.gmra.mrb[0].mxu0 %v1855
      %v1946 = vpop.f32.mrb[0].mxu0
      %v1947 = vadd.f32 %v1822, %v1946
      %v1948 = vpop.f32.mrb[0].mxu0
      %v1949 = vpop.f32.mrb[0].mxu0
      %v1950 = vadd.f32 %v1822, %v1949
      %v1951 = vpop.f32.mrb[0].mxu0
      %1952 = vmatprep.mubr.bf16.mxu0 0
      %1953 = vmatmul.mubr.bf16.gmra.mrb[0].mxu0 %v1858
      %v1954 = vpop.f32.mrb[0].mxu0
      %v1955 = vadd.f32 %v1822, %v1954
      %v1956 = vpop.f32.mrb[0].mxu0
      %v1957 = vpop.f32.mrb[0].mxu0
      %v1958 = vadd.f32 %v1822, %v1957
      %v1959 = vpop.f32.mrb[0].mxu0
      %1960 = vmatprep.mubr.bf16.mxu0 0
      %1961 = vmatmul.mubr.bf16.gmra.mrb[0].mxu0 %v1861
      %v1962 = vpop.f32.mrb[0].mxu0
      %v1963 = vadd.f32 %v1822, %v1962
      %v1964 = vpop.f32.mrb[0].mxu0
      %v1965 = vpop.f32.mrb[0].mxu0
      %v1966 = vadd.f32 %v1822, %v1965
      %v1967 = vpop.f32.mrb[0].mxu0
      %1968 = vmatprep.mubr.bf16.mxu0 0
      %1969 = vmatmul.mubr.bf16.gmra.mrb[0].mxu0 %v1864
      %v1970 = vpop.f32.mrb[0].mxu0
      %v1971 = vadd.f32 %v1822, %v1970
      %v1972 = vpop.f32.mrb[0].mxu0
      %v1973 = vpop.f32.mrb[0].mxu0
      %v1974 = vadd.f32 %v1822, %v1973
      %v1975 = vpop.f32.mrb[0].mxu0
      %1976 = vmatprep.mubr.bf16.mxu0 0
      %1977 = vmatmul.mubr.bf16.gmra.mrb[0].mxu0 %v1867
      %v1978 = vpop.f32.mrb[0].mxu0
      %v1979 = vadd.f32 %v1822, %v1978
      %v1980 = vpop.f32.mrb[0].mxu0
      %v1981 = vpop.f32.mrb[0].mxu0
      %v1982 = vadd.f32 %v1822, %v1981
      %v1983 = vpop.f32.mrb[0].mxu0
      %1984 = vmatprep.mubr.bf16.mxu0 0
      %1985 = vmatmul.mubr.bf16.gmra.mrb[0].mxu0 %v1870
      %v1986 = vpop.f32.mrb[0].mxu0
      %v1987 = vadd.f32 %v1822, %v1986
      %v1988 = vpop.f32.mrb[0].mxu0
      %v1989 = vpop.f32.mrb[0].mxu0
      %v1990 = vadd.f32 %v1822, %v1989
      %v1991 = vpop.f32.mrb[0].mxu0
      %1992 = vmatprep.mubr.bf16.mxu0 0
      %1993 = vmatmul.mubr.bf16.gmra.mrb[0].mxu0 %v1873
      %v1994 = vpop.f32.mrb[0].mxu0
      %v1995 = vadd.f32 %v1822, %v1994
      %v1996 = vpop.f32.mrb[0].mxu0
      %v1997 = vpop.f32.mrb[0].mxu0
      %v1998 = vadd.f32 %v1822, %v1997
      %v1999 = vpop.f32.mrb[0].mxu0
      %2000 = vmatprep.mubr.bf16.mxu0 0
      %2001 = vmatmul.mubr.bf16.gmra.mrb[0].mxu0 %v1876
      %v2002 = vpop.f32.mrb[0].mxu0
      %v2003 = vadd.f32 %v1822, %v2002
      %v2004 = vpop.f32.mrb[0].mxu0
      %v2005 = vpop.f32.mrb[0].mxu0
      %v2006 = vadd.f32 %v1822, %v2005
      %v2007 = vpop.f32.mrb[0].mxu0
      %2008 = vmatprep.mubr.bf16.mxu0 0
      %2009 = vmatmul.mubr.bf16.gmra.mrb[0].mxu0 %v1879
      %v2010 = vpop.f32.mrb[0].mxu0
      %v2011 = vadd.f32 %v1822, %v2010
      %v2012 = vpop.f32.mrb[0].mxu0
      %v2013 = vpop.f32.mrb[0].mxu0
      %v2014 = vadd.f32 %v1822, %v2013
      %v2015 = vpop.f32.mrb[0].mxu0
      %2016 = vmatprep.mubr.bf16.mxu0 0
      %2017 = vmatmul.mubr.bf16.gmra.mrb[0].mxu0 %v1882
      %v2018 = vpop.f32.mrb[0].mxu0
      %v2019 = vadd.f32 %v1822, %v2018
      %v2020 = vpop.f32.mrb[0].mxu0
      %v2021 = vpop.f32.mrb[0].mxu0
      %v2022 = vadd.f32 %v1822, %v2021
      %v2023 = vpop.f32.mrb[0].mxu0
      %2024 = vmatprep.mubr.bf16.mxu0 0
      %2025 = vmatmul.mubr.bf16.gmra.mrb[0].mxu0 %v1885
      %v2026 = vpop.f32.mrb[0].mxu0
      %v2027 = vadd.f32 %v1822, %v2026
      %v2028 = vpop.f32.mrb[0].mxu0
      %v2029 = vpop.f32.mrb[0].mxu0
      %v2030 = vadd.f32 %v1822, %v2029
      %v2031 = vpop.f32.mrb[0].mxu0
      %2032 = vmatprep.mubr.bf16.mxu0 0
      %2033 = vmatmul.mubr.bf16.gmra.mrb[0].mxu0 %v1888
      %v2034 = vpop.f32.mrb[0].mxu0
      %v2035 = vadd.f32 %v1822, %v2034
      %v2036 = vpop.f32.mrb[0].mxu0
      %v2037 = vpop.f32.mrb[0].mxu0
      %v2038 = vadd.f32 %v1822, %v2037
      %v2039 = vpop.f32.mrb[0].mxu0
      %2040 = vmatprep.mubr.bf16.mxu0 0
      %2041 = vmatmul.mubr.bf16.gmra.mrb[0].mxu0 %v1891
      %v2042 = vpop.f32.mrb[0].mxu0
      %v2043 = vadd.f32 %v1822, %v2042
      %v2044 = vpop.f32.mrb[0].mxu0
      %v2045 = vpop.f32.mrb[0].mxu0
      %v2046 = vadd.f32 %v1822, %v2045
      %v2047 = vpop.f32.mrb[0].mxu0
      %2048 = vmatprep.mubr.bf16.mxu0 0
      %2049 = vmatmul.mubr.bf16.gmra.mrb[0].mxu0 %v1894
      %v2050 = vpop.f32.mrb[0].mxu0
      %v2051 = vadd.f32 %v1822, %v2050
      %v2052 = vpop.f32.mrb[0].mxu0
      %v2053 = vpop.f32.mrb[0].mxu0
      %v2054 = vadd.f32 %v1822, %v2053
      %v2055 = vpop.f32.mrb[0].mxu0
      %2056 = vdwg.mxu0
      %v2057 = vpack.c.bf16 %v1934, %v1931
      %v2058 = vpack.c.bf16 %v1942, %v1939
      %v2059 = vpack.c.bf16 %v1950, %v1947
      %v2060 = vpack.c.bf16 %v1958, %v1955
      %v2061 = vpack.c.bf16 %v1966, %v1963
      %v2062 = vpack.c.bf16 %v1974, %v1971
      %v2063 = vpack.c.bf16 %v1982, %v1979
      %v2064 = vpack.c.bf16 %v1990, %v1987
      %v2065 = vpack.c.bf16 %v1998, %v1995
      %v2066 = vpack.c.bf16 %v2006, %v2003
      %v2067 = vpack.c.bf16 %v2014, %v2011
      %v2068 = vpack.c.bf16 %v2022, %v2019
      %v2069 = vpack.c.bf16 %v2030, %v2027
      %v2070 = vpack.c.bf16 %v2038, %v2035
      %v2071 = vpack.c.bf16 %v2046, %v2043
      %v2072 = vpack.c.bf16 %v2054, %v2051
      %s2073 = smul.addr %s1645, 8
      %s2074 = scalar_lea.vmem [#allocation2], %s2073
      %2075 = vst.msk [vmem:[%s2074] sm:$0xff] %vm326, %v2057
      %2076 = vst.msk [vmem:[%s2074 + $0x8] sm:$0xff] %vm326, %v2058
      %2077 = vst.msk [vmem:[%s2074 + $0x10] sm:$0xff] %vm326, %v2059
      %2078 = vst.msk [vmem:[%s2074 + $0x18] sm:$0xff] %vm326, %v2060
      %2079 = vst.msk [vmem:[%s2074 + $0x20] sm:$0xff] %vm326, %v2061
      %2080 = vst.msk [vmem:[%s2074 + $0x28] sm:$0xff] %vm326, %v2062
      %2081 = vst.msk [vmem:[%s2074 + $0x30] sm:$0xff] %vm326, %v2063
      %2082 = vst.msk [vmem:[%s2074 + $0x38] sm:$0xff] %vm326, %v2064
      %2083 = vst.msk [vmem:[%s2074 + $0x40] sm:$0xff] %vm326, %v2065
      %2084 = vst.msk [vmem:[%s2074 + $0x48] sm:$0xff] %vm326, %v2066
      %2085 = vst.msk [vmem:[%s2074 + $0x50] sm:$0xff] %vm326, %v2067
      %2086 = vst.msk [vmem:[%s2074 + $0x58] sm:$0xff] %vm326, %v2068
      %2087 = vst.msk [vmem:[%s2074 + $0x60] sm:$0xff] %vm326, %v2069
      %2088 = vst.msk [vmem:[%s2074 + $0x68] sm:$0xff] %vm326, %v2070
      %2089 = vst.msk [vmem:[%s2074 + $0x70] sm:$0xff] %vm326, %v2071
      %2090 = vst.msk [vmem:[%s2074 + $0x78] sm:$0xff] %vm326, %v2072
      %v2091 = vsel %vm326, %v1931, 0.0
      %v2092 = vsel %vm326, %v1934, 0.0
      %v2093 = vadd.f32 %v2091, %v2092
      %v2094 = vsel %vm326, %v1939, 0.0
      %v2095 = vadd.f32 %v2093, %v2094
      %v2096 = vsel %vm326, %v1942, 0.0
      %v2097 = vadd.f32 %v2095, %v2096
      %v2098 = vsel %vm326, %v1947, 0.0
      %v2099 = vadd.f32 %v2097, %v2098
      %v2100 = vsel %vm326, %v1950, 0.0
      %v2101 = vadd.f32 %v2099, %v2100
      %v2102 = vsel %vm326, %v1955, 0.0
      %v2103 = vadd.f32 %v2101, %v2102
      %v2104 = vsel %vm326, %v1958, 0.0
      %v2105 = vadd.f32 %v2103, %v2104
      %v2106 = vsel %vm326, %v1963, 0.0
      %v2107 = vadd.f32 %v2105, %v2106
      %v2108 = vsel %vm326, %v1966, 0.0
      %v2109 = vadd.f32 %v2107, %v2108
      %v2110 = vsel %vm326, %v1971, 0.0
      %v2111 = vadd.f32 %v2109, %v2110
      %v2112 = vsel %vm326, %v1974, 0.0
      %v2113 = vadd.f32 %v2111, %v2112
      %v2114 = vsel %vm326, %v1979, 0.0
      %v2115 = vadd.f32 %v2113, %v2114
      %v2116 = vsel %vm326, %v1982, 0.0
      %v2117 = vadd.f32 %v2115, %v2116
      %v2118 = vsel %vm326, %v1987, 0.0
      %v2119 = vadd.f32 %v2117, %v2118
      %v2120 = vsel %vm326, %v1990, 0.0
      %v2121 = vadd.f32 %v2119, %v2120
      %v2122 = vsel %vm326, %v1995, 0.0
      %v2123 = vadd.f32 %v2121, %v2122
      %v2124 = vsel %vm326, %v1998, 0.0
      %v2125 = vadd.f32 %v2123, %v2124
      %v2126 = vsel %vm326, %v2003, 0.0
      %v2127 = vadd.f32 %v2125, %v2126
      %v2128 = vsel %vm326, %v2006, 0.0
      %v2129 = vadd.f32 %v2127, %v2128
      %v2130 = vsel %vm326, %v2011, 0.0
      %v2131 = vadd.f32 %v2129, %v2130
      %v2132 = vsel %vm326, %v2014, 0.0
      %v2133 = vadd.f32 %v2131, %v2132
      %v2134 = vsel %vm326, %v2019, 0.0
      %v2135 = vadd.f32 %v2133, %v2134
      %v2136 = vsel %vm326, %v2022, 0.0
      %v2137 = vadd.f32 %v2135, %v2136
      %v2138 = vsel %vm326, %v2027, 0.0
      %v2139 = vadd.f32 %v2137, %v2138
      %v2140 = vsel %vm326, %v2030, 0.0
      %v2141 = vadd.f32 %v2139, %v2140
      %v2142 = vsel %vm326, %v2035, 0.0
      %v2143 = vadd.f32 %v2141, %v2142
      %v2144 = vsel %vm326, %v2038, 0.0
      %v2145 = vadd.f32 %v2143, %v2144
      %v2146 = vsel %vm326, %v2043, 0.0
      %v2147 = vadd.f32 %v2145, %v2146
      %v2148 = vsel %vm326, %v2046, 0.0
      %v2149 = vadd.f32 %v2147, %v2148
      %v2150 = vsel %vm326, %v2051, 0.0
      %v2151 = vadd.f32 %v2149, %v2150
      %v2152 = vsel %vm326, %v2054, 0.0
      %v2153 = vadd.f32 %v2151, %v2152
      %v2154 = vrot.slane %v2153, 4
      %v2155 = vadd.f32 %v2153, %v2154
      %v2156 = vrot.slane %v2155, 2
      %v2157 = vadd.f32 %v2155, %v2156
      %v2158 = vrot.slane %v2157, 1
      %v2159 = vadd.f32 %v2157, %v2158
      %v2160 = vadd.f32 %v1642, %v2159
      %v2161 = vmul.f32 %v1931, %v1931
      %v2162 = vmul.f32 %v1934, %v1934
      %v2163 = vmul.f32 %v1939, %v1939
      %v2164 = vmul.f32 %v1942, %v1942
      %v2165 = vmul.f32 %v1947, %v1947
      %v2166 = vmul.f32 %v1950, %v1950
      %v2167 = vmul.f32 %v1955, %v1955
      %v2168 = vmul.f32 %v1958, %v1958
      %v2169 = vmul.f32 %v1963, %v1963
      %v2170 = vmul.f32 %v1966, %v1966
      %v2171 = vmul.f32 %v1971, %v1971
      %v2172 = vmul.f32 %v1974, %v1974
      %v2173 = vmul.f32 %v1979, %v1979
      %v2174 = vmul.f32 %v1982, %v1982
      %v2175 = vmul.f32 %v1987, %v1987
      %v2176 = vmul.f32 %v1990, %v1990
      %v2177 = vmul.f32 %v1995, %v1995
      %v2178 = vmul.f32 %v1998, %v1998
      %v2179 = vmul.f32 %v2003, %v2003
      %v2180 = vmul.f32 %v2006, %v2006
      %v2181 = vmul.f32 %v2011, %v2011
      %v2182 = vmul.f32 %v2014, %v2014
      %v2183 = vmul.f32 %v2019, %v2019
      %v2184 = vmul.f32 %v2022, %v2022
      %v2185 = vmul.f32 %v2027, %v2027
      %v2186 = vmul.f32 %v2030, %v2030
      %v2187 = vmul.f32 %v2035, %v2035
      %v2188 = vmul.f32 %v2038, %v2038
      %v2189 = vmul.f32 %v2043, %v2043
      %v2190 = vmul.f32 %v2046, %v2046
      %v2191 = vmul.f32 %v2051, %v2051
      %v2192 = vmul.f32 %v2054, %v2054
      %v2193 = vsel %vm326, %v2161, 0.0
      %v2194 = vsel %vm326, %v2162, 0.0
      %v2195 = vadd.f32 %v2193, %v2194
      %v2196 = vsel %vm326, %v2163, 0.0
      %v2197 = vadd.f32 %v2195, %v2196
      %v2198 = vsel %vm326, %v2164, 0.0
      %v2199 = vadd.f32 %v2197, %v2198
      %v2200 = vsel %vm326, %v2165, 0.0
      %v2201 = vadd.f32 %v2199, %v2200
      %v2202 = vsel %vm326, %v2166, 0.0
      %v2203 = vadd.f32 %v2201, %v2202
      %v2204 = vsel %vm326, %v2167, 0.0
      %v2205 = vadd.f32 %v2203, %v2204
      %v2206 = vsel %vm326, %v2168, 0.0
      %v2207 = vadd.f32 %v2205, %v2206
      %v2208 = vsel %vm326, %v2169, 0.0
      %v2209 = vadd.f32 %v2207, %v2208
      %v2210 = vsel %vm326, %v2170, 0.0
      %v2211 = vadd.f32 %v2209, %v2210
      %v2212 = vsel %vm326, %v2171, 0.0
      %v2213 = vadd.f32 %v2211, %v2212
      %v2214 = vsel %vm326, %v2172, 0.0
      %v2215 = vadd.f32 %v2213, %v2214
      %v2216 = vsel %vm326, %v2173, 0.0
      %v2217 = vadd.f32 %v2215, %v2216
      %v2218 = vsel %vm326, %v2174, 0.0
      %v2219 = vadd.f32 %v2217, %v2218
      %v2220 = vsel %vm326, %v2175, 0.0
      %v2221 = vadd.f32 %v2219, %v2220
      %v2222 = vsel %vm326, %v2176, 0.0
      %v2223 = vadd.f32 %v2221, %v2222
      %v2224 = vsel %vm326, %v2177, 0.0
      %v2225 = vadd.f32 %v2223, %v2224
      %v2226 = vsel %vm326, %v2178, 0.0
      %v2227 = vadd.f32 %v2225, %v2226
      %v2228 = vsel %vm326, %v2179, 0.0
      %v2229 = vadd.f32 %v2227, %v2228
      %v2230 = vsel %vm326, %v2180, 0.0
      %v2231 = vadd.f32 %v2229, %v2230
      %v2232 = vsel %vm326, %v2181, 0.0
      %v2233 = vadd.f32 %v2231, %v2232
      %v2234 = vsel %vm326, %v2182, 0.0
      %v2235 = vadd.f32 %v2233, %v2234
      %v2236 = vsel %vm326, %v2183, 0.0
      %v2237 = vadd.f32 %v2235, %v2236
      %v2238 = vsel %vm326, %v2184, 0.0
      %v2239 = vadd.f32 %v2237, %v2238
      %v2240 = vsel %vm326, %v2185, 0.0
      %v2241 = vadd.f32 %v2239, %v2240
      %v2242 = vsel %vm326, %v2186, 0.0
      %v2243 = vadd.f32 %v2241, %v2242
      %v2244 = vsel %vm326, %v2187, 0.0
      %v2245 = vadd.f32 %v2243, %v2244
      %v2246 = vsel %vm326, %v2188, 0.0
      %v2247 = vadd.f32 %v2245, %v2246
      %v2248 = vsel %vm326, %v2189, 0.0
      %v2249 = vadd.f32 %v2247, %v2248
      %v2250 = vsel %vm326, %v2190, 0.0
      %v2251 = vadd.f32 %v2249, %v2250
      %v2252 = vsel %vm326, %v2191, 0.0
      %v2253 = vadd.f32 %v2251, %v2252
      %v2254 = vsel %vm326, %v2192, 0.0
      %v2255 = vadd.f32 %v2253, %v2254
      %v2256 = vrot.slane %v2255, 4
      %v2257 = vadd.f32 %v2255, %v2256
      %v2258 = vrot.slane %v2257, 2
      %v2259 = vadd.f32 %v2257, %v2258
      %v2260 = vrot.slane %v2259, 1
      %v2261 = vadd.f32 %v2259, %v2260
      %v2262 = vadd.f32 %v1643, %v2261
    $region57: #{pointnetfeat_v1.5} parent=1 // loop_footer
      %s1641 = sadd.s32 1, %s1637
    $region58: #{pointnetfeat_v1.5} parent=1 // loop_footer_branch
      %1636 = sbr.rel target = $region54
    $region59: #{pointnetfeat_v1.5} parent=1 // loop_exit
      _
    %v2263 = vmul.f32 %v1642, %v990
    %v2264 = vmul.f32 %v1643, %v990
    %v2265 = vmul.f32 %v2263, %v2263
    %v2266 = vsub.f32 %v2264, %v2265
    %v2267 = vmax.f32 %v2266, 0.0
    %v2268 = vadd.f32 %v2267, 1e-05
    %v2269 = vrsqrt.pop %v2268
    %v2270 = vsub.f32 0.0, %v2263
    %v2271 = vmul.f32 %v2270, %v2269
    loop: start=0, step=1, limit=2
    $region60: #{pointnetfeat_v1.5} parent=1 // loop_pre_header
      _
    $region61: #{pointnetfeat_v1.5} parent=1 // loop_header
      %s2273 = sphi 0, %s2277
      %p2274 = scmp.ge.s32.totalorder %s2273, 2
      %v2278 = vphi 0.0, %v2764
      %v2279 = vphi 0.0, %v2834
    $region62: #{pointnetfeat_v1.5} parent=1 // loop_header_branch
      %2276 = sbr.rel (%p2274) target = $region66
    $region63: #{pointnetfeat_v1.5} parent=1 // loop_body
      %s2280 = smul.u32 %s2273, 256
      %s2281 = sshra.s32 %s2280, 4
      %s2282 = sand.u32 %s2280, 15
      %s2283 = smul.addr %s2281, 8
      %s2284 = scalar_lea.vmem [#allocation2], %s2283
      %v2285 = vld [vmem:[%s2284] sm:$0xff]
      %v2286 = vld [vmem:[%s2284 + $0x8] sm:$0xff]
      %v2287 = vld [vmem:[%s2284 + $0x10] sm:$0xff]
      %v2288 = vld [vmem:[%s2284 + $0x18] sm:$0xff]
      %v2289 = vld [vmem:[%s2284 + $0x20] sm:$0xff]
      %v2290 = vld [vmem:[%s2284 + $0x28] sm:$0xff]
      %v2291 = vld [vmem:[%s2284 + $0x30] sm:$0xff]
      %v2292 = vld [vmem:[%s2284 + $0x38] sm:$0xff]
      %v2293 = vld [vmem:[%s2284 + $0x40] sm:$0xff]
      %v2294 = vld [vmem:[%s2284 + $0x48] sm:$0xff]
      %v2295 = vld [vmem:[%s2284 + $0x50] sm:$0xff]
      %v2296 = vld [vmem:[%s2284 + $0x58] sm:$0xff]
      %v2297 = vld [vmem:[%s2284 + $0x60] sm:$0xff]
      %v2298 = vld [vmem:[%s2284 + $0x68] sm:$0xff]
      %v2299 = vld [vmem:[%s2284 + $0x70] sm:$0xff]
      %v2300 = vld [vmem:[%s2284 + $0x78] sm:$0xff]
      %v2301 = vunpack.c.l.bf16 %v2285
      %v2302 = vunpack.c.h.bf16 %v2285
      %v2303 = vunpack.c.l.bf16 %v2286
      %v2304 = vunpack.c.h.bf16 %v2286
      %v2305 = vunpack.c.l.bf16 %v2287
      %v2306 = vunpack.c.h.bf16 %v2287
      %v2307 = vunpack.c.l.bf16 %v2288
      %v2308 = vunpack.c.h.bf16 %v2288
      %v2309 = vunpack.c.l.bf16 %v2289
      %v2310 = vunpack.c.h.bf16 %v2289
      %v2311 = vunpack.c.l.bf16 %v2290
      %v2312 = vunpack.c.h.bf16 %v2290
      %v2313 = vunpack.c.l.bf16 %v2291
      %v2314 = vunpack.c.h.bf16 %v2291
      %v2315 = vunpack.c.l.bf16 %v2292
      %v2316 = vunpack.c.h.bf16 %v2292
      %v2317 = vunpack.c.l.bf16 %v2293
      %v2318 = vunpack.c.h.bf16 %v2293
      %v2319 = vunpack.c.l.bf16 %v2294
      %v2320 = vunpack.c.h.bf16 %v2294
      %v2321 = vunpack.c.l.bf16 %v2295
      %v2322 = vunpack.c.h.bf16 %v2295
      %v2323 = vunpack.c.l.bf16 %v2296
      %v2324 = vunpack.c.h.bf16 %v2296
      %v2325 = vunpack.c.l.bf16 %v2297
      %v2326 = vunpack.c.h.bf16 %v2297
      %v2327 = vunpack.c.l.bf16 %v2298
      %v2328 = vunpack.c.h.bf16 %v2298
      %v2329 = vunpack.c.l.bf16 %v2299
      %v2330 = vunpack.c.h.bf16 %v2299
      %v2331 = vunpack.c.l.bf16 %v2300
      %v2332 = vunpack.c.h.bf16 %v2300
      %v2333 = vmul.f32 %v2301, %v2269
      %v2334 = vmul.f32 %v2302, %v2269
      %v2335 = vmul.f32 %v2303, %v2269
      %v2336 = vmul.f32 %v2304, %v2269
      %v2337 = vmul.f32 %v2305, %v2269
      %v2338 = vmul.f32 %v2306, %v2269
      %v2339 = vmul.f32 %v2307, %v2269
      %v2340 = vmul.f32 %v2308, %v2269
      %v2341 = vmul.f32 %v2309, %v2269
      %v2342 = vmul.f32 %v2310, %v2269
      %v2343 = vmul.f32 %v2311, %v2269
      %v2344 = vmul.f32 %v2312, %v2269
      %v2345 = vmul.f32 %v2313, %v2269
      %v2346 = vmul.f32 %v2314, %v2269
      %v2347 = vmul.f32 %v2315, %v2269
      %v2348 = vmul.f32 %v2316, %v2269
      %v2349 = vmul.f32 %v2317, %v2269
      %v2350 = vmul.f32 %v2318, %v2269
      %v2351 = vmul.f32 %v2319, %v2269
      %v2352 = vmul.f32 %v2320, %v2269
      %v2353 = vmul.f32 %v2321, %v2269
      %v2354 = vmul.f32 %v2322, %v2269
      %v2355 = vmul.f32 %v2323, %v2269
      %v2356 = vmul.f32 %v2324, %v2269
      %v2357 = vmul.f32 %v2325, %v2269
      %v2358 = vmul.f32 %v2326, %v2269
      %v2359 = vmul.f32 %v2327, %v2269
      %v2360 = vmul.f32 %v2328, %v2269
      %v2361 = vmul.f32 %v2329, %v2269
      %v2362 = vmul.f32 %v2330, %v2269
      %v2363 = vmul.f32 %v2331, %v2269
      %v2364 = vmul.f32 %v2332, %v2269
      %v2365 = vadd.f32 %v2333, %v2271
      %v2366 = vadd.f32 %v2334, %v2271
      %v2367 = vadd.f32 %v2335, %v2271
      %v2368 = vadd.f32 %v2336, %v2271
      %v2369 = vadd.f32 %v2337, %v2271
      %v2370 = vadd.f32 %v2338, %v2271
      %v2371 = vadd.f32 %v2339, %v2271
      %v2372 = vadd.f32 %v2340, %v2271
      %v2373 = vadd.f32 %v2341, %v2271
      %v2374 = vadd.f32 %v2342, %v2271
      %v2375 = vadd.f32 %v2343, %v2271
      %v2376 = vadd.f32 %v2344, %v2271
      %v2377 = vadd.f32 %v2345, %v2271
      %v2378 = vadd.f32 %v2346, %v2271
      %v2379 = vadd.f32 %v2347, %v2271
      %v2380 = vadd.f32 %v2348, %v2271
      %v2381 = vadd.f32 %v2349, %v2271
      %v2382 = vadd.f32 %v2350, %v2271
      %v2383 = vadd.f32 %v2351, %v2271
      %v2384 = vadd.f32 %v2352, %v2271
      %v2385 = vadd.f32 %v2353, %v2271
      %v2386 = vadd.f32 %v2354, %v2271
      %v2387 = vadd.f32 %v2355, %v2271
      %v2388 = vadd.f32 %v2356, %v2271
      %v2389 = vadd.f32 %v2357, %v2271
      %v2390 = vadd.f32 %v2358, %v2271
      %v2391 = vadd.f32 %v2359, %v2271
      %v2392 = vadd.f32 %v2360, %v2271
      %v2393 = vadd.f32 %v2361, %v2271
      %v2394 = vadd.f32 %v2362, %v2271
      %v2395 = vadd.f32 %v2363, %v2271
      %v2396 = vadd.f32 %v2364, %v2271
      %v2397 = vmax.f32 %v2365, 0.0
      %v2398 = vmax.f32 %v2366, 0.0
      %v2399 = vmax.f32 %v2367, 0.0
      %v2400 = vmax.f32 %v2368, 0.0
      %v2401 = vmax.f32 %v2369, 0.0
      %v2402 = vmax.f32 %v2370, 0.0
      %v2403 = vmax.f32 %v2371, 0.0
      %v2404 = vmax.f32 %v2372, 0.0
      %v2405 = vmax.f32 %v2373, 0.0
      %v2406 = vmax.f32 %v2374, 0.0
      %v2407 = vmax.f32 %v2375, 0.0
      %v2408 = vmax.f32 %v2376, 0.0
      %v2409 = vmax.f32 %v2377, 0.0
      %v2410 = vmax.f32 %v2378, 0.0
      %v2411 = vmax.f32 %v2379, 0.0
      %v2412 = vmax.f32 %v2380, 0.0
      %v2413 = vmax.f32 %v2381, 0.0
      %v2414 = vmax.f32 %v2382, 0.0
      %v2415 = vmax.f32 %v2383, 0.0
      %v2416 = vmax.f32 %v2384, 0.0
      %v2417 = vmax.f32 %v2385, 0.0
      %v2418 = vmax.f32 %v2386, 0.0
      %v2419 = vmax.f32 %v2387, 0.0
      %v2420 = vmax.f32 %v2388, 0.0
      %v2421 = vmax.f32 %v2389, 0.0
      %v2422 = vmax.f32 %v2390, 0.0
      %v2423 = vmax.f32 %v2391, 0.0
      %v2424 = vmax.f32 %v2392, 0.0
      %v2425 = vmax.f32 %v2393, 0.0
      %v2426 = vmax.f32 %v2394, 0.0
      %v2427 = vmax.f32 %v2395, 0.0
      %v2428 = vmax.f32 %v2396, 0.0
      %v2429 = vpack.c.bf16 %v2398, %v2397
      %v2430 = vpack.c.bf16 %v2400, %v2399
      %v2431 = vpack.c.bf16 %v2402, %v2401
      %v2432 = vpack.c.bf16 %v2404, %v2403
      %v2433 = vpack.c.bf16 %v2406, %v2405
      %v2434 = vpack.c.bf16 %v2408, %v2407
      %v2435 = vpack.c.bf16 %v2410, %v2409
      %v2436 = vpack.c.bf16 %v2412, %v2411
      %v2437 = vpack.c.bf16 %v2414, %v2413
      %v2438 = vpack.c.bf16 %v2416, %v2415
      %v2439 = vpack.c.bf16 %v2418, %v2417
      %v2440 = vpack.c.bf16 %v2420, %v2419
      %v2441 = vpack.c.bf16 %v2422, %v2421
      %v2442 = vpack.c.bf16 %v2424, %v2423
      %v2443 = vpack.c.bf16 %v2426, %v2425
      %v2444 = vpack.c.bf16 %v2428, %v2427
      %v2445 = vld [vmem:[%s7] sm:$0xf]
      %v2446 = vld [vmem:[%s7 + $0x4] sm:$0xf]
      %v2447 = vld [vmem:[%s7 + $0x8] sm:$0xf]
      %v2448 = vld [vmem:[%s7 + $0xc] sm:$0xf]
      %v2449 = vld [vmem:[%s7 + $0x10] sm:$0xf]
      %v2450 = vld [vmem:[%s7 + $0x14] sm:$0xf]
      %v2451 = vld [vmem:[%s7 + $0x18] sm:$0xf]
      %v2452 = vld [vmem:[%s7 + $0x1c] sm:$0xf]
      %v2453 = vld [vmem:[%s8] sm:$0x1]
      %v2455 = vlaneseq
      %v2456 = vshrl.u32 %v2455, 7
      %v2457 = vsub.s32 0, %v2456
      %v2458 = vrot.slane %v2453, %v2457
      %v2468 = vunpack.c.l.b16 %v2445
      %v2469 = vunpack.c.l.b16 %v2446
      %v2470 = vunpack.c.l.b16 %v2447
      %v2471 = vunpack.c.l.b16 %v2448
      %v2472 = vunpack.c.l.b16 %v2449
      %v2473 = vunpack.c.l.b16 %v2450
      %v2474 = vunpack.c.l.b16 %v2451
      %v2475 = vunpack.c.l.b16 %v2452
      %v2476 = vpack.c.b16 %v2469, %v2468
      %v2477 = vpack.c.b16 %v2471, %v2470
      %v2478 = vpack.c.b16 %v2473, %v2472
      %v2479 = vpack.c.b16 %v2475, %v2474
      %v2485 = vsel %vm326, %v2429, 0
      %v2488 = vsel %vm326, %v2430, 0
      %v2491 = vsel %vm326, %v2431, 0
      %v2494 = vsel %vm326, %v2432, 0
      %v2497 = vsel %vm326, %v2433, 0
      %v2500 = vsel %vm326, %v2434, 0
      %v2503 = vsel %vm326, %v2435, 0
      %v2506 = vsel %vm326, %v2436, 0
      %v2509 = vsel %vm326, %v2437, 0
      %v2512 = vsel %vm326, %v2438, 0
      %v2515 = vsel %vm326, %v2439, 0
      %v2518 = vsel %vm326, %v2440, 0
      %v2521 = vsel %vm326, %v2441, 0
      %v2524 = vsel %vm326, %v2442, 0
      %v2527 = vsel %vm326, %v2443, 0
      %v2530 = vsel %vm326, %v2444, 0
      %2532 = vmatprep.subr.bf16.mxu0 0
      %2533 = vmatpush1.bf16.msra.mxu0 %v2476
      %2534 = vmatprep.subr.bf16.mxu0 0
      %2535 = vmatpush1.bf16.msra.mxu0 %v2477
      %2536 = vmatprep.subr.bf16.mxu0 0
      %2537 = vmatpush1.bf16.msra.mxu0 %v2478
      %2538 = vmatprep.subr.bf16.mxu0 0
      %2539 = vmatpush1.bf16.msra.mxu0 %v2479
      %2540 = vmatprep.subr.bf16.mxu0 0
      %2541 = vmatpush1.bf16.msra.mxu0 0
      %2542 = vmatprep.subr.bf16.mxu0 0
      %2543 = vmatpush1.bf16.msra.mxu0 0
      %2544 = vmatprep.subr.bf16.mxu0 0
      %2545 = vmatpush1.bf16.msra.mxu0 0
      %2546 = vmatprep.subr.bf16.mxu0 0
      %2547 = vmatpush1.bf16.msra.mxu0 0
      %2548 = vmatprep.subr.bf16.mxu0 0
      %2549 = vmatpush1.bf16.msra.mxu0 0
      %2550 = vmatprep.subr.bf16.mxu0 0
      %2551 = vmatpush1.bf16.msra.mxu0 0
      %2552 = vmatprep.subr.bf16.mxu0 0
      %2553 = vmatpush1.bf16.msra.mxu0 0
      %2554 = vmatprep.subr.bf16.mxu0 0
      %2555 = vmatpush1.bf16.msra.mxu0 0
      %2556 = vmatprep.subr.bf16.mxu0 0
      %2557 = vmatpush1.bf16.msra.mxu0 0
      %2558 = vmatprep.subr.bf16.mxu0 0
      %2559 = vmatpush1.bf16.msra.mxu0 0
      %2560 = vmatprep.subr.bf16.mxu0 0
      %2561 = vmatpush1.bf16.msra.mxu0 0
      %2562 = vmatprep.subr.bf16.mxu0 0
      %2563 = vmatpush1.bf16.msra.mxu0 0
      %2564 = vmatprep.mubr.bf16.mxu0 0
      %2565 = vmatmul.mubr.bf16.gmra.mrb[0].mxu0 %v2485
      %v2566 = vpop.f32.mrb[0].mxu0
      %v2567 = vadd.f32 %v2458, %v2566
      %v2568 = vpop.f32.mrb[0].mxu0
      %v2569 = vpop.f32.mrb[0].mxu0
      %v2570 = vadd.f32 %v2458, %v2569
      %v2571 = vpop.f32.mrb[0].mxu0
      %2572 = vmatprep.mubr.bf16.mxu0 0
      %2573 = vmatmul.mubr.bf16.gmra.mrb[0].mxu0 %v2488
      %v2574 = vpop.f32.mrb[0].mxu0
      %v2575 = vadd.f32 %v2458, %v2574
      %v2576 = vpop.f32.mrb[0].mxu0
      %v2577 = vpop.f32.mrb[0].mxu0
      %v2578 = vadd.f32 %v2458, %v2577
      %v2579 = vpop.f32.mrb[0].mxu0
      %2580 = vmatprep.mubr.bf16.mxu0 0
      %2581 = vmatmul.mubr.bf16.gmra.mrb[0].mxu0 %v2491
      %v2582 = vpop.f32.mrb[0].mxu0
      %v2583 = vadd.f32 %v2458, %v2582
      %v2584 = vpop.f32.mrb[0].mxu0
      %v2585 = vpop.f32.mrb[0].mxu0
      %v2586 = vadd.f32 %v2458, %v2585
      %v2587 = vpop.f32.mrb[0].mxu0
      %2588 = vmatprep.mubr.bf16.mxu0 0
      %2589 = vmatmul.mubr.bf16.gmra.mrb[0].mxu0 %v2494
      %v2590 = vpop.f32.mrb[0].mxu0
      %v2591 = vadd.f32 %v2458, %v2590
      %v2592 = vpop.f32.mrb[0].mxu0
      %v2593 = vpop.f32.mrb[0].mxu0
      %v2594 = vadd.f32 %v2458, %v2593
      %v2595 = vpop.f32.mrb[0].mxu0
      %2596 = vmatprep.mubr.bf16.mxu0 0
      %2597 = vmatmul.mubr.bf16.gmra.mrb[0].mxu0 %v2497
      %v2598 = vpop.f32.mrb[0].mxu0
      %v2599 = vadd.f32 %v2458, %v2598
      %v2600 = vpop.f32.mrb[0].mxu0
      %v2601 = vpop.f32.mrb[0].mxu0
      %v2602 = vadd.f32 %v2458, %v2601
      %v2603 = vpop.f32.mrb[0].mxu0
      %2604 = vmatprep.mubr.bf16.mxu0 0
      %2605 = vmatmul.mubr.bf16.gmra.mrb[0].mxu0 %v2500
      %v2606 = vpop.f32.mrb[0].mxu0
      %v2607 = vadd.f32 %v2458, %v2606
      %v2608 = vpop.f32.mrb[0].mxu0
      %v2609 = vpop.f32.mrb[0].mxu0
      %v2610 = vadd.f32 %v2458, %v2609
      %v2611 = vpop.f32.mrb[0].mxu0
      %2612 = vmatprep.mubr.bf16.mxu0 0
      %2613 = vmatmul.mubr.bf16.gmra.mrb[0].mxu0 %v2503
      %v2614 = vpop.f32.mrb[0].mxu0
      %v2615 = vadd.f32 %v2458, %v2614
      %v2616 = vpop.f32.mrb[0].mxu0
      %v2617 = vpop.f32.mrb[0].mxu0
      %v2618 = vadd.f32 %v2458, %v2617
      %v2619 = vpop.f32.mrb[0].mxu0
      %2620 = vmatprep.mubr.bf16.mxu0 0
      %2621 = vmatmul.mubr.bf16.gmra.mrb[0].mxu0 %v2506
      %v2622 = vpop.f32.mrb[0].mxu0
      %v2623 = vadd.f32 %v2458, %v2622
      %v2624 = vpop.f32.mrb[0].mxu0
      %v2625 = vpop.f32.mrb[0].mxu0
      %v2626 = vadd.f32 %v2458, %v2625
      %v2627 = vpop.f32.mrb[0].mxu0
      %2628 = vmatprep.mubr.bf16.mxu0 0
      %2629 = vmatmul.mubr.bf16.gmra.mrb[0].mxu0 %v2509
      %v2630 = vpop.f32.mrb[0].mxu0
      %v2631 = vadd.f32 %v2458, %v2630
      %v2632 = vpop.f32.mrb[0].mxu0
      %v2633 = vpop.f32.mrb[0].mxu0
      %v2634 = vadd.f32 %v2458, %v2633
      %v2635 = vpop.f32.mrb[0].mxu0
      %2636 = vmatprep.mubr.bf16.mxu0 0
      %2637 = vmatmul.mubr.bf16.gmra.mrb[0].mxu0 %v2512
      %v2638 = vpop.f32.mrb[0].mxu0
      %v2639 = vadd.f32 %v2458, %v2638
      %v2640 = vpop.f32.mrb[0].mxu0
      %v2641 = vpop.f32.mrb[0].mxu0
      %v2642 = vadd.f32 %v2458, %v2641
      %v2643 = vpop.f32.mrb[0].mxu0
      %2644 = vmatprep.mubr.bf16.mxu0 0
      %2645 = vmatmul.mubr.bf16.gmra.mrb[0].mxu0 %v2515
      %v2646 = vpop.f32.mrb[0].mxu0
      %v2647 = vadd.f32 %v2458, %v2646
      %v2648 = vpop.f32.mrb[0].mxu0
      %v2649 = vpop.f32.mrb[0].mxu0
      %v2650 = vadd.f32 %v2458, %v2649
      %v2651 = vpop.f32.mrb[0].mxu0
      %2652 = vmatprep.mubr.bf16.mxu0 0
      %2653 = vmatmul.mubr.bf16.gmra.mrb[0].mxu0 %v2518
      %v2654 = vpop.f32.mrb[0].mxu0
      %v2655 = vadd.f32 %v2458, %v2654
      %v2656 = vpop.f32.mrb[0].mxu0
      %v2657 = vpop.f32.mrb[0].mxu0
      %v2658 = vadd.f32 %v2458, %v2657
      %v2659 = vpop.f32.mrb[0].mxu0
      %2660 = vmatprep.mubr.bf16.mxu0 0
      %2661 = vmatmul.mubr.bf16.gmra.mrb[0].mxu0 %v2521
      %v2662 = vpop.f32.mrb[0].mxu0
      %v2663 = vadd.f32 %v2458, %v2662
      %v2664 = vpop.f32.mrb[0].mxu0
      %v2665 = vpop.f32.mrb[0].mxu0
      %v2666 = vadd.f32 %v2458, %v2665
      %v2667 = vpop.f32.mrb[0].mxu0
      %2668 = vmatprep.mubr.bf16.mxu0 0
      %2669 = vmatmul.mubr.bf16.gmra.mrb[0].mxu0 %v2524
      %v2670 = vpop.f32.mrb[0].mxu0
      %v2671 = vadd.f32 %v2458, %v2670
      %v2672 = vpop.f32.mrb[0].mxu0
      %v2673 = vpop.f32.mrb[0].mxu0
      %v2674 = vadd.f32 %v2458, %v2673
      %v2675 = vpop.f32.mrb[0].mxu0
      %2676 = vmatprep.mubr.bf16.mxu0 0
      %2677 = vmatmul.mubr.bf16.gmra.mrb[0].mxu0 %v2527
      %v2678 = vpop.f32.mrb[0].mxu0
      %v2679 = vadd.f32 %v2458, %v2678
      %v2680 = vpop.f32.mrb[0].mxu0
      %v2681 = vpop.f32.mrb[0].mxu0
      %v2682 = vadd.f32 %v2458, %v2681
      %v2683 = vpop.f32.mrb[0].mxu0
      %2684 = vmatprep.mubr.bf16.mxu0 0
      %2685 = vmatmul.mubr.bf16.gmra.mrb[0].mxu0 %v2530
      %v2686 = vpop.f32.mrb[0].mxu0
      %v2687 = vadd.f32 %v2458, %v2686
      %v2688 = vpop.f32.mrb[0].mxu0
      %v2689 = vpop.f32.mrb[0].mxu0
      %v2690 = vadd.f32 %v2458, %v2689
      %v2691 = vpop.f32.mrb[0].mxu0
      %2692 = vdwg.mxu0
      %v2693 = vpack.c.bf16 %v2570, %v2567
      %v2694 = vpack.c.bf16 %v2578, %v2575
      %v2695 = vpack.c.bf16 %v2586, %v2583
      %v2696 = vpack.c.bf16 %v2594, %v2591
      %v2697 = vpack.c.bf16 %v2602, %v2599
      %v2698 = vpack.c.bf16 %v2610, %v2607
      %v2699 = vpack.c.bf16 %v2618, %v2615
      %v2700 = vpack.c.bf16 %v2626, %v2623
      %v2701 = vpack.c.bf16 %v2634, %v2631
      %v2702 = vpack.c.bf16 %v2642, %v2639
      %v2703 = vpack.c.bf16 %v2650, %v2647
      %v2704 = vpack.c.bf16 %v2658, %v2655
      %v2705 = vpack.c.bf16 %v2666, %v2663
      %v2706 = vpack.c.bf16 %v2674, %v2671
      %v2707 = vpack.c.bf16 %v2682, %v2679
      %v2708 = vpack.c.bf16 %v2690, %v2687
      %s2709 = smul.addr %s2281, 8
      %s2710 = scalar_lea.vmem [#allocation4], %s2709
      %2711 = vst [vmem:[%s2710] sm:$0xff] %v2693
      %2712 = vst [vmem:[%s2710 + $0x8] sm:$0xff] %v2694
      %2713 = vst [vmem:[%s2710 + $0x10] sm:$0xff] %v2695
      %2714 = vst [vmem:[%s2710 + $0x18] sm:$0xff] %v2696
      %2715 = vst [vmem:[%s2710 + $0x20] sm:$0xff] %v2697
      %2716 = vst [vmem:[%s2710 + $0x28] sm:$0xff] %v2698
      %2717 = vst [vmem:[%s2710 + $0x30] sm:$0xff] %v2699
      %2718 = vst [vmem:[%s2710 + $0x38] sm:$0xff] %v2700
      %2719 = vst [vmem:[%s2710 + $0x40] sm:$0xff] %v2701
      %2720 = vst [vmem:[%s2710 + $0x48] sm:$0xff] %v2702
      %2721 = vst [vmem:[%s2710 + $0x50] sm:$0xff] %v2703
      %2722 = vst [vmem:[%s2710 + $0x58] sm:$0xff] %v2704
      %2723 = vst [vmem:[%s2710 + $0x60] sm:$0xff] %v2705
      %2724 = vst [vmem:[%s2710 + $0x68] sm:$0xff] %v2706
      %2725 = vst [vmem:[%s2710 + $0x70] sm:$0xff] %v2707
      %2726 = vst [vmem:[%s2710 + $0x78] sm:$0xff] %v2708
      %v2727 = vadd.f32 %v2567, %v2570
      %v2728 = vadd.f32 %v2727, %v2575
      %v2729 = vadd.f32 %v2728, %v2578
      %v2730 = vadd.f32 %v2729, %v2583
      %v2731 = vadd.f32 %v2730, %v2586
      %v2732 = vadd.f32 %v2731, %v2591
      %v2733 = vadd.f32 %v2732, %v2594
      %v2734 = vadd.f32 %v2733, %v2599
      %v2735 = vadd.f32 %v2734, %v2602
      %v2736 = vadd.f32 %v2735, %v2607
      %v2737 = vadd.f32 %v2736, %v2610
      %v2738 = vadd.f32 %v2737, %v2615
      %v2739 = vadd.f32 %v2738, %v2618
      %v2740 = vadd.f32 %v2739, %v2623
      %v2741 = vadd.f32 %v2740, %v2626
      %v2742 = vadd.f32 %v2741, %v2631
      %v2743 = vadd.f32 %v2742, %v2634
      %v2744 = vadd.f32 %v2743, %v2639
      %v2745 = vadd.f32 %v2744, %v2642
      %v2746 = vadd.f32 %v2745, %v2647
      %v2747 = vadd.f32 %v2746, %v2650
      %v2748 = vadd.f32 %v2747, %v2655
      %v2749 = vadd.f32 %v2748, %v2658
      %v2750 = vadd.f32 %v2749, %v2663
      %v2751 = vadd.f32 %v2750, %v2666
      %v2752 = vadd.f32 %v2751, %v2671
      %v2753 = vadd.f32 %v2752, %v2674
      %v2754 = vadd.f32 %v2753, %v2679
      %v2755 = vadd.f32 %v2754, %v2682
      %v2756 = vadd.f32 %v2755, %v2687
      %v2757 = vadd.f32 %v2756, %v2690
      %v2758 = vrot.slane %v2757, 4
      %v2759 = vadd.f32 %v2757, %v2758
      %v2760 = vrot.slane %v2759, 2
      %v2761 = vadd.f32 %v2759, %v2760
      %v2762 = vrot.slane %v2761, 1
      %v2763 = vadd.f32 %v2761, %v2762
      %v2764 = vadd.f32 %v2278, %v2763
      %v2765 = vmul.f32 %v2567, %v2567
      %v2766 = vmul.f32 %v2570, %v2570
      %v2767 = vmul.f32 %v2575, %v2575
      %v2768 = vmul.f32 %v2578, %v2578
      %v2769 = vmul.f32 %v2583, %v2583
      %v2770 = vmul.f32 %v2586, %v2586
      %v2771 = vmul.f32 %v2591, %v2591
      %v2772 = vmul.f32 %v2594, %v2594
      %v2773 = vmul.f32 %v2599, %v2599
      %v2774 = vmul.f32 %v2602, %v2602
      %v2775 = vmul.f32 %v2607, %v2607
      %v2776 = vmul.f32 %v2610, %v2610
      %v2777 = vmul.f32 %v2615, %v2615
      %v2778 = vmul.f32 %v2618, %v2618
      %v2779 = vmul.f32 %v2623, %v2623
      %v2780 = vmul.f32 %v2626, %v2626
      %v2781 = vmul.f32 %v2631, %v2631
      %v2782 = vmul.f32 %v2634, %v2634
      %v2783 = vmul.f32 %v2639, %v2639
      %v2784 = vmul.f32 %v2642, %v2642
      %v2785 = vmul.f32 %v2647, %v2647
      %v2786 = vmul.f32 %v2650, %v2650
      %v2787 = vmul.f32 %v2655, %v2655
      %v2788 = vmul.f32 %v2658, %v2658
      %v2789 = vmul.f32 %v2663, %v2663
      %v2790 = vmul.f32 %v2666, %v2666
      %v2791 = vmul.f32 %v2671, %v2671
      %v2792 = vmul.f32 %v2674, %v2674
      %v2793 = vmul.f32 %v2679, %v2679
      %v2794 = vmul.f32 %v2682, %v2682
      %v2795 = vmul.f32 %v2687, %v2687
      %v2796 = vmul.f32 %v2690, %v2690
      %v2797 = vadd.f32 %v2765, %v2766
      %v2798 = vadd.f32 %v2797, %v2767
      %v2799 = vadd.f32 %v2798, %v2768
      %v2800 = vadd.f32 %v2799, %v2769
      %v2801 = vadd.f32 %v2800, %v2770
      %v2802 = vadd.f32 %v2801, %v2771
      %v2803 = vadd.f32 %v2802, %v2772
      %v2804 = vadd.f32 %v2803, %v2773
      %v2805 = vadd.f32 %v2804, %v2774
      %v2806 = vadd.f32 %v2805, %v2775
      %v2807 = vadd.f32 %v2806, %v2776
      %v2808 = vadd.f32 %v2807, %v2777
      %v2809 = vadd.f32 %v2808, %v2778
      %v2810 = vadd.f32 %v2809, %v2779
      %v2811 = vadd.f32 %v2810, %v2780
      %v2812 = vadd.f32 %v2811, %v2781
      %v2813 = vadd.f32 %v2812, %v2782
      %v2814 = vadd.f32 %v2813, %v2783
      %v2815 = vadd.f32 %v2814, %v2784
      %v2816 = vadd.f32 %v2815, %v2785
      %v2817 = vadd.f32 %v2816, %v2786
      %v2818 = vadd.f32 %v2817, %v2787
      %v2819 = vadd.f32 %v2818, %v2788
      %v2820 = vadd.f32 %v2819, %v2789
      %v2821 = vadd.f32 %v2820, %v2790
      %v2822 = vadd.f32 %v2821, %v2791
      %v2823 = vadd.f32 %v2822, %v2792
      %v2824 = vadd.f32 %v2823, %v2793
      %v2825 = vadd.f32 %v2824, %v2794
      %v2826 = vadd.f32 %v2825, %v2795
      %v2827 = vadd.f32 %v2826, %v2796
      %v2828 = vrot.slane %v2827, 4
      %v2829 = vadd.f32 %v2827, %v2828
      %v2830 = vrot.slane %v2829, 2
      %v2831 = vadd.f32 %v2829, %v2830
      %v2832 = vrot.slane %v2831, 1
      %v2833 = vadd.f32 %v2831, %v2832
      %v2834 = vadd.f32 %v2279, %v2833
    $region64: #{pointnetfeat_v1.5} parent=1 // loop_footer
      %s2277 = sadd.s32 1, %s2273
    $region65: #{pointnetfeat_v1.5} parent=1 // loop_footer_branch
      %2272 = sbr.rel target = $region61
    $region66: #{pointnetfeat_v1.5} parent=1 // loop_exit
      _
    %v2835 = vmul.f32 %v2278, %v990
    %v2836 = vmul.f32 %v2279, %v990
    %v2837 = vmul.f32 %v2835, %v2835
    %v2838 = vsub.f32 %v2836, %v2837
    %v2839 = vmax.f32 %v2838, 0.0
    %v2840 = vadd.f32 %v2839, 1e-05
    %v2841 = vrsqrt.pop %v2840
    %v2842 = vsub.f32 0.0, %v2835
    %v2843 = vmul.f32 %v2842, %v2841
    %v2844 = vld [vmem:[#allocation4] sm:$0xff]
    %v2845 = vld [vmem:[#allocation4 + $0x8] sm:$0xff]
    %v2846 = vld [vmem:[#allocation4 + $0x10] sm:$0xff]
    %v2847 = vld [vmem:[#allocation4 + $0x18] sm:$0xff]
    %v2848 = vld [vmem:[#allocation4 + $0x20] sm:$0xff]
    %v2849 = vld [vmem:[#allocation4 + $0x28] sm:$0xff]
    %v2850 = vld [vmem:[#allocation4 + $0x30] sm:$0xff]
    %v2851 = vld [vmem:[#allocation4 + $0x38] sm:$0xff]
    %v2852 = vld [vmem:[#allocation4 + $0x40] sm:$0xff]
    %v2853 = vld [vmem:[#allocation4 + $0x48] sm:$0xff]
    %v2854 = vld [vmem:[#allocation4 + $0x50] sm:$0xff]
    %v2855 = vld [vmem:[#allocation4 + $0x58] sm:$0xff]
    %v2856 = vld [vmem:[#allocation4 + $0x60] sm:$0xff]
    %v2857 = vld [vmem:[#allocation4 + $0x68] sm:$0xff]
    %v2858 = vld [vmem:[#allocation4 + $0x70] sm:$0xff]
    %v2859 = vld [vmem:[#allocation4 + $0x78] sm:$0xff]
    %v2860 = vunpack.c.l.bf16 %v2844
    %v2861 = vunpack.c.h.bf16 %v2844
    %v2862 = vunpack.c.l.bf16 %v2845
    %v2863 = vunpack.c.h.bf16 %v2845
    %v2864 = vunpack.c.l.bf16 %v2846
    %v2865 = vunpack.c.h.bf16 %v2846
    %v2866 = vunpack.c.l.bf16 %v2847
    %v2867 = vunpack.c.h.bf16 %v2847
    %v2868 = vunpack.c.l.bf16 %v2848
    %v2869 = vunpack.c.h.bf16 %v2848
    %v2870 = vunpack.c.l.bf16 %v2849
    %v2871 = vunpack.c.h.bf16 %v2849
    %v2872 = vunpack.c.l.bf16 %v2850
    %v2873 = vunpack.c.h.bf16 %v2850
    %v2874 = vunpack.c.l.bf16 %v2851
    %v2875 = vunpack.c.h.bf16 %v2851
    %v2876 = vunpack.c.l.bf16 %v2852
    %v2877 = vunpack.c.h.bf16 %v2852
    %v2878 = vunpack.c.l.bf16 %v2853
    %v2879 = vunpack.c.h.bf16 %v2853
    %v2880 = vunpack.c.l.bf16 %v2854
    %v2881 = vunpack.c.h.bf16 %v2854
    %v2882 = vunpack.c.l.bf16 %v2855
    %v2883 = vunpack.c.h.bf16 %v2855
    %v2884 = vunpack.c.l.bf16 %v2856
    %v2885 = vunpack.c.h.bf16 %v2856
    %v2886 = vunpack.c.l.bf16 %v2857
    %v2887 = vunpack.c.h.bf16 %v2857
    %v2888 = vunpack.c.l.bf16 %v2858
    %v2889 = vunpack.c.h.bf16 %v2858
    %v2890 = vunpack.c.l.bf16 %v2859
    %v2891 = vunpack.c.h.bf16 %v2859
    %v2892 = vmul.f32 %v2860, %v2841
    %v2893 = vmul.f32 %v2861, %v2841
    %v2894 = vmul.f32 %v2862, %v2841
    %v2895 = vmul.f32 %v2863, %v2841
    %v2896 = vmul.f32 %v2864, %v2841
    %v2897 = vmul.f32 %v2865, %v2841
    %v2898 = vmul.f32 %v2866, %v2841
    %v2899 = vmul.f32 %v2867, %v2841
    %v2900 = vmul.f32 %v2868, %v2841
    %v2901 = vmul.f32 %v2869, %v2841
    %v2902 = vmul.f32 %v2870, %v2841
    %v2903 = vmul.f32 %v2871, %v2841
    %v2904 = vmul.f32 %v2872, %v2841
    %v2905 = vmul.f32 %v2873, %v2841
    %v2906 = vmul.f32 %v2874, %v2841
    %v2907 = vmul.f32 %v2875, %v2841
    %v2908 = vmul.f32 %v2876, %v2841
    %v2909 = vmul.f32 %v2877, %v2841
    %v2910 = vmul.f32 %v2878, %v2841
    %v2911 = vmul.f32 %v2879, %v2841
    %v2912 = vmul.f32 %v2880, %v2841
    %v2913 = vmul.f32 %v2881, %v2841
    %v2914 = vmul.f32 %v2882, %v2841
    %v2915 = vmul.f32 %v2883, %v2841
    %v2916 = vmul.f32 %v2884, %v2841
    %v2917 = vmul.f32 %v2885, %v2841
    %v2918 = vmul.f32 %v2886, %v2841
    %v2919 = vmul.f32 %v2887, %v2841
    %v2920 = vmul.f32 %v2888, %v2841
    %v2921 = vmul.f32 %v2889, %v2841
    %v2922 = vmul.f32 %v2890, %v2841
    %v2923 = vmul.f32 %v2891, %v2841
    %v2924 = vadd.f32 %v2892, %v2843
    %v2925 = vadd.f32 %v2893, %v2843
    %v2926 = vadd.f32 %v2894, %v2843
    %v2927 = vadd.f32 %v2895, %v2843
    %v2928 = vadd.f32 %v2896, %v2843
    %v2929 = vadd.f32 %v2897, %v2843
    %v2930 = vadd.f32 %v2898, %v2843
    %v2931 = vadd.f32 %v2899, %v2843
    %v2932 = vadd.f32 %v2900, %v2843
    %v2933 = vadd.f32 %v2901, %v2843
    %v2934 = vadd.f32 %v2902, %v2843
    %v2935 = vadd.f32 %v2903, %v2843
    %v2936 = vadd.f32 %v2904, %v2843
    %v2937 = vadd.f32 %v2905, %v2843
    %v2938 = vadd.f32 %v2906, %v2843
    %v2939 = vadd.f32 %v2907, %v2843
    %v2940 = vadd.f32 %v2908, %v2843
    %v2941 = vadd.f32 %v2909, %v2843
    %v2942 = vadd.f32 %v2910, %v2843
    %v2943 = vadd.f32 %v2911, %v2843
    %v2944 = vadd.f32 %v2912, %v2843
    %v2945 = vadd.f32 %v2913, %v2843
    %v2946 = vadd.f32 %v2914, %v2843
    %v2947 = vadd.f32 %v2915, %v2843
    %v2948 = vadd.f32 %v2916, %v2843
    %v2949 = vadd.f32 %v2917, %v2843
    %v2950 = vadd.f32 %v2918, %v2843
    %v2951 = vadd.f32 %v2919, %v2843
    %v2952 = vadd.f32 %v2920, %v2843
    %v2953 = vadd.f32 %v2921, %v2843
    %v2954 = vadd.f32 %v2922, %v2843
    %v2955 = vadd.f32 %v2923, %v2843
    %v2956 = vmax.f32 %v2924, 0.0
    %v2957 = vmax.f32 %v2925, 0.0
    %v2958 = vmax.f32 %v2926, 0.0
    %v2959 = vmax.f32 %v2927, 0.0
    %v2960 = vmax.f32 %v2928, 0.0
    %v2961 = vmax.f32 %v2929, 0.0
    %v2962 = vmax.f32 %v2930, 0.0
    %v2963 = vmax.f32 %v2931, 0.0
    %v2964 = vmax.f32 %v2932, 0.0
    %v2965 = vmax.f32 %v2933, 0.0
    %v2966 = vmax.f32 %v2934, 0.0
    %v2967 = vmax.f32 %v2935, 0.0
    %v2968 = vmax.f32 %v2936, 0.0
    %v2969 = vmax.f32 %v2937, 0.0
    %v2970 = vmax.f32 %v2938, 0.0
    %v2971 = vmax.f32 %v2939, 0.0
    %v2972 = vmax.f32 %v2940, 0.0
    %v2973 = vmax.f32 %v2941, 0.0
    %v2974 = vmax.f32 %v2942, 0.0
    %v2975 = vmax.f32 %v2943, 0.0
    %v2976 = vmax.f32 %v2944, 0.0
    %v2977 = vmax.f32 %v2945, 0.0
    %v2978 = vmax.f32 %v2946, 0.0
    %v2979 = vmax.f32 %v2947, 0.0
    %v2980 = vmax.f32 %v2948, 0.0
    %v2981 = vmax.f32 %v2949, 0.0
    %v2982 = vmax.f32 %v2950, 0.0
    %v2983 = vmax.f32 %v2951, 0.0
    %v2984 = vmax.f32 %v2952, 0.0
    %v2985 = vmax.f32 %v2953, 0.0
    %v2986 = vmax.f32 %v2954, 0.0
    %v2987 = vmax.f32 %v2955, 0.0
    %v2988 = vpack.c.bf16 %v2957, %v2956
    %v2989 = vpack.c.bf16 %v2959, %v2958
    %v2990 = vpack.c.bf16 %v2961, %v2960
    %v2991 = vpack.c.bf16 %v2963, %v2962
    %v2992 = vpack.c.bf16 %v2965, %v2964
    %v2993 = vpack.c.bf16 %v2967, %v2966
    %v2994 = vpack.c.bf16 %v2969, %v2968
    %v2995 = vpack.c.bf16 %v2971, %v2970
    %v2996 = vpack.c.bf16 %v2973, %v2972
    %v2997 = vpack.c.bf16 %v2975, %v2974
    %v2998 = vpack.c.bf16 %v2977, %v2976
    %v2999 = vpack.c.bf16 %v2979, %v2978
    %v3000 = vpack.c.bf16 %v2981, %v2980
    %v3001 = vpack.c.bf16 %v2983, %v2982
    %v3002 = vpack.c.bf16 %v2985, %v2984
    %v3003 = vpack.c.bf16 %v2987, %v2986
    %v3004 = vld [vmem:[%s9] sm:$0xff]
    %v3005 = vld [vmem:[%s9 + $0x8] sm:$0xff]
    %v3006 = vld [vmem:[%s9 + $0x10] sm:$0xff]
    %v3007 = vld [vmem:[%s9 + $0x18] sm:$0xff]
    %v3008 = vld [vmem:[%s9 + $0x20] sm:$0xff]
    %v3009 = vld [vmem:[%s9 + $0x28] sm:$0xff]
    %v3010 = vld [vmem:[%s9 + $0x30] sm:$0xff]
    %v3011 = vld [vmem:[%s9 + $0x38] sm:$0xff]
    %v3012 = vld [vmem:[%s9 + $0x40] sm:$0xff]
    %v3013 = vld [vmem:[%s9 + $0x48] sm:$0xff]
    %v3014 = vld [vmem:[%s9 + $0x50] sm:$0xff]
    %v3015 = vld [vmem:[%s9 + $0x58] sm:$0xff]
    %v3016 = vld [vmem:[%s9 + $0x60] sm:$0xff]
    %v3017 = vld [vmem:[%s9 + $0x68] sm:$0xff]
    %v3018 = vld [vmem:[%s9 + $0x70] sm:$0xff]
    %v3019 = vld [vmem:[%s9 + $0x78] sm:$0xff]
    %v3020 = vld [vmem:[%s10] sm:$0x3]
    %v3022 = vlaneseq
    %v3023 = vshrl.u32 %v3022, 7
    %v3024 = vsub.s32 0, %v3023
    %v3025 = vrot.slane %v3020, %v3024
    %v3026 = vlaneseq
    %v3027 = vshrl.u32 %v3026, 7
    %v3028 = vsub.s32 1, %v3027
    %v3029 = vrot.slane %v3020, %v3028
    %v3048 = vunpack.c.l.b16 %v3004
    %v3049 = vunpack.c.h.b16 %v3004
    %v3050 = vunpack.c.l.b16 %v3005
    %v3051 = vunpack.c.h.b16 %v3005
    %v3052 = vunpack.c.l.b16 %v3006
    %v3053 = vunpack.c.h.b16 %v3006
    %v3054 = vunpack.c.l.b16 %v3007
    %v3055 = vunpack.c.h.b16 %v3007
    %v3056 = vunpack.c.l.b16 %v3008
    %v3057 = vunpack.c.h.b16 %v3008
    %v3058 = vunpack.c.l.b16 %v3009
    %v3059 = vunpack.c.h.b16 %v3009
    %v3060 = vunpack.c.l.b16 %v3010
    %v3061 = vunpack.c.h.b16 %v3010
    %v3062 = vunpack.c.l.b16 %v3011
    %v3063 = vunpack.c.h.b16 %v3011
    %v3064 = vunpack.c.l.b16 %v3012
    %v3065 = vunpack.c.h.b16 %v3012
    %v3066 = vunpack.c.l.b16 %v3013
    %v3067 = vunpack.c.h.b16 %v3013
    %v3068 = vunpack.c.l.b16 %v3014
    %v3069 = vunpack.c.h.b16 %v3014
    %v3070 = vunpack.c.l.b16 %v3015
    %v3071 = vunpack.c.h.b16 %v3015
    %v3072 = vunpack.c.l.b16 %v3016
    %v3073 = vunpack.c.h.b16 %v3016
    %v3074 = vunpack.c.l.b16 %v3017
    %v3075 = vunpack.c.h.b16 %v3017
    %v3076 = vunpack.c.l.b16 %v3018
    %v3077 = vunpack.c.h.b16 %v3018
    %v3078 = vunpack.c.l.b16 %v3019
    %v3079 = vunpack.c.h.b16 %v3019
    %v3080 = vpack.c.b16 %v3050, %v3048
    %v3081 = vpack.c.b16 %v3051, %v3049
    %v3082 = vpack.c.b16 %v3054, %v3052
    %v3083 = vpack.c.b16 %v3055, %v3053
    %v3084 = vpack.c.b16 %v3058, %v3056
    %v3085 = vpack.c.b16 %v3059, %v3057
    %v3086 = vpack.c.b16 %v3062, %v3060
    %v3087 = vpack.c.b16 %v3063, %v3061
    %v3088 = vpack.c.b16 %v3066, %v3064
    %v3089 = vpack.c.b16 %v3067, %v3065
    %v3090 = vpack.c.b16 %v3070, %v3068
    %v3091 = vpack.c.b16 %v3071, %v3069
    %v3092 = vpack.c.b16 %v3074, %v3072
    %v3093 = vpack.c.b16 %v3075, %v3073
    %v3094 = vpack.c.b16 %v3078, %v3076
    %v3095 = vpack.c.b16 %v3079, %v3077
    %3112 = vmatprep.subr.bf16.mxu0 %v3081
    %3113 = vmatpush1.bf16.msra.mxu0 %v3080
    %3114 = vmatprep.subr.bf16.mxu0 %v3083
    %3115 = vmatpush1.bf16.msra.mxu0 %v3082
    %3116 = vmatprep.subr.bf16.mxu0 %v3085
    %3117 = vmatpush1.bf16.msra.mxu0 %v3084
    %3118 = vmatprep.subr.bf16.mxu0 %v3087
    %3119 = vmatpush1.bf16.msra.mxu0 %v3086
    %3120 = vmatprep.subr.bf16.mxu0 %v3089
    %3121 = vmatpush1.bf16.msra.mxu0 %v3088
    %3122 = vmatprep.subr.bf16.mxu0 %v3091
    %3123 = vmatpush1.bf16.msra.mxu0 %v3090
    %3124 = vmatprep.subr.bf16.mxu0 %v3093
    %3125 = vmatpush1.bf16.msra.mxu0 %v3092
    %3126 = vmatprep.subr.bf16.mxu0 %v3095
    %3127 = vmatpush1.bf16.msra.mxu0 %v3094
    %3128 = vmatprep.subr.bf16.mxu0 0
    %3129 = vmatpush1.bf16.msra.mxu0 0
    %3130 = vmatprep.subr.bf16.mxu0 0
    %3131 = vmatpush1.bf16.msra.mxu0 0
    %3132 = vmatprep.subr.bf16.mxu0 0
    %3133 = vmatpush1.bf16.msra.mxu0 0
    %3134 = vmatprep.subr.bf16.mxu0 0
    %3135 = vmatpush1.bf16.msra.mxu0 0
    %3136 = vmatprep.subr.bf16.mxu0 0
    %3137 = vmatpush1.bf16.msra.mxu0 0
    %3138 = vmatprep.subr.bf16.mxu0 0
    %3139 = vmatpush1.bf16.msra.mxu0 0
    %3140 = vmatprep.subr.bf16.mxu0 0
    %3141 = vmatpush1.bf16.msra.mxu0 0
    %3142 = vmatprep.subr.bf16.mxu0 0
    %3143 = vmatpush1.bf16.msra.mxu0 0
    %3144 = vmatprep.mubr.bf16.mxu0 0
    %3145 = vmatmul.mubr.bf16.gmra.mrb[0].mxu0 %v2988
    %v3146 = vpop.f32.mrb[0].mxu0
    %v3147 = vadd.f32 %v3025, %v3146
    %v3148 = vpop.f32.mrb[0].mxu0
    %v3149 = vadd.f32 %v3029, %v3148
    %v3150 = vpop.f32.mrb[0].mxu0
    %v3151 = vadd.f32 %v3025, %v3150
    %v3152 = vpop.f32.mrb[0].mxu0
    %v3153 = vadd.f32 %v3029, %v3152
    %3154 = vmatprep.mubr.bf16.mxu0 0
    %3155 = vmatmul.mubr.bf16.gmra.mrb[0].mxu0 %v2989
    %v3156 = vpop.f32.mrb[0].mxu0
    %v3157 = vadd.f32 %v3025, %v3156
    %v3158 = vpop.f32.mrb[0].mxu0
    %v3159 = vadd.f32 %v3029, %v3158
    %v3160 = vpop.f32.mrb[0].mxu0
    %v3161 = vadd.f32 %v3025, %v3160
    %v3162 = vpop.f32.mrb[0].mxu0
    %v3163 = vadd.f32 %v3029, %v3162
    %3164 = vmatprep.mubr.bf16.mxu0 0
    %3165 = vmatmul.mubr.bf16.gmra.mrb[0].mxu0 %v2990
    %v3166 = vpop.f32.mrb[0].mxu0
    %v3167 = vadd.f32 %v3025, %v3166
    %v3168 = vpop.f32.mrb[0].mxu0
    %v3169 = vadd.f32 %v3029, %v3168
    %v3170 = vpop.f32.mrb[0].mxu0
    %v3171 = vadd.f32 %v3025, %v3170
    %v3172 = vpop.f32.mrb[0].mxu0
    %v3173 = vadd.f32 %v3029, %v3172
    %3174 = vmatprep.mubr.bf16.mxu0 0
    %3175 = vmatmul.mubr.bf16.gmra.mrb[0].mxu0 %v2991
    %v3176 = vpop.f32.mrb[0].mxu0
    %v3177 = vadd.f32 %v3025, %v3176
    %v3178 = vpop.f32.mrb[0].mxu0
    %v3179 = vadd.f32 %v3029, %v3178
    %v3180 = vpop.f32.mrb[0].mxu0
    %v3181 = vadd.f32 %v3025, %v3180
    %v3182 = vpop.f32.mrb[0].mxu0
    %v3183 = vadd.f32 %v3029, %v3182
    %3184 = vmatprep.mubr.bf16.mxu0 0
    %3185 = vmatmul.mubr.bf16.gmra.mrb[0].mxu0 %v2992
    %v3186 = vpop.f32.mrb[0].mxu0
    %v3187 = vadd.f32 %v3025, %v3186
    %v3188 = vpop.f32.mrb[0].mxu0
    %v3189 = vadd.f32 %v3029, %v3188
    %v3190 = vpop.f32.mrb[0].mxu0
    %v3191 = vadd.f32 %v3025, %v3190
    %v3192 = vpop.f32.mrb[0].mxu0
    %v3193 = vadd.f32 %v3029, %v3192
    %3194 = vmatprep.mubr.bf16.mxu0 0
    %3195 = vmatmul.mubr.bf16.gmra.mrb[0].mxu0 %v2993
    %v3196 = vpop.f32.mrb[0].mxu0
    %v3197 = vadd.f32 %v3025, %v3196
    %v3198 = vpop.f32.mrb[0].mxu0
    %v3199 = vadd.f32 %v3029, %v3198
    %v3200 = vpop.f32.mrb[0].mxu0
    %v3201 = vadd.f32 %v3025, %v3200
    %v3202 = vpop.f32.mrb[0].mxu0
    %v3203 = vadd.f32 %v3029, %v3202
    %3204 = vmatprep.mubr.bf16.mxu0 0
    %3205 = vmatmul.mubr.bf16.gmra.mrb[0].mxu0 %v2994
    %v3206 = vpop.f32.mrb[0].mxu0
    %v3207 = vadd.f32 %v3025, %v3206
    %v3208 = vpop.f32.mrb[0].mxu0
    %v3209 = vadd.f32 %v3029, %v3208
    %v3210 = vpop.f32.mrb[0].mxu0
    %v3211 = vadd.f32 %v3025, %v3210
    %v3212 = vpop.f32.mrb[0].mxu0
    %v3213 = vadd.f32 %v3029, %v3212
    %3214 = vmatprep.mubr.bf16.mxu0 0
    %3215 = vmatmul.mubr.bf16.gmra.mrb[0].mxu0 %v2995
    %v3216 = vpop.f32.mrb[0].mxu0
    %v3217 = vadd.f32 %v3025, %v3216
    %v3218 = vpop.f32.mrb[0].mxu0
    %v3219 = vadd.f32 %v3029, %v3218
    %v3220 = vpop.f32.mrb[0].mxu0
    %v3221 = vadd.f32 %v3025, %v3220
    %v3222 = vpop.f32.mrb[0].mxu0
    %v3223 = vadd.f32 %v3029, %v3222
    %3224 = vmatprep.mubr.bf16.mxu0 0
    %3225 = vmatmul.mubr.bf16.gmra.mrb[0].mxu0 %v2996
    %v3226 = vpop.f32.mrb[0].mxu0
    %v3227 = vadd.f32 %v3025, %v3226
    %v3228 = vpop.f32.mrb[0].mxu0
    %v3229 = vadd.f32 %v3029, %v3228
    %v3230 = vpop.f32.mrb[0].mxu0
    %v3231 = vadd.f32 %v3025, %v3230
    %v3232 = vpop.f32.mrb[0].mxu0
    %v3233 = vadd.f32 %v3029, %v3232
    %3234 = vmatprep.mubr.bf16.mxu0 0
    %3235 = vmatmul.mubr.bf16.gmra.mrb[0].mxu0 %v2997
    %v3236 = vpop.f32.mrb[0].mxu0
    %v3237 = vadd.f32 %v3025, %v3236
    %v3238 = vpop.f32.mrb[0].mxu0
    %v3239 = vadd.f32 %v3029, %v3238
    %v3240 = vpop.f32.mrb[0].mxu0
    %v3241 = vadd.f32 %v3025, %v3240
    %v3242 = vpop.f32.mrb[0].mxu0
    %v3243 = vadd.f32 %v3029, %v3242
    %3244 = vmatprep.mubr.bf16.mxu0 0
    %3245 = vmatmul.mubr.bf16.gmra.mrb[0].mxu0 %v2998
    %v3246 = vpop.f32.mrb[0].mxu0
    %v3247 = vadd.f32 %v3025, %v3246
    %v3248 = vpop.f32.mrb[0].mxu0
    %v3249 = vadd.f32 %v3029, %v3248
    %v3250 = vpop.f32.mrb[0].mxu0
    %v3251 = vadd.f32 %v3025, %v3250
    %v3252 = vpop.f32.mrb[0].mxu0
    %v3253 = vadd.f32 %v3029, %v3252
    %3254 = vmatprep.mubr.bf16.mxu0 0
    %3255 = vmatmul.mubr.bf16.gmra.mrb[0].mxu0 %v2999
    %v3256 = vpop.f32.mrb[0].mxu0
    %v3257 = vadd.f32 %v3025, %v3256
    %v3258 = vpop.f32.mrb[0].mxu0
    %v3259 = vadd.f32 %v3029, %v3258
    %v3260 = vpop.f32.mrb[0].mxu0
    %v3261 = vadd.f32 %v3025, %v3260
    %v3262 = vpop.f32.mrb[0].mxu0
    %v3263 = vadd.f32 %v3029, %v3262
    %3264 = vmatprep.mubr.bf16.mxu0 0
    %3265 = vmatmul.mubr.bf16.gmra.mrb[0].mxu0 %v3000
    %v3266 = vpop.f32.mrb[0].mxu0
    %v3267 = vadd.f32 %v3025, %v3266
    %v3268 = vpop.f32.mrb[0].mxu0
    %v3269 = vadd.f32 %v3029, %v3268
    %v3270 = vpop.f32.mrb[0].mxu0
    %v3271 = vadd.f32 %v3025, %v3270
    %v3272 = vpop.f32.mrb[0].mxu0
    %v3273 = vadd.f32 %v3029, %v3272
    %3274 = vmatprep.mubr.bf16.mxu0 0
    %3275 = vmatmul.mubr.bf16.gmra.mrb[0].mxu0 %v3001
    %v3276 = vpop.f32.mrb[0].mxu0
    %v3277 = vadd.f32 %v3025, %v3276
    %v3278 = vpop.f32.mrb[0].mxu0
    %v3279 = vadd.f32 %v3029, %v3278
    %v3280 = vpop.f32.mrb[0].mxu0
    %v3281 = vadd.f32 %v3025, %v3280
    %v3282 = vpop.f32.mrb[0].mxu0
    %v3283 = vadd.f32 %v3029, %v3282
    %3284 = vmatprep.mubr.bf16.mxu0 0
    %3285 = vmatmul.mubr.bf16.gmra.mrb[0].mxu0 %v3002
    %v3286 = vpop.f32.mrb[0].mxu0
    %v3287 = vadd.f32 %v3025, %v3286
    %v3288 = vpop.f32.mrb[0].mxu0
    %v3289 = vadd.f32 %v3029, %v3288
    %v3290 = vpop.f32.mrb[0].mxu0
    %v3291 = vadd.f32 %v3025, %v3290
    %v3292 = vpop.f32.mrb[0].mxu0
    %v3293 = vadd.f32 %v3029, %v3292
    %3294 = vmatprep.mubr.bf16.mxu0 0
    %3295 = vmatmul.mubr.bf16.gmra.mrb[0].mxu0 %v3003
    %v3296 = vpop.f32.mrb[0].mxu0
    %v3297 = vadd.f32 %v3025, %v3296
    %v3298 = vpop.f32.mrb[0].mxu0
    %v3299 = vadd.f32 %v3029, %v3298
    %v3300 = vpop.f32.mrb[0].mxu0
    %v3301 = vadd.f32 %v3025, %v3300
    %v3302 = vpop.f32.mrb[0].mxu0
    %v3303 = vadd.f32 %v3029, %v3302
    %3304 = vdwg.mxu0
    %v3305 = vadd.f32 %v3147, %v3151
    %v3306 = vadd.f32 %v3305, %v3157
    %v3307 = vadd.f32 %v3306, %v3161
    %v3308 = vadd.f32 %v3307, %v3167
    %v3309 = vadd.f32 %v3308, %v3171
    %v3310 = vadd.f32 %v3309, %v3177
    %v3311 = vadd.f32 %v3310, %v3181
    %v3312 = vadd.f32 %v3311, %v3187
    %v3313 = vadd.f32 %v3312, %v3191
    %v3314 = vadd.f32 %v3313, %v3197
    %v3315 = vadd.f32 %v3314, %v3201
    %v3316 = vadd.f32 %v3315, %v3207
    %v3317 = vadd.f32 %v3316, %v3211
    %v3318 = vadd.f32 %v3317, %v3217
    %v3319 = vadd.f32 %v3318, %v3221
    %v3320 = vadd.f32 %v3319, %v3227
    %v3321 = vadd.f32 %v3320, %v3231
    %v3322 = vadd.f32 %v3321, %v3237
    %v3323 = vadd.f32 %v3322, %v3241
    %v3324 = vadd.f32 %v3323, %v3247
    %v3325 = vadd.f32 %v3324, %v3251
    %v3326 = vadd.f32 %v3325, %v3257
    %v3327 = vadd.f32 %v3326, %v3261
    %v3328 = vadd.f32 %v3327, %v3267
    %v3329 = vadd.f32 %v3328, %v3271
    %v3330 = vadd.f32 %v3329, %v3277
    %v3331 = vadd.f32 %v3330, %v3281
    %v3332 = vadd.f32 %v3331, %v3287
    %v3333 = vadd.f32 %v3332, %v3291
    %v3334 = vadd.f32 %v3333, %v3297
    %v3335 = vadd.f32 %v3334, %v3301
    %v3336 = vrot.slane %v3335, 4
    %v3337 = vadd.f32 %v3335, %v3336
    %v3338 = vrot.slane %v3337, 2
    %v3339 = vadd.f32 %v3337, %v3338
    %v3340 = vrot.slane %v3339, 1
    %v3341 = vadd.f32 %v3339, %v3340
    %v3342 = vadd.f32 %v3149, %v3153
    %v3343 = vadd.f32 %v3342, %v3159
    %v3344 = vadd.f32 %v3343, %v3163
    %v3345 = vadd.f32 %v3344, %v3169
    %v3346 = vadd.f32 %v3345, %v3173
    %v3347 = vadd.f32 %v3346, %v3179
    %v3348 = vadd.f32 %v3347, %v3183
    %v3349 = vadd.f32 %v3348, %v3189
    %v3350 = vadd.f32 %v3349, %v3193
    %v3351 = vadd.f32 %v3350, %v3199
    %v3352 = vadd.f32 %v3351, %v3203
    %v3353 = vadd.f32 %v3352, %v3209
    %v3354 = vadd.f32 %v3353, %v3213
    %v3355 = vadd.f32 %v3354, %v3219
    %v3356 = vadd.f32 %v3355, %v3223
    %v3357 = vadd.f32 %v3356, %v3229
    %v3358 = vadd.f32 %v3357, %v3233
    %v3359 = vadd.f32 %v3358, %v3239
    %v3360 = vadd.f32 %v3359, %v3243
    %v3361 = vadd.f32 %v3360, %v3249
    %v3362 = vadd.f32 %v3361, %v3253
    %v3363 = vadd.f32 %v3362, %v3259
    %v3364 = vadd.f32 %v3363, %v3263
    %v3365 = vadd.f32 %v3364, %v3269
    %v3366 = vadd.f32 %v3365, %v3273
    %v3367 = vadd.f32 %v3366, %v3279
    %v3368 = vadd.f32 %v3367, %v3283
    %v3369 = vadd.f32 %v3368, %v3289
    %v3370 = vadd.f32 %v3369, %v3293
    %v3371 = vadd.f32 %v3370, %v3299
    %v3372 = vadd.f32 %v3371, %v3303
    %v3373 = vrot.slane %v3372, 4
    %v3374 = vadd.f32 %v3372, %v3373
    %v3375 = vrot.slane %v3374, 2
    %v3376 = vadd.f32 %v3374, %v3375
    %v3377 = vrot.slane %v3376, 1
    %v3378 = vadd.f32 %v3376, %v3377
    %v3379 = vadd.f32 %v3341, 0.0
    %v3380 = vadd.f32 %v3378, 0.0
    %v3381 = vmul.f32 %v3147, %v3147
    %v3382 = vmul.f32 %v3149, %v3149
    %v3383 = vmul.f32 %v3151, %v3151
    %v3384 = vmul.f32 %v3153, %v3153
    %v3385 = vmul.f32 %v3157, %v3157
    %v3386 = vmul.f32 %v3159, %v3159
    %v3387 = vmul.f32 %v3161, %v3161
    %v3388 = vmul.f32 %v3163, %v3163
    %v3389 = vmul.f32 %v3167, %v3167
    %v3390 = vmul.f32 %v3169, %v3169
    %v3391 = vmul.f32 %v3171, %v3171
    %v3392 = vmul.f32 %v3173, %v3173
    %v3393 = vmul.f32 %v3177, %v3177
    %v3394 = vmul.f32 %v3179, %v3179
    %v3395 = vmul.f32 %v3181, %v3181
    %v3396 = vmul.f32 %v3183, %v3183
    %v3397 = vmul.f32 %v3187, %v3187
    %v3398 = vmul.f32 %v3189, %v3189
    %v3399 = vmul.f32 %v3191, %v3191
    %v3400 = vmul.f32 %v3193, %v3193
    %v3401 = vmul.f32 %v3197, %v3197
    %v3402 = vmul.f32 %v3199, %v3199
    %v3403 = vmul.f32 %v3201, %v3201
    %v3404 = vmul.f32 %v3203, %v3203
    %v3405 = vmul.f32 %v3207, %v3207
    %v3406 = vmul.f32 %v3209, %v3209
    %v3407 = vmul.f32 %v3211, %v3211
    %v3408 = vmul.f32 %v3213, %v3213
    %v3409 = vmul.f32 %v3217, %v3217
    %v3410 = vmul.f32 %v3219, %v3219
    %v3411 = vmul.f32 %v3221, %v3221
    %v3412 = vmul.f32 %v3223, %v3223
    %v3413 = vmul.f32 %v3227, %v3227
    %v3414 = vmul.f32 %v3229, %v3229
    %v3415 = vmul.f32 %v3231, %v3231
    %v3416 = vmul.f32 %v3233, %v3233
    %v3417 = vmul.f32 %v3237, %v3237
    %v3418 = vmul.f32 %v3239, %v3239
    %v3419 = vmul.f32 %v3241, %v3241
    %v3420 = vmul.f32 %v3243, %v3243
    %v3421 = vmul.f32 %v3247, %v3247
    %v3422 = vmul.f32 %v3249, %v3249
    %v3423 = vmul.f32 %v3251, %v3251
    %v3424 = vmul.f32 %v3253, %v3253
    %v3425 = vmul.f32 %v3257, %v3257
    %v3426 = vmul.f32 %v3259, %v3259
    %v3427 = vmul.f32 %v3261, %v3261
    %v3428 = vmul.f32 %v3263, %v3263
    %v3429 = vmul.f32 %v3267, %v3267
    %v3430 = vmul.f32 %v3269, %v3269
    %v3431 = vmul.f32 %v3271, %v3271
    %v3432 = vmul.f32 %v3273, %v3273
    %v3433 = vmul.f32 %v3277, %v3277
    %v3434 = vmul.f32 %v3279, %v3279
    %v3435 = vmul.f32 %v3281, %v3281
    %v3436 = vmul.f32 %v3283, %v3283
    %v3437 = vmul.f32 %v3287, %v3287
    %v3438 = vmul.f32 %v3289, %v3289
    %v3439 = vmul.f32 %v3291, %v3291
    %v3440 = vmul.f32 %v3293, %v3293
    %v3441 = vmul.f32 %v3297, %v3297
    %v3442 = vmul.f32 %v3299, %v3299
    %v3443 = vmul.f32 %v3301, %v3301
    %v3444 = vmul.f32 %v3303, %v3303
    %v3445 = vadd.f32 %v3381, %v3383
    %v3446 = vadd.f32 %v3445, %v3385
    %v3447 = vadd.f32 %v3446, %v3387
    %v3448 = vadd.f32 %v3447, %v3389
    %v3449 = vadd.f32 %v3448, %v3391
    %v3450 = vadd.f32 %v3449, %v3393
    %v3451 = vadd.f32 %v3450, %v3395
    %v3452 = vadd.f32 %v3451, %v3397
    %v3453 = vadd.f32 %v3452, %v3399
    %v3454 = vadd.f32 %v3453, %v3401
    %v3455 = vadd.f32 %v3454, %v3403
    %v3456 = vadd.f32 %v3455, %v3405
    %v3457 = vadd.f32 %v3456, %v3407
    %v3458 = vadd.f32 %v3457, %v3409
    %v3459 = vadd.f32 %v3458, %v3411
    %v3460 = vadd.f32 %v3459, %v3413
    %v3461 = vadd.f32 %v3460, %v3415
    %v3462 = vadd.f32 %v3461, %v3417
    %v3463 = vadd.f32 %v3462, %v3419
    %v3464 = vadd.f32 %v3463, %v3421
    %v3465 = vadd.f32 %v3464, %v3423
    %v3466 = vadd.f32 %v3465, %v3425
    %v3467 = vadd.f32 %v3466, %v3427
    %v3468 = vadd.f32 %v3467, %v3429
    %v3469 = vadd.f32 %v3468, %v3431
    %v3470 = vadd.f32 %v3469, %v3433
    %v3471 = vadd.f32 %v3470, %v3435
    %v3472 = vadd.f32 %v3471, %v3437
    %v3473 = vadd.f32 %v3472, %v3439
    %v3474 = vadd.f32 %v3473, %v3441
    %v3475 = vadd.f32 %v3474, %v3443
    %v3476 = vrot.slane %v3475, 4
    %v3477 = vadd.f32 %v3475, %v3476
    %v3478 = vrot.slane %v3477, 2
    %v3479 = vadd.f32 %v3477, %v3478
    %v3480 = vrot.slane %v3479, 1
    %v3481 = vadd.f32 %v3479, %v3480
    %v3482 = vadd.f32 %v3382, %v3384
    %v3483 = vadd.f32 %v3482, %v3386
    %v3484 = vadd.f32 %v3483, %v3388
    %v3485 = vadd.f32 %v3484, %v3390
    %v3486 = vadd.f32 %v3485, %v3392
    %v3487 = vadd.f32 %v3486, %v3394
    %v3488 = vadd.f32 %v3487, %v3396
    %v3489 = vadd.f32 %v3488, %v3398
    %v3490 = vadd.f32 %v3489, %v3400
    %v3491 = vadd.f32 %v3490, %v3402
    %v3492 = vadd.f32 %v3491, %v3404
    %v3493 = vadd.f32 %v3492, %v3406
    %v3494 = vadd.f32 %v3493, %v3408
    %v3495 = vadd.f32 %v3494, %v3410
    %v3496 = vadd.f32 %v3495, %v3412
    %v3497 = vadd.f32 %v3496, %v3414
    %v3498 = vadd.f32 %v3497, %v3416
    %v3499 = vadd.f32 %v3498, %v3418
    %v3500 = vadd.f32 %v3499, %v3420
    %v3501 = vadd.f32 %v3500, %v3422
    %v3502 = vadd.f32 %v3501, %v3424
    %v3503 = vadd.f32 %v3502, %v3426
    %v3504 = vadd.f32 %v3503, %v3428
    %v3505 = vadd.f32 %v3504, %v3430
    %v3506 = vadd.f32 %v3505, %v3432
    %v3507 = vadd.f32 %v3506, %v3434
    %v3508 = vadd.f32 %v3507, %v3436
    %v3509 = vadd.f32 %v3508, %v3438
    %v3510 = vadd.f32 %v3509, %v3440
    %v3511 = vadd.f32 %v3510, %v3442
    %v3512 = vadd.f32 %v3511, %v3444
    %v3513 = vrot.slane %v3512, 4
    %v3514 = vadd.f32 %v3512, %v3513
    %v3515 = vrot.slane %v3514, 2
    %v3516 = vadd.f32 %v3514, %v3515
    %v3517 = vrot.slane %v3516, 1
    %v3518 = vadd.f32 %v3516, %v3517
    %v3519 = vadd.f32 %v3481, 0.0
    %v3520 = vadd.f32 %v3518, 0.0
    %v3521 = vmax.f32 %v3147, %v3157
    %v3522 = vmax.f32 %v3151, %v3161
    %v3523 = vmax.f32 %v3521, %v3167
    %v3524 = vmax.f32 %v3522, %v3171
    %v3525 = vmax.f32 %v3523, %v3177
    %v3526 = vmax.f32 %v3524, %v3181
    %v3527 = vmax.f32 %v3525, %v3187
    %v3528 = vmax.f32 %v3526, %v3191
    %v3529 = vmax.f32 %v3527, %v3197
    %v3530 = vmax.f32 %v3528, %v3201
    %v3531 = vmax.f32 %v3529, %v3207
    %v3532 = vmax.f32 %v3530, %v3211
    %v3533 = vmax.f32 %v3531, %v3217
    %v3534 = vmax.f32 %v3532, %v3221
    %v3535 = vmax.f32 %v3533, %v3227
    %v3536 = vmax.f32 %v3534, %v3231
    %v3537 = vmax.f32 %v3535, %v3237
    %v3538 = vmax.f32 %v3536, %v3241
    %v3539 = vmax.f32 %v3537, %v3247
    %v3540 = vmax.f32 %v3538, %v3251
    %v3541 = vmax.f32 %v3539, %v3257
    %v3542 = vmax.f32 %v3540, %v3261
    %v3543 = vmax.f32 %v3541, %v3267
    %v3544 = vmax.f32 %v3542, %v3271
    %v3545 = vmax.f32 %v3543, %v3277
    %v3546 = vmax.f32 %v3544, %v3281
    %v3547 = vmax.f32 %v3545, %v3287
    %v3548 = vmax.f32 %v3546, %v3291
    %v3549 = vmax.f32 %v3547, %v3297
    %v3550 = vmax.f32 %v3548, %v3301
    %v3551 = vmax.f32 %v3549, %v3550
    %v3552 = vrot.slane %v3551, 4
    %v3553 = vmax.f32 %v3551, %v3552
    %v3554 = vrot.slane %v3553, 2
    %v3555 = vmax.f32 %v3553, %v3554
    %v3556 = vrot.slane %v3555, 1
    %v3557 = vmax.f32 %v3555, %v3556
    %v3558 = vmax.f32 %v3149, %v3159
    %v3559 = vmax.f32 %v3153, %v3163
    %v3560 = vmax.f32 %v3558, %v3169
    %v3561 = vmax.f32 %v3559, %v3173
    %v3562 = vmax.f32 %v3560, %v3179
    %v3563 = vmax.f32 %v3561, %v3183
    %v3564 = vmax.f32 %v3562, %v3189
    %v3565 = vmax.f32 %v3563, %v3193
    %v3566 = vmax.f32 %v3564, %v3199
    %v3567 = vmax.f32 %v3565, %v3203
    %v3568 = vmax.f32 %v3566, %v3209
    %v3569 = vmax.f32 %v3567, %v3213
    %v3570 = vmax.f32 %v3568, %v3219
    %v3571 = vmax.f32 %v3569, %v3223
    %v3572 = vmax.f32 %v3570, %v3229
    %v3573 = vmax.f32 %v3571, %v3233
    %v3574 = vmax.f32 %v3572, %v3239
    %v3575 = vmax.f32 %v3573, %v3243
    %v3576 = vmax.f32 %v3574, %v3249
    %v3577 = vmax.f32 %v3575, %v3253
    %v3578 = vmax.f32 %v3576, %v3259
    %v3579 = vmax.f32 %v3577, %v3263
    %v3580 = vmax.f32 %v3578, %v3269
    %v3581 = vmax.f32 %v3579, %v3273
    %v3582 = vmax.f32 %v3580, %v3279
    %v3583 = vmax.f32 %v3581, %v3283
    %v3584 = vmax.f32 %v3582, %v3289
    %v3585 = vmax.f32 %v3583, %v3293
    %v3586 = vmax.f32 %v3584, %v3299
    %v3587 = vmax.f32 %v3585, %v3303
    %v3588 = vmax.f32 %v3586, %v3587
    %v3589 = vrot.slane %v3588, 4
    %v3590 = vmax.f32 %v3588, %v3589
    %v3591 = vrot.slane %v3590, 2
    %v3592 = vmax.f32 %v3590, %v3591
    %v3593 = vrot.slane %v3592, 1
    %v3594 = vmax.f32 %v3592, %v3593
    %v3597 = vcombine.low %v3557, %v3594
    %v3599 = vunpack.c.l.s4 1966171168
    %v3600 = vunpack.c.0.s8 %v3599
    %v3601 = vlaneseq
    %v3602 = vshrl.u32 %v3601, 7
    %v3603 = vsub.s32 %v3600, %v3602
    %v3604 = vrot.slane %v3597, %v3603
    %v3606 = vunpack.c.l.s4 1966171168
    %v3607 = vunpack.c.0.s8 %v3606
    %v3608 = vlaneseq
    %v3609 = vshrl.u32 %v3608, 7
    %v3610 = vsub.s32 %v3607, %v3609
    %v3611 = vrot.slane %v3604, %v3610
    %v3613 = vlaneseq
    %vm3614 = vcmp.ge.s32.totalorder %v3613, 0
    %vm3615 = vcmp.lt.s32.totalorder %v3613, 256
    %vm3616 = vmand %vm3614, %vm3615
    %3617 = vst.msk [vmem:[#allocation5] ss:$2 sm:$0x3] %vm3616, %v3611
    %s3618 = scalar_lea.vmem [#allocation4], 128
    %v3619 = vld [vmem:[%s3618] sm:$0xff]
    %v3620 = vld [vmem:[%s3618 + $0x8] sm:$0xff]
    %v3621 = vld [vmem:[%s3618 + $0x10] sm:$0xff]
    %v3622 = vld [vmem:[%s3618 + $0x18] sm:$0xff]
    %v3623 = vld [vmem:[%s3618 + $0x20] sm:$0xff]
    %v3624 = vld [vmem:[%s3618 + $0x28] sm:$0xff]
    %v3625 = vld [vmem:[%s3618 + $0x30] sm:$0xff]
    %v3626 = vld [vmem:[%s3618 + $0x38] sm:$0xff]
    %v3627 = vld [vmem:[%s3618 + $0x40] sm:$0xff]
    %v3628 = vld [vmem:[%s3618 + $0x48] sm:$0xff]
    %v3629 = vld [vmem:[%s3618 + $0x50] sm:$0xff]
    %v3630 = vld [vmem:[%s3618 + $0x58] sm:$0xff]
    %v3631 = vld [vmem:[%s3618 + $0x60] sm:$0xff]
    %v3632 = vld [vmem:[%s3618 + $0x68] sm:$0xff]
    %v3633 = vld [vmem:[%s3618 + $0x70] sm:$0xff]
    %v3634 = vld [vmem:[%s3618 + $0x78] sm:$0xff]
    %v3635 = vunpack.c.l.bf16 %v3619
    %v3636 = vunpack.c.h.bf16 %v3619
    %v3637 = vunpack.c.l.bf16 %v3620
    %v3638 = vunpack.c.h.bf16 %v3620
    %v3639 = vunpack.c.l.bf16 %v3621
    %v3640 = vunpack.c.h.bf16 %v3621
    %v3641 = vunpack.c.l.bf16 %v3622
    %v3642 = vunpack.c.h.bf16 %v3622
    %v3643 = vunpack.c.l.bf16 %v3623
    %v3644 = vunpack.c.h.bf16 %v3623
    %v3645 = vunpack.c.l.bf16 %v3624
    %v3646 = vunpack.c.h.bf16 %v3624
    %v3647 = vunpack.c.l.bf16 %v3625
    %v3648 = vunpack.c.h.bf16 %v3625
    %v3649 = vunpack.c.l.bf16 %v3626
    %v3650 = vunpack.c.h.bf16 %v3626
    %v3651 = vunpack.c.l.bf16 %v3627
    %v3652 = vunpack.c.h.bf16 %v3627
    %v3653 = vunpack.c.l.bf16 %v3628
    %v3654 = vunpack.c.h.bf16 %v3628
    %v3655 = vunpack.c.l.bf16 %v3629
    %v3656 = vunpack.c.h.bf16 %v3629
    %v3657 = vunpack.c.l.bf16 %v3630
    %v3658 = vunpack.c.h.bf16 %v3630
    %v3659 = vunpack.c.l.bf16 %v3631
    %v3660 = vunpack.c.h.bf16 %v3631
    %v3661 = vunpack.c.l.bf16 %v3632
    %v3662 = vunpack.c.h.bf16 %v3632
    %v3663 = vunpack.c.l.bf16 %v3633
    %v3664 = vunpack.c.h.bf16 %v3633
    %v3665 = vunpack.c.l.bf16 %v3634
    %v3666 = vunpack.c.h.bf16 %v3634
    %v3667 = vmul.f32 %v3635, %v2841
    %v3668 = vmul.f32 %v3636, %v2841
    %v3669 = vmul.f32 %v3637, %v2841
    %v3670 = vmul.f32 %v3638, %v2841
    %v3671 = vmul.f32 %v3639, %v2841
    %v3672 = vmul.f32 %v3640, %v2841
    %v3673 = vmul.f32 %v3641, %v2841
    %v3674 = vmul.f32 %v3642, %v2841
    %v3675 = vmul.f32 %v3643, %v2841
    %v3676 = vmul.f32 %v3644, %v2841
    %v3677 = vmul.f32 %v3645, %v2841
    %v3678 = vmul.f32 %v3646, %v2841
    %v3679 = vmul.f32 %v3647, %v2841
    %v3680 = vmul.f32 %v3648, %v2841
    %v3681 = vmul.f32 %v3649, %v2841
    %v3682 = vmul.f32 %v3650, %v2841
    %v3683 = vmul.f32 %v3651, %v2841
    %v3684 = vmul.f32 %v3652, %v2841
    %v3685 = vmul.f32 %v3653, %v2841
    %v3686 = vmul.f32 %v3654, %v2841
    %v3687 = vmul.f32 %v3655, %v2841
    %v3688 = vmul.f32 %v3656, %v2841
    %v3689 = vmul.f32 %v3657, %v2841
    %v3690 = vmul.f32 %v3658, %v2841
    %v3691 = vmul.f32 %v3659, %v2841
    %v3692 = vmul.f32 %v3660, %v2841
    %v3693 = vmul.f32 %v3661, %v2841
    %v3694 = vmul.f32 %v3662, %v2841
    %v3695 = vmul.f32 %v3663, %v2841
    %v3696 = vmul.f32 %v3664, %v2841
    %v3697 = vmul.f32 %v3665, %v2841
    %v3698 = vmul.f32 %v3666, %v2841
    %v3699 = vadd.f32 %v3667, %v2843
    %v3700 = vadd.f32 %v3668, %v2843
    %v3701 = vadd.f32 %v3669, %v2843
    %v3702 = vadd.f32 %v3670, %v2843
    %v3703 = vadd.f32 %v3671, %v2843
    %v3704 = vadd.f32 %v3672, %v2843
    %v3705 = vadd.f32 %v3673, %v2843
    %v3706 = vadd.f32 %v3674, %v2843
    %v3707 = vadd.f32 %v3675, %v2843
    %v3708 = vadd.f32 %v3676, %v2843
    %v3709 = vadd.f32 %v3677, %v2843
    %v3710 = vadd.f32 %v3678, %v2843
    %v3711 = vadd.f32 %v3679, %v2843
    %v3712 = vadd.f32 %v3680, %v2843
    %v3713 = vadd.f32 %v3681, %v2843
    %v3714 = vadd.f32 %v3682, %v2843
    %v3715 = vadd.f32 %v3683, %v2843
    %v3716 = vadd.f32 %v3684, %v2843
    %v3717 = vadd.f32 %v3685, %v2843
    %v3718 = vadd.f32 %v3686, %v2843
    %v3719 = vadd.f32 %v3687, %v2843
    %v3720 = vadd.f32 %v3688, %v2843
    %v3721 = vadd.f32 %v3689, %v2843
    %v3722 = vadd.f32 %v3690, %v2843
    %v3723 = vadd.f32 %v3691, %v2843
    %v3724 = vadd.f32 %v3692, %v2843
    %v3725 = vadd.f32 %v3693, %v2843
    %v3726 = vadd.f32 %v3694, %v2843
    %v3727 = vadd.f32 %v3695, %v2843
    %v3728 = vadd.f32 %v3696, %v2843
    %v3729 = vadd.f32 %v3697, %v2843
    %v3730 = vadd.f32 %v3698, %v2843
    %v3731 = vmax.f32 %v3699, 0.0
    %v3732 = vmax.f32 %v3700, 0.0
    %v3733 = vmax.f32 %v3701, 0.0
    %v3734 = vmax.f32 %v3702, 0.0
    %v3735 = vmax.f32 %v3703, 0.0
    %v3736 = vmax.f32 %v3704, 0.0
    %v3737 = vmax.f32 %v3705, 0.0
    %v3738 = vmax.f32 %v3706, 0.0
    %v3739 = vmax.f32 %v3707, 0.0
    %v3740 = vmax.f32 %v3708, 0.0
    %v3741 = vmax.f32 %v3709, 0.0
    %v3742 = vmax.f32 %v3710, 0.0
    %v3743 = vmax.f32 %v3711, 0.0
    %v3744 = vmax.f32 %v3712, 0.0
    %v3745 = vmax.f32 %v3713, 0.0
    %v3746 = vmax.f32 %v3714, 0.0
    %v3747 = vmax.f32 %v3715, 0.0
    %v3748 = vmax.f32 %v3716, 0.0
    %v3749 = vmax.f32 %v3717, 0.0
    %v3750 = vmax.f32 %v3718, 0.0
    %v3751 = vmax.f32 %v3719, 0.0
    %v3752 = vmax.f32 %v3720, 0.0
    %v3753 = vmax.f32 %v3721, 0.0
    %v3754 = vmax.f32 %v3722, 0.0
    %v3755 = vmax.f32 %v3723, 0.0
    %v3756 = vmax.f32 %v3724, 0.0
    %v3757 = vmax.f32 %v3725, 0.0
    %v3758 = vmax.f32 %v3726, 0.0
    %v3759 = vmax.f32 %v3727, 0.0
    %v3760 = vmax.f32 %v3728, 0.0
    %v3761 = vmax.f32 %v3729, 0.0
    %v3762 = vmax.f32 %v3730, 0.0
    %v3763 = vpack.c.bf16 %v3732, %v3731
    %v3764 = vpack.c.bf16 %v3734, %v3733
    %v3765 = vpack.c.bf16 %v3736, %v3735
    %v3766 = vpack.c.bf16 %v3738, %v3737
    %v3767 = vpack.c.bf16 %v3740, %v3739
    %v3768 = vpack.c.bf16 %v3742, %v3741
    %v3769 = vpack.c.bf16 %v3744, %v3743
    %v3770 = vpack.c.bf16 %v3746, %v3745
    %v3771 = vpack.c.bf16 %v3748, %v3747
    %v3772 = vpack.c.bf16 %v3750, %v3749
    %v3773 = vpack.c.bf16 %v3752, %v3751
    %v3774 = vpack.c.bf16 %v3754, %v3753
    %v3775 = vpack.c.bf16 %v3756, %v3755
    %v3776 = vpack.c.bf16 %v3758, %v3757
    %v3777 = vpack.c.bf16 %v3760, %v3759
    %v3778 = vpack.c.bf16 %v3762, %v3761
    %v3779 = vld [vmem:[%s9] sm:$0xff]
    %v3780 = vld [vmem:[%s9 + $0x8] sm:$0xff]
    %v3781 = vld [vmem:[%s9 + $0x10] sm:$0xff]
    %v3782 = vld [vmem:[%s9 + $0x18] sm:$0xff]
    %v3783 = vld [vmem:[%s9 + $0x20] sm:$0xff]
    %v3784 = vld [vmem:[%s9 + $0x28] sm:$0xff]
    %v3785 = vld [vmem:[%s9 + $0x30] sm:$0xff]
    %v3786 = vld [vmem:[%s9 + $0x38] sm:$0xff]
    %v3787 = vld [vmem:[%s9 + $0x40] sm:$0xff]
    %v3788 = vld [vmem:[%s9 + $0x48] sm:$0xff]
    %v3789 = vld [vmem:[%s9 + $0x50] sm:$0xff]
    %v3790 = vld [vmem:[%s9 + $0x58] sm:$0xff]
    %v3791 = vld [vmem:[%s9 + $0x60] sm:$0xff]
    %v3792 = vld [vmem:[%s9 + $0x68] sm:$0xff]
    %v3793 = vld [vmem:[%s9 + $0x70] sm:$0xff]
    %v3794 = vld [vmem:[%s9 + $0x78] sm:$0xff]
    %v3795 = vld [vmem:[%s10] sm:$0x3]
    %v3797 = vlaneseq
    %v3798 = vshrl.u32 %v3797, 7
    %v3799 = vsub.s32 0, %v3798
    %v3800 = vrot.slane %v3795, %v3799
    %v3801 = vlaneseq
    %v3802 = vshrl.u32 %v3801, 7
    %v3803 = vsub.s32 1, %v3802
    %v3804 = vrot.slane %v3795, %v3803
    %v3823 = vunpack.c.l.b16 %v3779
    %v3824 = vunpack.c.h.b16 %v3779
    %v3825 = vunpack.c.l.b16 %v3780
    %v3826 = vunpack.c.h.b16 %v3780
    %v3827 = vunpack.c.l.b16 %v3781
    %v3828 = vunpack.c.h.b16 %v3781
    %v3829 = vunpack.c.l.b16 %v3782
    %v3830 = vunpack.c.h.b16 %v3782
    %v3831 = vunpack.c.l.b16 %v3783
    %v3832 = vunpack.c.h.b16 %v3783
    %v3833 = vunpack.c.l.b16 %v3784
    %v3834 = vunpack.c.h.b16 %v3784
    %v3835 = vunpack.c.l.b16 %v3785
    %v3836 = vunpack.c.h.b16 %v3785
    %v3837 = vunpack.c.l.b16 %v3786
    %v3838 = vunpack.c.h.b16 %v3786
    %v3839 = vunpack.c.l.b16 %v3787
    %v3840 = vunpack.c.h.b16 %v3787
    %v3841 = vunpack.c.l.b16 %v3788
    %v3842 = vunpack.c.h.b16 %v3788
    %v3843 = vunpack.c.l.b16 %v3789
    %v3844 = vunpack.c.h.b16 %v3789
    %v3845 = vunpack.c.l.b16 %v3790
    %v3846 = vunpack.c.h.b16 %v3790
    %v3847 = vunpack.c.l.b16 %v3791
    %v3848 = vunpack.c.h.b16 %v3791
    %v3849 = vunpack.c.l.b16 %v3792
    %v3850 = vunpack.c.h.b16 %v3792
    %v3851 = vunpack.c.l.b16 %v3793
    %v3852 = vunpack.c.h.b16 %v3793
    %v3853 = vunpack.c.l.b16 %v3794
    %v3854 = vunpack.c.h.b16 %v3794
    %v3855 = vpack.c.b16 %v3825, %v3823
    %v3856 = vpack.c.b16 %v3826, %v3824
    %v3857 = vpack.c.b16 %v3829, %v3827
    %v3858 = vpack.c.b16 %v3830, %v3828
    %v3859 = vpack.c.b16 %v3833, %v3831
    %v3860 = vpack.c.b16 %v3834, %v3832
    %v3861 = vpack.c.b16 %v3837, %v3835
    %v3862 = vpack.c.b16 %v3838, %v3836
    %v3863 = vpack.c.b16 %v3841, %v3839
    %v3864 = vpack.c.b16 %v3842, %v3840
    %v3865 = vpack.c.b16 %v3845, %v3843
    %v3866 = vpack.c.b16 %v3846, %v3844
    %v3867 = vpack.c.b16 %v3849, %v3847
    %v3868 = vpack.c.b16 %v3850, %v3848
    %v3869 = vpack.c.b16 %v3853, %v3851
    %v3870 = vpack.c.b16 %v3854, %v3852
    %3887 = vmatprep.subr.bf16.mxu0 %v3856
    %3888 = vmatpush1.bf16.msra.mxu0 %v3855
    %3889 = vmatprep.subr.bf16.mxu0 %v3858
    %3890 = vmatpush1.bf16.msra.mxu0 %v3857
    %3891 = vmatprep.subr.bf16.mxu0 %v3860
    %3892 = vmatpush1.bf16.msra.mxu0 %v3859
    %3893 = vmatprep.subr.bf16.mxu0 %v3862
    %3894 = vmatpush1.bf16.msra.mxu0 %v3861
    %3895 = vmatprep.subr.bf16.mxu0 %v3864
    %3896 = vmatpush1.bf16.msra.mxu0 %v3863
    %3897 = vmatprep.subr.bf16.mxu0 %v3866
    %3898 = vmatpush1.bf16.msra.mxu0 %v3865
    %3899 = vmatprep.subr.bf16.mxu0 %v3868
    %3900 = vmatpush1.bf16.msra.mxu0 %v3867
    %3901 = vmatprep.subr.bf16.mxu0 %v3870
    %3902 = vmatpush1.bf16.msra.mxu0 %v3869
    %3903 = vmatprep.subr.bf16.mxu0 0
    %3904 = vmatpush1.bf16.msra.mxu0 0
    %3905 = vmatprep.subr.bf16.mxu0 0
    %3906 = vmatpush1.bf16.msra.mxu0 0
    %3907 = vmatprep.subr.bf16.mxu0 0
    %3908 = vmatpush1.bf16.msra.mxu0 0
    %3909 = vmatprep.subr.bf16.mxu0 0
    %3910 = vmatpush1.bf16.msra.mxu0 0
    %3911 = vmatprep.subr.bf16.mxu0 0
    %3912 = vmatpush1.bf16.msra.mxu0 0
    %3913 = vmatprep.subr.bf16.mxu0 0
    %3914 = vmatpush1.bf16.msra.mxu0 0
    %3915 = vmatprep.subr.bf16.mxu0 0
    %3916 = vmatpush1.bf16.msra.mxu0 0
    %3917 = vmatprep.subr.bf16.mxu0 0
    %3918 = vmatpush1.bf16.msra.mxu0 0
    %3919 = vmatprep.mubr.bf16.mxu0 0
    %3920 = vmatmul.mubr.bf16.gmra.mrb[0].mxu0 %v3763
    %v3921 = vpop.f32.mrb[0].mxu0
    %v3922 = vadd.f32 %v3800, %v3921
    %v3923 = vpop.f32.mrb[0].mxu0
    %v3924 = vadd.f32 %v3804, %v3923
    %v3925 = vpop.f32.mrb[0].mxu0
    %v3926 = vadd.f32 %v3800, %v3925
    %v3927 = vpop.f32.mrb[0].mxu0
    %v3928 = vadd.f32 %v3804, %v3927
    %3929 = vmatprep.mubr.bf16.mxu0 0
    %3930 = vmatmul.mubr.bf16.gmra.mrb[0].mxu0 %v3764
    %v3931 = vpop.f32.mrb[0].mxu0
    %v3932 = vadd.f32 %v3800, %v3931
    %v3933 = vpop.f32.mrb[0].mxu0
    %v3934 = vadd.f32 %v3804, %v3933
    %v3935 = vpop.f32.mrb[0].mxu0
    %v3936 = vadd.f32 %v3800, %v3935
    %v3937 = vpop.f32.mrb[0].mxu0
    %v3938 = vadd.f32 %v3804, %v3937
    %3939 = vmatprep.mubr.bf16.mxu0 0
    %3940 = vmatmul.mubr.bf16.gmra.mrb[0].mxu0 %v3765
    %v3941 = vpop.f32.mrb[0].mxu0
    %v3942 = vadd.f32 %v3800, %v3941
    %v3943 = vpop.f32.mrb[0].mxu0
    %v3944 = vadd.f32 %v3804, %v3943
    %v3945 = vpop.f32.mrb[0].mxu0
    %v3946 = vadd.f32 %v3800, %v3945
    %v3947 = vpop.f32.mrb[0].mxu0
    %v3948 = vadd.f32 %v3804, %v3947
    %3949 = vmatprep.mubr.bf16.mxu0 0
    %3950 = vmatmul.mubr.bf16.gmra.mrb[0].mxu0 %v3766
    %v3951 = vpop.f32.mrb[0].mxu0
    %v3952 = vadd.f32 %v3800, %v3951
    %v3953 = vpop.f32.mrb[0].mxu0
    %v3954 = vadd.f32 %v3804, %v3953
    %v3955 = vpop.f32.mrb[0].mxu0
    %v3956 = vadd.f32 %v3800, %v3955
    %v3957 = vpop.f32.mrb[0].mxu0
    %v3958 = vadd.f32 %v3804, %v3957
    %3959 = vmatprep.mubr.bf16.mxu0 0
    %3960 = vmatmul.mubr.bf16.gmra.mrb[0].mxu0 %v3767
    %v3961 = vpop.f32.mrb[0].mxu0
    %v3962 = vadd.f32 %v3800, %v3961
    %v3963 = vpop.f32.mrb[0].mxu0
    %v3964 = vadd.f32 %v3804, %v3963
    %v3965 = vpop.f32.mrb[0].mxu0
    %v3966 = vadd.f32 %v3800, %v3965
    %v3967 = vpop.f32.mrb[0].mxu0
    %v3968 = vadd.f32 %v3804, %v3967
    %3969 = vmatprep.mubr.bf16.mxu0 0
    %3970 = vmatmul.mubr.bf16.gmra.mrb[0].mxu0 %v3768
    %v3971 = vpop.f32.mrb[0].mxu0
    %v3972 = vadd.f32 %v3800, %v3971
    %v3973 = vpop.f32.mrb[0].mxu0
    %v3974 = vadd.f32 %v3804, %v3973
    %v3975 = vpop.f32.mrb[0].mxu0
    %v3976 = vadd.f32 %v3800, %v3975
    %v3977 = vpop.f32.mrb[0].mxu0
    %v3978 = vadd.f32 %v3804, %v3977
    %3979 = vmatprep.mubr.bf16.mxu0 0
    %3980 = vmatmul.mubr.bf16.gmra.mrb[0].mxu0 %v3769
    %v3981 = vpop.f32.mrb[0].mxu0
    %v3982 = vadd.f32 %v3800, %v3981
    %v3983 = vpop.f32.mrb[0].mxu0
    %v3984 = vadd.f32 %v3804, %v3983
    %v3985 = vpop.f32.mrb[0].mxu0
    %v3986 = vadd.f32 %v3800, %v3985
    %v3987 = vpop.f32.mrb[0].mxu0
    %v3988 = vadd.f32 %v3804, %v3987
    %3989 = vmatprep.mubr.bf16.mxu0 0
    %3990 = vmatmul.mubr.bf16.gmra.mrb[0].mxu0 %v3770
    %v3991 = vpop.f32.mrb[0].mxu0
    %v3992 = vadd.f32 %v3800, %v3991
    %v3993 = vpop.f32.mrb[0].mxu0
    %v3994 = vadd.f32 %v3804, %v3993
    %v3995 = vpop.f32.mrb[0].mxu0
    %v3996 = vadd.f32 %v3800, %v3995
    %v3997 = vpop.f32.mrb[0].mxu0
    %v3998 = vadd.f32 %v3804, %v3997
    %3999 = vmatprep.mubr.bf16.mxu0 0
    %4000 = vmatmul.mubr.bf16.gmra.mrb[0].mxu0 %v3771
    %v4001 = vpop.f32.mrb[0].mxu0
    %v4002 = vadd.f32 %v3800, %v4001
    %v4003 = vpop.f32.mrb[0].mxu0
    %v4004 = vadd.f32 %v3804, %v4003
    %v4005 = vpop.f32.mrb[0].mxu0
    %v4006 = vadd.f32 %v3800, %v4005
    %v4007 = vpop.f32.mrb[0].mxu0
    %v4008 = vadd.f32 %v3804, %v4007
    %4009 = vmatprep.mubr.bf16.mxu0 0
    %4010 = vmatmul.mubr.bf16.gmra.mrb[0].mxu0 %v3772
    %v4011 = vpop.f32.mrb[0].mxu0
    %v4012 = vadd.f32 %v3800, %v4011
    %v4013 = vpop.f32.mrb[0].mxu0
    %v4014 = vadd.f32 %v3804, %v4013
    %v4015 = vpop.f32.mrb[0].mxu0
    %v4016 = vadd.f32 %v3800, %v4015
    %v4017 = vpop.f32.mrb[0].mxu0
    %v4018 = vadd.f32 %v3804, %v4017
    %4019 = vmatprep.mubr.bf16.mxu0 0
    %4020 = vmatmul.mubr.bf16.gmra.mrb[0].mxu0 %v3773
    %v4021 = vpop.f32.mrb[0].mxu0
    %v4022 = vadd.f32 %v3800, %v4021
    %v4023 = vpop.f32.mrb[0].mxu0
    %v4024 = vadd.f32 %v3804, %v4023
    %v4025 = vpop.f32.mrb[0].mxu0
    %v4026 = vadd.f32 %v3800, %v4025
    %v4027 = vpop.f32.mrb[0].mxu0
    %v4028 = vadd.f32 %v3804, %v4027
    %4029 = vmatprep.mubr.bf16.mxu0 0
    %4030 = vmatmul.mubr.bf16.gmra.mrb[0].mxu0 %v3774
    %v4031 = vpop.f32.mrb[0].mxu0
    %v4032 = vadd.f32 %v3800, %v4031
    %v4033 = vpop.f32.mrb[0].mxu0
    %v4034 = vadd.f32 %v3804, %v4033
    %v4035 = vpop.f32.mrb[0].mxu0
    %v4036 = vadd.f32 %v3800, %v4035
    %v4037 = vpop.f32.mrb[0].mxu0
    %v4038 = vadd.f32 %v3804, %v4037
    %4039 = vmatprep.mubr.bf16.mxu0 0
    %4040 = vmatmul.mubr.bf16.gmra.mrb[0].mxu0 %v3775
    %v4041 = vpop.f32.mrb[0].mxu0
    %v4042 = vadd.f32 %v3800, %v4041
    %v4043 = vpop.f32.mrb[0].mxu0
    %v4044 = vadd.f32 %v3804, %v4043
    %v4045 = vpop.f32.mrb[0].mxu0
    %v4046 = vadd.f32 %v3800, %v4045
    %v4047 = vpop.f32.mrb[0].mxu0
    %v4048 = vadd.f32 %v3804, %v4047
    %4049 = vmatprep.mubr.bf16.mxu0 0
    %4050 = vmatmul.mubr.bf16.gmra.mrb[0].mxu0 %v3776
    %v4051 = vpop.f32.mrb[0].mxu0
    %v4052 = vadd.f32 %v3800, %v4051
    %v4053 = vpop.f32.mrb[0].mxu0
    %v4054 = vadd.f32 %v3804, %v4053
    %v4055 = vpop.f32.mrb[0].mxu0
    %v4056 = vadd.f32 %v3800, %v4055
    %v4057 = vpop.f32.mrb[0].mxu0
    %v4058 = vadd.f32 %v3804, %v4057
    %4059 = vmatprep.mubr.bf16.mxu0 0
    %4060 = vmatmul.mubr.bf16.gmra.mrb[0].mxu0 %v3777
    %v4061 = vpop.f32.mrb[0].mxu0
    %v4062 = vadd.f32 %v3800, %v4061
    %v4063 = vpop.f32.mrb[0].mxu0
    %v4064 = vadd.f32 %v3804, %v4063
    %v4065 = vpop.f32.mrb[0].mxu0
    %v4066 = vadd.f32 %v3800, %v4065
    %v4067 = vpop.f32.mrb[0].mxu0
    %v4068 = vadd.f32 %v3804, %v4067
    %4069 = vmatprep.mubr.bf16.mxu0 0
    %4070 = vmatmul.mubr.bf16.gmra.mrb[0].mxu0 %v3778
    %v4071 = vpop.f32.mrb[0].mxu0
    %v4072 = vadd.f32 %v3800, %v4071
    %v4073 = vpop.f32.mrb[0].mxu0
    %v4074 = vadd.f32 %v3804, %v4073
    %v4075 = vpop.f32.mrb[0].mxu0
    %v4076 = vadd.f32 %v3800, %v4075
    %v4077 = vpop.f32.mrb[0].mxu0
    %v4078 = vadd.f32 %v3804, %v4077
    %4079 = vdwg.mxu0
    %v4080 = vadd.f32 %v3922, %v3926
    %v4081 = vadd.f32 %v4080, %v3932
    %v4082 = vadd.f32 %v4081, %v3936
    %v4083 = vadd.f32 %v4082, %v3942
    %v4084 = vadd.f32 %v4083, %v3946
    %v4085 = vadd.f32 %v4084, %v3952
    %v4086 = vadd.f32 %v4085, %v3956
    %v4087 = vadd.f32 %v4086, %v3962
    %v4088 = vadd.f32 %v4087, %v3966
    %v4089 = vadd.f32 %v4088, %v3972
    %v4090 = vadd.f32 %v4089, %v3976
    %v4091 = vadd.f32 %v4090, %v3982
    %v4092 = vadd.f32 %v4091, %v3986
    %v4093 = vadd.f32 %v4092, %v3992
    %v4094 = vadd.f32 %v4093, %v3996
    %v4095 = vadd.f32 %v4094, %v4002
    %v4096 = vadd.f32 %v4095, %v4006
    %v4097 = vadd.f32 %v4096, %v4012
    %v4098 = vadd.f32 %v4097, %v4016
    %v4099 = vadd.f32 %v4098, %v4022
    %v4100 = vadd.f32 %v4099, %v4026
    %v4101 = vadd.f32 %v4100, %v4032
    %v4102 = vadd.f32 %v4101, %v4036
    %v4103 = vadd.f32 %v4102, %v4042
    %v4104 = vadd.f32 %v4103, %v4046
    %v4105 = vadd.f32 %v4104, %v4052
    %v4106 = vadd.f32 %v4105, %v4056
    %v4107 = vadd.f32 %v4106, %v4062
    %v4108 = vadd.f32 %v4107, %v4066
    %v4109 = vadd.f32 %v4108, %v4072
    %v4110 = vadd.f32 %v4109, %v4076
    %v4111 = vrot.slane %v4110, 4
    %v4112 = vadd.f32 %v4110, %v4111
    %v4113 = vrot.slane %v4112, 2
    %v4114 = vadd.f32 %v4112, %v4113
    %v4115 = vrot.slane %v4114, 1
    %v4116 = vadd.f32 %v4114, %v4115
    %v4117 = vadd.f32 %v3924, %v3928
    %v4118 = vadd.f32 %v4117, %v3934
    %v4119 = vadd.f32 %v4118, %v3938
    %v4120 = vadd.f32 %v4119, %v3944
    %v4121 = vadd.f32 %v4120, %v3948
    %v4122 = vadd.f32 %v4121, %v3954
    %v4123 = vadd.f32 %v4122, %v3958
    %v4124 = vadd.f32 %v4123, %v3964
    %v4125 = vadd.f32 %v4124, %v3968
    %v4126 = vadd.f32 %v4125, %v3974
    %v4127 = vadd.f32 %v4126, %v3978
    %v4128 = vadd.f32 %v4127, %v3984
    %v4129 = vadd.f32 %v4128, %v3988
    %v4130 = vadd.f32 %v4129, %v3994
    %v4131 = vadd.f32 %v4130, %v3998
    %v4132 = vadd.f32 %v4131, %v4004
    %v4133 = vadd.f32 %v4132, %v4008
    %v4134 = vadd.f32 %v4133, %v4014
    %v4135 = vadd.f32 %v4134, %v4018
    %v4136 = vadd.f32 %v4135, %v4024
    %v4137 = vadd.f32 %v4136, %v4028
    %v4138 = vadd.f32 %v4137, %v4034
    %v4139 = vadd.f32 %v4138, %v4038
    %v4140 = vadd.f32 %v4139, %v4044
    %v4141 = vadd.f32 %v4140, %v4048
    %v4142 = vadd.f32 %v4141, %v4054
    %v4143 = vadd.f32 %v4142, %v4058
    %v4144 = vadd.f32 %v4143, %v4064
    %v4145 = vadd.f32 %v4144, %v4068
    %v4146 = vadd.f32 %v4145, %v4074
    %v4147 = vadd.f32 %v4146, %v4078
    %v4148 = vrot.slane %v4147, 4
    %v4149 = vadd.f32 %v4147, %v4148
    %v4150 = vrot.slane %v4149, 2
    %v4151 = vadd.f32 %v4149, %v4150
    %v4152 = vrot.slane %v4151, 1
    %v4153 = vadd.f32 %v4151, %v4152
    %v4154 = vadd.f32 %v3379, %v4116
    %v4155 = vadd.f32 %v3380, %v4153
    %v4156 = vmul.f32 %v3922, %v3922
    %v4157 = vmul.f32 %v3924, %v3924
    %v4158 = vmul.f32 %v3926, %v3926
    %v4159 = vmul.f32 %v3928, %v3928
    %v4160 = vmul.f32 %v3932, %v3932
    %v4161 = vmul.f32 %v3934, %v3934
    %v4162 = vmul.f32 %v3936, %v3936
    %v4163 = vmul.f32 %v3938, %v3938
    %v4164 = vmul.f32 %v3942, %v3942
    %v4165 = vmul.f32 %v3944, %v3944
    %v4166 = vmul.f32 %v3946, %v3946
    %v4167 = vmul.f32 %v3948, %v3948
    %v4168 = vmul.f32 %v3952, %v3952
    %v4169 = vmul.f32 %v3954, %v3954
    %v4170 = vmul.f32 %v3956, %v3956
    %v4171 = vmul.f32 %v3958, %v3958
    %v4172 = vmul.f32 %v3962, %v3962
    %v4173 = vmul.f32 %v3964, %v3964
    %v4174 = vmul.f32 %v3966, %v3966
    %v4175 = vmul.f32 %v3968, %v3968
    %v4176 = vmul.f32 %v3972, %v3972
    %v4177 = vmul.f32 %v3974, %v3974
    %v4178 = vmul.f32 %v3976, %v3976
    %v4179 = vmul.f32 %v3978, %v3978
    %v4180 = vmul.f32 %v3982, %v3982
    %v4181 = vmul.f32 %v3984, %v3984
    %v4182 = vmul.f32 %v3986, %v3986
    %v4183 = vmul.f32 %v3988, %v3988
    %v4184 = vmul.f32 %v3992, %v3992
    %v4185 = vmul.f32 %v3994, %v3994
    %v4186 = vmul.f32 %v3996, %v3996
    %v4187 = vmul.f32 %v3998, %v3998
    %v4188 = vmul.f32 %v4002, %v4002
    %v4189 = vmul.f32 %v4004, %v4004
    %v4190 = vmul.f32 %v4006, %v4006
    %v4191 = vmul.f32 %v4008, %v4008
    %v4192 = vmul.f32 %v4012, %v4012
    %v4193 = vmul.f32 %v4014, %v4014
    %v4194 = vmul.f32 %v4016, %v4016
    %v4195 = vmul.f32 %v4018, %v4018
    %v4196 = vmul.f32 %v4022, %v4022
    %v4197 = vmul.f32 %v4024, %v4024
    %v4198 = vmul.f32 %v4026, %v4026
    %v4199 = vmul.f32 %v4028, %v4028
    %v4200 = vmul.f32 %v4032, %v4032
    %v4201 = vmul.f32 %v4034, %v4034
    %v4202 = vmul.f32 %v4036, %v4036
    %v4203 = vmul.f32 %v4038, %v4038
    %v4204 = vmul.f32 %v4042, %v4042
    %v4205 = vmul.f32 %v4044, %v4044
    %v4206 = vmul.f32 %v4046, %v4046
    %v4207 = vmul.f32 %v4048, %v4048
    %v4208 = vmul.f32 %v4052, %v4052
    %v4209 = vmul.f32 %v4054, %v4054
    %v4210 = vmul.f32 %v4056, %v4056
    %v4211 = vmul.f32 %v4058, %v4058
    %v4212 = vmul.f32 %v4062, %v4062
    %v4213 = vmul.f32 %v4064, %v4064
    %v4214 = vmul.f32 %v4066, %v4066
    %v4215 = vmul.f32 %v4068, %v4068
    %v4216 = vmul.f32 %v4072, %v4072
    %v4217 = vmul.f32 %v4074, %v4074
    %v4218 = vmul.f32 %v4076, %v4076
    %v4219 = vmul.f32 %v4078, %v4078
    %v4220 = vadd.f32 %v4156, %v4158
    %v4221 = vadd.f32 %v4220, %v4160
    %v4222 = vadd.f32 %v4221, %v4162
    %v4223 = vadd.f32 %v4222, %v4164
    %v4224 = vadd.f32 %v4223, %v4166
    %v4225 = vadd.f32 %v4224, %v4168
    %v4226 = vadd.f32 %v4225, %v4170
    %v4227 = vadd.f32 %v4226, %v4172
    %v4228 = vadd.f32 %v4227, %v4174
    %v4229 = vadd.f32 %v4228, %v4176
    %v4230 = vadd.f32 %v4229, %v4178
    %v4231 = vadd.f32 %v4230, %v4180
    %v4232 = vadd.f32 %v4231, %v4182
    %v4233 = vadd.f32 %v4232, %v4184
    %v4234 = vadd.f32 %v4233, %v4186
    %v4235 = vadd.f32 %v4234, %v4188
    %v4236 = vadd.f32 %v4235, %v4190
    %v4237 = vadd.f32 %v4236, %v4192
    %v4238 = vadd.f32 %v4237, %v4194
    %v4239 = vadd.f32 %v4238, %v4196
    %v4240 = vadd.f32 %v4239, %v4198
    %v4241 = vadd.f32 %v4240, %v4200
    %v4242 = vadd.f32 %v4241, %v4202
    %v4243 = vadd.f32 %v4242, %v4204
    %v4244 = vadd.f32 %v4243, %v4206
    %v4245 = vadd.f32 %v4244, %v4208
    %v4246 = vadd.f32 %v4245, %v4210
    %v4247 = vadd.f32 %v4246, %v4212
    %v4248 = vadd.f32 %v4247, %v4214
    %v4249 = vadd.f32 %v4248, %v4216
    %v4250 = vadd.f32 %v4249, %v4218
    %v4251 = vrot.slane %v4250, 4
    %v4252 = vadd.f32 %v4250, %v4251
    %v4253 = vrot.slane %v4252, 2
    %v4254 = vadd.f32 %v4252, %v4253
    %v4255 = vrot.slane %v4254, 1
    %v4256 = vadd.f32 %v4254, %v4255
    %v4257 = vadd.f32 %v4157, %v4159
    %v4258 = vadd.f32 %v4257, %v4161
    %v4259 = vadd.f32 %v4258, %v4163
    %v4260 = vadd.f32 %v4259, %v4165
    %v4261 = vadd.f32 %v4260, %v4167
    %v4262 = vadd.f32 %v4261, %v4169
    %v4263 = vadd.f32 %v4262, %v4171
    %v4264 = vadd.f32 %v4263, %v4173
    %v4265 = vadd.f32 %v4264, %v4175
    %v4266 = vadd.f32 %v4265, %v4177
    %v4267 = vadd.f32 %v4266, %v4179
    %v4268 = vadd.f32 %v4267, %v4181
    %v4269 = vadd.f32 %v4268, %v4183
    %v4270 = vadd.f32 %v4269, %v4185
    %v4271 = vadd.f32 %v4270, %v4187
    %v4272 = vadd.f32 %v4271, %v4189
    %v4273 = vadd.f32 %v4272, %v4191
    %v4274 = vadd.f32 %v4273, %v4193
    %v4275 = vadd.f32 %v4274, %v4195
    %v4276 = vadd.f32 %v4275, %v4197
    %v4277 = vadd.f32 %v4276, %v4199
    %v4278 = vadd.f32 %v4277, %v4201
    %v4279 = vadd.f32 %v4278, %v4203
    %v4280 = vadd.f32 %v4279, %v4205
    %v4281 = vadd.f32 %v4280, %v4207
    %v4282 = vadd.f32 %v4281, %v4209
    %v4283 = vadd.f32 %v4282, %v4211
    %v4284 = vadd.f32 %v4283, %v4213
    %v4285 = vadd.f32 %v4284, %v4215
    %v4286 = vadd.f32 %v4285, %v4217
    %v4287 = vadd.f32 %v4286, %v4219
    %v4288 = vrot.slane %v4287, 4
    %v4289 = vadd.f32 %v4287, %v4288
    %v4290 = vrot.slane %v4289, 2
    %v4291 = vadd.f32 %v4289, %v4290
    %v4292 = vrot.slane %v4291, 1
    %v4293 = vadd.f32 %v4291, %v4292
    %v4294 = vadd.f32 %v3519, %v4256
    %v4295 = vadd.f32 %v3520, %v4293
    %v4296 = vmax.f32 %v3922, %v3932
    %v4297 = vmax.f32 %v3926, %v3936
    %v4298 = vmax.f32 %v4296, %v3942
    %v4299 = vmax.f32 %v4297, %v3946
    %v4300 = vmax.f32 %v4298, %v3952
    %v4301 = vmax.f32 %v4299, %v3956
    %v4302 = vmax.f32 %v4300, %v3962
    %v4303 = vmax.f32 %v4301, %v3966
    %v4304 = vmax.f32 %v4302, %v3972
    %v4305 = vmax.f32 %v4303, %v3976
    %v4306 = vmax.f32 %v4304, %v3982
    %v4307 = vmax.f32 %v4305, %v3986
    %v4308 = vmax.f32 %v4306, %v3992
    %v4309 = vmax.f32 %v4307, %v3996
    %v4310 = vmax.f32 %v4308, %v4002
    %v4311 = vmax.f32 %v4309, %v4006
    %v4312 = vmax.f32 %v4310, %v4012
    %v4313 = vmax.f32 %v4311, %v4016
    %v4314 = vmax.f32 %v4312, %v4022
    %v4315 = vmax.f32 %v4313, %v4026
    %v4316 = vmax.f32 %v4314, %v4032
    %v4317 = vmax.f32 %v4315, %v4036
    %v4318 = vmax.f32 %v4316, %v4042
    %v4319 = vmax.f32 %v4317, %v4046
    %v4320 = vmax.f32 %v4318, %v4052
    %v4321 = vmax.f32 %v4319, %v4056
    %v4322 = vmax.f32 %v4320, %v4062
    %v4323 = vmax.f32 %v4321, %v4066
    %v4324 = vmax.f32 %v4322, %v4072
    %v4325 = vmax.f32 %v4323, %v4076
    %v4326 = vmax.f32 %v4324, %v4325
    %v4327 = vrot.slane %v4326, 4
    %v4328 = vmax.f32 %v4326, %v4327
    %v4329 = vrot.slane %v4328, 2
    %v4330 = vmax.f32 %v4328, %v4329
    %v4331 = vrot.slane %v4330, 1
    %v4332 = vmax.f32 %v4330, %v4331
    %v4333 = vmax.f32 %v3924, %v3934
    %v4334 = vmax.f32 %v3928, %v3938
    %v4335 = vmax.f32 %v4333, %v3944
    %v4336 = vmax.f32 %v4334, %v3948
    %v4337 = vmax.f32 %v4335, %v3954
    %v4338 = vmax.f32 %v4336, %v3958
    %v4339 = vmax.f32 %v4337, %v3964
    %v4340 = vmax.f32 %v4338, %v3968
    %v4341 = vmax.f32 %v4339, %v3974
    %v4342 = vmax.f32 %v4340, %v3978
    %v4343 = vmax.f32 %v4341, %v3984
    %v4344 = vmax.f32 %v4342, %v3988
    %v4345 = vmax.f32 %v4343, %v3994
    %v4346 = vmax.f32 %v4344, %v3998
    %v4347 = vmax.f32 %v4345, %v4004
    %v4348 = vmax.f32 %v4346, %v4008
    %v4349 = vmax.f32 %v4347, %v4014
    %v4350 = vmax.f32 %v4348, %v4018
    %v4351 = vmax.f32 %v4349, %v4024
    %v4352 = vmax.f32 %v4350, %v4028
    %v4353 = vmax.f32 %v4351, %v4034
    %v4354 = vmax.f32 %v4352, %v4038
    %v4355 = vmax.f32 %v4353, %v4044
    %v4356 = vmax.f32 %v4354, %v4048
    %v4357 = vmax.f32 %v4355, %v4054
    %v4358 = vmax.f32 %v4356, %v4058
    %v4359 = vmax.f32 %v4357, %v4064
    %v4360 = vmax.f32 %v4358, %v4068
    %v4361 = vmax.f32 %v4359, %v4074
    %v4362 = vmax.f32 %v4360, %v4078
    %v4363 = vmax.f32 %v4361, %v4362
    %v4364 = vrot.slane %v4363, 4
    %v4365 = vmax.f32 %v4363, %v4364
    %v4366 = vrot.slane %v4365, 2
    %v4367 = vmax.f32 %v4365, %v4366
    %v4368 = vrot.slane %v4367, 1
    %v4369 = vmax.f32 %v4367, %v4368
    %v4372 = vcombine.low %v4332, %v4369
    %v4374 = vunpack.c.l.s4 1966171168
    %v4375 = vunpack.c.0.s8 %v4374
    %v4376 = vlaneseq
    %v4377 = vshrl.u32 %v4376, 7
    %v4378 = vsub.s32 %v4375, %v4377
    %v4379 = vrot.slane %v4372, %v4378
    %v4381 = vunpack.c.l.s4 1966171168
    %v4382 = vunpack.c.0.s8 %v4381
    %v4383 = vlaneseq
    %v4384 = vshrl.u32 %v4383, 7
    %v4385 = vsub.s32 %v4382, %v4384
    %v4386 = vrot.slane %v4379, %v4385
    %s4388 = scalar_lea.vmem [#allocation5], 1
    %4389 = vst.msk [vmem:[%s4388] ss:$2 sm:$0x3] %vm3616, %v4386
    %v4390 = vmul.f32 %v4154, %v990
    %v4391 = vmul.f32 %v4155, %v990
    %v4392 = vmul.f32 %v4294, %v990
    %v4393 = vmul.f32 %v4295, %v990
    %v4394 = vmul.f32 %v4390, %v4390
    %v4395 = vmul.f32 %v4391, %v4391
    %v4396 = vsub.f32 %v4392, %v4394
    %v4397 = vsub.f32 %v4393, %v4395
    %v4398 = vmax.f32 %v4396, 0.0
    %v4399 = vmax.f32 %v4397, 0.0
    %v4400 = vadd.f32 %v4398, 1e-05
    %v4401 = vadd.f32 %v4399, 1e-05
    %v4402 = vrsqrt.pop %v4400
    %v4403 = vrsqrt.pop %v4401
    %v4404 = vsub.f32 0.0, %v4390
    %v4405 = vsub.f32 0.0, %v4391
    %v4406 = vmul.f32 %v4404, %v4402
    %v4407 = vmul.f32 %v4405, %v4403
    %v4408 = vld [vmem:[#allocation5] sm:$0xf]
    %v4411 = vcombine.low %v4402, %v4403
    %v4413 = vunpack.c.l.s4 1983009808
    %v4414 = vunpack.c.0.s8 %v4413
    %v4415 = vlaneseq
    %v4416 = vshrl.u32 %v4415, 7
    %v4417 = vsub.s32 %v4414, %v4416
    %v4418 = vrot.slane %v4411, %v4417
    %v4420 = vmul.f32 %v4408, %v4418
    %v4423 = vcombine.low %v4406, %v4407
    %v4425 = vunpack.c.l.s4 1983009808
    %v4426 = vunpack.c.0.s8 %v4425
    %v4427 = vlaneseq
    %v4428 = vshrl.u32 %v4427, 7
    %v4429 = vsub.s32 %v4426, %v4428
    %v4430 = vrot.slane %v4423, %v4429
    %v4432 = vadd.f32 %v4420, %v4430
    %4433 = vst [vmem:[#allocation5] sm:$0xf] %v4432
    // Predicated region
    $region67: #{pointnetfeat_v1.5} parent=1 // pred_check
      _
    $region68: #{pointnetfeat_v1.5} parent=1 // pred_check_branch
      %4435 = sbr.rel (0) target = $region70
    $region69: #{pointnetfeat_v1.5} parent=1 // pred_region
      %s4437 = ssub.s32 64, 64
      %4438 = vsyncadd [#allocation6], %s4437
      %s4440 = sshll.u32 [#allocation5], 4
      %s4441 = int_to_ptr.vmem [resolvable:$true] %s4440
      %4443 = dma.vmem_to_hbm [thread:$0]  %s4441, 64, %s11, [#allocation6]
    $region70: #{pointnetfeat_v1.5} parent=1 // pred_fallthru
      _
    // Predicated region
    $region71: #{pointnetfeat_v1.5} parent=1 // pred_check
      _
    $region72: #{pointnetfeat_v1.5} parent=1 // pred_check_branch
      %4445 = sbr.rel (0) target = $region74
    $region73: #{pointnetfeat_v1.5} parent=1 // pred_region
      %4446 = dma.done [#allocation6], 64
    $region74: #{pointnetfeat_v1.5} parent=1 // pred_fallthru
      _
    %4447 = vsyncpa [#allocation6], 1

</llo_original>
